<compile_context>
chip_gen: v7x
topology: tpu7x:2x2x1
jax: 0.10.0
libtpu: 0.0.40
codegen_flags: <defaults>
</compile_context>

<pallas_src>
import functools

import jax
import jax.numpy as jnp
from jax.experimental import pallas as pl
from jax.experimental.pallas import tpu as pltpu

# ---- small EDSR-style config (consistent with ModelWrapper geometry) ----------
BATCH = 2
OUT_H = OUT_W = 16            # args.height, args.width
SCALE = 2                     # args.scale = [2] -> lcm = 2
PAD_FACTOR = 1
SR_PAD = SCALE * PAD_FACTOR   # lcm(scales) * pad_factor = 2
N_FEATS = 32                  # args.n_feats
N_RESBLOCKS = 2               # args.n_resblocks
IN_H = (OUT_H + 2 * SR_PAD) // SCALE   # 10
IN_W = (OUT_W + 2 * SR_PAD) // SCALE   # 10

RGB_MEAN = jnp.array([0.4488, 0.4371, 0.4040], dtype=jnp.float32) * 255.0


# ------------------------------ fused Pallas kernel ----------------------------
def _edsr_fused_kernel(*refs, n_resblocks, hw, w_lr):
    """Whole EDSR forward for one batch element, everything resident in VMEM.

    refs = (x, mean, edge, w0, b0, ..., w7, b7, out, pad_scratch)
      x    : (1, hw, 3)               flattened LR image
      mean : (1, 3)                   RGB mean
      edge : (hw, 2)                  horizontal validity masks (left / right)
      wi   : (3, 3*Cin_i, Cout_i)     3x3 conv, dy-major, dx folded into Cin
      bi   : (1, Cout_i)
      out  : (1, hw, 3*SCALE**2)      sub-pixel output (already clamped)
      pad  : (hw + 2*(w_lr+1), 3*Cmax) dx-im2col slab with zero halo rows
    """
    n_layers = 4 + 2 * n_resblocks
    x_ref = refs[0]
    mean_ref = refs[1]
    edge_ref = refs[2]
    wb = refs[3:3 + 2 * n_layers]
    o_ref = refs[3 + 2 * n_layers]
    pad_ref = refs[4 + 2 * n_layers]
    layers = [(wb[2 * i], wb[2 * i + 1]) for i in range(n_layers)]

    off = w_lr + 1
    c_max = pad_ref.shape[1]

    # Zero the halo bands once; the interior columns in use are rewritten before
    # every conv, so the halo provides the vertical (dy = +/-1) zero padding.
    pad_ref[0:off, :] = jnp.zeros((off, c_max), jnp.float32)
    pad_ref[off + hw:off + hw + off, :] = jnp.zeros((off, c_max), jnp.float32)

    # Hoisted edge masks (column-validity of the source pixel) and a zero row.
    m_left = edge_ref[:, 0:1]    # 0 where col == 0     -> gates the dx=+1 block
    m_right = edge_ref[:, 1:2]   # 0 where col == W - 1 -> gates the dx=-1 block
    zrow = jnp.zeros((1, c_max), jnp.float32)

    def conv3x3(x, w_ref, b_ref, relu):
        """Same-padded 3x3 conv on the flattened (hw, Cin) activation.

        dx-im2col: three column-shifted, edge-masked copies of x are stored into
        the scratch slab; the conv is then 3 accumulated (hw, 3*Cin) @ (3*Cin,
        Cout) MXU matmuls (one per dy), bias folded into the accumulator init.
        """
        cin = x.shape[-1]
        cout = w_ref.shape[-1]
        # Refresh the two layout-sensitive boundary rows (stale data can linger
        # there when consecutive layers have different Cin block layouts).
        pad_ref[off:off + 1, :] = zrow
        pad_ref[off + hw - 1:off + hw, :] = zrow
        # Column blocks: [0:cin] = dx=-1 taps, [cin:2cin] = dx=0, [2cin:3cin] = dx=+1.
        pad_ref[off + 1:off + 1 + hw, 0:cin] = x * m_right
        pad_ref[off:off + hw, cin:2 * cin] = x
        pad_ref[off - 1:off - 1 + hw, 2 * cin:3 * cin] = x * m_left
        acc = jnp.broadcast_to(b_ref[...], (hw, cout)).astype(jnp.float32)
        for t, dy in enumerate((-1, 0, 1)):
            r0 = off + dy * w_lr
            acc = acc + jnp.dot(pad_ref[r0:r0 + hw, 0:3 * cin], w_ref[t],
                                preferred_element_type=jnp.float32)
        if relu:
            acc = jnp.maximum(acc, 0.0)
        return acc

    # sub_mean (MeanShift sign=-1, std=1)
    x = x_ref[0] - mean_ref[...]
    # head
    feat = conv3x3(x, *layers[0], relu=False)
    skip = feat
    # body: resblocks (+ residual) then final conv + global skip
    for i in range(n_resblocks):
        r = conv3x3(feat, *layers[1 + 2 * i], relu=True)
        r = conv3x3(r, *layers[2 + 2 * i], relu=False)
        feat = feat + r
    feat = conv3x3(feat, *layers[1 + 2 * n_resblocks], relu=False) + skip
    # upsampler conv (N_FEATS -> N_FEATS * SCALE**2)
    up = conv3x3(feat, *layers[2 + 2 * n_resblocks], relu=False)
    # pixel-shuffle + tail conv + add_mean folded into one sub-pixel 3x3 conv
    out = conv3x3(up, *layers[3 + 2 * n_resblocks], relu=False)
    # ModelWrapper clamp(0, 255); depth-to-space + sr_pad crop happen in the wrapper
    o_ref[0] = jnp.clip(out, 0.0, 255.0)


def edsr_forward_pallas(x_nhwc, prep):
    """Single fused pallas_call for the whole EDSR forward; tiny XLA epilogue."""
    n, h, w, _ = x_nhwc.shape
    hw = h * w
    c_out = 3 * SCALE * SCALE
    x_flat = x_nhwc.reshape(n, hw, 3)

    kernel = functools.partial(_edsr_fused_kernel, n_resblocks=N_RESBLOCKS,
                               hw=hw, w_lr=w)

    def _const_map(ndim):
        return lambda i: (0,) * ndim

    in_specs = ([pl.BlockSpec((1, hw, 3), lambda i: (i, 0, 0)),
                 pl.BlockSpec(prep["mean"].shape, _const_map(2)),
                 pl.BlockSpec(prep["edge"].shape, _const_map(2))] +
                [pl.BlockSpec(t.shape, _const_map(t.ndim)) for t in prep["tensors"]])

    out12 = pl.pallas_call(
        kernel,
        out_shape=jax.ShapeDtypeStruct((n, hw, c_out), jnp.float32),
        grid=(n,),
        in_specs=in_specs,
        out_specs=pl.BlockSpec((1, hw, c_out), lambda i: (i, 0, 0)),
        scratch_shapes=[
            pltpu.VMEM((hw + 2 * (w + 1), 3 * N_FEATS * SCALE * SCALE),
                       jnp.float32)],
        compiler_params=pltpu.CompilerParams(
            dimension_semantics=("parallel",)),
    )(x_flat, prep["mean"], prep["edge"], *prep["tensors"])

    # depth-to-space of the per-pixel (r1, r2, rgb) channels, then sr_pad crop
    out = out12.reshape(n, h, w, SCALE, SCALE, 3)
    out = out.transpose(0, 1, 3, 2, 4, 5).reshape(n, h * SCALE, w * SCALE, 3)
    if SR_PAD > 0:
        out = out[:, SR_PAD:-SR_PAD, SR_PAD:-SR_PAD, :]
    return out


# ------------------------------ setup / weight prep ----------------------------
def pixel_shuffle_nhwc(x, r):
    n, h, w, crr = x.shape
    c = crr // (r * r)
    x = x.reshape(n, h, w, c, r, r)
    x = x.transpose(0, 1, 4, 2, 5, 3)
    return x.reshape(n, h * r, w * r, c)


def derive_subpixel_tail_weight(tail_w, r):
    """Exact (3, 3, C*r*r, 3*r*r) LR-grid conv equivalent to PixelShuffle(r)
    followed by the same-padded 3x3 tail conv.

    The composition is linear, so the weights are extracted numerically with
    jacrev of the *reference* composition on a 3x3 LR patch; channel ordering is
    therefore consistent with torch.nn.PixelShuffle by construction.
    """
    c_hr = tail_w.shape[2]
    c_lr = c_hr * r * r

    def center_response(y_patch):                        # (3, 3, c_lr)
        hr = pixel_shuffle_nhwc(y_patch[None], r)[0]     # (3r, 3r, c_hr)
        out = jax.lax.conv_general_dilated(
            hr[None], tail_w, window_strides=(1, 1), padding=((1, 1), (1, 1)),
            dimension_numbers=("NHWC", "HWIO", "NHWC"))[0]
        # HR pixels belonging to the LR center pixel, order (r1, r2, rgb)
        return out[r:2 * r, r:2 * r, :].reshape(r * r * tail_w.shape[3])

    jac = jax.jacrev(center_response)(jnp.zeros((3, 3, c_lr), jnp.float32))
    return jnp.transpose(jac, (1, 2, 3, 0))              # (3, 3, c_lr, 3*r*r)


def prepare_params(params):
    """Reshape weights to dy-major dx-im2col form (3, 3*Cin, Cout), fold
    PixelShuffle + tail + add_mean into a single sub-pixel conv, and precompute
    in-kernel constants."""
    def flat(w, b):
        w = jnp.asarray(w, jnp.float32)                  # HWIO (3, 3, cin, cout)
        return [w.reshape(3, 3 * w.shape[2], w.shape[3]),
                jnp.asarray(b, jnp.float32).reshape(1, -1)]

    tensors = []
    tensors += flat(params["head_w"], params["head_b"])
    for i in range(N_RESBLOCKS):
        tensors += flat(params[f"rb{i}_w1"], params[f"rb{i}_b1"])
        tensors += flat(params[f"rb{i}_w2"], params[f"rb{i}_b2"])
    tensors += flat(params["body_w"], params["body_b"])
    tensors += flat(params["up_w"], params["up_b"])

    sp_w = derive_subpixel_tail_weight(params["tail_w"], SCALE)      # (3,3,128,12)
    sp_b = jnp.tile(params["tail_b"] + RGB_MEAN, SCALE * SCALE)      # add_mean folded
    tensors += flat(sp_w, sp_b)

    hw = IN_H * IN_W
    col = jnp.arange(hw, dtype=jnp.int32) % IN_W
    edge = jnp.stack([col > 0, col < IN_W - 1], axis=1).astype(jnp.float32)
    return {"mean": RGB_MEAN.reshape(1, 3), "edge": edge, "tensors": tensors}


# ------------------------------ JAX reference -----------------------------------
def conv3x3_ref(x, w, b, relu=False):
    y = jax.lax.conv_general_dilated(
        x, w, window_strides=(1, 1), padding=((1, 1), (1, 1)),
        dimension_numbers=("NHWC", "HWIO", "NHWC")) + b
    return jnp.maximum(y, 0.0) if relu else y


def edsr_forward_ref(x, params):
    x = x - RGB_MEAN
    x = conv3x3_ref(x, params["head_w"], params["head_b"])
    skip = x
    for i in range(N_RESBLOCKS):
        r = conv3x3_ref(x, params[f"rb{i}_w1"], params[f"rb{i}_b1"], relu=True)
        r = conv3x3_ref(r, params[f"rb{i}_w2"], params[f"rb{i}_b2"])
        x = x + r
    x = conv3x3_ref(x, params["body_w"], params["body_b"]) + skip
    x = conv3x3_ref(x, params["up_w"], params["up_b"])
    x = pixel_shuffle_nhwc(x, SCALE)
    x = conv3x3_ref(x, params["tail_w"], params["tail_b"])
    x = x + RGB_MEAN
    x = jnp.clip(x, 0.0, 255.0)
    if SR_PAD > 0:
        x = x[:, SR_PAD:-SR_PAD, SR_PAD:-SR_PAD, :]
    return x


def init_params(key):
    def conv_p(k, cin, cout, wscale=0.05):
        kw, kb = jax.random.split(k)
        w = jax.random.normal(kw, (3, 3, cin, cout), jnp.float32) * wscale
        b = jax.random.normal(kb, (cout,), jnp.float32) * 0.01
        return w, b

    n_convs = 1 + 2 * N_RESBLOCKS + 1 + 1 + 1
    keys = jax.random.split(key, n_convs)
    params = {}
    ki = 0
    params["head_w"], params["head_b"] = conv_p(keys[ki], 3, N_FEATS); ki += 1
    for i in range(N_RESBLOCKS):
        params[f"rb{i}_w1"], params[f"rb{i}_b1"] = conv_p(keys[ki], N_FEATS, N_FEATS); ki += 1
        params[f"rb{i}_w2"], params[f"rb{i}_b2"] = conv_p(keys[ki], N_FEATS, N_FEATS); ki += 1
    params["body_w"], params["body_b"] = conv_p(keys[ki], N_FEATS, N_FEATS); ki += 1
    params["up_w"], params["up_b"] = conv_p(keys[ki], N_FEATS, N_FEATS * SCALE * SCALE); ki += 1
    params["tail_w"], params["tail_b"] = conv_p(keys[ki], N_FEATS, 3); ki += 1
    return params


if __name__ == "__main__":
    key = jax.random.PRNGKey(0)
    k_par, k_x = jax.random.split(key)
    params = init_params(k_par)

    # input: (batch, (H + 2*sr_pad)/scale, (W + 2*sr_pad)/scale, 3) in [0, 255]
    x = jax.random.uniform(k_x, (BATCH, IN_H, IN_W, 3), jnp.float32, 0.0, 255.0)

    prep = prepare_params(params)

    fwd_pallas = jax.jit(functools.partial(edsr_forward_pallas, prep=prep))
    fwd_ref = jax.jit(functools.partial(edsr_forward_ref, params=params))

    out = jax.block_until_ready(fwd_pallas(x))
    ref = jax.block_until_ready(fwd_ref(x))

    assert out.shape == (BATCH, OUT_H, OUT_W, 3), out.shape
    max_err = float(jnp.max(jnp.abs(out - ref)))
    assert jnp.allclose(out, ref, rtol=2e-4, atol=1e-1), max_err

    print("KERNEL_OK")
</pallas_src>

<mosaic_0001>
module attributes {stable_mosaic.version = 11 : i64} {
  func.func @_edsr_fused_kernel(%arg0: i32, %arg1: memref<1x100x3xf32, #tpu.memory_space<vmem>>, %arg2: memref<1x3xf32, #tpu.memory_space<vmem>>, %arg3: memref<100x2xf32, #tpu.memory_space<vmem>>, %arg4: memref<3x9x32xf32, #tpu.memory_space<vmem>>, %arg5: memref<1x32xf32, #tpu.memory_space<vmem>>, %arg6: memref<3x96x32xf32, #tpu.memory_space<vmem>>, %arg7: memref<1x32xf32, #tpu.memory_space<vmem>>, %arg8: memref<3x96x32xf32, #tpu.memory_space<vmem>>, %arg9: memref<1x32xf32, #tpu.memory_space<vmem>>, %arg10: memref<3x96x32xf32, #tpu.memory_space<vmem>>, %arg11: memref<1x32xf32, #tpu.memory_space<vmem>>, %arg12: memref<3x96x32xf32, #tpu.memory_space<vmem>>, %arg13: memref<1x32xf32, #tpu.memory_space<vmem>>, %arg14: memref<3x96x32xf32, #tpu.memory_space<vmem>>, %arg15: memref<1x32xf32, #tpu.memory_space<vmem>>, %arg16: memref<3x96x128xf32, #tpu.memory_space<vmem>>, %arg17: memref<1x128xf32, #tpu.memory_space<vmem>>, %arg18: memref<3x384x12xf32, #tpu.memory_space<vmem>>, %arg19: memref<1x12xf32, #tpu.memory_space<vmem>>, %arg20: memref<1x100x12xf32, #tpu.memory_space<vmem>>, %arg21: memref<122x384xf32, #tpu.memory_space<vmem>>) attributes {dimension_semantics = [#tpu.dimension_semantics<parallel>], iteration_bounds = array<i64: 2>, scalar_prefetch = 0 : i64, scratch_operands = 1 : i64, tpu.core_type = #tpu.core_type<tc>, window_params = [{transform_indices = @transform_0, window_bounds = array<i64: 1, 100, 3>}, {pipeline_mode = #tpu.pipeline_mode<synchronous>, transform_indices = @transform_1, window_bounds = array<i64: 1, 3>}, {pipeline_mode = #tpu.pipeline_mode<synchronous>, transform_indices = @transform_2, window_bounds = array<i64: 100, 2>}, {pipeline_mode = #tpu.pipeline_mode<synchronous>, transform_indices = @transform_3, window_bounds = array<i64: 3, 9, 32>}, {pipeline_mode = #tpu.pipeline_mode<synchronous>, transform_indices = @transform_4, window_bounds = array<i64: 1, 32>}, {pipeline_mode = #tpu.pipeline_mode<synchronous>, transform_indices = @transform_5, window_bounds = array<i64: 3, 96, 32>}, {pipeline_mode = #tpu.pipeline_mode<synchronous>, transform_indices = @transform_6, window_bounds = array<i64: 1, 32>}, {pipeline_mode = #tpu.pipeline_mode<synchronous>, transform_indices = @transform_7, window_bounds = array<i64: 3, 96, 32>}, {pipeline_mode = #tpu.pipeline_mode<synchronous>, transform_indices = @transform_8, window_bounds = array<i64: 1, 32>}, {pipeline_mode = #tpu.pipeline_mode<synchronous>, transform_indices = @transform_9, window_bounds = array<i64: 3, 96, 32>}, {pipeline_mode = #tpu.pipeline_mode<synchronous>, transform_indices = @transform_10, window_bounds = array<i64: 1, 32>}, {pipeline_mode = #tpu.pipeline_mode<synchronous>, transform_indices = @transform_11, window_bounds = array<i64: 3, 96, 32>}, {pipeline_mode = #tpu.pipeline_mode<synchronous>, transform_indices = @transform_12, window_bounds = array<i64: 1, 32>}, {pipeline_mode = #tpu.pipeline_mode<synchronous>, transform_indices = @transform_13, window_bounds = array<i64: 3, 96, 32>}, {pipeline_mode = #tpu.pipeline_mode<synchronous>, transform_indices = @transform_14, window_bounds = array<i64: 1, 32>}, {pipeline_mode = #tpu.pipeline_mode<synchronous>, transform_indices = @transform_15, window_bounds = array<i64: 3, 96, 128>}, {pipeline_mode = #tpu.pipeline_mode<synchronous>, transform_indices = @transform_16, window_bounds = array<i64: 1, 128>}, {pipeline_mode = #tpu.pipeline_mode<synchronous>, transform_indices = @transform_17, window_bounds = array<i64: 3, 384, 12>}, {pipeline_mode = #tpu.pipeline_mode<synchronous>, transform_indices = @transform_18, window_bounds = array<i64: 1, 12>}, {transform_indices = @transform_19, window_bounds = array<i64: 1, 100, 12>}]} {
    %cst = arith.constant 0.000000e+00 : f32
    %0 = vector.broadcast %cst : f32 to vector<11x384xf32>
    %c0 = arith.constant 0 : index
    %c0_0 = arith.constant 0 : index
    %1 = vector.load %arg21[%c0, %c0_0] : memref<122x384xf32, #tpu.memory_space<vmem>>, vector<11x384xf32>
    tpu.vector_store %arg21[%c0, %c0_0], %0 {strides = array<i32>} : memref<122x384xf32, #tpu.memory_space<vmem>>, vector<11x384xf32>,
    %cst_1 = arith.constant 0.000000e+00 : f32
    %2 = vector.broadcast %cst_1 : f32 to vector<11x384xf32>
    %c111 = arith.constant 111 : index
    %c0_2 = arith.constant 0 : index
    %3 = vector.load %arg21[%c111, %c0_2] : memref<122x384xf32, #tpu.memory_space<vmem>>, vector<11x384xf32>
    tpu.vector_store %arg21[%c111, %c0_2], %2 {strides = array<i32>} : memref<122x384xf32, #tpu.memory_space<vmem>>, vector<11x384xf32>,
    %c0_3 = arith.constant 0 : index
    %c0_4 = arith.constant 0 : index
    %4 = vector.load %arg3[%c0_3, %c0_4] : memref<100x2xf32, #tpu.memory_space<vmem>>, vector<100x1xf32>
    %c0_5 = arith.constant 0 : index
    %c1 = arith.constant 1 : index
    %5 = vector.load %arg3[%c0_5, %c1] : memref<100x2xf32, #tpu.memory_space<vmem>>, vector<100x1xf32>
    %cst_6 = arith.constant 0.000000e+00 : f32
    %6 = vector.broadcast %cst_6 : f32 to vector<1x384xf32>
    %c0_7 = arith.constant 0 : index
    %c0_8 = arith.constant 0 : index
    %c0_9 = arith.constant 0 : index
    %7 = vector.load %arg1[%c0_7, %c0_8, %c0_9] : memref<1x100x3xf32, #tpu.memory_space<vmem>>, vector<1x100x3xf32>
    %8 = vector.shape_cast %7 : vector<1x100x3xf32> to vector<100x3xf32>
    %c0_10 = arith.constant 0 : index
    %c0_11 = arith.constant 0 : index
    %9 = vector.load %arg2[%c0_10, %c0_11] : memref<1x3xf32, #tpu.memory_space<vmem>>, vector<1x3xf32>
    %10 = vector.broadcast %9 : vector<1x3xf32> to vector<100x3xf32>
    %11 = arith.subf %8, %10 : vector<100x3xf32>
    %c11 = arith.constant 11 : index
    %c0_12 = arith.constant 0 : index
    %12 = vector.load %arg21[%c11, %c0_12] : memref<122x384xf32, #tpu.memory_space<vmem>>, vector<1x384xf32>
    tpu.vector_store %arg21[%c11, %c0_12], %6 {strides = array<i32>} : memref<122x384xf32, #tpu.memory_space<vmem>>, vector<1x384xf32>,
    %c110 = arith.constant 110 : index
    %c0_13 = arith.constant 0 : index
    %13 = vector.load %arg21[%c110, %c0_13] : memref<122x384xf32, #tpu.memory_space<vmem>>, vector<1x384xf32>
    tpu.vector_store %arg21[%c110, %c0_13], %6 {strides = array<i32>} : memref<122x384xf32, #tpu.memory_space<vmem>>, vector<1x384xf32>,
    %14 = vector.broadcast %5 : vector<100x1xf32> to vector<100x3xf32>
    %15 = arith.mulf %11, %14 : vector<100x3xf32>
    %c12 = arith.constant 12 : index
    %c0_14 = arith.constant 0 : index
    %16 = vector.load %arg21[%c12, %c0_14] : memref<122x384xf32, #tpu.memory_space<vmem>>, vector<100x3xf32>
    tpu.vector_store %arg21[%c12, %c0_14], %15 {strides = array<i32>} : memref<122x384xf32, #tpu.memory_space<vmem>>, vector<100x3xf32>,
    %c11_15 = arith.constant 11 : index
    %c3 = arith.constant 3 : index
    %17 = vector.load %arg21[%c11_15, %c3] : memref<122x384xf32, #tpu.memory_space<vmem>>, vector<100x3xf32>
    tpu.vector_store %arg21[%c11_15, %c3], %11 {strides = array<i32>} : memref<122x384xf32, #tpu.memory_space<vmem>>, vector<100x3xf32>,
    %18 = vector.broadcast %4 : vector<100x1xf32> to vector<100x3xf32>
    %19 = arith.mulf %11, %18 : vector<100x3xf32>
    %c10 = arith.constant 10 : index
    %c6 = arith.constant 6 : index
    %20 = vector.load %arg21[%c10, %c6] : memref<122x384xf32, #tpu.memory_space<vmem>>, vector<100x3xf32>
    tpu.vector_store %arg21[%c10, %c6], %19 {strides = array<i32>} : memref<122x384xf32, #tpu.memory_space<vmem>>, vector<100x3xf32>,
    %c0_16 = arith.constant 0 : index
    %c0_17 = arith.constant 0 : index
    %21 = vector.load %arg5[%c0_16, %c0_17] : memref<1x32xf32, #tpu.memory_space<vmem>>, vector<1x32xf32>
    %22 = vector.shape_cast %21 : vector<1x32xf32> to vector<1x32xf32>
    %23 = vector.broadcast %22 : vector<1x32xf32> to vector<100x32xf32>
    %c1_18 = arith.constant 1 : index
    %c0_19 = arith.constant 0 : index
    %24 = vector.load %arg21[%c1_18, %c0_19] : memref<122x384xf32, #tpu.memory_space<vmem>>, vector<100x9xf32>
    %c0_20 = arith.constant 0 : index
    %c0_21 = arith.constant 0 : index
    %c0_22 = arith.constant 0 : index
    %25 = vector.load %arg4[%c0_20, %c0_21, %c0_22] : memref<3x9x32xf32, #tpu.memory_space<vmem>>, vector<1x9x32xf32>
    %26 = vector.shape_cast %25 : vector<1x9x32xf32> to vector<9x32xf32>
    %cst_23 = arith.constant dense<0.000000e+00> : vector<100x32xf32>
    %27 = tpu.matmul %24, %26, %cst_23 {dimension_numbers = #tpu.dot_dimension_numbers<[1], [0], [0], [1], [0, 0, 1, 1], [], []>} : vector<100x9xf32>, vector<9x32xf32>, vector<100x32xf32> -> vector<100x32xf32>
    %28 = arith.addf %23, %27 : vector<100x32xf32>
    %c11_24 = arith.constant 11 : index
    %c0_25 = arith.constant 0 : index
    %29 = vector.load %arg21[%c11_24, %c0_25] : memref<122x384xf32, #tpu.memory_space<vmem>>, vector<100x9xf32>
    %c1_26 = arith.constant 1 : index
    %c0_27 = arith.constant 0 : index
    %c0_28 = arith.constant 0 : index
    %30 = vector.load %arg4[%c1_26, %c0_27, %c0_28] : memref<3x9x32xf32, #tpu.memory_space<vmem>>, vector<1x9x32xf32>
    %31 = vector.shape_cast %30 : vector<1x9x32xf32> to vector<9x32xf32>
    %cst_29 = arith.constant dense<0.000000e+00> : vector<100x32xf32>
    %32 = tpu.matmul %29, %31, %cst_29 {dimension_numbers = #tpu.dot_dimension_numbers<[1], [0], [0], [1], [0, 0, 1, 1], [], []>} : vector<100x9xf32>, vector<9x32xf32>, vector<100x32xf32> -> vector<100x32xf32>
    %33 = arith.addf %28, %32 : vector<100x32xf32>
    %c21 = arith.constant 21 : index
    %c0_30 = arith.constant 0 : index
    %34 = vector.load %arg21[%c21, %c0_30] : memref<122x384xf32, #tpu.memory_space<vmem>>, vector<100x9xf32>
    %c2 = arith.constant 2 : index
    %c0_31 = arith.constant 0 : index
    %c0_32 = arith.constant 0 : index
    %35 = vector.load %arg4[%c2, %c0_31, %c0_32] : memref<3x9x32xf32, #tpu.memory_space<vmem>>, vector<1x9x32xf32>
    %36 = vector.shape_cast %35 : vector<1x9x32xf32> to vector<9x32xf32>
    %cst_33 = arith.constant dense<0.000000e+00> : vector<100x32xf32>
    %37 = tpu.matmul %34, %36, %cst_33 {dimension_numbers = #tpu.dot_dimension_numbers<[1], [0], [0], [1], [0, 0, 1, 1], [], []>} : vector<100x9xf32>, vector<9x32xf32>, vector<100x32xf32> -> vector<100x32xf32>
    %38 = arith.addf %33, %37 : vector<100x32xf32>
    %c11_34 = arith.constant 11 : index
    %c0_35 = arith.constant 0 : index
    %39 = vector.load %arg21[%c11_34, %c0_35] : memref<122x384xf32, #tpu.memory_space<vmem>>, vector<1x384xf32>
    tpu.vector_store %arg21[%c11_34, %c0_35], %6 {strides = array<i32>} : memref<122x384xf32, #tpu.memory_space<vmem>>, vector<1x384xf32>,
    %c110_36 = arith.constant 110 : index
    %c0_37 = arith.constant 0 : index
    %40 = vector.load %arg21[%c110_36, %c0_37] : memref<122x384xf32, #tpu.memory_space<vmem>>, vector<1x384xf32>
    tpu.vector_store %arg21[%c110_36, %c0_37], %6 {strides = array<i32>} : memref<122x384xf32, #tpu.memory_space<vmem>>, vector<1x384xf32>,
    %41 = vector.broadcast %5 : vector<100x1xf32> to vector<100x32xf32>
    %42 = arith.mulf %38, %41 : vector<100x32xf32>
    %c12_38 = arith.constant 12 : index
    %c0_39 = arith.constant 0 : index
    %43 = vector.load %arg21[%c12_38, %c0_39] : memref<122x384xf32, #tpu.memory_space<vmem>>, vector<100x32xf32>
    tpu.vector_store %arg21[%c12_38, %c0_39], %42 {strides = array<i32>} : memref<122x384xf32, #tpu.memory_space<vmem>>, vector<100x32xf32>,
    %c11_40 = arith.constant 11 : index
    %c32 = arith.constant 32 : index
    %44 = vector.load %arg21[%c11_40, %c32] : memref<122x384xf32, #tpu.memory_space<vmem>>, vector<100x32xf32>
    tpu.vector_store %arg21[%c11_40, %c32], %38 {strides = array<i32>} : memref<122x384xf32, #tpu.memory_space<vmem>>, vector<100x32xf32>,
    %45 = vector.broadcast %4 : vector<100x1xf32> to vector<100x32xf32>
    %46 = arith.mulf %38, %45 : vector<100x32xf32>
    %c10_41 = arith.constant 10 : index
    %c64 = arith.constant 64 : index
    %47 = vector.load %arg21[%c10_41, %c64] : memref<122x384xf32, #tpu.memory_space<vmem>>, vector<100x32xf32>
    tpu.vector_store %arg21[%c10_41, %c64], %46 {strides = array<i32>} : memref<122x384xf32, #tpu.memory_space<vmem>>, vector<100x32xf32>,
    %c0_42 = arith.constant 0 : index
    %c0_43 = arith.constant 0 : index
    %48 = vector.load %arg7[%c0_42, %c0_43] : memref<1x32xf32, #tpu.memory_space<vmem>>, vector<1x32xf32>
    %49 = vector.shape_cast %48 : vector<1x32xf32> to vector<1x32xf32>
    %50 = vector.broadcast %49 : vector<1x32xf32> to vector<100x32xf32>
    %c1_44 = arith.constant 1 : index
    %c0_45 = arith.constant 0 : index
    %51 = vector.load %arg21[%c1_44, %c0_45] : memref<122x384xf32, #tpu.memory_space<vmem>>, vector<100x96xf32>
    %c0_46 = arith.constant 0 : index
    %c0_47 = arith.constant 0 : index
    %c0_48 = arith.constant 0 : index
    %52 = vector.load %arg6[%c0_46, %c0_47, %c0_48] : memref<3x96x32xf32, #tpu.memory_space<vmem>>, vector<1x96x32xf32>
    %53 = vector.shape_cast %52 : vector<1x96x32xf32> to vector<96x32xf32>
    %cst_49 = arith.constant dense<0.000000e+00> : vector<100x32xf32>
    %54 = tpu.matmul %51, %53, %cst_49 {dimension_numbers = #tpu.dot_dimension_numbers<[1], [0], [0], [1], [0, 0, 1, 1], [], []>} : vector<100x96xf32>, vector<96x32xf32>, vector<100x32xf32> -> vector<100x32xf32>
    %55 = arith.addf %50, %54 : vector<100x32xf32>
    %c11_50 = arith.constant 11 : index
    %c0_51 = arith.constant 0 : index
    %56 = vector.load %arg21[%c11_50, %c0_51] : memref<122x384xf32, #tpu.memory_space<vmem>>, vector<100x96xf32>
    %c1_52 = arith.constant 1 : index
    %c0_53 = arith.constant 0 : index
    %c0_54 = arith.constant 0 : index
    %57 = vector.load %arg6[%c1_52, %c0_53, %c0_54] : memref<3x96x32xf32, #tpu.memory_space<vmem>>, vector<1x96x32xf32>
    %58 = vector.shape_cast %57 : vector<1x96x32xf32> to vector<96x32xf32>
    %cst_55 = arith.constant dense<0.000000e+00> : vector<100x32xf32>
    %59 = tpu.matmul %56, %58, %cst_55 {dimension_numbers = #tpu.dot_dimension_numbers<[1], [0], [0], [1], [0, 0, 1, 1], [], []>} : vector<100x96xf32>, vector<96x32xf32>, vector<100x32xf32> -> vector<100x32xf32>
    %60 = arith.addf %55, %59 : vector<100x32xf32>
    %c21_56 = arith.constant 21 : index
    %c0_57 = arith.constant 0 : index
    %61 = vector.load %arg21[%c21_56, %c0_57] : memref<122x384xf32, #tpu.memory_space<vmem>>, vector<100x96xf32>
    %c2_58 = arith.constant 2 : index
    %c0_59 = arith.constant 0 : index
    %c0_60 = arith.constant 0 : index
    %62 = vector.load %arg6[%c2_58, %c0_59, %c0_60] : memref<3x96x32xf32, #tpu.memory_space<vmem>>, vector<1x96x32xf32>
    %63 = vector.shape_cast %62 : vector<1x96x32xf32> to vector<96x32xf32>
    %cst_61 = arith.constant dense<0.000000e+00> : vector<100x32xf32>
    %64 = tpu.matmul %61, %63, %cst_61 {dimension_numbers = #tpu.dot_dimension_numbers<[1], [0], [0], [1], [0, 0, 1, 1], [], []>} : vector<100x96xf32>, vector<96x32xf32>, vector<100x32xf32> -> vector<100x32xf32>
    %65 = arith.addf %60, %64 : vector<100x32xf32>
    %cst_62 = arith.constant 0.000000e+00 : f32
    %66 = vector.broadcast %cst_62 : f32 to vector<100x32xf32>
    %67 = arith.maximumf %65, %66 : vector<100x32xf32>
    %c11_63 = arith.constant 11 : index
    %c0_64 = arith.constant 0 : index
    %68 = vector.load %arg21[%c11_63, %c0_64] : memref<122x384xf32, #tpu.memory_space<vmem>>, vector<1x384xf32>
    tpu.vector_store %arg21[%c11_63, %c0_64], %6 {strides = array<i32>} : memref<122x384xf32, #tpu.memory_space<vmem>>, vector<1x384xf32>,
    %c110_65 = arith.constant 110 : index
    %c0_66 = arith.constant 0 : index
    %69 = vector.load %arg21[%c110_65, %c0_66] : memref<122x384xf32, #tpu.memory_space<vmem>>, vector<1x384xf32>
    tpu.vector_store %arg21[%c110_65, %c0_66], %6 {strides = array<i32>} : memref<122x384xf32, #tpu.memory_space<vmem>>, vector<1x384xf32>,
    %70 = vector.broadcast %5 : vector<100x1xf32> to vector<100x32xf32>
    %71 = arith.mulf %67, %70 : vector<100x32xf32>
    %c12_67 = arith.constant 12 : index
    %c0_68 = arith.constant 0 : index
    %72 = vector.load %arg21[%c12_67, %c0_68] : memref<122x384xf32, #tpu.memory_space<vmem>>, vector<100x32xf32>
    tpu.vector_store %arg21[%c12_67, %c0_68], %71 {strides = array<i32>} : memref<122x384xf32, #tpu.memory_space<vmem>>, vector<100x32xf32>,
    %c11_69 = arith.constant 11 : index
    %c32_70 = arith.constant 32 : index
    %73 = vector.load %arg21[%c11_69, %c32_70] : memref<122x384xf32, #tpu.memory_space<vmem>>, vector<100x32xf32>
    tpu.vector_store %arg21[%c11_69, %c32_70], %67 {strides = array<i32>} : memref<122x384xf32, #tpu.memory_space<vmem>>, vector<100x32xf32>,
    %74 = vector.broadcast %4 : vector<100x1xf32> to vector<100x32xf32>
    %75 = arith.mulf %67, %74 : vector<100x32xf32>
    %c10_71 = arith.constant 10 : index
    %c64_72 = arith.constant 64 : index
    %76 = vector.load %arg21[%c10_71, %c64_72] : memref<122x384xf32, #tpu.memory_space<vmem>>, vector<100x32xf32>
    tpu.vector_store %arg21[%c10_71, %c64_72], %75 {strides = array<i32>} : memref<122x384xf32, #tpu.memory_space<vmem>>, vector<100x32xf32>,
    %c0_73 = arith.constant 0 : index
    %c0_74 = arith.constant 0 : index
    %77 = vector.load %arg9[%c0_73, %c0_74] : memref<1x32xf32, #tpu.memory_space<vmem>>, vector<1x32xf32>
    %78 = vector.shape_cast %77 : vector<1x32xf32> to vector<1x32xf32>
    %79 = vector.broadcast %78 : vector<1x32xf32> to vector<100x32xf32>
    %c1_75 = arith.constant 1 : index
    %c0_76 = arith.constant 0 : index
    %80 = vector.load %arg21[%c1_75, %c0_76] : memref<122x384xf32, #tpu.memory_space<vmem>>, vector<100x96xf32>
    %c0_77 = arith.constant 0 : index
    %c0_78 = arith.constant 0 : index
    %c0_79 = arith.constant 0 : index
    %81 = vector.load %arg8[%c0_77, %c0_78, %c0_79] : memref<3x96x32xf32, #tpu.memory_space<vmem>>, vector<1x96x32xf32>
    %82 = vector.shape_cast %81 : vector<1x96x32xf32> to vector<96x32xf32>
    %cst_80 = arith.constant dense<0.000000e+00> : vector<100x32xf32>
    %83 = tpu.matmul %80, %82, %cst_80 {dimension_numbers = #tpu.dot_dimension_numbers<[1], [0], [0], [1], [0, 0, 1, 1], [], []>} : vector<100x96xf32>, vector<96x32xf32>, vector<100x32xf32> -> vector<100x32xf32>
    %84 = arith.addf %79, %83 : vector<100x32xf32>
    %c11_81 = arith.constant 11 : index
    %c0_82 = arith.constant 0 : index
    %85 = vector.load %arg21[%c11_81, %c0_82] : memref<122x384xf32, #tpu.memory_space<vmem>>, vector<100x96xf32>
    %c1_83 = arith.constant 1 : index
    %c0_84 = arith.constant 0 : index
    %c0_85 = arith.constant 0 : index
    %86 = vector.load %arg8[%c1_83, %c0_84, %c0_85] : memref<3x96x32xf32, #tpu.memory_space<vmem>>, vector<1x96x32xf32>
    %87 = vector.shape_cast %86 : vector<1x96x32xf32> to vector<96x32xf32>
    %cst_86 = arith.constant dense<0.000000e+00> : vector<100x32xf32>
    %88 = tpu.matmul %85, %87, %cst_86 {dimension_numbers = #tpu.dot_dimension_numbers<[1], [0], [0], [1], [0, 0, 1, 1], [], []>} : vector<100x96xf32>, vector<96x32xf32>, vector<100x32xf32> -> vector<100x32xf32>
    %89 = arith.addf %84, %88 : vector<100x32xf32>
    %c21_87 = arith.constant 21 : index
    %c0_88 = arith.constant 0 : index
    %90 = vector.load %arg21[%c21_87, %c0_88] : memref<122x384xf32, #tpu.memory_space<vmem>>, vector<100x96xf32>
    %c2_89 = arith.constant 2 : index
    %c0_90 = arith.constant 0 : index
    %c0_91 = arith.constant 0 : index
    %91 = vector.load %arg8[%c2_89, %c0_90, %c0_91] : memref<3x96x32xf32, #tpu.memory_space<vmem>>, vector<1x96x32xf32>
    %92 = vector.shape_cast %91 : vector<1x96x32xf32> to vector<96x32xf32>
    %cst_92 = arith.constant dense<0.000000e+00> : vector<100x32xf32>
    %93 = tpu.matmul %90, %92, %cst_92 {dimension_numbers = #tpu.dot_dimension_numbers<[1], [0], [0], [1], [0, 0, 1, 1], [], []>} : vector<100x96xf32>, vector<96x32xf32>, vector<100x32xf32> -> vector<100x32xf32>
    %94 = arith.addf %89, %93 : vector<100x32xf32>
    %95 = arith.addf %38, %94 : vector<100x32xf32>
    %c11_93 = arith.constant 11 : index
    %c0_94 = arith.constant 0 : index
    %96 = vector.load %arg21[%c11_93, %c0_94] : memref<122x384xf32, #tpu.memory_space<vmem>>, vector<1x384xf32>
    tpu.vector_store %arg21[%c11_93, %c0_94], %6 {strides = array<i32>} : memref<122x384xf32, #tpu.memory_space<vmem>>, vector<1x384xf32>,
    %c110_95 = arith.constant 110 : index
    %c0_96 = arith.constant 0 : index
    %97 = vector.load %arg21[%c110_95, %c0_96] : memref<122x384xf32, #tpu.memory_space<vmem>>, vector<1x384xf32>
    tpu.vector_store %arg21[%c110_95, %c0_96], %6 {strides = array<i32>} : memref<122x384xf32, #tpu.memory_space<vmem>>, vector<1x384xf32>,
    %98 = vector.broadcast %5 : vector<100x1xf32> to vector<100x32xf32>
    %99 = arith.mulf %95, %98 : vector<100x32xf32>
    %c12_97 = arith.constant 12 : index
    %c0_98 = arith.constant 0 : index
    %100 = vector.load %arg21[%c12_97, %c0_98] : memref<122x384xf32, #tpu.memory_space<vmem>>, vector<100x32xf32>
    tpu.vector_store %arg21[%c12_97, %c0_98], %99 {strides = array<i32>} : memref<122x384xf32, #tpu.memory_space<vmem>>, vector<100x32xf32>,
    %c11_99 = arith.constant 11 : index
    %c32_100 = arith.constant 32 : index
    %101 = vector.load %arg21[%c11_99, %c32_100] : memref<122x384xf32, #tpu.memory_space<vmem>>, vector<100x32xf32>
    tpu.vector_store %arg21[%c11_99, %c32_100], %95 {strides = array<i32>} : memref<122x384xf32, #tpu.memory_space<vmem>>, vector<100x32xf32>,
    %102 = vector.broadcast %4 : vector<100x1xf32> to vector<100x32xf32>
    %103 = arith.mulf %95, %102 : vector<100x32xf32>
    %c10_101 = arith.constant 10 : index
    %c64_102 = arith.constant 64 : index
    %104 = vector.load %arg21[%c10_101, %c64_102] : memref<122x384xf32, #tpu.memory_space<vmem>>, vector<100x32xf32>
    tpu.vector_store %arg21[%c10_101, %c64_102], %103 {strides = array<i32>} : memref<122x384xf32, #tpu.memory_space<vmem>>, vector<100x32xf32>,
    %c0_103 = arith.constant 0 : index
    %c0_104 = arith.constant 0 : index
    %105 = vector.load %arg11[%c0_103, %c0_104] : memref<1x32xf32, #tpu.memory_space<vmem>>, vector<1x32xf32>
    %106 = vector.shape_cast %105 : vector<1x32xf32> to vector<1x32xf32>
    %107 = vector.broadcast %106 : vector<1x32xf32> to vector<100x32xf32>
    %c1_105 = arith.constant 1 : index
    %c0_106 = arith.constant 0 : index
    %108 = vector.load %arg21[%c1_105, %c0_106] : memref<122x384xf32, #tpu.memory_space<vmem>>, vector<100x96xf32>
    %c0_107 = arith.constant 0 : index
    %c0_108 = arith.constant 0 : index
    %c0_109 = arith.constant 0 : index
    %109 = vector.load %arg10[%c0_107, %c0_108, %c0_109] : memref<3x96x32xf32, #tpu.memory_space<vmem>>, vector<1x96x32xf32>
    %110 = vector.shape_cast %109 : vector<1x96x32xf32> to vector<96x32xf32>
    %cst_110 = arith.constant dense<0.000000e+00> : vector<100x32xf32>
    %111 = tpu.matmul %108, %110, %cst_110 {dimension_numbers = #tpu.dot_dimension_numbers<[1], [0], [0], [1], [0, 0, 1, 1], [], []>} : vector<100x96xf32>, vector<96x32xf32>, vector<100x32xf32> -> vector<100x32xf32>
    %112 = arith.addf %107, %111 : vector<100x32xf32>
    %c11_111 = arith.constant 11 : index
    %c0_112 = arith.constant 0 : index
    %113 = vector.load %arg21[%c11_111, %c0_112] : memref<122x384xf32, #tpu.memory_space<vmem>>, vector<100x96xf32>
    %c1_113 = arith.constant 1 : index
    %c0_114 = arith.constant 0 : index
    %c0_115 = arith.constant 0 : index
    %114 = vector.load %arg10[%c1_113, %c0_114, %c0_115] : memref<3x96x32xf32, #tpu.memory_space<vmem>>, vector<1x96x32xf32>
    %115 = vector.shape_cast %114 : vector<1x96x32xf32> to vector<96x32xf32>
    %cst_116 = arith.constant dense<0.000000e+00> : vector<100x32xf32>
    %116 = tpu.matmul %113, %115, %cst_116 {dimension_numbers = #tpu.dot_dimension_numbers<[1], [0], [0], [1], [0, 0, 1, 1], [], []>} : vector<100x96xf32>, vector<96x32xf32>, vector<100x32xf32> -> vector<100x32xf32>
    %117 = arith.addf %112, %116 : vector<100x32xf32>
    %c21_117 = arith.constant 21 : index
    %c0_118 = arith.constant 0 : index
    %118 = vector.load %arg21[%c21_117, %c0_118] : memref<122x384xf32, #tpu.memory_space<vmem>>, vector<100x96xf32>
    %c2_119 = arith.constant 2 : index
    %c0_120 = arith.constant 0 : index
    %c0_121 = arith.constant 0 : index
    %119 = vector.load %arg10[%c2_119, %c0_120, %c0_121] : memref<3x96x32xf32, #tpu.memory_space<vmem>>, vector<1x96x32xf32>
    %120 = vector.shape_cast %119 : vector<1x96x32xf32> to vector<96x32xf32>
    %cst_122 = arith.constant dense<0.000000e+00> : vector<100x32xf32>
    %121 = tpu.matmul %118, %120, %cst_122 {dimension_numbers = #tpu.dot_dimension_numbers<[1], [0], [0], [1], [0, 0, 1, 1], [], []>} : vector<100x96xf32>, vector<96x32xf32>, vector<100x32xf32> -> vector<100x32xf32>
    %122 = arith.addf %117, %121 : vector<100x32xf32>
    %cst_123 = arith.constant 0.000000e+00 : f32
    %123 = vector.broadcast %cst_123 : f32 to vector<100x32xf32>
    %124 = arith.maximumf %122, %123 : vector<100x32xf32>
    %c11_124 = arith.constant 11 : index
    %c0_125 = arith.constant 0 : index
    %125 = vector.load %arg21[%c11_124, %c0_125] : memref<122x384xf32, #tpu.memory_space<vmem>>, vector<1x384xf32>
    tpu.vector_store %arg21[%c11_124, %c0_125], %6 {strides = array<i32>} : memref<122x384xf32, #tpu.memory_space<vmem>>, vector<1x384xf32>,
    %c110_126 = arith.constant 110 : index
    %c0_127 = arith.constant 0 : index
    %126 = vector.load %arg21[%c110_126, %c0_127] : memref<122x384xf32, #tpu.memory_space<vmem>>, vector<1x384xf32>
    tpu.vector_store %arg21[%c110_126, %c0_127], %6 {strides = array<i32>} : memref<122x384xf32, #tpu.memory_space<vmem>>, vector<1x384xf32>,
    %127 = vector.broadcast %5 : vector<100x1xf32> to vector<100x32xf32>
    %128 = arith.mulf %124, %127 : vector<100x32xf32>
    %c12_128 = arith.constant 12 : index
    %c0_129 = arith.constant 0 : index
    %129 = vector.load %arg21[%c12_128, %c0_129] : memref<122x384xf32, #tpu.memory_space<vmem>>, vector<100x32xf32>
    tpu.vector_store %arg21[%c12_128, %c0_129], %128 {strides = array<i32>} : memref<122x384xf32, #tpu.memory_space<vmem>>, vector<100x32xf32>,
    %c11_130 = arith.constant 11 : index
    %c32_131 = arith.constant 32 : index
    %130 = vector.load %arg21[%c11_130, %c32_131] : memref<122x384xf32, #tpu.memory_space<vmem>>, vector<100x32xf32>
    tpu.vector_store %arg21[%c11_130, %c32_131], %124 {strides = array<i32>} : memref<122x384xf32, #tpu.memory_space<vmem>>, vector<100x32xf32>,
    %131 = vector.broadcast %4 : vector<100x1xf32> to vector<100x32xf32>
    %132 = arith.mulf %124, %131 : vector<100x32xf32>
    %c10_132 = arith.constant 10 : index
    %c64_133 = arith.constant 64 : index
    %133 = vector.load %arg21[%c10_132, %c64_133] : memref<122x384xf32, #tpu.memory_space<vmem>>, vector<100x32xf32>
    tpu.vector_store %arg21[%c10_132, %c64_133], %132 {strides = array<i32>} : memref<122x384xf32, #tpu.memory_space<vmem>>, vector<100x32xf32>,
    %c0_134 = arith.constant 0 : index
    %c0_135 = arith.constant 0 : index
    %134 = vector.load %arg13[%c0_134, %c0_135] : memref<1x32xf32, #tpu.memory_space<vmem>>, vector<1x32xf32>
    %135 = vector.shape_cast %134 : vector<1x32xf32> to vector<1x32xf32>
    %136 = vector.broadcast %135 : vector<1x32xf32> to vector<100x32xf32>
    %c1_136 = arith.constant 1 : index
    %c0_137 = arith.constant 0 : index
    %137 = vector.load %arg21[%c1_136, %c0_137] : memref<122x384xf32, #tpu.memory_space<vmem>>, vector<100x96xf32>
    %c0_138 = arith.constant 0 : index
    %c0_139 = arith.constant 0 : index
    %c0_140 = arith.constant 0 : index
    %138 = vector.load %arg12[%c0_138, %c0_139, %c0_140] : memref<3x96x32xf32, #tpu.memory_space<vmem>>, vector<1x96x32xf32>
    %139 = vector.shape_cast %138 : vector<1x96x32xf32> to vector<96x32xf32>
    %cst_141 = arith.constant dense<0.000000e+00> : vector<100x32xf32>
    %140 = tpu.matmul %137, %139, %cst_141 {dimension_numbers = #tpu.dot_dimension_numbers<[1], [0], [0], [1], [0, 0, 1, 1], [], []>} : vector<100x96xf32>, vector<96x32xf32>, vector<100x32xf32> -> vector<100x32xf32>
    %141 = arith.addf %136, %140 : vector<100x32xf32>
    %c11_142 = arith.constant 11 : index
    %c0_143 = arith.constant 0 : index
    %142 = vector.load %arg21[%c11_142, %c0_143] : memref<122x384xf32, #tpu.memory_space<vmem>>, vector<100x96xf32>
    %c1_144 = arith.constant 1 : index
    %c0_145 = arith.constant 0 : index
    %c0_146 = arith.constant 0 : index
    %143 = vector.load %arg12[%c1_144, %c0_145, %c0_146] : memref<3x96x32xf32, #tpu.memory_space<vmem>>, vector<1x96x32xf32>
    %144 = vector.shape_cast %143 : vector<1x96x32xf32> to vector<96x32xf32>
    %cst_147 = arith.constant dense<0.000000e+00> : vector<100x32xf32>
    %145 = tpu.matmul %142, %144, %cst_147 {dimension_numbers = #tpu.dot_dimension_numbers<[1], [0], [0], [1], [0, 0, 1, 1], [], []>} : vector<100x96xf32>, vector<96x32xf32>, vector<100x32xf32> -> vector<100x32xf32>
    %146 = arith.addf %141, %145 : vector<100x32xf32>
    %c21_148 = arith.constant 21 : index
    %c0_149 = arith.constant 0 : index
    %147 = vector.load %arg21[%c21_148, %c0_149] : memref<122x384xf32, #tpu.memory_space<vmem>>, vector<100x96xf32>
    %c2_150 = arith.constant 2 : index
    %c0_151 = arith.constant 0 : index
    %c0_152 = arith.constant 0 : index
    %148 = vector.load %arg12[%c2_150, %c0_151, %c0_152] : memref<3x96x32xf32, #tpu.memory_space<vmem>>, vector<1x96x32xf32>
    %149 = vector.shape_cast %148 : vector<1x96x32xf32> to vector<96x32xf32>
    %cst_153 = arith.constant dense<0.000000e+00> : vector<100x32xf32>
    %150 = tpu.matmul %147, %149, %cst_153 {dimension_numbers = #tpu.dot_dimension_numbers<[1], [0], [0], [1], [0, 0, 1, 1], [], []>} : vector<100x96xf32>, vector<96x32xf32>, vector<100x32xf32> -> vector<100x32xf32>
    %151 = arith.addf %146, %150 : vector<100x32xf32>
    %152 = arith.addf %95, %151 : vector<100x32xf32>
    %c11_154 = arith.constant 11 : index
    %c0_155 = arith.constant 0 : index
    %153 = vector.load %arg21[%c11_154, %c0_155] : memref<122x384xf32, #tpu.memory_space<vmem>>, vector<1x384xf32>
    tpu.vector_store %arg21[%c11_154, %c0_155], %6 {strides = array<i32>} : memref<122x384xf32, #tpu.memory_space<vmem>>, vector<1x384xf32>,
    %c110_156 = arith.constant 110 : index
    %c0_157 = arith.constant 0 : index
    %154 = vector.load %arg21[%c110_156, %c0_157] : memref<122x384xf32, #tpu.memory_space<vmem>>, vector<1x384xf32>
    tpu.vector_store %arg21[%c110_156, %c0_157], %6 {strides = array<i32>} : memref<122x384xf32, #tpu.memory_space<vmem>>, vector<1x384xf32>,
    %155 = vector.broadcast %5 : vector<100x1xf32> to vector<100x32xf32>
    %156 = arith.mulf %152, %155 : vector<100x32xf32>
    %c12_158 = arith.constant 12 : index
    %c0_159 = arith.constant 0 : index
    %157 = vector.load %arg21[%c12_158, %c0_159] : memref<122x384xf32, #tpu.memory_space<vmem>>, vector<100x32xf32>
    tpu.vector_store %arg21[%c12_158, %c0_159], %156 {strides = array<i32>} : memref<122x384xf32, #tpu.memory_space<vmem>>, vector<100x32xf32>,
    %c11_160 = arith.constant 11 : index
    %c32_161 = arith.constant 32 : index
    %158 = vector.load %arg21[%c11_160, %c32_161] : memref<122x384xf32, #tpu.memory_space<vmem>>, vector<100x32xf32>
    tpu.vector_store %arg21[%c11_160, %c32_161], %152 {strides = array<i32>} : memref<122x384xf32, #tpu.memory_space<vmem>>, vector<100x32xf32>,
    %159 = vector.broadcast %4 : vector<100x1xf32> to vector<100x32xf32>
    %160 = arith.mulf %152, %159 : vector<100x32xf32>
    %c10_162 = arith.constant 10 : index
    %c64_163 = arith.constant 64 : index
    %161 = vector.load %arg21[%c10_162, %c64_163] : memref<122x384xf32, #tpu.memory_space<vmem>>, vector<100x32xf32>
    tpu.vector_store %arg21[%c10_162, %c64_163], %160 {strides = array<i32>} : memref<122x384xf32, #tpu.memory_space<vmem>>, vector<100x32xf32>,
    %c0_164 = arith.constant 0 : index
    %c0_165 = arith.constant 0 : index
    %162 = vector.load %arg15[%c0_164, %c0_165] : memref<1x32xf32, #tpu.memory_space<vmem>>, vector<1x32xf32>
    %163 = vector.shape_cast %162 : vector<1x32xf32> to vector<1x32xf32>
    %164 = vector.broadcast %163 : vector<1x32xf32> to vector<100x32xf32>
    %c1_166 = arith.constant 1 : index
    %c0_167 = arith.constant 0 : index
    %165 = vector.load %arg21[%c1_166, %c0_167] : memref<122x384xf32, #tpu.memory_space<vmem>>, vector<100x96xf32>
    %c0_168 = arith.constant 0 : index
    %c0_169 = arith.constant 0 : index
    %c0_170 = arith.constant 0 : index
    %166 = vector.load %arg14[%c0_168, %c0_169, %c0_170] : memref<3x96x32xf32, #tpu.memory_space<vmem>>, vector<1x96x32xf32>
    %167 = vector.shape_cast %166 : vector<1x96x32xf32> to vector<96x32xf32>
    %cst_171 = arith.constant dense<0.000000e+00> : vector<100x32xf32>
    %168 = tpu.matmul %165, %167, %cst_171 {dimension_numbers = #tpu.dot_dimension_numbers<[1], [0], [0], [1], [0, 0, 1, 1], [], []>} : vector<100x96xf32>, vector<96x32xf32>, vector<100x32xf32> -> vector<100x32xf32>
    %169 = arith.addf %164, %168 : vector<100x32xf32>
    %c11_172 = arith.constant 11 : index
    %c0_173 = arith.constant 0 : index
    %170 = vector.load %arg21[%c11_172, %c0_173] : memref<122x384xf32, #tpu.memory_space<vmem>>, vector<100x96xf32>
    %c1_174 = arith.constant 1 : index
    %c0_175 = arith.constant 0 : index
    %c0_176 = arith.constant 0 : index
    %171 = vector.load %arg14[%c1_174, %c0_175, %c0_176] : memref<3x96x32xf32, #tpu.memory_space<vmem>>, vector<1x96x32xf32>
    %172 = vector.shape_cast %171 : vector<1x96x32xf32> to vector<96x32xf32>
    %cst_177 = arith.constant dense<0.000000e+00> : vector<100x32xf32>
    %173 = tpu.matmul %170, %172, %cst_177 {dimension_numbers = #tpu.dot_dimension_numbers<[1], [0], [0], [1], [0, 0, 1, 1], [], []>} : vector<100x96xf32>, vector<96x32xf32>, vector<100x32xf32> -> vector<100x32xf32>
    %174 = arith.addf %169, %173 : vector<100x32xf32>
    %c21_178 = arith.constant 21 : index
    %c0_179 = arith.constant 0 : index
    %175 = vector.load %arg21[%c21_178, %c0_179] : memref<122x384xf32, #tpu.memory_space<vmem>>, vector<100x96xf32>
    %c2_180 = arith.constant 2 : index
    %c0_181 = arith.constant 0 : index
    %c0_182 = arith.constant 0 : index
    %176 = vector.load %arg14[%c2_180, %c0_181, %c0_182] : memref<3x96x32xf32, #tpu.memory_space<vmem>>, vector<1x96x32xf32>
    %177 = vector.shape_cast %176 : vector<1x96x32xf32> to vector<96x32xf32>
    %cst_183 = arith.constant dense<0.000000e+00> : vector<100x32xf32>
    %178 = tpu.matmul %175, %177, %cst_183 {dimension_numbers = #tpu.dot_dimension_numbers<[1], [0], [0], [1], [0, 0, 1, 1], [], []>} : vector<100x96xf32>, vector<96x32xf32>, vector<100x32xf32> -> vector<100x32xf32>
    %179 = arith.addf %174, %178 : vector<100x32xf32>
    %180 = arith.addf %179, %38 : vector<100x32xf32>
    %c11_184 = arith.constant 11 : index
    %c0_185 = arith.constant 0 : index
    %181 = vector.load %arg21[%c11_184, %c0_185] : memref<122x384xf32, #tpu.memory_space<vmem>>, vector<1x384xf32>
    tpu.vector_store %arg21[%c11_184, %c0_185], %6 {strides = array<i32>} : memref<122x384xf32, #tpu.memory_space<vmem>>, vector<1x384xf32>,
    %c110_186 = arith.constant 110 : index
    %c0_187 = arith.constant 0 : index
    %182 = vector.load %arg21[%c110_186, %c0_187] : memref<122x384xf32, #tpu.memory_space<vmem>>, vector<1x384xf32>
    tpu.vector_store %arg21[%c110_186, %c0_187], %6 {strides = array<i32>} : memref<122x384xf32, #tpu.memory_space<vmem>>, vector<1x384xf32>,
    %183 = vector.broadcast %5 : vector<100x1xf32> to vector<100x32xf32>
    %184 = arith.mulf %180, %183 : vector<100x32xf32>
    %c12_188 = arith.constant 12 : index
    %c0_189 = arith.constant 0 : index
    %185 = vector.load %arg21[%c12_188, %c0_189] : memref<122x384xf32, #tpu.memory_space<vmem>>, vector<100x32xf32>
    tpu.vector_store %arg21[%c12_188, %c0_189], %184 {strides = array<i32>} : memref<122x384xf32, #tpu.memory_space<vmem>>, vector<100x32xf32>,
    %c11_190 = arith.constant 11 : index
    %c32_191 = arith.constant 32 : index
    %186 = vector.load %arg21[%c11_190, %c32_191] : memref<122x384xf32, #tpu.memory_space<vmem>>, vector<100x32xf32>
    tpu.vector_store %arg21[%c11_190, %c32_191], %180 {strides = array<i32>} : memref<122x384xf32, #tpu.memory_space<vmem>>, vector<100x32xf32>,
    %187 = vector.broadcast %4 : vector<100x1xf32> to vector<100x32xf32>
    %188 = arith.mulf %180, %187 : vector<100x32xf32>
    %c10_192 = arith.constant 10 : index
    %c64_193 = arith.constant 64 : index
    %189 = vector.load %arg21[%c10_192, %c64_193] : memref<122x384xf32, #tpu.memory_space<vmem>>, vector<100x32xf32>
    tpu.vector_store %arg21[%c10_192, %c64_193], %188 {strides = array<i32>} : memref<122x384xf32, #tpu.memory_space<vmem>>, vector<100x32xf32>,
    %c0_194 = arith.constant 0 : index
    %c0_195 = arith.constant 0 : index
    %190 = vector.load %arg17[%c0_194, %c0_195] : memref<1x128xf32, #tpu.memory_space<vmem>>, vector<1x128xf32>
    %191 = vector.shape_cast %190 : vector<1x128xf32> to vector<1x128xf32>
    %192 = vector.broadcast %191 : vector<1x128xf32> to vector<100x128xf32>
    %c1_196 = arith.constant 1 : index
    %c0_197 = arith.constant 0 : index
    %193 = vector.load %arg21[%c1_196, %c0_197] : memref<122x384xf32, #tpu.memory_space<vmem>>, vector<100x96xf32>
    %c0_198 = arith.constant 0 : index
    %c0_199 = arith.constant 0 : index
    %c0_200 = arith.constant 0 : index
    %194 = vector.load %arg16[%c0_198, %c0_199, %c0_200] : memref<3x96x128xf32, #tpu.memory_space<vmem>>, vector<1x96x128xf32>
    %195 = vector.shape_cast %194 : vector<1x96x128xf32> to vector<96x128xf32>
    %cst_201 = arith.constant dense<0.000000e+00> : vector<100x128xf32>
    %196 = tpu.matmul %193, %195, %cst_201 {dimension_numbers = #tpu.dot_dimension_numbers<[1], [0], [0], [1], [0, 0, 1, 1], [], []>} : vector<100x96xf32>, vector<96x128xf32>, vector<100x128xf32> -> vector<100x128xf32>
    %197 = arith.addf %192, %196 : vector<100x128xf32>
    %c11_202 = arith.constant 11 : index
    %c0_203 = arith.constant 0 : index
    %198 = vector.load %arg21[%c11_202, %c0_203] : memref<122x384xf32, #tpu.memory_space<vmem>>, vector<100x96xf32>
    %c1_204 = arith.constant 1 : index
    %c0_205 = arith.constant 0 : index
    %c0_206 = arith.constant 0 : index
    %199 = vector.load %arg16[%c1_204, %c0_205, %c0_206] : memref<3x96x128xf32, #tpu.memory_space<vmem>>, vector<1x96x128xf32>
    %200 = vector.shape_cast %199 : vector<1x96x128xf32> to vector<96x128xf32>
    %cst_207 = arith.constant dense<0.000000e+00> : vector<100x128xf32>
    %201 = tpu.matmul %198, %200, %cst_207 {dimension_numbers = #tpu.dot_dimension_numbers<[1], [0], [0], [1], [0, 0, 1, 1], [], []>} : vector<100x96xf32>, vector<96x128xf32>, vector<100x128xf32> -> vector<100x128xf32>
    %202 = arith.addf %197, %201 : vector<100x128xf32>
    %c21_208 = arith.constant 21 : index
    %c0_209 = arith.constant 0 : index
    %203 = vector.load %arg21[%c21_208, %c0_209] : memref<122x384xf32, #tpu.memory_space<vmem>>, vector<100x96xf32>
    %c2_210 = arith.constant 2 : index
    %c0_211 = arith.constant 0 : index
    %c0_212 = arith.constant 0 : index
    %204 = vector.load %arg16[%c2_210, %c0_211, %c0_212] : memref<3x96x128xf32, #tpu.memory_space<vmem>>, vector<1x96x128xf32>
    %205 = vector.shape_cast %204 : vector<1x96x128xf32> to vector<96x128xf32>
    %cst_213 = arith.constant dense<0.000000e+00> : vector<100x128xf32>
    %206 = tpu.matmul %203, %205, %cst_213 {dimension_numbers = #tpu.dot_dimension_numbers<[1], [0], [0], [1], [0, 0, 1, 1], [], []>} : vector<100x96xf32>, vector<96x128xf32>, vector<100x128xf32> -> vector<100x128xf32>
    %207 = arith.addf %202, %206 : vector<100x128xf32>
    %c11_214 = arith.constant 11 : index
    %c0_215 = arith.constant 0 : index
    %208 = vector.load %arg21[%c11_214, %c0_215] : memref<122x384xf32, #tpu.memory_space<vmem>>, vector<1x384xf32>
    tpu.vector_store %arg21[%c11_214, %c0_215], %6 {strides = array<i32>} : memref<122x384xf32, #tpu.memory_space<vmem>>, vector<1x384xf32>,
    %c110_216 = arith.constant 110 : index
    %c0_217 = arith.constant 0 : index
    %209 = vector.load %arg21[%c110_216, %c0_217] : memref<122x384xf32, #tpu.memory_space<vmem>>, vector<1x384xf32>
    tpu.vector_store %arg21[%c110_216, %c0_217], %6 {strides = array<i32>} : memref<122x384xf32, #tpu.memory_space<vmem>>, vector<1x384xf32>,
    %210 = vector.broadcast %5 : vector<100x1xf32> to vector<100x128xf32>
    %211 = arith.mulf %207, %210 : vector<100x128xf32>
    %c12_218 = arith.constant 12 : index
    %c0_219 = arith.constant 0 : index
    %212 = vector.load %arg21[%c12_218, %c0_219] : memref<122x384xf32, #tpu.memory_space<vmem>>, vector<100x128xf32>
    tpu.vector_store %arg21[%c12_218, %c0_219], %211 {strides = array<i32>} : memref<122x384xf32, #tpu.memory_space<vmem>>, vector<100x128xf32>,
    %c11_220 = arith.constant 11 : index
    %c128 = arith.constant 128 : index
    %213 = vector.load %arg21[%c11_220, %c128] : memref<122x384xf32, #tpu.memory_space<vmem>>, vector<100x128xf32>
    tpu.vector_store %arg21[%c11_220, %c128], %207 {strides = array<i32>} : memref<122x384xf32, #tpu.memory_space<vmem>>, vector<100x128xf32>,
    %214 = vector.broadcast %4 : vector<100x1xf32> to vector<100x128xf32>
    %215 = arith.mulf %207, %214 : vector<100x128xf32>
    %c10_221 = arith.constant 10 : index
    %c256 = arith.constant 256 : index
    %216 = vector.load %arg21[%c10_221, %c256] : memref<122x384xf32, #tpu.memory_space<vmem>>, vector<100x128xf32>
    tpu.vector_store %arg21[%c10_221, %c256], %215 {strides = array<i32>} : memref<122x384xf32, #tpu.memory_space<vmem>>, vector<100x128xf32>,
    %c0_222 = arith.constant 0 : index
    %c0_223 = arith.constant 0 : index
    %217 = vector.load %arg19[%c0_222, %c0_223] : memref<1x12xf32, #tpu.memory_space<vmem>>, vector<1x12xf32>
    %218 = vector.shape_cast %217 : vector<1x12xf32> to vector<1x12xf32>
    %219 = vector.broadcast %218 : vector<1x12xf32> to vector<100x12xf32>
    %c1_224 = arith.constant 1 : index
    %c0_225 = arith.constant 0 : index
    %220 = vector.load %arg21[%c1_224, %c0_225] : memref<122x384xf32, #tpu.memory_space<vmem>>, vector<100x384xf32>
    %c0_226 = arith.constant 0 : index
    %c0_227 = arith.constant 0 : index
    %c0_228 = arith.constant 0 : index
    %221 = vector.load %arg18[%c0_226, %c0_227, %c0_228] : memref<3x384x12xf32, #tpu.memory_space<vmem>>, vector<1x384x12xf32>
    %222 = vector.shape_cast %221 : vector<1x384x12xf32> to vector<384x12xf32>
    %cst_229 = arith.constant dense<0.000000e+00> : vector<100x12xf32>
    %223 = tpu.matmul %220, %222, %cst_229 {dimension_numbers = #tpu.dot_dimension_numbers<[1], [0], [0], [1], [0, 0, 1, 1], [], []>} : vector<100x384xf32>, vector<384x12xf32>, vector<100x12xf32> -> vector<100x12xf32>
    %224 = arith.addf %219, %223 : vector<100x12xf32>
    %c11_230 = arith.constant 11 : index
    %c0_231 = arith.constant 0 : index
    %225 = vector.load %arg21[%c11_230, %c0_231] : memref<122x384xf32, #tpu.memory_space<vmem>>, vector<100x384xf32>
    %c1_232 = arith.constant 1 : index
    %c0_233 = arith.constant 0 : index
    %c0_234 = arith.constant 0 : index
    %226 = vector.load %arg18[%c1_232, %c0_233, %c0_234] : memref<3x384x12xf32, #tpu.memory_space<vmem>>, vector<1x384x12xf32>
    %227 = vector.shape_cast %226 : vector<1x384x12xf32> to vector<384x12xf32>
    %cst_235 = arith.constant dense<0.000000e+00> : vector<100x12xf32>
    %228 = tpu.matmul %225, %227, %cst_235 {dimension_numbers = #tpu.dot_dimension_numbers<[1], [0], [0], [1], [0, 0, 1, 1], [], []>} : vector<100x384xf32>, vector<384x12xf32>, vector<100x12xf32> -> vector<100x12xf32>
    %229 = arith.addf %224, %228 : vector<100x12xf32>
    %c21_236 = arith.constant 21 : index
    %c0_237 = arith.constant 0 : index
    %230 = vector.load %arg21[%c21_236, %c0_237] : memref<122x384xf32, #tpu.memory_space<vmem>>, vector<100x384xf32>
    %c2_238 = arith.constant 2 : index
    %c0_239 = arith.constant 0 : index
    %c0_240 = arith.constant 0 : index
    %231 = vector.load %arg18[%c2_238, %c0_239, %c0_240] : memref<3x384x12xf32, #tpu.memory_space<vmem>>, vector<1x384x12xf32>
    %232 = vector.shape_cast %231 : vector<1x384x12xf32> to vector<384x12xf32>
    %cst_241 = arith.constant dense<0.000000e+00> : vector<100x12xf32>
    %233 = tpu.matmul %230, %232, %cst_241 {dimension_numbers = #tpu.dot_dimension_numbers<[1], [0], [0], [1], [0, 0, 1, 1], [], []>} : vector<100x384xf32>, vector<384x12xf32>, vector<100x12xf32> -> vector<100x12xf32>
    %234 = arith.addf %229, %233 : vector<100x12xf32>
    %cst_242 = arith.constant 0.000000e+00 : f32
    %cst_243 = arith.constant 2.550000e+02 : f32
    %235 = vector.broadcast %cst_242 : f32 to vector<100x12xf32>
    %236 = arith.maximumf %235, %234 : vector<100x12xf32>
    %237 = vector.broadcast %cst_243 : f32 to vector<100x12xf32>
    %238 = arith.minimumf %237, %236 : vector<100x12xf32>
    %c0_244 = arith.constant 0 : index
    %c0_245 = arith.constant 0 : index
    %c0_246 = arith.constant 0 : index
    %239 = vector.load %arg20[%c0_244, %c0_245, %c0_246] : memref<1x100x12xf32, #tpu.memory_space<vmem>>, vector<1x100x12xf32>
    %240 = vector.shape_cast %239 : vector<1x100x12xf32> to vector<100x12xf32>
    %241 = vector.shape_cast %238 : vector<100x12xf32> to vector<1x100x12xf32>
    tpu.vector_store %arg20[%c0_244, %c0_245, %c0_246], %241 {strides = array<i32>} : memref<1x100x12xf32, #tpu.memory_space<vmem>>, vector<1x100x12xf32>,
    return
  }
  func.func @transform_0(%arg0: i32) -> (i32, i32, i32) {
    %c0_i32 = arith.constant 0 : i32
    %c0_i32_0 = arith.constant 0 : i32
    %c0_i32_1 = arith.constant 0 : i32
    return %arg0, %c0_i32, %c0_i32_0 : i32, i32, i32
  }
  func.func @transform_1(%arg0: i32) -> (i32, i32) {
    %c0_i32 = arith.constant 0 : i32
    %c0_i32_0 = arith.constant 0 : i32
    %c0_i32_1 = arith.constant 0 : i32
    return %c0_i32, %c0_i32_0 : i32, i32
  }
  func.func @transform_2(%arg0: i32) -> (i32, i32) {
    %c0_i32 = arith.constant 0 : i32
    %c0_i32_0 = arith.constant 0 : i32
    %c0_i32_1 = arith.constant 0 : i32
    return %c0_i32, %c0_i32_0 : i32, i32
  }
  func.func @transform_3(%arg0: i32) -> (i32, i32, i32) {
    %c0_i32 = arith.constant 0 : i32
    %c0_i32_0 = arith.constant 0 : i32
    %c0_i32_1 = arith.constant 0 : i32
    %c0_i32_2 = arith.constant 0 : i32
    return %c0_i32, %c0_i32_0, %c0_i32_1 : i32, i32, i32
  }
  func.func @transform_4(%arg0: i32) -> (i32, i32) {
    %c0_i32 = arith.constant 0 : i32
    %c0_i32_0 = arith.constant 0 : i32
    %c0_i32_1 = arith.constant 0 : i32
    return %c0_i32, %c0_i32_0 : i32, i32
  }
  func.func @transform_5(%arg0: i32) -> (i32, i32, i32) {
    %c0_i32 = arith.constant 0 : i32
    %c0_i32_0 = arith.constant 0 : i32
    %c0_i32_1 = arith.constant 0 : i32
    %c0_i32_2 = arith.constant 0 : i32
    return %c0_i32, %c0_i32_0, %c0_i32_1 : i32, i32, i32
  }
  func.func @transform_6(%arg0: i32) -> (i32, i32) {
    %c0_i32 = arith.constant 0 : i32
    %c0_i32_0 = arith.constant 0 : i32
    %c0_i32_1 = arith.constant 0 : i32
    return %c0_i32, %c0_i32_0 : i32, i32
  }
  func.func @transform_7(%arg0: i32) -> (i32, i32, i32) {
    %c0_i32 = arith.constant 0 : i32
    %c0_i32_0 = arith.constant 0 : i32
    %c0_i32_1 = arith.constant 0 : i32
    %c0_i32_2 = arith.constant 0 : i32
    return %c0_i32, %c0_i32_0, %c0_i32_1 : i32, i32, i32
  }
  func.func @transform_8(%arg0: i32) -> (i32, i32) {
    %c0_i32 = arith.constant 0 : i32
    %c0_i32_0 = arith.constant 0 : i32
    %c0_i32_1 = arith.constant 0 : i32
    return %c0_i32, %c0_i32_0 : i32, i32
  }
  func.func @transform_9(%arg0: i32) -> (i32, i32, i32) {
    %c0_i32 = arith.constant 0 : i32
    %c0_i32_0 = arith.constant 0 : i32
    %c0_i32_1 = arith.constant 0 : i32
    %c0_i32_2 = arith.constant 0 : i32
    return %c0_i32, %c0_i32_0, %c0_i32_1 : i32, i32, i32
  }
  func.func @transform_10(%arg0: i32) -> (i32, i32) {
    %c0_i32 = arith.constant 0 : i32
    %c0_i32_0 = arith.constant 0 : i32
    %c0_i32_1 = arith.constant 0 : i32
    return %c0_i32, %c0_i32_0 : i32, i32
  }
  func.func @transform_11(%arg0: i32) -> (i32, i32, i32) {
    %c0_i32 = arith.constant 0 : i32
    %c0_i32_0 = arith.constant 0 : i32
    %c0_i32_1 = arith.constant 0 : i32
    %c0_i32_2 = arith.constant 0 : i32
    return %c0_i32, %c0_i32_0, %c0_i32_1 : i32, i32, i32
  }
  func.func @transform_12(%arg0: i32) -> (i32, i32) {
    %c0_i32 = arith.constant 0 : i32
    %c0_i32_0 = arith.constant 0 : i32
    %c0_i32_1 = arith.constant 0 : i32
    return %c0_i32, %c0_i32_0 : i32, i32
  }
  func.func @transform_13(%arg0: i32) -> (i32, i32, i32) {
    %c0_i32 = arith.constant 0 : i32
    %c0_i32_0 = arith.constant 0 : i32
    %c0_i32_1 = arith.constant 0 : i32
    %c0_i32_2 = arith.constant 0 : i32
    return %c0_i32, %c0_i32_0, %c0_i32_1 : i32, i32, i32
  }
  func.func @transform_14(%arg0: i32) -> (i32, i32) {
    %c0_i32 = arith.constant 0 : i32
    %c0_i32_0 = arith.constant 0 : i32
    %c0_i32_1 = arith.constant 0 : i32
    return %c0_i32, %c0_i32_0 : i32, i32
  }
  func.func @transform_15(%arg0: i32) -> (i32, i32, i32) {
    %c0_i32 = arith.constant 0 : i32
    %c0_i32_0 = arith.constant 0 : i32
    %c0_i32_1 = arith.constant 0 : i32
    %c0_i32_2 = arith.constant 0 : i32
    return %c0_i32, %c0_i32_0, %c0_i32_1 : i32, i32, i32
  }
  func.func @transform_16(%arg0: i32) -> (i32, i32) {
    %c0_i32 = arith.constant 0 : i32
    %c0_i32_0 = arith.constant 0 : i32
    %c0_i32_1 = arith.constant 0 : i32
    return %c0_i32, %c0_i32_0 : i32, i32
  }
  func.func @transform_17(%arg0: i32) -> (i32, i32, i32) {
    %c0_i32 = arith.constant 0 : i32
    %c0_i32_0 = arith.constant 0 : i32
    %c0_i32_1 = arith.constant 0 : i32
    %c0_i32_2 = arith.constant 0 : i32
    return %c0_i32, %c0_i32_0, %c0_i32_1 : i32, i32, i32
  }
  func.func @transform_18(%arg0: i32) -> (i32, i32) {
    %c0_i32 = arith.constant 0 : i32
    %c0_i32_0 = arith.constant 0 : i32
    %c0_i32_1 = arith.constant 0 : i32
    return %c0_i32, %c0_i32_0 : i32, i32
  }
  func.func @transform_19(%arg0: i32) -> (i32, i32, i32) {
    %c0_i32 = arith.constant 0 : i32
    %c0_i32_0 = arith.constant 0 : i32
    %c0_i32_1 = arith.constant 0 : i32
    return %arg0, %c0_i32, %c0_i32_0 : i32, i32, i32
  }
}

</mosaic_0001>

<llo_original>
// kernel: edsr_forward_pallas.1
$region0: #{edsr_forward_pallas.1}
  #allocation0 [shape = 'u32[]', space=smem, size = 0x4, offset = 0x4, fixed_abs, tag = 'smem constant byte address 0x4 - core index']
  #allocation1 [shape = 'u32[144,128]{1,0:T(1,128)}', space=vmem, size = 0x12000, scoped, tag = 'internal scratch']
  #allocation2 [shape = 'f32[122,384]{1,0:T(8,128)}', space=vmem, size = 0x30000, scoped, tag = 'scratch operand']
  %s0 = inlined_call_operand.vmem [shape: f32[2,100,3], index: 0, kind: input, shape index: {}]
  %s1 = inlined_call_operand.vmem [shape: f32[1,3], index: 1, kind: input, shape index: {}]
  %s2 = inlined_call_operand.vmem [shape: f32[100,2], index: 2, kind: input, shape index: {}]
  %s3 = inlined_call_operand.vmem [shape: f32[3,9,32], index: 3, kind: input, shape index: {}]
  %s4 = inlined_call_operand.vmem [shape: f32[1,32], index: 4, kind: input, shape index: {}]
  %s5 = inlined_call_operand.hbm [shape: f32[3,96,32], index: 5, kind: input, shape index: {}]
  %s6 = inlined_call_operand.vmem [shape: f32[1,32], index: 6, kind: input, shape index: {}]
  %s7 = inlined_call_operand.hbm [shape: f32[3,96,32], index: 7, kind: input, shape index: {}]
  %s8 = inlined_call_operand.vmem [shape: f32[1,32], index: 8, kind: input, shape index: {}]
  %s9 = inlined_call_operand.hbm [shape: f32[3,96,32], index: 9, kind: input, shape index: {}]
  %s10 = inlined_call_operand.vmem [shape: f32[1,32], index: 10, kind: input, shape index: {}]
  %s11 = inlined_call_operand.hbm [shape: f32[3,96,32], index: 11, kind: input, shape index: {}]
  %s12 = inlined_call_operand.vmem [shape: f32[1,32], index: 12, kind: input, shape index: {}]
  %s13 = inlined_call_operand.hbm [shape: f32[3,96,32], index: 13, kind: input, shape index: {}]
  %s14 = inlined_call_operand.vmem [shape: f32[1,32], index: 14, kind: input, shape index: {}]
  %s15 = inlined_call_operand.vmem [shape: f32[3,96,128], index: 15, kind: input, shape index: {}]
  %s16 = inlined_call_operand.vmem [shape: f32[1,128], index: 16, kind: input, shape index: {}]
  %s17 = inlined_call_operand.hbm [shape: f32[3,384,12], index: 17, kind: input, shape index: {}]
  %s18 = inlined_call_operand.vmem [shape: f32[1,12], index: 18, kind: input, shape index: {}]
  %s19 = inlined_call_operand.vmem [shape: f32[2,100,12], index: 19, kind: output, shape index: {}]
  %s20 = sld [smem:[#allocation0]]
  $region133: #{edsr_forward_pallas.1} parent=0
    _
  %s22 = ssub.s32 1, %s20
  %s23 = scalar_select 0, %s22, %s20
  $region1: #{edsr_forward_pallas.1} parent=0
    #allocation3 [shape = 'u8[147456]{0}', space=vmem, size = 0x24000, scoped, tag = 'input window, operand 5, single buffered']
    #allocation4 [shape = 's32[2]{0}', space=sflag, size = 0x8, scoped, tag = 'scoped memory for edsr_forward_pallas.1']
    #allocation5 [shape = 'u8[147456]{0}', space=vmem, size = 0x24000, scoped, tag = 'input window, operand 7, single buffered']
    #allocation6 [shape = 's32[1]{0}', space=sflag, size = 0x4, scoped, tag = 'scoped memory for edsr_forward_pallas.1']
    #allocation7 [shape = 'u8[147456]{0}', space=vmem, size = 0x24000, scoped, tag = 'input window, operand 9, single buffered']
    #allocation8 [shape = 'u8[147456]{0}', space=vmem, size = 0x24000, scoped, tag = 'input window, operand 11, single buffered']
    #allocation9 [shape = 's32[1]{0}', space=sflag, size = 0x4, scoped, tag = 'scoped memory for edsr_forward_pallas.1']
    #allocation10 [shape = 'u8[147456]{0}', space=vmem, size = 0x24000, scoped, tag = 'input window, operand 13, single buffered']
    #allocation11 [shape = 'u8[589824]{0}', space=vmem, size = 0x90000, scoped, tag = 'input window, operand 17, single buffered']
    #allocation12 [shape = 's32[1]{0}', space=sflag, size = 0x4, scoped, tag = 'scoped memory for edsr_forward_pallas.1']
    %24 = vsyncpa [#allocation4], 0
    %25 = vsyncpa [#allocation6], 0
    %26 = vsyncpa [#allocation9], 0
    %27 = vsyncpa [#allocation12], 0
    loop: start=0, step=1, limit=4
    $region2: #{edsr_forward_pallas.1} parent=1 // loop_pre_header
      _
    $region3: #{edsr_forward_pallas.1} parent=1 // loop_header
      %s29 = sphi 0, %s33
      %p30 = scmp.ge.s32.totalorder %s29, 4
      %s39 = sphi 0, %s41
      %s42 = sphi 0, %s39
      %s43 = sphi 0, %s42
      %s59 = sphi 0, %s43
      %s63 = sphi 0, %s63
      %s65 = sphi 0, %s63
      %s66 = sphi 0, %s65
      %s80 = sphi 0, %s66
      %s84 = sphi 0, %s84
      %s86 = sphi 0, %s84
      %s87 = sphi 0, %s86
      %s101 = sphi 0, %s87
      %s105 = sphi 0, %s105
      %s107 = sphi 0, %s105
      %s108 = sphi 0, %s107
      %s122 = sphi 0, %s108
      %s126 = sphi 0, %s126
      %s128 = sphi 0, %s126
      %s129 = sphi 0, %s128
      %s143 = sphi 0, %s129
      %s147 = sphi 0, %s147
      %s149 = sphi 0, %s147
      %s150 = sphi 0, %s149
      %s164 = sphi 0, %s150
      %s168 = sphi 0, %s168
      %s170 = sphi 0, %s168
      %s171 = sphi 0, %s170
      %s185 = sphi 0, %s171
      %s189 = sphi 0, %s189
      %s191 = sphi 0, %s189
      %s192 = sphi 0, %s191
      %s206 = sphi 0, %s192
      %s210 = sphi 0, %s210
      %s212 = sphi 0, %s210
      %s213 = sphi 0, %s212
      %s227 = sphi 0, %s213
      %s231 = sphi 0, %s231
      %s233 = sphi 0, %s231
      %s234 = sphi 0, %s233
      %s248 = sphi 0, %s234
      %s252 = sphi 0, %s252
      %s254 = sphi 0, %s252
      %s255 = sphi 0, %s254
      %s269 = sphi 0, %s255
      %s273 = sphi 0, %s273
      %s275 = sphi 0, %s273
      %s276 = sphi 0, %s275
      %s290 = sphi 0, %s276
      %s294 = sphi 0, %s294
      %s296 = sphi 0, %s294
      %s297 = sphi 0, %s296
      %s311 = sphi 0, %s297
      %s315 = sphi 0, %s315
      %s317 = sphi 0, %s315
      %s318 = sphi 0, %s317
      %s332 = sphi 0, %s318
      %s336 = sphi 0, %s336
      %s338 = sphi 0, %s336
      %s339 = sphi 0, %s338
      %s353 = sphi 0, %s339
      %s357 = sphi 0, %s357
      %s359 = sphi 0, %s357
      %s360 = sphi 0, %s359
      %s374 = sphi 0, %s360
      %s378 = sphi 0, %s378
      %s380 = sphi 0, %s378
      %s381 = sphi 0, %s380
      %s395 = sphi 0, %s381
      %s399 = sphi 0, %s399
      %s401 = sphi 0, %s399
      %s402 = sphi 0, %s401
      %s416 = sphi 0, %s402
      %s420 = sphi 0, %s420
      %s422 = sphi 0, %s420
      %s423 = sphi 0, %s422
      %s437 = sphi 0, %s423
      %s443 = sphi 0, %s445
      %s446 = sphi 0, %s443
      %s447 = sphi 0, %s446
      %s463 = sphi 0, %s447
    $region4: #{edsr_forward_pallas.1} parent=1 // loop_header_branch
      %32 = sbr.rel (%p30) target = $region8
    $region5: #{edsr_forward_pallas.1} parent=1 // loop_body
      %s34 = ssub.s32 %s29, 1
      %s35 = ssub.s32 %s29, 2
      %s36 = sadd.s32 %s29, 1
      %s37 = ssub.s32 %s29, %s36
      %p38 = scmp.eq.s32.totalorder %s37, 0
      %s40 = sadd.s32 %s39, 1
      %s41 = scalar_select %p38, %s39, %s40
      %p44 = pneg %p38
      %p45 = scmp.eq.s32.totalorder %s29, 1
      %p46 = por %p44, %p45
      %p47 = scmp.ne.s32.totalorder %s39, %s42
      %p48 = scmp.eq.s32.totalorder %s29, 0
      %p49 = por %p47, %p48
      %p50 = scmp.ne.s32.totalorder %s39, %s42
      %p51 = scmp.eq.s32.totalorder %s34, 1
      %p52 = por %p50, %p51
      %p53 = scmp.ne.s32.totalorder %s42, %s43
      %p54 = scmp.eq.s32.totalorder %s34, 0
      %p55 = por %p53, %p54
      %p56 = scmp.ne.s32.totalorder %s42, %s43
      %p57 = scmp.eq.s32.totalorder %s35, 1
      %p58 = por %p56, %p57
      %p60 = scmp.ne.s32.totalorder %s43, %s59
      %p61 = scmp.eq.s32.totalorder %s35, 0
      %p62 = por %p60, %p61
      %s64 = sadd.s32 %s63, 1
      %p67 = scmp.eq.s32.totalorder %s29, 1
      %p68 = scmp.ne.s32.totalorder %s63, %s65
      %p69 = scmp.eq.s32.totalorder %s29, 0
      %p70 = por %p68, %p69
      %p71 = scmp.ne.s32.totalorder %s63, %s65
      %p72 = scmp.eq.s32.totalorder %s34, 1
      %p73 = por %p71, %p72
      %p74 = scmp.ne.s32.totalorder %s65, %s66
      %p75 = scmp.eq.s32.totalorder %s34, 0
      %p76 = por %p74, %p75
      %p77 = scmp.ne.s32.totalorder %s65, %s66
      %p78 = scmp.eq.s32.totalorder %s35, 1
      %p79 = por %p77, %p78
      %p81 = scmp.ne.s32.totalorder %s66, %s80
      %p82 = scmp.eq.s32.totalorder %s35, 0
      %p83 = por %p81, %p82
      %s85 = sadd.s32 %s84, 1
      %p88 = scmp.eq.s32.totalorder %s29, 1
      %p89 = scmp.ne.s32.totalorder %s84, %s86
      %p90 = scmp.eq.s32.totalorder %s29, 0
      %p91 = por %p89, %p90
      %p92 = scmp.ne.s32.totalorder %s84, %s86
      %p93 = scmp.eq.s32.totalorder %s34, 1
      %p94 = por %p92, %p93
      %p95 = scmp.ne.s32.totalorder %s86, %s87
      %p96 = scmp.eq.s32.totalorder %s34, 0
      %p97 = por %p95, %p96
      %p98 = scmp.ne.s32.totalorder %s86, %s87
      %p99 = scmp.eq.s32.totalorder %s35, 1
      %p100 = por %p98, %p99
      %p102 = scmp.ne.s32.totalorder %s87, %s101
      %p103 = scmp.eq.s32.totalorder %s35, 0
      %p104 = por %p102, %p103
      %s106 = sadd.s32 %s105, 1
      %p109 = scmp.eq.s32.totalorder %s29, 1
      %p110 = scmp.ne.s32.totalorder %s105, %s107
      %p111 = scmp.eq.s32.totalorder %s29, 0
      %p112 = por %p110, %p111
      %p113 = scmp.ne.s32.totalorder %s105, %s107
      %p114 = scmp.eq.s32.totalorder %s34, 1
      %p115 = por %p113, %p114
      %p116 = scmp.ne.s32.totalorder %s107, %s108
      %p117 = scmp.eq.s32.totalorder %s34, 0
      %p118 = por %p116, %p117
      %p119 = scmp.ne.s32.totalorder %s107, %s108
      %p120 = scmp.eq.s32.totalorder %s35, 1
      %p121 = por %p119, %p120
      %p123 = scmp.ne.s32.totalorder %s108, %s122
      %p124 = scmp.eq.s32.totalorder %s35, 0
      %p125 = por %p123, %p124
      %s127 = sadd.s32 %s126, 1
      %p130 = scmp.eq.s32.totalorder %s29, 1
      %p131 = scmp.ne.s32.totalorder %s126, %s128
      %p132 = scmp.eq.s32.totalorder %s29, 0
      %p133 = por %p131, %p132
      %p134 = scmp.ne.s32.totalorder %s126, %s128
      %p135 = scmp.eq.s32.totalorder %s34, 1
      %p136 = por %p134, %p135
      %p137 = scmp.ne.s32.totalorder %s128, %s129
      %p138 = scmp.eq.s32.totalorder %s34, 0
      %p139 = por %p137, %p138
      %p140 = scmp.ne.s32.totalorder %s128, %s129
      %p141 = scmp.eq.s32.totalorder %s35, 1
      %p142 = por %p140, %p141
      %p144 = scmp.ne.s32.totalorder %s129, %s143
      %p145 = scmp.eq.s32.totalorder %s35, 0
      %p146 = por %p144, %p145
      %s148 = sadd.s32 %s147, 1
      %p151 = scmp.eq.s32.totalorder %s29, 1
      %p152 = scmp.ne.s32.totalorder %s147, %s149
      %p153 = scmp.eq.s32.totalorder %s29, 0
      %p154 = por %p152, %p153
      %p155 = scmp.ne.s32.totalorder %s147, %s149
      %p156 = scmp.eq.s32.totalorder %s34, 1
      %p157 = por %p155, %p156
      %p158 = scmp.ne.s32.totalorder %s149, %s150
      %p159 = scmp.eq.s32.totalorder %s34, 0
      %p160 = por %p158, %p159
      %p161 = scmp.ne.s32.totalorder %s149, %s150
      %p162 = scmp.eq.s32.totalorder %s35, 1
      %p163 = por %p161, %p162
      %p165 = scmp.ne.s32.totalorder %s150, %s164
      %p166 = scmp.eq.s32.totalorder %s35, 0
      %p167 = por %p165, %p166
      %s169 = sadd.s32 %s168, 1
      %p172 = scmp.eq.s32.totalorder %s29, 1
      %p173 = scmp.ne.s32.totalorder %s168, %s170
      %p174 = scmp.eq.s32.totalorder %s29, 0
      %p175 = por %p173, %p174
      %p176 = scmp.ne.s32.totalorder %s168, %s170
      %p177 = scmp.eq.s32.totalorder %s34, 1
      %p178 = por %p176, %p177
      %p179 = scmp.ne.s32.totalorder %s170, %s171
      %p180 = scmp.eq.s32.totalorder %s34, 0
      %p181 = por %p179, %p180
      %p182 = scmp.ne.s32.totalorder %s170, %s171
      %p183 = scmp.eq.s32.totalorder %s35, 1
      %p184 = por %p182, %p183
      %p186 = scmp.ne.s32.totalorder %s171, %s185
      %p187 = scmp.eq.s32.totalorder %s35, 0
      %p188 = por %p186, %p187
      %s190 = sadd.s32 %s189, 1
      %p193 = scmp.eq.s32.totalorder %s29, 1
      %p194 = scmp.ne.s32.totalorder %s189, %s191
      %p195 = scmp.eq.s32.totalorder %s29, 0
      %p196 = por %p194, %p195
      %p197 = scmp.ne.s32.totalorder %s189, %s191
      %p198 = scmp.eq.s32.totalorder %s34, 1
      %p199 = por %p197, %p198
      %p200 = scmp.ne.s32.totalorder %s191, %s192
      %p201 = scmp.eq.s32.totalorder %s34, 0
      %p202 = por %p200, %p201
      %p203 = scmp.ne.s32.totalorder %s191, %s192
      %p204 = scmp.eq.s32.totalorder %s35, 1
      %p205 = por %p203, %p204
      %p207 = scmp.ne.s32.totalorder %s192, %s206
      %p208 = scmp.eq.s32.totalorder %s35, 0
      %p209 = por %p207, %p208
      %s211 = sadd.s32 %s210, 1
      %p214 = scmp.eq.s32.totalorder %s29, 1
      %p215 = scmp.ne.s32.totalorder %s210, %s212
      %p216 = scmp.eq.s32.totalorder %s29, 0
      %p217 = por %p215, %p216
      %p218 = scmp.ne.s32.totalorder %s210, %s212
      %p219 = scmp.eq.s32.totalorder %s34, 1
      %p220 = por %p218, %p219
      %p221 = scmp.ne.s32.totalorder %s212, %s213
      %p222 = scmp.eq.s32.totalorder %s34, 0
      %p223 = por %p221, %p222
      %p224 = scmp.ne.s32.totalorder %s212, %s213
      %p225 = scmp.eq.s32.totalorder %s35, 1
      %p226 = por %p224, %p225
      %p228 = scmp.ne.s32.totalorder %s213, %s227
      %p229 = scmp.eq.s32.totalorder %s35, 0
      %p230 = por %p228, %p229
      %s232 = sadd.s32 %s231, 1
      %p235 = scmp.eq.s32.totalorder %s29, 1
      %p236 = scmp.ne.s32.totalorder %s231, %s233
      %p237 = scmp.eq.s32.totalorder %s29, 0
      %p238 = por %p236, %p237
      %p239 = scmp.ne.s32.totalorder %s231, %s233
      %p240 = scmp.eq.s32.totalorder %s34, 1
      %p241 = por %p239, %p240
      %p242 = scmp.ne.s32.totalorder %s233, %s234
      %p243 = scmp.eq.s32.totalorder %s34, 0
      %p244 = por %p242, %p243
      %p245 = scmp.ne.s32.totalorder %s233, %s234
      %p246 = scmp.eq.s32.totalorder %s35, 1
      %p247 = por %p245, %p246
      %p249 = scmp.ne.s32.totalorder %s234, %s248
      %p250 = scmp.eq.s32.totalorder %s35, 0
      %p251 = por %p249, %p250
      %s253 = sadd.s32 %s252, 1
      %p256 = scmp.eq.s32.totalorder %s29, 1
      %p257 = scmp.ne.s32.totalorder %s252, %s254
      %p258 = scmp.eq.s32.totalorder %s29, 0
      %p259 = por %p257, %p258
      %p260 = scmp.ne.s32.totalorder %s252, %s254
      %p261 = scmp.eq.s32.totalorder %s34, 1
      %p262 = por %p260, %p261
      %p263 = scmp.ne.s32.totalorder %s254, %s255
      %p264 = scmp.eq.s32.totalorder %s34, 0
      %p265 = por %p263, %p264
      %p266 = scmp.ne.s32.totalorder %s254, %s255
      %p267 = scmp.eq.s32.totalorder %s35, 1
      %p268 = por %p266, %p267
      %p270 = scmp.ne.s32.totalorder %s255, %s269
      %p271 = scmp.eq.s32.totalorder %s35, 0
      %p272 = por %p270, %p271
      %s274 = sadd.s32 %s273, 1
      %p277 = scmp.eq.s32.totalorder %s29, 1
      %p278 = scmp.ne.s32.totalorder %s273, %s275
      %p279 = scmp.eq.s32.totalorder %s29, 0
      %p280 = por %p278, %p279
      %p281 = scmp.ne.s32.totalorder %s273, %s275
      %p282 = scmp.eq.s32.totalorder %s34, 1
      %p283 = por %p281, %p282
      %p284 = scmp.ne.s32.totalorder %s275, %s276
      %p285 = scmp.eq.s32.totalorder %s34, 0
      %p286 = por %p284, %p285
      %p287 = scmp.ne.s32.totalorder %s275, %s276
      %p288 = scmp.eq.s32.totalorder %s35, 1
      %p289 = por %p287, %p288
      %p291 = scmp.ne.s32.totalorder %s276, %s290
      %p292 = scmp.eq.s32.totalorder %s35, 0
      %p293 = por %p291, %p292
      %s295 = sadd.s32 %s294, 1
      %p298 = scmp.eq.s32.totalorder %s29, 1
      %p299 = scmp.ne.s32.totalorder %s294, %s296
      %p300 = scmp.eq.s32.totalorder %s29, 0
      %p301 = por %p299, %p300
      %p302 = scmp.ne.s32.totalorder %s294, %s296
      %p303 = scmp.eq.s32.totalorder %s34, 1
      %p304 = por %p302, %p303
      %p305 = scmp.ne.s32.totalorder %s296, %s297
      %p306 = scmp.eq.s32.totalorder %s34, 0
      %p307 = por %p305, %p306
      %p308 = scmp.ne.s32.totalorder %s296, %s297
      %p309 = scmp.eq.s32.totalorder %s35, 1
      %p310 = por %p308, %p309
      %p312 = scmp.ne.s32.totalorder %s297, %s311
      %p313 = scmp.eq.s32.totalorder %s35, 0
      %p314 = por %p312, %p313
      %s316 = sadd.s32 %s315, 1
      %p319 = scmp.eq.s32.totalorder %s29, 1
      %p320 = scmp.ne.s32.totalorder %s315, %s317
      %p321 = scmp.eq.s32.totalorder %s29, 0
      %p322 = por %p320, %p321
      %p323 = scmp.ne.s32.totalorder %s315, %s317
      %p324 = scmp.eq.s32.totalorder %s34, 1
      %p325 = por %p323, %p324
      %p326 = scmp.ne.s32.totalorder %s317, %s318
      %p327 = scmp.eq.s32.totalorder %s34, 0
      %p328 = por %p326, %p327
      %p329 = scmp.ne.s32.totalorder %s317, %s318
      %p330 = scmp.eq.s32.totalorder %s35, 1
      %p331 = por %p329, %p330
      %p333 = scmp.ne.s32.totalorder %s318, %s332
      %p334 = scmp.eq.s32.totalorder %s35, 0
      %p335 = por %p333, %p334
      %s337 = sadd.s32 %s336, 1
      %p340 = scmp.eq.s32.totalorder %s29, 1
      %p341 = scmp.ne.s32.totalorder %s336, %s338
      %p342 = scmp.eq.s32.totalorder %s29, 0
      %p343 = por %p341, %p342
      %p344 = scmp.ne.s32.totalorder %s336, %s338
      %p345 = scmp.eq.s32.totalorder %s34, 1
      %p346 = por %p344, %p345
      %p347 = scmp.ne.s32.totalorder %s338, %s339
      %p348 = scmp.eq.s32.totalorder %s34, 0
      %p349 = por %p347, %p348
      %p350 = scmp.ne.s32.totalorder %s338, %s339
      %p351 = scmp.eq.s32.totalorder %s35, 1
      %p352 = por %p350, %p351
      %p354 = scmp.ne.s32.totalorder %s339, %s353
      %p355 = scmp.eq.s32.totalorder %s35, 0
      %p356 = por %p354, %p355
      %s358 = sadd.s32 %s357, 1
      %p361 = scmp.eq.s32.totalorder %s29, 1
      %p362 = scmp.ne.s32.totalorder %s357, %s359
      %p363 = scmp.eq.s32.totalorder %s29, 0
      %p364 = por %p362, %p363
      %p365 = scmp.ne.s32.totalorder %s357, %s359
      %p366 = scmp.eq.s32.totalorder %s34, 1
      %p367 = por %p365, %p366
      %p368 = scmp.ne.s32.totalorder %s359, %s360
      %p369 = scmp.eq.s32.totalorder %s34, 0
      %p370 = por %p368, %p369
      %p371 = scmp.ne.s32.totalorder %s359, %s360
      %p372 = scmp.eq.s32.totalorder %s35, 1
      %p373 = por %p371, %p372
      %p375 = scmp.ne.s32.totalorder %s360, %s374
      %p376 = scmp.eq.s32.totalorder %s35, 0
      %p377 = por %p375, %p376
      %s379 = sadd.s32 %s378, 1
      %p382 = scmp.eq.s32.totalorder %s29, 1
      %p383 = scmp.ne.s32.totalorder %s378, %s380
      %p384 = scmp.eq.s32.totalorder %s29, 0
      %p385 = por %p383, %p384
      %p386 = scmp.ne.s32.totalorder %s378, %s380
      %p387 = scmp.eq.s32.totalorder %s34, 1
      %p388 = por %p386, %p387
      %p389 = scmp.ne.s32.totalorder %s380, %s381
      %p390 = scmp.eq.s32.totalorder %s34, 0
      %p391 = por %p389, %p390
      %p392 = scmp.ne.s32.totalorder %s380, %s381
      %p393 = scmp.eq.s32.totalorder %s35, 1
      %p394 = por %p392, %p393
      %p396 = scmp.ne.s32.totalorder %s381, %s395
      %p397 = scmp.eq.s32.totalorder %s35, 0
      %p398 = por %p396, %p397
      %s400 = sadd.s32 %s399, 1
      %p403 = scmp.eq.s32.totalorder %s29, 1
      %p404 = scmp.ne.s32.totalorder %s399, %s401
      %p405 = scmp.eq.s32.totalorder %s29, 0
      %p406 = por %p404, %p405
      %p407 = scmp.ne.s32.totalorder %s399, %s401
      %p408 = scmp.eq.s32.totalorder %s34, 1
      %p409 = por %p407, %p408
      %p410 = scmp.ne.s32.totalorder %s401, %s402
      %p411 = scmp.eq.s32.totalorder %s34, 0
      %p412 = por %p410, %p411
      %p413 = scmp.ne.s32.totalorder %s401, %s402
      %p414 = scmp.eq.s32.totalorder %s35, 1
      %p415 = por %p413, %p414
      %p417 = scmp.ne.s32.totalorder %s402, %s416
      %p418 = scmp.eq.s32.totalorder %s35, 0
      %p419 = por %p417, %p418
      %s421 = sadd.s32 %s420, 1
      %p424 = scmp.eq.s32.totalorder %s29, 1
      %p425 = scmp.ne.s32.totalorder %s420, %s422
      %p426 = scmp.eq.s32.totalorder %s29, 0
      %p427 = por %p425, %p426
      %p428 = scmp.ne.s32.totalorder %s420, %s422
      %p429 = scmp.eq.s32.totalorder %s34, 1
      %p430 = por %p428, %p429
      %p431 = scmp.ne.s32.totalorder %s422, %s423
      %p432 = scmp.eq.s32.totalorder %s34, 0
      %p433 = por %p431, %p432
      %p434 = scmp.ne.s32.totalorder %s422, %s423
      %p435 = scmp.eq.s32.totalorder %s35, 1
      %p436 = por %p434, %p435
      %p438 = scmp.ne.s32.totalorder %s423, %s437
      %p439 = scmp.eq.s32.totalorder %s35, 0
      %p440 = por %p438, %p439
      %s441 = ssub.s32 %s29, %s36
      %p442 = scmp.eq.s32.totalorder %s441, 0
      %s444 = sadd.s32 %s443, 1
      %s445 = scalar_select %p442, %s443, %s444
      %p448 = pneg %p442
      %p449 = scmp.eq.s32.totalorder %s29, 1
      %p450 = por %p448, %p449
      %p451 = scmp.ne.s32.totalorder %s443, %s446
      %p452 = scmp.eq.s32.totalorder %s29, 0
      %p453 = por %p451, %p452
      %p454 = scmp.ne.s32.totalorder %s443, %s446
      %p455 = scmp.eq.s32.totalorder %s34, 1
      %p456 = por %p454, %p455
      %p457 = scmp.ne.s32.totalorder %s446, %s447
      %p458 = scmp.eq.s32.totalorder %s34, 0
      %p459 = por %p457, %p458
      %p460 = scmp.ne.s32.totalorder %s446, %s447
      %p461 = scmp.eq.s32.totalorder %s35, 1
      %p462 = por %p460, %p461
      %p464 = scmp.ne.s32.totalorder %s447, %s463
      %p465 = scmp.eq.s32.totalorder %s35, 0
      %p466 = por %p464, %p465
      %p467 = scmp.le.s32.totalorder 1, %s29
      %p468 = scmp.lt.s32.totalorder %s29, 3
      %p469 = pnand %p467, %p468
      %p470 = pneg %p469
      // Predicated region
      $region9: #{edsr_forward_pallas.1} parent=5 // pred_check
        _
      $region10: #{edsr_forward_pallas.1} parent=5 // pred_check_branch
        %472 = sbr.rel (%p469) target = $region12
      $region11: #{edsr_forward_pallas.1} parent=5 // pred_region
        %s473 = ssub.s32 %s29, 1
        // Predicated region
        $region13: #{edsr_forward_pallas.1} parent=11 // pred_check
          %p474 = pneg %p76
        $region14: #{edsr_forward_pallas.1} parent=11 // pred_check_branch
          %476 = sbr.rel (%p474) target = $region16
        $region15: #{edsr_forward_pallas.1} parent=11 // pred_region
          _
        $region16: #{edsr_forward_pallas.1} parent=11 // pred_fallthru
          _
        // Predicated region
        $region17: #{edsr_forward_pallas.1} parent=11 // pred_check
          %p477 = pneg %p97
        $region18: #{edsr_forward_pallas.1} parent=11 // pred_check_branch
          %479 = sbr.rel (%p477) target = $region20
        $region19: #{edsr_forward_pallas.1} parent=11 // pred_region
          _
        $region20: #{edsr_forward_pallas.1} parent=11 // pred_fallthru
          _
        // Predicated region
        $region21: #{edsr_forward_pallas.1} parent=11 // pred_check
          %p480 = pneg %p118
        $region22: #{edsr_forward_pallas.1} parent=11 // pred_check_branch
          %482 = sbr.rel (%p480) target = $region24
        $region23: #{edsr_forward_pallas.1} parent=11 // pred_region
          _
        $region24: #{edsr_forward_pallas.1} parent=11 // pred_fallthru
          _
        // Predicated region
        $region25: #{edsr_forward_pallas.1} parent=11 // pred_check
          %p483 = pneg %p139
        $region26: #{edsr_forward_pallas.1} parent=11 // pred_check_branch
          %485 = sbr.rel (%p483) target = $region28
        $region27: #{edsr_forward_pallas.1} parent=11 // pred_region
          _
        $region28: #{edsr_forward_pallas.1} parent=11 // pred_fallthru
          _
        // Predicated region
        $region29: #{edsr_forward_pallas.1} parent=11 // pred_check
          %p486 = pneg %p160
        $region30: #{edsr_forward_pallas.1} parent=11 // pred_check_branch
          %488 = sbr.rel (%p486) target = $region32
        $region31: #{edsr_forward_pallas.1} parent=11 // pred_region
          %s490 = ssub.s32 4608, 4608
          %491 = vsyncadd [#allocation4], %s490
          %s492 = sshll.u32 [#allocation3], 4
          %s493 = int_to_ptr.vmem [resolvable:$true] %s492
          %498 = dma.hbm_to_vmem [thread:$0]  %s5, 4608, %s493, [#allocation4], 128, 128, 8
        $region32: #{edsr_forward_pallas.1} parent=11 // pred_fallthru
          _
        // Predicated region
        $region33: #{edsr_forward_pallas.1} parent=11 // pred_check
          %p499 = pneg %p181
        $region34: #{edsr_forward_pallas.1} parent=11 // pred_check_branch
          %501 = sbr.rel (%p499) target = $region36
        $region35: #{edsr_forward_pallas.1} parent=11 // pred_region
          _
        $region36: #{edsr_forward_pallas.1} parent=11 // pred_fallthru
          _
        // Predicated region
        $region37: #{edsr_forward_pallas.1} parent=11 // pred_check
          %p502 = pneg %p202
        $region38: #{edsr_forward_pallas.1} parent=11 // pred_check_branch
          %504 = sbr.rel (%p502) target = $region40
        $region39: #{edsr_forward_pallas.1} parent=11 // pred_region
          %s506 = ssub.s32 4608, 4608
          %507 = vsyncadd [#allocation6], %s506
          %s508 = sshll.u32 [#allocation5], 4
          %s509 = int_to_ptr.vmem [resolvable:$true] %s508
          %514 = dma.hbm_to_vmem [thread:$0]  %s7, 4608, %s509, [#allocation6], 128, 128, 8
        $region40: #{edsr_forward_pallas.1} parent=11 // pred_fallthru
          _
        // Predicated region
        $region41: #{edsr_forward_pallas.1} parent=11 // pred_check
          %p515 = pneg %p223
        $region42: #{edsr_forward_pallas.1} parent=11 // pred_check_branch
          %517 = sbr.rel (%p515) target = $region44
        $region43: #{edsr_forward_pallas.1} parent=11 // pred_region
          _
        $region44: #{edsr_forward_pallas.1} parent=11 // pred_fallthru
          _
        // Predicated region
        $region45: #{edsr_forward_pallas.1} parent=11 // pred_check
          %p518 = pneg %p244
        $region46: #{edsr_forward_pallas.1} parent=11 // pred_check_branch
          %520 = sbr.rel (%p518) target = $region48
        $region47: #{edsr_forward_pallas.1} parent=11 // pred_region
          %s522 = ssub.s32 4608, 4608
          %523 = vsyncadd [#allocation6], %s522
          %s524 = sshll.u32 [#allocation7], 4
          %s525 = int_to_ptr.vmem [resolvable:$true] %s524
          %530 = dma.hbm_to_vmem [thread:$0]  %s9, 4608, %s525, [#allocation6], 128, 128, 8
        $region48: #{edsr_forward_pallas.1} parent=11 // pred_fallthru
          _
        // Predicated region
        $region49: #{edsr_forward_pallas.1} parent=11 // pred_check
          %p531 = pneg %p265
        $region50: #{edsr_forward_pallas.1} parent=11 // pred_check_branch
          %533 = sbr.rel (%p531) target = $region52
        $region51: #{edsr_forward_pallas.1} parent=11 // pred_region
          _
        $region52: #{edsr_forward_pallas.1} parent=11 // pred_fallthru
          _
        // Predicated region
        $region53: #{edsr_forward_pallas.1} parent=11 // pred_check
          %p534 = pneg %p286
        $region54: #{edsr_forward_pallas.1} parent=11 // pred_check_branch
          %536 = sbr.rel (%p534) target = $region56
        $region55: #{edsr_forward_pallas.1} parent=11 // pred_region
          %s538 = ssub.s32 4608, 4608
          %539 = vsyncadd [#allocation9], %s538
          %s540 = sshll.u32 [#allocation8], 4
          %s541 = int_to_ptr.vmem [resolvable:$true] %s540
          %546 = dma.hbm_to_vmem [thread:$0]  %s11, 4608, %s541, [#allocation9], 128, 128, 8
        $region56: #{edsr_forward_pallas.1} parent=11 // pred_fallthru
          _
        // Predicated region
        $region57: #{edsr_forward_pallas.1} parent=11 // pred_check
          %p547 = pneg %p307
        $region58: #{edsr_forward_pallas.1} parent=11 // pred_check_branch
          %549 = sbr.rel (%p547) target = $region60
        $region59: #{edsr_forward_pallas.1} parent=11 // pred_region
          _
        $region60: #{edsr_forward_pallas.1} parent=11 // pred_fallthru
          _
        // Predicated region
        $region61: #{edsr_forward_pallas.1} parent=11 // pred_check
          %p550 = pneg %p328
        $region62: #{edsr_forward_pallas.1} parent=11 // pred_check_branch
          %552 = sbr.rel (%p550) target = $region64
        $region63: #{edsr_forward_pallas.1} parent=11 // pred_region
          %s554 = ssub.s32 4608, 4608
          %555 = vsyncadd [#allocation9], %s554
          %s556 = sshll.u32 [#allocation10], 4
          %s557 = int_to_ptr.vmem [resolvable:$true] %s556
          %562 = dma.hbm_to_vmem [thread:$0]  %s13, 4608, %s557, [#allocation9], 128, 128, 8
        $region64: #{edsr_forward_pallas.1} parent=11 // pred_fallthru
          _
        // Predicated region
        $region65: #{edsr_forward_pallas.1} parent=11 // pred_check
          %p563 = pneg %p349
        $region66: #{edsr_forward_pallas.1} parent=11 // pred_check_branch
          %565 = sbr.rel (%p563) target = $region68
        $region67: #{edsr_forward_pallas.1} parent=11 // pred_region
          _
        $region68: #{edsr_forward_pallas.1} parent=11 // pred_fallthru
          _
        // Predicated region
        $region69: #{edsr_forward_pallas.1} parent=11 // pred_check
          %p566 = pneg %p370
        $region70: #{edsr_forward_pallas.1} parent=11 // pred_check_branch
          %568 = sbr.rel (%p566) target = $region72
        $region71: #{edsr_forward_pallas.1} parent=11 // pred_region
          _
        $region72: #{edsr_forward_pallas.1} parent=11 // pred_fallthru
          _
        // Predicated region
        $region73: #{edsr_forward_pallas.1} parent=11 // pred_check
          %p569 = pneg %p391
        $region74: #{edsr_forward_pallas.1} parent=11 // pred_check_branch
          %571 = sbr.rel (%p569) target = $region76
        $region75: #{edsr_forward_pallas.1} parent=11 // pred_region
          _
        $region76: #{edsr_forward_pallas.1} parent=11 // pred_fallthru
          _
        // Predicated region
        $region77: #{edsr_forward_pallas.1} parent=11 // pred_check
          %p572 = pneg %p412
        $region78: #{edsr_forward_pallas.1} parent=11 // pred_check_branch
          %574 = sbr.rel (%p572) target = $region80
        $region79: #{edsr_forward_pallas.1} parent=11 // pred_region
          %s576 = ssub.s32 18432, 18432
          %577 = vsyncadd [#allocation12], %s576
          %s578 = sshll.u32 [#allocation11], 4
          %s579 = int_to_ptr.vmem [resolvable:$true] %s578
          %584 = dma.hbm_to_vmem [thread:$0]  %s17, 18432, %s579, [#allocation12], 128, 128, 8
        $region80: #{edsr_forward_pallas.1} parent=11 // pred_fallthru
          _
        // Predicated region
        $region81: #{edsr_forward_pallas.1} parent=11 // pred_check
          %p585 = pneg %p433
        $region82: #{edsr_forward_pallas.1} parent=11 // pred_check_branch
          %587 = sbr.rel (%p585) target = $region84
        $region83: #{edsr_forward_pallas.1} parent=11 // pred_region
          _
        $region84: #{edsr_forward_pallas.1} parent=11 // pred_fallthru
          _
      $region12: #{edsr_forward_pallas.1} parent=5 // pred_fallthru
        _
      %p588 = scmp.lt.s32.totalorder %s29, 2
      // Predicated region
      $region85: #{edsr_forward_pallas.1} parent=5 // pred_check
        %p589 = pneg %p588
      $region86: #{edsr_forward_pallas.1} parent=5 // pred_check_branch
        %591 = sbr.rel (%p589) target = $region88
      $region87: #{edsr_forward_pallas.1} parent=5 // pred_region
        // Predicated region
        $region89: #{edsr_forward_pallas.1} parent=87 // pred_check
          %p592 = pneg %p49
        $region90: #{edsr_forward_pallas.1} parent=87 // pred_check_branch
          %594 = sbr.rel (%p592) target = $region92
        $region91: #{edsr_forward_pallas.1} parent=87 // pred_region
          %p595 = scmp.lt.s32.totalorder %s29, 1
          %s596 = scalar_select %p595, %s29, 1
          %s597 = smul.addr %s596, 13
          %s598 = smul.addr %s597, 8
          %s599 = scalar_lea.vmem %s0, %s598
        $region92: #{edsr_forward_pallas.1} parent=87 // pred_fallthru
          _
      $region88: #{edsr_forward_pallas.1} parent=5 // pred_fallthru
        _
      %p600 = scmp.le.s32.totalorder 1, %s29
      %p601 = scmp.lt.s32.totalorder %s29, 3
      %p602 = pnand %p600, %p601
      %p603 = pneg %p602
      // Predicated region
      $region93: #{edsr_forward_pallas.1} parent=5 // pred_check
        _
      $region94: #{edsr_forward_pallas.1} parent=5 // pred_check_branch
        %605 = sbr.rel (%p602) target = $region96
      $region95: #{edsr_forward_pallas.1} parent=5 // pred_region
        %s606 = ssub.s32 %s29, 1
        // Predicated region
        $region97: #{edsr_forward_pallas.1} parent=95 // pred_check
          %p607 = pneg %p160
        $region98: #{edsr_forward_pallas.1} parent=95 // pred_check_branch
          %609 = sbr.rel (%p607) target = $region100
        $region99: #{edsr_forward_pallas.1} parent=95 // pred_region
          %610 = dma.done [#allocation4], 4608
        $region100: #{edsr_forward_pallas.1} parent=95 // pred_fallthru
          _
        // Predicated region
        $region101: #{edsr_forward_pallas.1} parent=95 // pred_check
          %p611 = pneg %p202
        $region102: #{edsr_forward_pallas.1} parent=95 // pred_check_branch
          %613 = sbr.rel (%p611) target = $region104
        $region103: #{edsr_forward_pallas.1} parent=95 // pred_region
          %614 = dma.done [#allocation6], 4608
        $region104: #{edsr_forward_pallas.1} parent=95 // pred_fallthru
          _
        // Predicated region
        $region105: #{edsr_forward_pallas.1} parent=95 // pred_check
          %p615 = pneg %p244
        $region106: #{edsr_forward_pallas.1} parent=95 // pred_check_branch
          %617 = sbr.rel (%p615) target = $region108
        $region107: #{edsr_forward_pallas.1} parent=95 // pred_region
          %618 = dma.done [#allocation6], 4608
        $region108: #{edsr_forward_pallas.1} parent=95 // pred_fallthru
          _
        // Predicated region
        $region109: #{edsr_forward_pallas.1} parent=95 // pred_check
          %p619 = pneg %p286
        $region110: #{edsr_forward_pallas.1} parent=95 // pred_check_branch
          %621 = sbr.rel (%p619) target = $region112
        $region111: #{edsr_forward_pallas.1} parent=95 // pred_region
          %622 = dma.done [#allocation9], 4608
        $region112: #{edsr_forward_pallas.1} parent=95 // pred_fallthru
          _
        // Predicated region
        $region113: #{edsr_forward_pallas.1} parent=95 // pred_check
          %p623 = pneg %p328
        $region114: #{edsr_forward_pallas.1} parent=95 // pred_check_branch
          %625 = sbr.rel (%p623) target = $region116
        $region115: #{edsr_forward_pallas.1} parent=95 // pred_region
          %626 = dma.done [#allocation9], 4608
        $region116: #{edsr_forward_pallas.1} parent=95 // pred_fallthru
          _
        // Predicated region
        $region117: #{edsr_forward_pallas.1} parent=95 // pred_check
          %p627 = pneg %p412
        $region118: #{edsr_forward_pallas.1} parent=95 // pred_check_branch
          %629 = sbr.rel (%p627) target = $region120
        $region119: #{edsr_forward_pallas.1} parent=95 // pred_region
          %630 = dma.done [#allocation12], 18432
        $region120: #{edsr_forward_pallas.1} parent=95 // pred_fallthru
          _
        %p631 = scmp.lt.s32.totalorder %s34, 1
        %s632 = scalar_select %p631, %s34, 1
        %s633 = smul.addr %s632, 13
        %s634 = smul.addr %s633, 8
        %s635 = scalar_lea.vmem %s0, %s634
        %p636 = pneg %p55
        %p637 = pneg %p52
        %p638 = pneg %p76
        %p639 = pneg %p73
        %p640 = pneg %p97
        %p641 = pneg %p94
        %p642 = pneg %p118
        %p643 = pneg %p115
        %p644 = pneg %p139
        %p645 = pneg %p136
        %p646 = pneg %p160
        %p647 = pneg %p157
        %p648 = pneg %p181
        %p649 = pneg %p178
        %p650 = pneg %p202
        %p651 = pneg %p199
        %p652 = pneg %p223
        %p653 = pneg %p220
        %p654 = pneg %p244
        %p655 = pneg %p241
        %p656 = pneg %p265
        %p657 = pneg %p262
        %p658 = pneg %p286
        %p659 = pneg %p283
        %p660 = pneg %p307
        %p661 = pneg %p304
        %p662 = pneg %p328
        %p663 = pneg %p325
        %p664 = pneg %p349
        %p665 = pneg %p346
        %p666 = pneg %p370
        %p667 = pneg %p367
        %p668 = pneg %p391
        %p669 = pneg %p388
        %p670 = pneg %p412
        %p671 = pneg %p409
        %p672 = pneg %p433
        %p673 = pneg %p430
        %p674 = pneg %p459
        %p675 = pneg %p456
        %p676 = scmp.lt.s32.totalorder %s34, 1
        %s677 = scalar_select %p676, %s34, 1
        %s678 = smul.addr %s677, 13
        %s679 = smul.addr %s678, 8
        %s680 = scalar_lea.vmem %s19, %s679
        %p681 = scmp.lt.s32.totalorder %s34, 1
        %s682 = scalar_select %p681, %s34, 1
        %s683 = smul.addr %s682, 13
        %s684 = smul.addr %s683, 8
        %s685 = scalar_lea.vmem %s0, %s684
        %p686 = scmp.lt.s32.totalorder %s34, 1
        %s687 = scalar_select %p686, %s34, 1
        %s688 = smul.addr %s687, 13
        %s689 = smul.addr %s688, 8
        %s690 = scalar_lea.vmem %s19, %s689
        %691 = vst [vmem:[#allocation2] sm:$0xff] 0.0
        %692 = vst [vmem:[#allocation2 + $0x8] sm:$0xff] 0.0
        %693 = vst [vmem:[#allocation2 + $0x10] sm:$0xff] 0.0
        %694 = vst [vmem:[#allocation2 + $0x18] sm:$0x7] 0.0
        %695 = vst [vmem:[#allocation2 + $0x20] sm:$0x7] 0.0
        %696 = vst [vmem:[#allocation2 + $0x28] sm:$0x7] 0.0
        %697 = vst [vmem:[#allocation2 + $0x138] sm:$0x80] 0.0
        %698 = vst [vmem:[#allocation2 + $0x140] sm:$0x80] 0.0
        %699 = vst [vmem:[#allocation2 + $0x148] sm:$0x80] 0.0
        %700 = vst [vmem:[#allocation2 + $0x150] sm:$0xff] 0.0
        %701 = vst [vmem:[#allocation2 + $0x158] sm:$0xff] 0.0
        %702 = vst [vmem:[#allocation2 + $0x160] sm:$0xff] 0.0
        %703 = vst [vmem:[#allocation2 + $0x168] sm:$0x3] 0.0
        %704 = vst [vmem:[#allocation2 + $0x170] sm:$0x3] 0.0
        %705 = vst [vmem:[#allocation2 + $0x178] sm:$0x3] 0.0
        %v706 = vld [vmem:[%s2] sm:$0xff]
        %v707 = vld [vmem:[%s2 + $0x8] sm:$0xff]
        %v708 = vld [vmem:[%s2 + $0x10] sm:$0xff]
        %v709 = vld [vmem:[%s2 + $0x18] sm:$0xff]
        %v710 = vld [vmem:[%s2 + $0x20] sm:$0xff]
        %v711 = vld [vmem:[%s2 + $0x28] sm:$0xff]
        %v712 = vld [vmem:[%s2 + $0x30] sm:$0xff]
        %v713 = vld [vmem:[%s2 + $0x38] sm:$0xff]
        %v714 = vld [vmem:[%s2 + $0x40] sm:$0xff]
        %v715 = vld [vmem:[%s2 + $0x48] sm:$0xff]
        %v716 = vld [vmem:[%s2 + $0x50] sm:$0xff]
        %v717 = vld [vmem:[%s2 + $0x58] sm:$0xff]
        %v718 = vld [vmem:[%s2 + $0x60] sm:$0xf]
        %v719 = vld [vmem:[%s685] sm:$0xff]
        %v720 = vld [vmem:[%s685 + $0x8] sm:$0xff]
        %v721 = vld [vmem:[%s685 + $0x10] sm:$0xff]
        %v722 = vld [vmem:[%s685 + $0x18] sm:$0xff]
        %v723 = vld [vmem:[%s685 + $0x20] sm:$0xff]
        %v724 = vld [vmem:[%s685 + $0x28] sm:$0xff]
        %v725 = vld [vmem:[%s685 + $0x30] sm:$0xff]
        %v726 = vld [vmem:[%s685 + $0x38] sm:$0xff]
        %v727 = vld [vmem:[%s685 + $0x40] sm:$0xff]
        %v728 = vld [vmem:[%s685 + $0x48] sm:$0xff]
        %v729 = vld [vmem:[%s685 + $0x50] sm:$0xff]
        %v730 = vld [vmem:[%s685 + $0x58] sm:$0xff]
        %v731 = vld [vmem:[%s685 + $0x60] sm:$0xf]
        %v732 = vld [vmem:[%s1] sm:$0x1]
        %v734 = vlaneseq
        %v735 = vshrl.u32 %v734, 7
        %v736 = vsub.s32 0, %v735
        %v737 = vrot.slane %v732, %v736
        %v739 = vsub.f32 %v719, %v737
        %v740 = vsub.f32 %v720, %v737
        %v741 = vsub.f32 %v721, %v737
        %v742 = vsub.f32 %v722, %v737
        %v743 = vsub.f32 %v723, %v737
        %v744 = vsub.f32 %v724, %v737
        %v745 = vsub.f32 %v725, %v737
        %v746 = vsub.f32 %v726, %v737
        %v747 = vsub.f32 %v727, %v737
        %v748 = vsub.f32 %v728, %v737
        %v749 = vsub.f32 %v729, %v737
        %v750 = vsub.f32 %v730, %v737
        %v751 = vsub.f32 %v731, %v737
        %v752 = vlaneseq
        %vm753 = vcmp.ge.s32.totalorder %v752, 0
        %vm754 = vcmp.lt.s32.totalorder %v752, 384
        %vm755 = vmand %vm753, %vm754
        %s756 = scalar_lea.vmem [#allocation2], 27
        %757 = vst.msk [vmem:[%s756] ss:$8 sm:$0x7] %vm755, 0.0
        %758 = vst.msk [vmem:[%s756] ss:$8 sm:$0x0] %vm755, 0.0
        %s759 = scalar_lea.vmem [#allocation2], 318
        %760 = vst.msk [vmem:[%s759] ss:$8 sm:$0x7] %vm755, 0.0
        %761 = vst.msk [vmem:[%s759] ss:$8 sm:$0x0] %vm755, 0.0
        %763 = vset.pattern.permute.xlu0 1
        %764 = vperm.xlu0 %763, %v706
        %v765 = vpop.permute.xlu0 %764
        %768 = vset.pattern.permute.xlu0 1
        %769 = vperm.xlu0 %768, %v707
        %v770 = vpop.permute.xlu0 %769
        %773 = vset.pattern.permute.xlu0 1
        %774 = vperm.xlu0 %773, %v708
        %v775 = vpop.permute.xlu0 %774
        %778 = vset.pattern.permute.xlu0 1
        %779 = vperm.xlu0 %778, %v709
        %v780 = vpop.permute.xlu0 %779
        %783 = vset.pattern.permute.xlu0 1
        %784 = vperm.xlu0 %783, %v710
        %v785 = vpop.permute.xlu0 %784
        %788 = vset.pattern.permute.xlu0 1
        %789 = vperm.xlu0 %788, %v711
        %v790 = vpop.permute.xlu0 %789
        %793 = vset.pattern.permute.xlu0 1
        %794 = vperm.xlu0 %793, %v712
        %v795 = vpop.permute.xlu0 %794
        %798 = vset.pattern.permute.xlu0 1
        %799 = vperm.xlu0 %798, %v713
        %v800 = vpop.permute.xlu0 %799
        %803 = vset.pattern.permute.xlu0 1
        %804 = vperm.xlu0 %803, %v714
        %v805 = vpop.permute.xlu0 %804
        %808 = vset.pattern.permute.xlu0 1
        %809 = vperm.xlu0 %808, %v715
        %v810 = vpop.permute.xlu0 %809
        %813 = vset.pattern.permute.xlu0 1
        %814 = vperm.xlu0 %813, %v716
        %v815 = vpop.permute.xlu0 %814
        %818 = vset.pattern.permute.xlu0 1
        %819 = vperm.xlu0 %818, %v717
        %v820 = vpop.permute.xlu0 %819
        %823 = vset.pattern.permute.xlu0 1
        %824 = vperm.xlu0 %823, %v718
        %v825 = vpop.permute.xlu0 %824
        %v827 = vmul.f32 %v739, %v765
        %v828 = vmul.f32 %v740, %v770
        %v829 = vmul.f32 %v741, %v775
        %v830 = vmul.f32 %v742, %v780
        %v831 = vmul.f32 %v743, %v785
        %v832 = vmul.f32 %v744, %v790
        %v833 = vmul.f32 %v745, %v795
        %v834 = vmul.f32 %v746, %v800
        %v835 = vmul.f32 %v747, %v805
        %v836 = vmul.f32 %v748, %v810
        %v837 = vmul.f32 %v749, %v815
        %v838 = vmul.f32 %v750, %v820
        %v839 = vmul.f32 %v751, %v825
        %vm853 = vcmask 1043456
        %v854 = vrot.slane %v827, 4
        %v855 = vrot.slane %v828, 4
        %v856 = vsel %vm853, %v854, %v855
        %v857 = vrot.slane %v829, 4
        %v858 = vsel %vm853, %v855, %v857
        %v859 = vrot.slane %v830, 4
        %v860 = vsel %vm853, %v857, %v859
        %v861 = vrot.slane %v831, 4
        %v862 = vsel %vm853, %v859, %v861
        %v863 = vrot.slane %v832, 4
        %v864 = vsel %vm853, %v861, %v863
        %v865 = vrot.slane %v833, 4
        %v866 = vsel %vm853, %v863, %v865
        %v867 = vrot.slane %v834, 4
        %v868 = vsel %vm853, %v865, %v867
        %v869 = vrot.slane %v835, 4
        %v870 = vsel %vm853, %v867, %v869
        %v871 = vrot.slane %v836, 4
        %v872 = vsel %vm853, %v869, %v871
        %v873 = vrot.slane %v837, 4
        %v874 = vsel %vm853, %v871, %v873
        %v875 = vrot.slane %v838, 4
        %v876 = vsel %vm853, %v873, %v875
        %v877 = vrot.slane %v839, 4
        %v878 = vsel %vm853, %v875, %v877
        %vm892 = vcmask 23556
        %893 = vst.msk [vmem:[#allocation2 + $0x18] sm:$0xf0] %vm892, %v854
        %vm894 = vcmask 23552
        %895 = vst.msk [vmem:[#allocation2 + $0x30] sm:$0xff] %vm894, %v856
        %896 = vst.msk [vmem:[#allocation2 + $0x48] sm:$0xff] %vm894, %v858
        %897 = vst.msk [vmem:[#allocation2 + $0x60] sm:$0xff] %vm894, %v860
        %898 = vst.msk [vmem:[#allocation2 + $0x78] sm:$0xff] %vm894, %v862
        %899 = vst.msk [vmem:[#allocation2 + $0x90] sm:$0xff] %vm894, %v864
        %900 = vst.msk [vmem:[#allocation2 + $0xa8] sm:$0xff] %vm894, %v866
        %901 = vst.msk [vmem:[#allocation2 + $0xc0] sm:$0xff] %vm894, %v868
        %902 = vst.msk [vmem:[#allocation2 + $0xd8] sm:$0xff] %vm894, %v870
        %903 = vst.msk [vmem:[#allocation2 + $0xf0] sm:$0xff] %vm894, %v872
        %904 = vst.msk [vmem:[#allocation2 + $0x108] sm:$0xff] %vm894, %v874
        %905 = vst.msk [vmem:[#allocation2 + $0x120] sm:$0xff] %vm894, %v876
        %906 = vst.msk [vmem:[#allocation2 + $0x138] sm:$0xff] %vm894, %v878
        %vm920 = vcmask 1042432
        %v921 = vrot.slane %v739, 5
        %v922 = vrot.slane %v740, 5
        %v923 = vsel %vm920, %v921, %v922
        %v924 = vrot.slane %v741, 5
        %v925 = vsel %vm920, %v922, %v924
        %v926 = vrot.slane %v742, 5
        %v927 = vsel %vm920, %v924, %v926
        %v928 = vrot.slane %v743, 5
        %v929 = vsel %vm920, %v926, %v928
        %v930 = vrot.slane %v744, 5
        %v931 = vsel %vm920, %v928, %v930
        %v932 = vrot.slane %v745, 5
        %v933 = vsel %vm920, %v930, %v932
        %v934 = vrot.slane %v746, 5
        %v935 = vsel %vm920, %v932, %v934
        %v936 = vrot.slane %v747, 5
        %v937 = vsel %vm920, %v934, %v936
        %v938 = vrot.slane %v748, 5
        %v939 = vsel %vm920, %v936, %v938
        %v940 = vrot.slane %v749, 5
        %v941 = vsel %vm920, %v938, %v940
        %v942 = vrot.slane %v750, 5
        %v943 = vsel %vm920, %v940, %v942
        %v944 = vrot.slane %v751, 5
        %v945 = vsel %vm920, %v942, %v944
        %946 = vrot.lane.b32.xlu0 %v921, 3
        %v947 = vpop.permute.xlu0 %946
        %948 = vrot.lane.b32.xlu0 %v923, 3
        %v949 = vpop.permute.xlu0 %948
        %950 = vrot.lane.b32.xlu0 %v925, 3
        %v951 = vpop.permute.xlu0 %950
        %952 = vrot.lane.b32.xlu0 %v927, 3
        %v953 = vpop.permute.xlu0 %952
        %954 = vrot.lane.b32.xlu0 %v929, 3
        %v955 = vpop.permute.xlu0 %954
        %956 = vrot.lane.b32.xlu0 %v931, 3
        %v957 = vpop.permute.xlu0 %956
        %958 = vrot.lane.b32.xlu0 %v933, 3
        %v959 = vpop.permute.xlu0 %958
        %960 = vrot.lane.b32.xlu0 %v935, 3
        %v961 = vpop.permute.xlu0 %960
        %962 = vrot.lane.b32.xlu0 %v937, 3
        %v963 = vpop.permute.xlu0 %962
        %964 = vrot.lane.b32.xlu0 %v939, 3
        %v965 = vpop.permute.xlu0 %964
        %966 = vrot.lane.b32.xlu0 %v941, 3
        %v967 = vpop.permute.xlu0 %966
        %968 = vrot.lane.b32.xlu0 %v943, 3
        %v969 = vpop.permute.xlu0 %968
        %970 = vrot.lane.b32.xlu0 %v945, 3
        %v971 = vpop.permute.xlu0 %970
        %vm985 = vcmask 48155
        %986 = vst.msk [vmem:[#allocation2 + $0x18] sm:$0xf8] %vm985, %v947
        %vm987 = vcmask 48152
        %988 = vst.msk [vmem:[#allocation2 + $0x30] sm:$0xff] %vm987, %v949
        %989 = vst.msk [vmem:[#allocation2 + $0x48] sm:$0xff] %vm987, %v951
        %990 = vst.msk [vmem:[#allocation2 + $0x60] sm:$0xff] %vm987, %v953
        %991 = vst.msk [vmem:[#allocation2 + $0x78] sm:$0xff] %vm987, %v955
        %992 = vst.msk [vmem:[#allocation2 + $0x90] sm:$0xff] %vm987, %v957
        %993 = vst.msk [vmem:[#allocation2 + $0xa8] sm:$0xff] %vm987, %v959
        %994 = vst.msk [vmem:[#allocation2 + $0xc0] sm:$0xff] %vm987, %v961
        %995 = vst.msk [vmem:[#allocation2 + $0xd8] sm:$0xff] %vm987, %v963
        %996 = vst.msk [vmem:[#allocation2 + $0xf0] sm:$0xff] %vm987, %v965
        %997 = vst.msk [vmem:[#allocation2 + $0x108] sm:$0xff] %vm987, %v967
        %998 = vst.msk [vmem:[#allocation2 + $0x120] sm:$0xff] %vm987, %v969
        %vm999 = vcmask 47128
        %1000 = vst.msk [vmem:[#allocation2 + $0x138] sm:$0x7f] %vm999, %v971
        %1001 = vset.pattern.permute.xlu0 0
        %1002 = vperm.xlu0 %1001, %v706
        %v1003 = vpop.permute.xlu0 %1002
        %1005 = vset.pattern.permute.xlu0 0
        %1006 = vperm.xlu0 %1005, %v707
        %v1007 = vpop.permute.xlu0 %1006
        %1009 = vset.pattern.permute.xlu0 0
        %1010 = vperm.xlu0 %1009, %v708
        %v1011 = vpop.permute.xlu0 %1010
        %1013 = vset.pattern.permute.xlu0 0
        %1014 = vperm.xlu0 %1013, %v709
        %v1015 = vpop.permute.xlu0 %1014
        %1017 = vset.pattern.permute.xlu0 0
        %1018 = vperm.xlu0 %1017, %v710
        %v1019 = vpop.permute.xlu0 %1018
        %1021 = vset.pattern.permute.xlu0 0
        %1022 = vperm.xlu0 %1021, %v711
        %v1023 = vpop.permute.xlu0 %1022
        %1025 = vset.pattern.permute.xlu0 0
        %1026 = vperm.xlu0 %1025, %v712
        %v1027 = vpop.permute.xlu0 %1026
        %1029 = vset.pattern.permute.xlu0 0
        %1030 = vperm.xlu0 %1029, %v713
        %v1031 = vpop.permute.xlu0 %1030
        %1033 = vset.pattern.permute.xlu0 0
        %1034 = vperm.xlu0 %1033, %v714
        %v1035 = vpop.permute.xlu0 %1034
        %1037 = vset.pattern.permute.xlu0 0
        %1038 = vperm.xlu0 %1037, %v715
        %v1039 = vpop.permute.xlu0 %1038
        %1041 = vset.pattern.permute.xlu0 0
        %1042 = vperm.xlu0 %1041, %v716
        %v1043 = vpop.permute.xlu0 %1042
        %1045 = vset.pattern.permute.xlu0 0
        %1046 = vperm.xlu0 %1045, %v717
        %v1047 = vpop.permute.xlu0 %1046
        %1049 = vset.pattern.permute.xlu0 0
        %1050 = vperm.xlu0 %1049, %v718
        %v1051 = vpop.permute.xlu0 %1050
        %v1053 = vmul.f32 %v739, %v1003
        %v1054 = vmul.f32 %v740, %v1007
        %v1055 = vmul.f32 %v741, %v1011
        %v1056 = vmul.f32 %v742, %v1015
        %v1057 = vmul.f32 %v743, %v1019
        %v1058 = vmul.f32 %v744, %v1023
        %v1059 = vmul.f32 %v745, %v1027
        %v1060 = vmul.f32 %v746, %v1031
        %v1061 = vmul.f32 %v747, %v1035
        %v1062 = vmul.f32 %v748, %v1039
        %v1063 = vmul.f32 %v749, %v1043
        %v1064 = vmul.f32 %v750, %v1047
        %v1065 = vmul.f32 %v751, %v1051
        %vm1079 = vcmask 1041408
        %v1080 = vrot.slane %v1053, 6
        %v1081 = vrot.slane %v1054, 6
        %v1082 = vsel %vm1079, %v1080, %v1081
        %v1083 = vrot.slane %v1055, 6
        %v1084 = vsel %vm1079, %v1081, %v1083
        %v1085 = vrot.slane %v1056, 6
        %v1086 = vsel %vm1079, %v1083, %v1085
        %v1087 = vrot.slane %v1057, 6
        %v1088 = vsel %vm1079, %v1085, %v1087
        %v1089 = vrot.slane %v1058, 6
        %v1090 = vsel %vm1079, %v1087, %v1089
        %v1091 = vrot.slane %v1059, 6
        %v1092 = vsel %vm1079, %v1089, %v1091
        %v1093 = vrot.slane %v1060, 6
        %v1094 = vsel %vm1079, %v1091, %v1093
        %v1095 = vrot.slane %v1061, 6
        %v1096 = vsel %vm1079, %v1093, %v1095
        %v1097 = vrot.slane %v1062, 6
        %v1098 = vsel %vm1079, %v1095, %v1097
        %v1099 = vrot.slane %v1063, 6
        %v1100 = vsel %vm1079, %v1097, %v1099
        %v1101 = vrot.slane %v1064, 6
        %v1102 = vsel %vm1079, %v1099, %v1101
        %v1103 = vrot.slane %v1065, 6
        %v1104 = vsel %vm1079, %v1101, %v1103
        %1105 = vrot.lane.b32.xlu0 %v1080, 6
        %v1106 = vpop.permute.xlu0 %1105
        %1107 = vrot.lane.b32.xlu0 %v1082, 6
        %v1108 = vpop.permute.xlu0 %1107
        %1109 = vrot.lane.b32.xlu0 %v1084, 6
        %v1110 = vpop.permute.xlu0 %1109
        %1111 = vrot.lane.b32.xlu0 %v1086, 6
        %v1112 = vpop.permute.xlu0 %1111
        %1113 = vrot.lane.b32.xlu0 %v1088, 6
        %v1114 = vpop.permute.xlu0 %1113
        %1115 = vrot.lane.b32.xlu0 %v1090, 6
        %v1116 = vpop.permute.xlu0 %1115
        %1117 = vrot.lane.b32.xlu0 %v1092, 6
        %v1118 = vpop.permute.xlu0 %1117
        %1119 = vrot.lane.b32.xlu0 %v1094, 6
        %v1120 = vpop.permute.xlu0 %1119
        %1121 = vrot.lane.b32.xlu0 %v1096, 6
        %v1122 = vpop.permute.xlu0 %1121
        %1123 = vrot.lane.b32.xlu0 %v1098, 6
        %v1124 = vpop.permute.xlu0 %1123
        %1125 = vrot.lane.b32.xlu0 %v1100, 6
        %v1126 = vpop.permute.xlu0 %1125
        %1127 = vrot.lane.b32.xlu0 %v1102, 6
        %v1128 = vpop.permute.xlu0 %1127
        %1129 = vrot.lane.b32.xlu0 %v1104, 6
        %v1130 = vpop.permute.xlu0 %1129
        %vm1144 = vcmask 72754
        %1145 = vst.msk [vmem:[#allocation2 + $0x18] sm:$0xfc] %vm1144, %v1106
        %vm1146 = vcmask 72752
        %1147 = vst.msk [vmem:[#allocation2 + $0x30] sm:$0xff] %vm1146, %v1108
        %1148 = vst.msk [vmem:[#allocation2 + $0x48] sm:$0xff] %vm1146, %v1110
        %1149 = vst.msk [vmem:[#allocation2 + $0x60] sm:$0xff] %vm1146, %v1112
        %1150 = vst.msk [vmem:[#allocation2 + $0x78] sm:$0xff] %vm1146, %v1114
        %1151 = vst.msk [vmem:[#allocation2 + $0x90] sm:$0xff] %vm1146, %v1116
        %1152 = vst.msk [vmem:[#allocation2 + $0xa8] sm:$0xff] %vm1146, %v1118
        %1153 = vst.msk [vmem:[#allocation2 + $0xc0] sm:$0xff] %vm1146, %v1120
        %1154 = vst.msk [vmem:[#allocation2 + $0xd8] sm:$0xff] %vm1146, %v1122
        %1155 = vst.msk [vmem:[#allocation2 + $0xf0] sm:$0xff] %vm1146, %v1124
        %1156 = vst.msk [vmem:[#allocation2 + $0x108] sm:$0xff] %vm1146, %v1126
        %1157 = vst.msk [vmem:[#allocation2 + $0x120] sm:$0xff] %vm1146, %v1128
        %vm1158 = vcmask 70704
        %1159 = vst.msk [vmem:[#allocation2 + $0x138] sm:$0x3f] %vm1158, %v1130
        %v1160 = vld [vmem:[%s4] sm:$0x1]
        %v1162 = vlaneseq
        %v1163 = vshrl.u32 %v1162, 7
        %v1164 = vsub.s32 0, %v1163
        %v1165 = vrot.slane %v1160, %v1164
        %v1167 = vld [vmem:[#allocation2] sm:$0xfe]
        %v1168 = vld [vmem:[#allocation2 + $0x18] sm:$0xff]
        %v1169 = vld [vmem:[#allocation2 + $0x30] sm:$0xff]
        %v1170 = vld [vmem:[#allocation2 + $0x48] sm:$0xff]
        %v1171 = vld [vmem:[#allocation2 + $0x60] sm:$0xff]
        %v1172 = vld [vmem:[#allocation2 + $0x78] sm:$0xff]
        %v1173 = vld [vmem:[#allocation2 + $0x90] sm:$0xff]
        %v1174 = vld [vmem:[#allocation2 + $0xa8] sm:$0xff]
        %v1175 = vld [vmem:[#allocation2 + $0xc0] sm:$0xff]
        %v1176 = vld [vmem:[#allocation2 + $0xd8] sm:$0xff]
        %v1177 = vld [vmem:[#allocation2 + $0xf0] sm:$0xff]
        %v1178 = vld [vmem:[#allocation2 + $0x108] sm:$0xff]
        %v1179 = vld [vmem:[#allocation2 + $0x120] sm:$0x1f]
        %v1180 = vld [vmem:[%s3] sm:$0xff]
        %v1181 = vld [vmem:[%s3 + $0x8] sm:$0x1]
        %vm1195 = vcmask 1046528
        %v1196 = vrot.slane %v1167, 1
        %v1197 = vrot.slane %v1168, 1
        %v1198 = vsel %vm1195, %v1196, %v1197
        %v1199 = vrot.slane %v1169, 1
        %v1200 = vsel %vm1195, %v1197, %v1199
        %v1201 = vrot.slane %v1170, 1
        %v1202 = vsel %vm1195, %v1199, %v1201
        %v1203 = vrot.slane %v1171, 1
        %v1204 = vsel %vm1195, %v1201, %v1203
        %v1205 = vrot.slane %v1172, 1
        %v1206 = vsel %vm1195, %v1203, %v1205
        %v1207 = vrot.slane %v1173, 1
        %v1208 = vsel %vm1195, %v1205, %v1207
        %v1209 = vrot.slane %v1174, 1
        %v1210 = vsel %vm1195, %v1207, %v1209
        %v1211 = vrot.slane %v1175, 1
        %v1212 = vsel %vm1195, %v1209, %v1211
        %v1213 = vrot.slane %v1176, 1
        %v1214 = vsel %vm1195, %v1211, %v1213
        %v1215 = vrot.slane %v1177, 1
        %v1216 = vsel %vm1195, %v1213, %v1215
        %v1217 = vrot.slane %v1178, 1
        %v1218 = vsel %vm1195, %v1215, %v1217
        %v1219 = vrot.slane %v1179, 1
        %v1220 = vsel %vm1195, %v1217, %v1219
        %vm1221 = vcmask 72704
        %v1222 = vsel %vm1221, %v1198, 0
        %v1224 = vsel %vm1221, %v1200, 0
        %v1226 = vsel %vm1221, %v1202, 0
        %v1228 = vsel %vm1221, %v1204, 0
        %v1230 = vsel %vm1221, %v1206, 0
        %v1232 = vsel %vm1221, %v1208, 0
        %v1234 = vsel %vm1221, %v1210, 0
        %v1236 = vsel %vm1221, %v1212, 0
        %v1238 = vsel %vm1221, %v1214, 0
        %v1240 = vsel %vm1221, %v1216, 0
        %v1242 = vsel %vm1221, %v1218, 0
        %v1244 = vsel %vm1221, %v1220, 0
        %v1246 = vsel %vm1221, %v1219, 0
        %vm1248 = vcmask 1040384
        %v1250 = vsel %vm1248, %v1181, 0
        %1252 = vmatprep.subr.mxu0 0.0
        %1253 = vmatpush1.msra.mxu0 %v1180
        %1254 = vmatprep.subr.mxu0 0.0
        %1255 = vmatpush1.msra.mxu0 %v1250
        %1256 = vmatprep.subr.mxu0 0.0
        %1257 = vmatpush1.msra.mxu0 0.0
        %1258 = vmatprep.subr.mxu0 0.0
        %1259 = vmatpush1.msra.mxu0 0.0
        %1260 = vmatprep.subr.mxu0 0.0
        %1261 = vmatpush1.msra.mxu0 0.0
        %1262 = vmatprep.subr.mxu0 0.0
        %1263 = vmatpush1.msra.mxu0 0.0
        %1264 = vmatprep.subr.mxu0 0.0
        %1265 = vmatpush1.msra.mxu0 0.0
        %1266 = vmatprep.subr.mxu0 0.0
        %1267 = vmatpush1.msra.mxu0 0.0
        %1268 = vmatprep.subr.mxu0 0.0
        %1269 = vmatpush1.msra.mxu0 0.0
        %1270 = vmatprep.subr.mxu0 0.0
        %1271 = vmatpush1.msra.mxu0 0.0
        %1272 = vmatprep.subr.mxu0 0.0
        %1273 = vmatpush1.msra.mxu0 0.0
        %1274 = vmatprep.subr.mxu0 0.0
        %1275 = vmatpush1.msra.mxu0 0.0
        %1276 = vmatprep.subr.mxu0 0.0
        %1277 = vmatpush1.msra.mxu0 0.0
        %1278 = vmatprep.subr.mxu0 0.0
        %1279 = vmatpush1.msra.mxu0 0.0
        %1280 = vmatprep.subr.mxu0 0.0
        %1281 = vmatpush1.msra.mxu0 0.0
        %1282 = vmatprep.subr.mxu0 0.0
        %1283 = vmatpush1.msra.mxu0 0.0
        %1284 = vmatprep.subr.mxu0 0.0
        %1285 = vmatpush1.msra.mxu0 0.0
        %1286 = vmatprep.subr.mxu0 0.0
        %1287 = vmatpush1.msra.mxu0 0.0
        %1288 = vmatprep.subr.mxu0 0.0
        %1289 = vmatpush1.msra.mxu0 0.0
        %1290 = vmatprep.subr.mxu0 0.0
        %1291 = vmatpush1.msra.mxu0 0.0
        %1292 = vmatprep.subr.mxu0 0.0
        %1293 = vmatpush1.msra.mxu0 0.0
        %1294 = vmatprep.subr.mxu0 0.0
        %1295 = vmatpush1.msra.mxu0 0.0
        %1296 = vmatprep.subr.mxu0 0.0
        %1297 = vmatpush1.msra.mxu0 0.0
        %1298 = vmatprep.subr.mxu0 0.0
        %1299 = vmatpush1.msra.mxu0 0.0
        %1300 = vmatprep.subr.mxu0 0.0
        %1301 = vmatpush1.msra.mxu0 0.0
        %1302 = vmatprep.subr.mxu0 0.0
        %1303 = vmatpush1.msra.mxu0 0.0
        %1304 = vmatprep.subr.mxu0 0.0
        %1305 = vmatpush1.msra.mxu0 0.0
        %1306 = vmatprep.subr.mxu0 0.0
        %1307 = vmatpush1.msra.mxu0 0.0
        %1308 = vmatprep.subr.mxu0 0.0
        %1309 = vmatpush1.msra.mxu0 0.0
        %1310 = vmatprep.subr.mxu0 0.0
        %1311 = vmatpush1.msra.mxu0 0.0
        %1312 = vmatprep.subr.mxu0 0.0
        %1313 = vmatpush1.msra.mxu0 0.0
        %1314 = vmatprep.subr.mxu0 0.0
        %1315 = vmatpush1.msra.mxu0 0.0
        %1316 = vmatprep.mubr.f32.mxu0 0.0
        %1317 = vmatmul.mubr.f32.gmra.mrb[0].mxu0 %v1222
        %v1318 = vpop.f32.mrb[0].mxu0
        %v1319 = vadd.f32 0.0, %v1318
        %v1320 = vpop.f32.mrb[0].mxu0
        %1321 = vmatprep.mubr.f32.mxu0 0.0
        %1322 = vmatmul.mubr.f32.gmra.mrb[0].mxu0 %v1224
        %v1323 = vpop.f32.mrb[0].mxu0
        %v1324 = vadd.f32 0.0, %v1323
        %v1325 = vpop.f32.mrb[0].mxu0
        %1326 = vmatprep.mubr.f32.mxu0 0.0
        %1327 = vmatmul.mubr.f32.gmra.mrb[0].mxu0 %v1226
        %v1328 = vpop.f32.mrb[0].mxu0
        %v1329 = vadd.f32 0.0, %v1328
        %v1330 = vpop.f32.mrb[0].mxu0
        %1331 = vmatprep.mubr.f32.mxu0 0.0
        %1332 = vmatmul.mubr.f32.gmra.mrb[0].mxu0 %v1228
        %v1333 = vpop.f32.mrb[0].mxu0
        %v1334 = vadd.f32 0.0, %v1333
        %v1335 = vpop.f32.mrb[0].mxu0
        %1336 = vmatprep.mubr.f32.mxu0 0.0
        %1337 = vmatmul.mubr.f32.gmra.mrb[0].mxu0 %v1230
        %v1338 = vpop.f32.mrb[0].mxu0
        %v1339 = vadd.f32 0.0, %v1338
        %v1340 = vpop.f32.mrb[0].mxu0
        %1341 = vmatprep.mubr.f32.mxu0 0.0
        %1342 = vmatmul.mubr.f32.gmra.mrb[0].mxu0 %v1232
        %v1343 = vpop.f32.mrb[0].mxu0
        %v1344 = vadd.f32 0.0, %v1343
        %v1345 = vpop.f32.mrb[0].mxu0
        %1346 = vmatprep.mubr.f32.mxu0 0.0
        %1347 = vmatmul.mubr.f32.gmra.mrb[0].mxu0 %v1234
        %v1348 = vpop.f32.mrb[0].mxu0
        %v1349 = vadd.f32 0.0, %v1348
        %v1350 = vpop.f32.mrb[0].mxu0
        %1351 = vmatprep.mubr.f32.mxu0 0.0
        %1352 = vmatmul.mubr.f32.gmra.mrb[0].mxu0 %v1236
        %v1353 = vpop.f32.mrb[0].mxu0
        %v1354 = vadd.f32 0.0, %v1353
        %v1355 = vpop.f32.mrb[0].mxu0
        %1356 = vmatprep.mubr.f32.mxu0 0.0
        %1357 = vmatmul.mubr.f32.gmra.mrb[0].mxu0 %v1238
        %v1358 = vpop.f32.mrb[0].mxu0
        %v1359 = vadd.f32 0.0, %v1358
        %v1360 = vpop.f32.mrb[0].mxu0
        %1361 = vmatprep.mubr.f32.mxu0 0.0
        %1362 = vmatmul.mubr.f32.gmra.mrb[0].mxu0 %v1240
        %v1363 = vpop.f32.mrb[0].mxu0
        %v1364 = vadd.f32 0.0, %v1363
        %v1365 = vpop.f32.mrb[0].mxu0
        %1366 = vmatprep.mubr.f32.mxu0 0.0
        %1367 = vmatmul.mubr.f32.gmra.mrb[0].mxu0 %v1242
        %v1368 = vpop.f32.mrb[0].mxu0
        %v1369 = vadd.f32 0.0, %v1368
        %v1370 = vpop.f32.mrb[0].mxu0
        %1371 = vmatprep.mubr.f32.mxu0 0.0
        %1372 = vmatmul.mubr.f32.gmra.mrb[0].mxu0 %v1244
        %v1373 = vpop.f32.mrb[0].mxu0
        %v1374 = vadd.f32 0.0, %v1373
        %v1375 = vpop.f32.mrb[0].mxu0
        %1376 = vmatprep.mubr.f32.mxu0 0.0
        %1377 = vmatmul.mubr.f32.gmra.mrb[0].mxu0 %v1246
        %v1378 = vpop.f32.mrb[0].mxu0
        %v1379 = vadd.f32 0.0, %v1378
        %v1380 = vpop.f32.mrb[0].mxu0
        %1381 = vdwg.mxu0
        %v1382 = vadd.f32 %v1165, %v1319
        %v1383 = vadd.f32 %v1165, %v1324
        %v1384 = vadd.f32 %v1165, %v1329
        %v1385 = vadd.f32 %v1165, %v1334
        %v1386 = vadd.f32 %v1165, %v1339
        %v1387 = vadd.f32 %v1165, %v1344
        %v1388 = vadd.f32 %v1165, %v1349
        %v1389 = vadd.f32 %v1165, %v1354
        %v1390 = vadd.f32 %v1165, %v1359
        %v1391 = vadd.f32 %v1165, %v1364
        %v1392 = vadd.f32 %v1165, %v1369
        %v1393 = vadd.f32 %v1165, %v1374
        %v1394 = vadd.f32 %v1165, %v1379
        %v1395 = vld [vmem:[#allocation2 + $0x18] sm:$0xf8]
        %v1396 = vld [vmem:[#allocation2 + $0x30] sm:$0xff]
        %v1397 = vld [vmem:[#allocation2 + $0x48] sm:$0xff]
        %v1398 = vld [vmem:[#allocation2 + $0x60] sm:$0xff]
        %v1399 = vld [vmem:[#allocation2 + $0x78] sm:$0xff]
        %v1400 = vld [vmem:[#allocation2 + $0x90] sm:$0xff]
        %v1401 = vld [vmem:[#allocation2 + $0xa8] sm:$0xff]
        %v1402 = vld [vmem:[#allocation2 + $0xc0] sm:$0xff]
        %v1403 = vld [vmem:[#allocation2 + $0xd8] sm:$0xff]
        %v1404 = vld [vmem:[#allocation2 + $0xf0] sm:$0xff]
        %v1405 = vld [vmem:[#allocation2 + $0x108] sm:$0xff]
        %v1406 = vld [vmem:[#allocation2 + $0x120] sm:$0xff]
        %v1407 = vld [vmem:[#allocation2 + $0x138] sm:$0x7f]
        %s1408 = scalar_lea.vmem %s3, 16
        %v1409 = vld [vmem:[%s1408] sm:$0xff]
        %v1410 = vld [vmem:[%s1408 + $0x8] sm:$0x1]
        %vm1424 = vcmask 1044480
        %v1425 = vrot.slane %v1395, 3
        %v1426 = vrot.slane %v1396, 3
        %v1427 = vsel %vm1424, %v1425, %v1426
        %v1428 = vrot.slane %v1397, 3
        %v1429 = vsel %vm1424, %v1426, %v1428
        %v1430 = vrot.slane %v1398, 3
        %v1431 = vsel %vm1424, %v1428, %v1430
        %v1432 = vrot.slane %v1399, 3
        %v1433 = vsel %vm1424, %v1430, %v1432
        %v1434 = vrot.slane %v1400, 3
        %v1435 = vsel %vm1424, %v1432, %v1434
        %v1436 = vrot.slane %v1401, 3
        %v1437 = vsel %vm1424, %v1434, %v1436
        %v1438 = vrot.slane %v1402, 3
        %v1439 = vsel %vm1424, %v1436, %v1438
        %v1440 = vrot.slane %v1403, 3
        %v1441 = vsel %vm1424, %v1438, %v1440
        %v1442 = vrot.slane %v1404, 3
        %v1443 = vsel %vm1424, %v1440, %v1442
        %v1444 = vrot.slane %v1405, 3
        %v1445 = vsel %vm1424, %v1442, %v1444
        %v1446 = vrot.slane %v1406, 3
        %v1447 = vsel %vm1424, %v1444, %v1446
        %v1448 = vrot.slane %v1407, 3
        %v1449 = vsel %vm1424, %v1446, %v1448
        %v1450 = vsel %vm1221, %v1427, 0
        %v1452 = vsel %vm1221, %v1429, 0
        %v1454 = vsel %vm1221, %v1431, 0
        %v1456 = vsel %vm1221, %v1433, 0
        %v1458 = vsel %vm1221, %v1435, 0
        %v1460 = vsel %vm1221, %v1437, 0
        %v1462 = vsel %vm1221, %v1439, 0
        %v1464 = vsel %vm1221, %v1441, 0
        %v1466 = vsel %vm1221, %v1443, 0
        %v1468 = vsel %vm1221, %v1445, 0
        %v1470 = vsel %vm1221, %v1447, 0
        %v1472 = vsel %vm1221, %v1449, 0
        %v1474 = vsel %vm1221, %v1448, 0
        %v1477 = vsel %vm1248, %v1410, 0
        %1479 = vmatprep.subr.mxu0 0.0
        %1480 = vmatpush1.msra.mxu0 %v1409
        %1481 = vmatprep.subr.mxu0 0.0
        %1482 = vmatpush1.msra.mxu0 %v1477
        %1483 = vmatprep.subr.mxu0 0.0
        %1484 = vmatpush1.msra.mxu0 0.0
        %1485 = vmatprep.subr.mxu0 0.0
        %1486 = vmatpush1.msra.mxu0 0.0
        %1487 = vmatprep.subr.mxu0 0.0
        %1488 = vmatpush1.msra.mxu0 0.0
        %1489 = vmatprep.subr.mxu0 0.0
        %1490 = vmatpush1.msra.mxu0 0.0
        %1491 = vmatprep.subr.mxu0 0.0
        %1492 = vmatpush1.msra.mxu0 0.0
        %1493 = vmatprep.subr.mxu0 0.0
        %1494 = vmatpush1.msra.mxu0 0.0
        %1495 = vmatprep.subr.mxu0 0.0
        %1496 = vmatpush1.msra.mxu0 0.0
        %1497 = vmatprep.subr.mxu0 0.0
        %1498 = vmatpush1.msra.mxu0 0.0
        %1499 = vmatprep.subr.mxu0 0.0
        %1500 = vmatpush1.msra.mxu0 0.0
        %1501 = vmatprep.subr.mxu0 0.0
        %1502 = vmatpush1.msra.mxu0 0.0
        %1503 = vmatprep.subr.mxu0 0.0
        %1504 = vmatpush1.msra.mxu0 0.0
        %1505 = vmatprep.subr.mxu0 0.0
        %1506 = vmatpush1.msra.mxu0 0.0
        %1507 = vmatprep.subr.mxu0 0.0
        %1508 = vmatpush1.msra.mxu0 0.0
        %1509 = vmatprep.subr.mxu0 0.0
        %1510 = vmatpush1.msra.mxu0 0.0
        %1511 = vmatprep.subr.mxu0 0.0
        %1512 = vmatpush1.msra.mxu0 0.0
        %1513 = vmatprep.subr.mxu0 0.0
        %1514 = vmatpush1.msra.mxu0 0.0
        %1515 = vmatprep.subr.mxu0 0.0
        %1516 = vmatpush1.msra.mxu0 0.0
        %1517 = vmatprep.subr.mxu0 0.0
        %1518 = vmatpush1.msra.mxu0 0.0
        %1519 = vmatprep.subr.mxu0 0.0
        %1520 = vmatpush1.msra.mxu0 0.0
        %1521 = vmatprep.subr.mxu0 0.0
        %1522 = vmatpush1.msra.mxu0 0.0
        %1523 = vmatprep.subr.mxu0 0.0
        %1524 = vmatpush1.msra.mxu0 0.0
        %1525 = vmatprep.subr.mxu0 0.0
        %1526 = vmatpush1.msra.mxu0 0.0
        %1527 = vmatprep.subr.mxu0 0.0
        %1528 = vmatpush1.msra.mxu0 0.0
        %1529 = vmatprep.subr.mxu0 0.0
        %1530 = vmatpush1.msra.mxu0 0.0
        %1531 = vmatprep.subr.mxu0 0.0
        %1532 = vmatpush1.msra.mxu0 0.0
        %1533 = vmatprep.subr.mxu0 0.0
        %1534 = vmatpush1.msra.mxu0 0.0
        %1535 = vmatprep.subr.mxu0 0.0
        %1536 = vmatpush1.msra.mxu0 0.0
        %1537 = vmatprep.subr.mxu0 0.0
        %1538 = vmatpush1.msra.mxu0 0.0
        %1539 = vmatprep.subr.mxu0 0.0
        %1540 = vmatpush1.msra.mxu0 0.0
        %1541 = vmatprep.subr.mxu0 0.0
        %1542 = vmatpush1.msra.mxu0 0.0
        %1543 = vmatprep.mubr.f32.mxu0 0.0
        %1544 = vmatmul.mubr.f32.gmra.mrb[0].mxu0 %v1450
        %v1545 = vpop.f32.mrb[0].mxu0
        %v1546 = vadd.f32 0.0, %v1545
        %v1547 = vpop.f32.mrb[0].mxu0
        %1548 = vmatprep.mubr.f32.mxu0 0.0
        %1549 = vmatmul.mubr.f32.gmra.mrb[0].mxu0 %v1452
        %v1550 = vpop.f32.mrb[0].mxu0
        %v1551 = vadd.f32 0.0, %v1550
        %v1552 = vpop.f32.mrb[0].mxu0
        %1553 = vmatprep.mubr.f32.mxu0 0.0
        %1554 = vmatmul.mubr.f32.gmra.mrb[0].mxu0 %v1454
        %v1555 = vpop.f32.mrb[0].mxu0
        %v1556 = vadd.f32 0.0, %v1555
        %v1557 = vpop.f32.mrb[0].mxu0
        %1558 = vmatprep.mubr.f32.mxu0 0.0
        %1559 = vmatmul.mubr.f32.gmra.mrb[0].mxu0 %v1456
        %v1560 = vpop.f32.mrb[0].mxu0
        %v1561 = vadd.f32 0.0, %v1560
        %v1562 = vpop.f32.mrb[0].mxu0
        %1563 = vmatprep.mubr.f32.mxu0 0.0
        %1564 = vmatmul.mubr.f32.gmra.mrb[0].mxu0 %v1458
        %v1565 = vpop.f32.mrb[0].mxu0
        %v1566 = vadd.f32 0.0, %v1565
        %v1567 = vpop.f32.mrb[0].mxu0
        %1568 = vmatprep.mubr.f32.mxu0 0.0
        %1569 = vmatmul.mubr.f32.gmra.mrb[0].mxu0 %v1460
        %v1570 = vpop.f32.mrb[0].mxu0
        %v1571 = vadd.f32 0.0, %v1570
        %v1572 = vpop.f32.mrb[0].mxu0
        %1573 = vmatprep.mubr.f32.mxu0 0.0
        %1574 = vmatmul.mubr.f32.gmra.mrb[0].mxu0 %v1462
        %v1575 = vpop.f32.mrb[0].mxu0
        %v1576 = vadd.f32 0.0, %v1575
        %v1577 = vpop.f32.mrb[0].mxu0
        %1578 = vmatprep.mubr.f32.mxu0 0.0
        %1579 = vmatmul.mubr.f32.gmra.mrb[0].mxu0 %v1464
        %v1580 = vpop.f32.mrb[0].mxu0
        %v1581 = vadd.f32 0.0, %v1580
        %v1582 = vpop.f32.mrb[0].mxu0
        %1583 = vmatprep.mubr.f32.mxu0 0.0
        %1584 = vmatmul.mubr.f32.gmra.mrb[0].mxu0 %v1466
        %v1585 = vpop.f32.mrb[0].mxu0
        %v1586 = vadd.f32 0.0, %v1585
        %v1587 = vpop.f32.mrb[0].mxu0
        %1588 = vmatprep.mubr.f32.mxu0 0.0
        %1589 = vmatmul.mubr.f32.gmra.mrb[0].mxu0 %v1468
        %v1590 = vpop.f32.mrb[0].mxu0
        %v1591 = vadd.f32 0.0, %v1590
        %v1592 = vpop.f32.mrb[0].mxu0
        %1593 = vmatprep.mubr.f32.mxu0 0.0
        %1594 = vmatmul.mubr.f32.gmra.mrb[0].mxu0 %v1470
        %v1595 = vpop.f32.mrb[0].mxu0
        %v1596 = vadd.f32 0.0, %v1595
        %v1597 = vpop.f32.mrb[0].mxu0
        %1598 = vmatprep.mubr.f32.mxu0 0.0
        %1599 = vmatmul.mubr.f32.gmra.mrb[0].mxu0 %v1472
        %v1600 = vpop.f32.mrb[0].mxu0
        %v1601 = vadd.f32 0.0, %v1600
        %v1602 = vpop.f32.mrb[0].mxu0
        %1603 = vmatprep.mubr.f32.mxu0 0.0
        %1604 = vmatmul.mubr.f32.gmra.mrb[0].mxu0 %v1474
        %v1605 = vpop.f32.mrb[0].mxu0
        %v1606 = vadd.f32 0.0, %v1605
        %v1607 = vpop.f32.mrb[0].mxu0
        %1608 = vdwg.mxu0
        %v1609 = vadd.f32 %v1382, %v1546
        %v1610 = vadd.f32 %v1383, %v1551
        %v1611 = vadd.f32 %v1384, %v1556
        %v1612 = vadd.f32 %v1385, %v1561
        %v1613 = vadd.f32 %v1386, %v1566
        %v1614 = vadd.f32 %v1387, %v1571
        %v1615 = vadd.f32 %v1388, %v1576
        %v1616 = vadd.f32 %v1389, %v1581
        %v1617 = vadd.f32 %v1390, %v1586
        %v1618 = vadd.f32 %v1391, %v1591
        %v1619 = vadd.f32 %v1392, %v1596
        %v1620 = vadd.f32 %v1393, %v1601
        %v1621 = vadd.f32 %v1394, %v1606
        %v1622 = vld [vmem:[#allocation2 + $0x30] sm:$0xe0]
        %v1623 = vld [vmem:[#allocation2 + $0x48] sm:$0xff]
        %v1624 = vld [vmem:[#allocation2 + $0x60] sm:$0xff]
        %v1625 = vld [vmem:[#allocation2 + $0x78] sm:$0xff]
        %v1626 = vld [vmem:[#allocation2 + $0x90] sm:$0xff]
        %v1627 = vld [vmem:[#allocation2 + $0xa8] sm:$0xff]
        %v1628 = vld [vmem:[#allocation2 + $0xc0] sm:$0xff]
        %v1629 = vld [vmem:[#allocation2 + $0xd8] sm:$0xff]
        %v1630 = vld [vmem:[#allocation2 + $0xf0] sm:$0xff]
        %v1631 = vld [vmem:[#allocation2 + $0x108] sm:$0xff]
        %v1632 = vld [vmem:[#allocation2 + $0x120] sm:$0xff]
        %v1633 = vld [vmem:[#allocation2 + $0x138] sm:$0xff]
        %v1634 = vld [vmem:[#allocation2 + $0x150] sm:$0xff]
        %v1635 = vld [vmem:[#allocation2 + $0x168] sm:$0x1]
        %s1636 = scalar_lea.vmem %s3, 32
        %v1637 = vld [vmem:[%s1636] sm:$0xff]
        %v1638 = vld [vmem:[%s1636 + $0x8] sm:$0x1]
        %v1653 = vrot.slane %v1622, 5
        %v1654 = vrot.slane %v1623, 5
        %v1655 = vsel %vm920, %v1653, %v1654
        %v1656 = vrot.slane %v1624, 5
        %v1657 = vsel %vm920, %v1654, %v1656
        %v1658 = vrot.slane %v1625, 5
        %v1659 = vsel %vm920, %v1656, %v1658
        %v1660 = vrot.slane %v1626, 5
        %v1661 = vsel %vm920, %v1658, %v1660
        %v1662 = vrot.slane %v1627, 5
        %v1663 = vsel %vm920, %v1660, %v1662
        %v1664 = vrot.slane %v1628, 5
        %v1665 = vsel %vm920, %v1662, %v1664
        %v1666 = vrot.slane %v1629, 5
        %v1667 = vsel %vm920, %v1664, %v1666
        %v1668 = vrot.slane %v1630, 5
        %v1669 = vsel %vm920, %v1666, %v1668
        %v1670 = vrot.slane %v1631, 5
        %v1671 = vsel %vm920, %v1668, %v1670
        %v1672 = vrot.slane %v1632, 5
        %v1673 = vsel %vm920, %v1670, %v1672
        %v1674 = vrot.slane %v1633, 5
        %v1675 = vsel %vm920, %v1672, %v1674
        %v1676 = vrot.slane %v1634, 5
        %v1677 = vsel %vm920, %v1674, %v1676
        %v1678 = vrot.slane %v1635, 5
        %v1679 = vsel %vm920, %v1676, %v1678
        %v1680 = vsel %vm1221, %v1655, 0
        %v1682 = vsel %vm1221, %v1657, 0
        %v1684 = vsel %vm1221, %v1659, 0
        %v1686 = vsel %vm1221, %v1661, 0
        %v1688 = vsel %vm1221, %v1663, 0
        %v1690 = vsel %vm1221, %v1665, 0
        %v1692 = vsel %vm1221, %v1667, 0
        %v1694 = vsel %vm1221, %v1669, 0
        %v1696 = vsel %vm1221, %v1671, 0
        %v1698 = vsel %vm1221, %v1673, 0
        %v1700 = vsel %vm1221, %v1675, 0
        %v1702 = vsel %vm1221, %v1677, 0
        %v1704 = vsel %vm1221, %v1679, 0
        %v1707 = vsel %vm1248, %v1638, 0
        %1709 = vmatprep.subr.mxu0 0.0
        %1710 = vmatpush1.msra.mxu0 %v1637
        %1711 = vmatprep.subr.mxu0 0.0
        %1712 = vmatpush1.msra.mxu0 %v1707
        %1713 = vmatprep.subr.mxu0 0.0
        %1714 = vmatpush1.msra.mxu0 0.0
        %1715 = vmatprep.subr.mxu0 0.0
        %1716 = vmatpush1.msra.mxu0 0.0
        %1717 = vmatprep.subr.mxu0 0.0
        %1718 = vmatpush1.msra.mxu0 0.0
        %1719 = vmatprep.subr.mxu0 0.0
        %1720 = vmatpush1.msra.mxu0 0.0
        %1721 = vmatprep.subr.mxu0 0.0
        %1722 = vmatpush1.msra.mxu0 0.0
        %1723 = vmatprep.subr.mxu0 0.0
        %1724 = vmatpush1.msra.mxu0 0.0
        %1725 = vmatprep.subr.mxu0 0.0
        %1726 = vmatpush1.msra.mxu0 0.0
        %1727 = vmatprep.subr.mxu0 0.0
        %1728 = vmatpush1.msra.mxu0 0.0
        %1729 = vmatprep.subr.mxu0 0.0
        %1730 = vmatpush1.msra.mxu0 0.0
        %1731 = vmatprep.subr.mxu0 0.0
        %1732 = vmatpush1.msra.mxu0 0.0
        %1733 = vmatprep.subr.mxu0 0.0
        %1734 = vmatpush1.msra.mxu0 0.0
        %1735 = vmatprep.subr.mxu0 0.0
        %1736 = vmatpush1.msra.mxu0 0.0
        %1737 = vmatprep.subr.mxu0 0.0
        %1738 = vmatpush1.msra.mxu0 0.0
        %1739 = vmatprep.subr.mxu0 0.0
        %1740 = vmatpush1.msra.mxu0 0.0
        %1741 = vmatprep.subr.mxu0 0.0
        %1742 = vmatpush1.msra.mxu0 0.0
        %1743 = vmatprep.subr.mxu0 0.0
        %1744 = vmatpush1.msra.mxu0 0.0
        %1745 = vmatprep.subr.mxu0 0.0
        %1746 = vmatpush1.msra.mxu0 0.0
        %1747 = vmatprep.subr.mxu0 0.0
        %1748 = vmatpush1.msra.mxu0 0.0
        %1749 = vmatprep.subr.mxu0 0.0
        %1750 = vmatpush1.msra.mxu0 0.0
        %1751 = vmatprep.subr.mxu0 0.0
        %1752 = vmatpush1.msra.mxu0 0.0
        %1753 = vmatprep.subr.mxu0 0.0
        %1754 = vmatpush1.msra.mxu0 0.0
        %1755 = vmatprep.subr.mxu0 0.0
        %1756 = vmatpush1.msra.mxu0 0.0
        %1757 = vmatprep.subr.mxu0 0.0
        %1758 = vmatpush1.msra.mxu0 0.0
        %1759 = vmatprep.subr.mxu0 0.0
        %1760 = vmatpush1.msra.mxu0 0.0
        %1761 = vmatprep.subr.mxu0 0.0
        %1762 = vmatpush1.msra.mxu0 0.0
        %1763 = vmatprep.subr.mxu0 0.0
        %1764 = vmatpush1.msra.mxu0 0.0
        %1765 = vmatprep.subr.mxu0 0.0
        %1766 = vmatpush1.msra.mxu0 0.0
        %1767 = vmatprep.subr.mxu0 0.0
        %1768 = vmatpush1.msra.mxu0 0.0
        %1769 = vmatprep.subr.mxu0 0.0
        %1770 = vmatpush1.msra.mxu0 0.0
        %1771 = vmatprep.subr.mxu0 0.0
        %1772 = vmatpush1.msra.mxu0 0.0
        %1773 = vmatprep.mubr.f32.mxu0 0.0
        %1774 = vmatmul.mubr.f32.gmra.mrb[0].mxu0 %v1680
        %v1775 = vpop.f32.mrb[0].mxu0
        %v1776 = vadd.f32 0.0, %v1775
        %v1777 = vpop.f32.mrb[0].mxu0
        %1778 = vmatprep.mubr.f32.mxu0 0.0
        %1779 = vmatmul.mubr.f32.gmra.mrb[0].mxu0 %v1682
        %v1780 = vpop.f32.mrb[0].mxu0
        %v1781 = vadd.f32 0.0, %v1780
        %v1782 = vpop.f32.mrb[0].mxu0
        %1783 = vmatprep.mubr.f32.mxu0 0.0
        %1784 = vmatmul.mubr.f32.gmra.mrb[0].mxu0 %v1684
        %v1785 = vpop.f32.mrb[0].mxu0
        %v1786 = vadd.f32 0.0, %v1785
        %v1787 = vpop.f32.mrb[0].mxu0
        %1788 = vmatprep.mubr.f32.mxu0 0.0
        %1789 = vmatmul.mubr.f32.gmra.mrb[0].mxu0 %v1686
        %v1790 = vpop.f32.mrb[0].mxu0
        %v1791 = vadd.f32 0.0, %v1790
        %v1792 = vpop.f32.mrb[0].mxu0
        %1793 = vmatprep.mubr.f32.mxu0 0.0
        %1794 = vmatmul.mubr.f32.gmra.mrb[0].mxu0 %v1688
        %v1795 = vpop.f32.mrb[0].mxu0
        %v1796 = vadd.f32 0.0, %v1795
        %v1797 = vpop.f32.mrb[0].mxu0
        %1798 = vmatprep.mubr.f32.mxu0 0.0
        %1799 = vmatmul.mubr.f32.gmra.mrb[0].mxu0 %v1690
        %v1800 = vpop.f32.mrb[0].mxu0
        %v1801 = vadd.f32 0.0, %v1800
        %v1802 = vpop.f32.mrb[0].mxu0
        %1803 = vmatprep.mubr.f32.mxu0 0.0
        %1804 = vmatmul.mubr.f32.gmra.mrb[0].mxu0 %v1692
        %v1805 = vpop.f32.mrb[0].mxu0
        %v1806 = vadd.f32 0.0, %v1805
        %v1807 = vpop.f32.mrb[0].mxu0
        %1808 = vmatprep.mubr.f32.mxu0 0.0
        %1809 = vmatmul.mubr.f32.gmra.mrb[0].mxu0 %v1694
        %v1810 = vpop.f32.mrb[0].mxu0
        %v1811 = vadd.f32 0.0, %v1810
        %v1812 = vpop.f32.mrb[0].mxu0
        %1813 = vmatprep.mubr.f32.mxu0 0.0
        %1814 = vmatmul.mubr.f32.gmra.mrb[0].mxu0 %v1696
        %v1815 = vpop.f32.mrb[0].mxu0
        %v1816 = vadd.f32 0.0, %v1815
        %v1817 = vpop.f32.mrb[0].mxu0
        %1818 = vmatprep.mubr.f32.mxu0 0.0
        %1819 = vmatmul.mubr.f32.gmra.mrb[0].mxu0 %v1698
        %v1820 = vpop.f32.mrb[0].mxu0
        %v1821 = vadd.f32 0.0, %v1820
        %v1822 = vpop.f32.mrb[0].mxu0
        %1823 = vmatprep.mubr.f32.mxu0 0.0
        %1824 = vmatmul.mubr.f32.gmra.mrb[0].mxu0 %v1700
        %v1825 = vpop.f32.mrb[0].mxu0
        %v1826 = vadd.f32 0.0, %v1825
        %v1827 = vpop.f32.mrb[0].mxu0
        %1828 = vmatprep.mubr.f32.mxu0 0.0
        %1829 = vmatmul.mubr.f32.gmra.mrb[0].mxu0 %v1702
        %v1830 = vpop.f32.mrb[0].mxu0
        %v1831 = vadd.f32 0.0, %v1830
        %v1832 = vpop.f32.mrb[0].mxu0
        %1833 = vmatprep.mubr.f32.mxu0 0.0
        %1834 = vmatmul.mubr.f32.gmra.mrb[0].mxu0 %v1704
        %v1835 = vpop.f32.mrb[0].mxu0
        %v1836 = vadd.f32 0.0, %v1835
        %v1837 = vpop.f32.mrb[0].mxu0
        %1838 = vdwg.mxu0
        %v1839 = vadd.f32 %v1609, %v1776
        %v1840 = vadd.f32 %v1610, %v1781
        %v1841 = vadd.f32 %v1611, %v1786
        %v1842 = vadd.f32 %v1612, %v1791
        %v1843 = vadd.f32 %v1613, %v1796
        %v1844 = vadd.f32 %v1614, %v1801
        %v1845 = vadd.f32 %v1615, %v1806
        %v1846 = vadd.f32 %v1616, %v1811
        %v1847 = vadd.f32 %v1617, %v1816
        %v1848 = vadd.f32 %v1618, %v1821
        %v1849 = vadd.f32 %v1619, %v1826
        %v1850 = vadd.f32 %v1620, %v1831
        %v1851 = vadd.f32 %v1621, %v1836
        %1852 = vst.msk [vmem:[%s756] ss:$8 sm:$0x7] %vm755, 0.0
        %1853 = vst.msk [vmem:[%s756] ss:$8 sm:$0x0] %vm755, 0.0
        %1854 = vst.msk [vmem:[%s759] ss:$8 sm:$0x7] %vm755, 0.0
        %1855 = vst.msk [vmem:[%s759] ss:$8 sm:$0x0] %vm755, 0.0
        %v1856 = vmul.f32 %v1839, %v765
        %v1857 = vmul.f32 %v1840, %v770
        %v1858 = vmul.f32 %v1841, %v775
        %v1859 = vmul.f32 %v1842, %v780
        %v1860 = vmul.f32 %v1843, %v785
        %v1861 = vmul.f32 %v1844, %v790
        %v1862 = vmul.f32 %v1845, %v795
        %v1863 = vmul.f32 %v1846, %v800
        %v1864 = vmul.f32 %v1847, %v805
        %v1865 = vmul.f32 %v1848, %v810
        %v1866 = vmul.f32 %v1849, %v815
        %v1867 = vmul.f32 %v1850, %v820
        %v1868 = vmul.f32 %v1851, %v825
        %v1882 = vrot.slane %v1856, 4
        %v1883 = vrot.slane %v1857, 4
        %v1884 = vsel %vm853, %v1882, %v1883
        %v1885 = vrot.slane %v1858, 4
        %v1886 = vsel %vm853, %v1883, %v1885
        %v1887 = vrot.slane %v1859, 4
        %v1888 = vsel %vm853, %v1885, %v1887
        %v1889 = vrot.slane %v1860, 4
        %v1890 = vsel %vm853, %v1887, %v1889
        %v1891 = vrot.slane %v1861, 4
        %v1892 = vsel %vm853, %v1889, %v1891
        %v1893 = vrot.slane %v1862, 4
        %v1894 = vsel %vm853, %v1891, %v1893
        %v1895 = vrot.slane %v1863, 4
        %v1896 = vsel %vm853, %v1893, %v1895
        %v1897 = vrot.slane %v1864, 4
        %v1898 = vsel %vm853, %v1895, %v1897
        %v1899 = vrot.slane %v1865, 4
        %v1900 = vsel %vm853, %v1897, %v1899
        %v1901 = vrot.slane %v1866, 4
        %v1902 = vsel %vm853, %v1899, %v1901
        %v1903 = vrot.slane %v1867, 4
        %v1904 = vsel %vm853, %v1901, %v1903
        %v1905 = vrot.slane %v1868, 4
        %v1906 = vsel %vm853, %v1903, %v1905
        %vm1920 = vcmask 261124
        %1921 = vst.msk [vmem:[#allocation2 + $0x18] sm:$0xf0] %vm1920, %v1882
        %vm1922 = vcmask 261120
        %1923 = vst.msk [vmem:[#allocation2 + $0x30] sm:$0xff] %vm1922, %v1884
        %1924 = vst.msk [vmem:[#allocation2 + $0x48] sm:$0xff] %vm1922, %v1886
        %1925 = vst.msk [vmem:[#allocation2 + $0x60] sm:$0xff] %vm1922, %v1888
        %1926 = vst.msk [vmem:[#allocation2 + $0x78] sm:$0xff] %vm1922, %v1890
        %1927 = vst.msk [vmem:[#allocation2 + $0x90] sm:$0xff] %vm1922, %v1892
        %1928 = vst.msk [vmem:[#allocation2 + $0xa8] sm:$0xff] %vm1922, %v1894
        %1929 = vst.msk [vmem:[#allocation2 + $0xc0] sm:$0xff] %vm1922, %v1896
        %1930 = vst.msk [vmem:[#allocation2 + $0xd8] sm:$0xff] %vm1922, %v1898
        %1931 = vst.msk [vmem:[#allocation2 + $0xf0] sm:$0xff] %vm1922, %v1900
        %1932 = vst.msk [vmem:[#allocation2 + $0x108] sm:$0xff] %vm1922, %v1902
        %1933 = vst.msk [vmem:[#allocation2 + $0x120] sm:$0xff] %vm1922, %v1904
        %1934 = vst.msk [vmem:[#allocation2 + $0x138] sm:$0xff] %vm1922, %v1906
        %v1948 = vrot.slane %v1839, 5
        %v1949 = vrot.slane %v1840, 5
        %v1950 = vsel %vm920, %v1948, %v1949
        %v1951 = vrot.slane %v1841, 5
        %v1952 = vsel %vm920, %v1949, %v1951
        %v1953 = vrot.slane %v1842, 5
        %v1954 = vsel %vm920, %v1951, %v1953
        %v1955 = vrot.slane %v1843, 5
        %v1956 = vsel %vm920, %v1953, %v1955
        %v1957 = vrot.slane %v1844, 5
        %v1958 = vsel %vm920, %v1955, %v1957
        %v1959 = vrot.slane %v1845, 5
        %v1960 = vsel %vm920, %v1957, %v1959
        %v1961 = vrot.slane %v1846, 5
        %v1962 = vsel %vm920, %v1959, %v1961
        %v1963 = vrot.slane %v1847, 5
        %v1964 = vsel %vm920, %v1961, %v1963
        %v1965 = vrot.slane %v1848, 5
        %v1966 = vsel %vm920, %v1963, %v1965
        %v1967 = vrot.slane %v1849, 5
        %v1968 = vsel %vm920, %v1965, %v1967
        %v1969 = vrot.slane %v1850, 5
        %v1970 = vsel %vm920, %v1967, %v1969
        %v1971 = vrot.slane %v1851, 5
        %v1972 = vsel %vm920, %v1969, %v1971
        %1973 = vrot.lane.b32.xlu0 %v1948, 32
        %v1974 = vpop.permute.xlu0 %1973
        %1975 = vrot.lane.b32.xlu0 %v1950, 32
        %v1976 = vpop.permute.xlu0 %1975
        %1977 = vrot.lane.b32.xlu0 %v1952, 32
        %v1978 = vpop.permute.xlu0 %1977
        %1979 = vrot.lane.b32.xlu0 %v1954, 32
        %v1980 = vpop.permute.xlu0 %1979
        %1981 = vrot.lane.b32.xlu0 %v1956, 32
        %v1982 = vpop.permute.xlu0 %1981
        %1983 = vrot.lane.b32.xlu0 %v1958, 32
        %v1984 = vpop.permute.xlu0 %1983
        %1985 = vrot.lane.b32.xlu0 %v1960, 32
        %v1986 = vpop.permute.xlu0 %1985
        %1987 = vrot.lane.b32.xlu0 %v1962, 32
        %v1988 = vpop.permute.xlu0 %1987
        %1989 = vrot.lane.b32.xlu0 %v1964, 32
        %v1990 = vpop.permute.xlu0 %1989
        %1991 = vrot.lane.b32.xlu0 %v1966, 32
        %v1992 = vpop.permute.xlu0 %1991
        %1993 = vrot.lane.b32.xlu0 %v1968, 32
        %v1994 = vpop.permute.xlu0 %1993
        %1995 = vrot.lane.b32.xlu0 %v1970, 32
        %v1996 = vpop.permute.xlu0 %1995
        %1997 = vrot.lane.b32.xlu0 %v1972, 32
        %v1998 = vpop.permute.xlu0 %1997
        %vm2012 = vcmask 523523
        %2013 = vst.msk [vmem:[#allocation2 + $0x18] sm:$0xf8] %vm2012, %v1974
        %vm2014 = vcmask 523520
        %2015 = vst.msk [vmem:[#allocation2 + $0x30] sm:$0xff] %vm2014, %v1976
        %2016 = vst.msk [vmem:[#allocation2 + $0x48] sm:$0xff] %vm2014, %v1978
        %2017 = vst.msk [vmem:[#allocation2 + $0x60] sm:$0xff] %vm2014, %v1980
        %2018 = vst.msk [vmem:[#allocation2 + $0x78] sm:$0xff] %vm2014, %v1982
        %2019 = vst.msk [vmem:[#allocation2 + $0x90] sm:$0xff] %vm2014, %v1984
        %2020 = vst.msk [vmem:[#allocation2 + $0xa8] sm:$0xff] %vm2014, %v1986
        %2021 = vst.msk [vmem:[#allocation2 + $0xc0] sm:$0xff] %vm2014, %v1988
        %2022 = vst.msk [vmem:[#allocation2 + $0xd8] sm:$0xff] %vm2014, %v1990
        %2023 = vst.msk [vmem:[#allocation2 + $0xf0] sm:$0xff] %vm2014, %v1992
        %2024 = vst.msk [vmem:[#allocation2 + $0x108] sm:$0xff] %vm2014, %v1994
        %2025 = vst.msk [vmem:[#allocation2 + $0x120] sm:$0xff] %vm2014, %v1996
        %vm2026 = vcmask 522496
        %2027 = vst.msk [vmem:[#allocation2 + $0x138] sm:$0x7f] %vm2026, %v1998
        %v2028 = vmul.f32 %v1839, %v1003
        %v2029 = vmul.f32 %v1840, %v1007
        %v2030 = vmul.f32 %v1841, %v1011
        %v2031 = vmul.f32 %v1842, %v1015
        %v2032 = vmul.f32 %v1843, %v1019
        %v2033 = vmul.f32 %v1844, %v1023
        %v2034 = vmul.f32 %v1845, %v1027
        %v2035 = vmul.f32 %v1846, %v1031
        %v2036 = vmul.f32 %v1847, %v1035
        %v2037 = vmul.f32 %v1848, %v1039
        %v2038 = vmul.f32 %v1849, %v1043
        %v2039 = vmul.f32 %v1850, %v1047
        %v2040 = vmul.f32 %v1851, %v1051
        %v2054 = vrot.slane %v2028, 6
        %v2055 = vrot.slane %v2029, 6
        %v2056 = vsel %vm1079, %v2054, %v2055
        %v2057 = vrot.slane %v2030, 6
        %v2058 = vsel %vm1079, %v2055, %v2057
        %v2059 = vrot.slane %v2031, 6
        %v2060 = vsel %vm1079, %v2057, %v2059
        %v2061 = vrot.slane %v2032, 6
        %v2062 = vsel %vm1079, %v2059, %v2061
        %v2063 = vrot.slane %v2033, 6
        %v2064 = vsel %vm1079, %v2061, %v2063
        %v2065 = vrot.slane %v2034, 6
        %v2066 = vsel %vm1079, %v2063, %v2065
        %v2067 = vrot.slane %v2035, 6
        %v2068 = vsel %vm1079, %v2065, %v2067
        %v2069 = vrot.slane %v2036, 6
        %v2070 = vsel %vm1079, %v2067, %v2069
        %v2071 = vrot.slane %v2037, 6
        %v2072 = vsel %vm1079, %v2069, %v2071
        %v2073 = vrot.slane %v2038, 6
        %v2074 = vsel %vm1079, %v2071, %v2073
        %v2075 = vrot.slane %v2039, 6
        %v2076 = vsel %vm1079, %v2073, %v2075
        %v2077 = vrot.slane %v2040, 6
        %v2078 = vsel %vm1079, %v2075, %v2077
        %2079 = vrot.lane.b32.xlu0 %v2054, 64
        %v2080 = vpop.permute.xlu0 %2079
        %2081 = vrot.lane.b32.xlu0 %v2056, 64
        %v2082 = vpop.permute.xlu0 %2081
        %2083 = vrot.lane.b32.xlu0 %v2058, 64
        %v2084 = vpop.permute.xlu0 %2083
        %2085 = vrot.lane.b32.xlu0 %v2060, 64
        %v2086 = vpop.permute.xlu0 %2085
        %2087 = vrot.lane.b32.xlu0 %v2062, 64
        %v2088 = vpop.permute.xlu0 %2087
        %2089 = vrot.lane.b32.xlu0 %v2064, 64
        %v2090 = vpop.permute.xlu0 %2089
        %2091 = vrot.lane.b32.xlu0 %v2066, 64
        %v2092 = vpop.permute.xlu0 %2091
        %2093 = vrot.lane.b32.xlu0 %v2068, 64
        %v2094 = vpop.permute.xlu0 %2093
        %2095 = vrot.lane.b32.xlu0 %v2070, 64
        %v2096 = vpop.permute.xlu0 %2095
        %2097 = vrot.lane.b32.xlu0 %v2072, 64
        %v2098 = vpop.permute.xlu0 %2097
        %2099 = vrot.lane.b32.xlu0 %v2074, 64
        %v2100 = vpop.permute.xlu0 %2099
        %2101 = vrot.lane.b32.xlu0 %v2076, 64
        %v2102 = vpop.permute.xlu0 %2101
        %2103 = vrot.lane.b32.xlu0 %v2078, 64
        %v2104 = vpop.permute.xlu0 %2103
        %vm2118 = vcmask 785922
        %2119 = vst.msk [vmem:[#allocation2 + $0x18] sm:$0xfc] %vm2118, %v2080
        %vm2120 = vcmask 785920
        %2121 = vst.msk [vmem:[#allocation2 + $0x30] sm:$0xff] %vm2120, %v2082
        %2122 = vst.msk [vmem:[#allocation2 + $0x48] sm:$0xff] %vm2120, %v2084
        %2123 = vst.msk [vmem:[#allocation2 + $0x60] sm:$0xff] %vm2120, %v2086
        %2124 = vst.msk [vmem:[#allocation2 + $0x78] sm:$0xff] %vm2120, %v2088
        %2125 = vst.msk [vmem:[#allocation2 + $0x90] sm:$0xff] %vm2120, %v2090
        %2126 = vst.msk [vmem:[#allocation2 + $0xa8] sm:$0xff] %vm2120, %v2092
        %2127 = vst.msk [vmem:[#allocation2 + $0xc0] sm:$0xff] %vm2120, %v2094
        %2128 = vst.msk [vmem:[#allocation2 + $0xd8] sm:$0xff] %vm2120, %v2096
        %2129 = vst.msk [vmem:[#allocation2 + $0xf0] sm:$0xff] %vm2120, %v2098
        %2130 = vst.msk [vmem:[#allocation2 + $0x108] sm:$0xff] %vm2120, %v2100
        %2131 = vst.msk [vmem:[#allocation2 + $0x120] sm:$0xff] %vm2120, %v2102
        %vm2132 = vcmask 783872
        %2133 = vst.msk [vmem:[#allocation2 + $0x138] sm:$0x3f] %vm2132, %v2104
        %v2134 = vld [vmem:[%s6] sm:$0x1]
        %v2136 = vlaneseq
        %v2137 = vshrl.u32 %v2136, 7
        %v2138 = vsub.s32 0, %v2137
        %v2139 = vrot.slane %v2134, %v2138
        %v2141 = vld [vmem:[#allocation2] sm:$0xfe]
        %v2142 = vld [vmem:[#allocation2 + $0x18] sm:$0xff]
        %v2143 = vld [vmem:[#allocation2 + $0x30] sm:$0xff]
        %v2144 = vld [vmem:[#allocation2 + $0x48] sm:$0xff]
        %v2145 = vld [vmem:[#allocation2 + $0x60] sm:$0xff]
        %v2146 = vld [vmem:[#allocation2 + $0x78] sm:$0xff]
        %v2147 = vld [vmem:[#allocation2 + $0x90] sm:$0xff]
        %v2148 = vld [vmem:[#allocation2 + $0xa8] sm:$0xff]
        %v2149 = vld [vmem:[#allocation2 + $0xc0] sm:$0xff]
        %v2150 = vld [vmem:[#allocation2 + $0xd8] sm:$0xff]
        %v2151 = vld [vmem:[#allocation2 + $0xf0] sm:$0xff]
        %v2152 = vld [vmem:[#allocation2 + $0x108] sm:$0xff]
        %v2153 = vld [vmem:[#allocation2 + $0x120] sm:$0x1f]
        %v2154 = vld [vmem:[#allocation3] sm:$0xff]
        %v2155 = vld [vmem:[#allocation3 + $0x8] sm:$0xff]
        %v2156 = vld [vmem:[#allocation3 + $0x10] sm:$0xff]
        %v2157 = vld [vmem:[#allocation3 + $0x18] sm:$0xff]
        %v2158 = vld [vmem:[#allocation3 + $0x20] sm:$0xff]
        %v2159 = vld [vmem:[#allocation3 + $0x28] sm:$0xff]
        %v2160 = vld [vmem:[#allocation3 + $0x30] sm:$0xff]
        %v2161 = vld [vmem:[#allocation3 + $0x38] sm:$0xff]
        %v2162 = vld [vmem:[#allocation3 + $0x40] sm:$0xff]
        %v2163 = vld [vmem:[#allocation3 + $0x48] sm:$0xff]
        %v2164 = vld [vmem:[#allocation3 + $0x50] sm:$0xff]
        %v2165 = vld [vmem:[#allocation3 + $0x58] sm:$0xff]
        %v2179 = vrot.slane %v2141, 1
        %v2180 = vrot.slane %v2142, 1
        %v2181 = vsel %vm1195, %v2179, %v2180
        %v2182 = vrot.slane %v2143, 1
        %v2183 = vsel %vm1195, %v2180, %v2182
        %v2184 = vrot.slane %v2144, 1
        %v2185 = vsel %vm1195, %v2182, %v2184
        %v2186 = vrot.slane %v2145, 1
        %v2187 = vsel %vm1195, %v2184, %v2186
        %v2188 = vrot.slane %v2146, 1
        %v2189 = vsel %vm1195, %v2186, %v2188
        %v2190 = vrot.slane %v2147, 1
        %v2191 = vsel %vm1195, %v2188, %v2190
        %v2192 = vrot.slane %v2148, 1
        %v2193 = vsel %vm1195, %v2190, %v2192
        %v2194 = vrot.slane %v2149, 1
        %v2195 = vsel %vm1195, %v2192, %v2194
        %v2196 = vrot.slane %v2150, 1
        %v2197 = vsel %vm1195, %v2194, %v2196
        %v2198 = vrot.slane %v2151, 1
        %v2199 = vsel %vm1195, %v2196, %v2198
        %v2200 = vrot.slane %v2152, 1
        %v2201 = vsel %vm1195, %v2198, %v2200
        %v2202 = vrot.slane %v2153, 1
        %v2203 = vsel %vm1195, %v2200, %v2202
        %vm2204 = vcmask 785408
        %v2205 = vsel %vm2204, %v2181, 0
        %v2207 = vsel %vm2204, %v2183, 0
        %v2209 = vsel %vm2204, %v2185, 0
        %v2211 = vsel %vm2204, %v2187, 0
        %v2213 = vsel %vm2204, %v2189, 0
        %v2215 = vsel %vm2204, %v2191, 0
        %v2217 = vsel %vm2204, %v2193, 0
        %v2219 = vsel %vm2204, %v2195, 0
        %v2221 = vsel %vm2204, %v2197, 0
        %v2223 = vsel %vm2204, %v2199, 0
        %v2225 = vsel %vm2204, %v2201, 0
        %v2227 = vsel %vm2204, %v2203, 0
        %v2229 = vsel %vm2204, %v2202, 0
        %2231 = vmatprep.subr.mxu0 0.0
        %2232 = vmatpush1.msra.mxu0 %v2154
        %2233 = vmatprep.subr.mxu0 0.0
        %2234 = vmatpush1.msra.mxu0 %v2155
        %2235 = vmatprep.subr.mxu0 0.0
        %2236 = vmatpush1.msra.mxu0 %v2156
        %2237 = vmatprep.subr.mxu0 0.0
        %2238 = vmatpush1.msra.mxu0 %v2157
        %2239 = vmatprep.subr.mxu0 0.0
        %2240 = vmatpush1.msra.mxu0 %v2158
        %2241 = vmatprep.subr.mxu0 0.0
        %2242 = vmatpush1.msra.mxu0 %v2159
        %2243 = vmatprep.subr.mxu0 0.0
        %2244 = vmatpush1.msra.mxu0 %v2160
        %2245 = vmatprep.subr.mxu0 0.0
        %2246 = vmatpush1.msra.mxu0 %v2161
        %2247 = vmatprep.subr.mxu0 0.0
        %2248 = vmatpush1.msra.mxu0 %v2162
        %2249 = vmatprep.subr.mxu0 0.0
        %2250 = vmatpush1.msra.mxu0 %v2163
        %2251 = vmatprep.subr.mxu0 0.0
        %2252 = vmatpush1.msra.mxu0 %v2164
        %2253 = vmatprep.subr.mxu0 0.0
        %2254 = vmatpush1.msra.mxu0 %v2165
        %2255 = vmatprep.subr.mxu0 0.0
        %2256 = vmatpush1.msra.mxu0 0.0
        %2257 = vmatprep.subr.mxu0 0.0
        %2258 = vmatpush1.msra.mxu0 0.0
        %2259 = vmatprep.subr.mxu0 0.0
        %2260 = vmatpush1.msra.mxu0 0.0
        %2261 = vmatprep.subr.mxu0 0.0
        %2262 = vmatpush1.msra.mxu0 0.0
        %2263 = vmatprep.subr.mxu0 0.0
        %2264 = vmatpush1.msra.mxu0 0.0
        %2265 = vmatprep.subr.mxu0 0.0
        %2266 = vmatpush1.msra.mxu0 0.0
        %2267 = vmatprep.subr.mxu0 0.0
        %2268 = vmatpush1.msra.mxu0 0.0
        %2269 = vmatprep.subr.mxu0 0.0
        %2270 = vmatpush1.msra.mxu0 0.0
        %2271 = vmatprep.subr.mxu0 0.0
        %2272 = vmatpush1.msra.mxu0 0.0
        %2273 = vmatprep.subr.mxu0 0.0
        %2274 = vmatpush1.msra.mxu0 0.0
        %2275 = vmatprep.subr.mxu0 0.0
        %2276 = vmatpush1.msra.mxu0 0.0
        %2277 = vmatprep.subr.mxu0 0.0
        %2278 = vmatpush1.msra.mxu0 0.0
        %2279 = vmatprep.subr.mxu0 0.0
        %2280 = vmatpush1.msra.mxu0 0.0
        %2281 = vmatprep.subr.mxu0 0.0
        %2282 = vmatpush1.msra.mxu0 0.0
        %2283 = vmatprep.subr.mxu0 0.0
        %2284 = vmatpush1.msra.mxu0 0.0
        %2285 = vmatprep.subr.mxu0 0.0
        %2286 = vmatpush1.msra.mxu0 0.0
        %2287 = vmatprep.subr.mxu0 0.0
        %2288 = vmatpush1.msra.mxu0 0.0
        %2289 = vmatprep.subr.mxu0 0.0
        %2290 = vmatpush1.msra.mxu0 0.0
        %2291 = vmatprep.subr.mxu0 0.0
        %2292 = vmatpush1.msra.mxu0 0.0
        %2293 = vmatprep.subr.mxu0 0.0
        %2294 = vmatpush1.msra.mxu0 0.0
        %2295 = vmatprep.mubr.f32.mxu0 0.0
        %2296 = vmatmul.mubr.f32.gmra.mrb[0].mxu0 %v2205
        %v2297 = vpop.f32.mrb[0].mxu0
        %v2298 = vadd.f32 0.0, %v2297
        %v2299 = vpop.f32.mrb[0].mxu0
        %2300 = vmatprep.mubr.f32.mxu0 0.0
        %2301 = vmatmul.mubr.f32.gmra.mrb[0].mxu0 %v2207
        %v2302 = vpop.f32.mrb[0].mxu0
        %v2303 = vadd.f32 0.0, %v2302
        %v2304 = vpop.f32.mrb[0].mxu0
        %2305 = vmatprep.mubr.f32.mxu0 0.0
        %2306 = vmatmul.mubr.f32.gmra.mrb[0].mxu0 %v2209
        %v2307 = vpop.f32.mrb[0].mxu0
        %v2308 = vadd.f32 0.0, %v2307
        %v2309 = vpop.f32.mrb[0].mxu0
        %2310 = vmatprep.mubr.f32.mxu0 0.0
        %2311 = vmatmul.mubr.f32.gmra.mrb[0].mxu0 %v2211
        %v2312 = vpop.f32.mrb[0].mxu0
        %v2313 = vadd.f32 0.0, %v2312
        %v2314 = vpop.f32.mrb[0].mxu0
        %2315 = vmatprep.mubr.f32.mxu0 0.0
        %2316 = vmatmul.mubr.f32.gmra.mrb[0].mxu0 %v2213
        %v2317 = vpop.f32.mrb[0].mxu0
        %v2318 = vadd.f32 0.0, %v2317
        %v2319 = vpop.f32.mrb[0].mxu0
        %2320 = vmatprep.mubr.f32.mxu0 0.0
        %2321 = vmatmul.mubr.f32.gmra.mrb[0].mxu0 %v2215
        %v2322 = vpop.f32.mrb[0].mxu0
        %v2323 = vadd.f32 0.0, %v2322
        %v2324 = vpop.f32.mrb[0].mxu0
        %2325 = vmatprep.mubr.f32.mxu0 0.0
        %2326 = vmatmul.mubr.f32.gmra.mrb[0].mxu0 %v2217
        %v2327 = vpop.f32.mrb[0].mxu0
        %v2328 = vadd.f32 0.0, %v2327
        %v2329 = vpop.f32.mrb[0].mxu0
        %2330 = vmatprep.mubr.f32.mxu0 0.0
        %2331 = vmatmul.mubr.f32.gmra.mrb[0].mxu0 %v2219
        %v2332 = vpop.f32.mrb[0].mxu0
        %v2333 = vadd.f32 0.0, %v2332
        %v2334 = vpop.f32.mrb[0].mxu0
        %2335 = vmatprep.mubr.f32.mxu0 0.0
        %2336 = vmatmul.mubr.f32.gmra.mrb[0].mxu0 %v2221
        %v2337 = vpop.f32.mrb[0].mxu0
        %v2338 = vadd.f32 0.0, %v2337
        %v2339 = vpop.f32.mrb[0].mxu0
        %2340 = vmatprep.mubr.f32.mxu0 0.0
        %2341 = vmatmul.mubr.f32.gmra.mrb[0].mxu0 %v2223
        %v2342 = vpop.f32.mrb[0].mxu0
        %v2343 = vadd.f32 0.0, %v2342
        %v2344 = vpop.f32.mrb[0].mxu0
        %2345 = vmatprep.mubr.f32.mxu0 0.0
        %2346 = vmatmul.mubr.f32.gmra.mrb[0].mxu0 %v2225
        %v2347 = vpop.f32.mrb[0].mxu0
        %v2348 = vadd.f32 0.0, %v2347
        %v2349 = vpop.f32.mrb[0].mxu0
        %2350 = vmatprep.mubr.f32.mxu0 0.0
        %2351 = vmatmul.mubr.f32.gmra.mrb[0].mxu0 %v2227
        %v2352 = vpop.f32.mrb[0].mxu0
        %v2353 = vadd.f32 0.0, %v2352
        %v2354 = vpop.f32.mrb[0].mxu0
        %2355 = vmatprep.mubr.f32.mxu0 0.0
        %2356 = vmatmul.mubr.f32.gmra.mrb[0].mxu0 %v2229
        %v2357 = vpop.f32.mrb[0].mxu0
        %v2358 = vadd.f32 0.0, %v2357
        %v2359 = vpop.f32.mrb[0].mxu0
        %2360 = vdwg.mxu0
        %v2361 = vadd.f32 %v2139, %v2298
        %v2362 = vadd.f32 %v2139, %v2303
        %v2363 = vadd.f32 %v2139, %v2308
        %v2364 = vadd.f32 %v2139, %v2313
        %v2365 = vadd.f32 %v2139, %v2318
        %v2366 = vadd.f32 %v2139, %v2323
        %v2367 = vadd.f32 %v2139, %v2328
        %v2368 = vadd.f32 %v2139, %v2333
        %v2369 = vadd.f32 %v2139, %v2338
        %v2370 = vadd.f32 %v2139, %v2343
        %v2371 = vadd.f32 %v2139, %v2348
        %v2372 = vadd.f32 %v2139, %v2353
        %v2373 = vadd.f32 %v2139, %v2358
        %v2374 = vld [vmem:[#allocation2 + $0x18] sm:$0xf8]
        %v2375 = vld [vmem:[#allocation2 + $0x30] sm:$0xff]
        %v2376 = vld [vmem:[#allocation2 + $0x48] sm:$0xff]
        %v2377 = vld [vmem:[#allocation2 + $0x60] sm:$0xff]
        %v2378 = vld [vmem:[#allocation2 + $0x78] sm:$0xff]
        %v2379 = vld [vmem:[#allocation2 + $0x90] sm:$0xff]
        %v2380 = vld [vmem:[#allocation2 + $0xa8] sm:$0xff]
        %v2381 = vld [vmem:[#allocation2 + $0xc0] sm:$0xff]
        %v2382 = vld [vmem:[#allocation2 + $0xd8] sm:$0xff]
        %v2383 = vld [vmem:[#allocation2 + $0xf0] sm:$0xff]
        %v2384 = vld [vmem:[#allocation2 + $0x108] sm:$0xff]
        %v2385 = vld [vmem:[#allocation2 + $0x120] sm:$0xff]
        %v2386 = vld [vmem:[#allocation2 + $0x138] sm:$0x7f]
        %s2387 = scalar_lea.vmem [#allocation3], 96
        %v2388 = vld [vmem:[%s2387] sm:$0xff]
        %v2389 = vld [vmem:[%s2387 + $0x8] sm:$0xff]
        %v2390 = vld [vmem:[%s2387 + $0x10] sm:$0xff]
        %v2391 = vld [vmem:[%s2387 + $0x18] sm:$0xff]
        %v2392 = vld [vmem:[%s2387 + $0x20] sm:$0xff]
        %v2393 = vld [vmem:[%s2387 + $0x28] sm:$0xff]
        %v2394 = vld [vmem:[%s2387 + $0x30] sm:$0xff]
        %v2395 = vld [vmem:[%s2387 + $0x38] sm:$0xff]
        %v2396 = vld [vmem:[%s2387 + $0x40] sm:$0xff]
        %v2397 = vld [vmem:[%s2387 + $0x48] sm:$0xff]
        %v2398 = vld [vmem:[%s2387 + $0x50] sm:$0xff]
        %v2399 = vld [vmem:[%s2387 + $0x58] sm:$0xff]
        %v2413 = vrot.slane %v2374, 3
        %v2414 = vrot.slane %v2375, 3
        %v2415 = vsel %vm1424, %v2413, %v2414
        %v2416 = vrot.slane %v2376, 3
        %v2417 = vsel %vm1424, %v2414, %v2416
        %v2418 = vrot.slane %v2377, 3
        %v2419 = vsel %vm1424, %v2416, %v2418
        %v2420 = vrot.slane %v2378, 3
        %v2421 = vsel %vm1424, %v2418, %v2420
        %v2422 = vrot.slane %v2379, 3
        %v2423 = vsel %vm1424, %v2420, %v2422
        %v2424 = vrot.slane %v2380, 3
        %v2425 = vsel %vm1424, %v2422, %v2424
        %v2426 = vrot.slane %v2381, 3
        %v2427 = vsel %vm1424, %v2424, %v2426
        %v2428 = vrot.slane %v2382, 3
        %v2429 = vsel %vm1424, %v2426, %v2428
        %v2430 = vrot.slane %v2383, 3
        %v2431 = vsel %vm1424, %v2428, %v2430
        %v2432 = vrot.slane %v2384, 3
        %v2433 = vsel %vm1424, %v2430, %v2432
        %v2434 = vrot.slane %v2385, 3
        %v2435 = vsel %vm1424, %v2432, %v2434
        %v2436 = vrot.slane %v2386, 3
        %v2437 = vsel %vm1424, %v2434, %v2436
        %v2438 = vsel %vm2204, %v2415, 0
        %v2440 = vsel %vm2204, %v2417, 0
        %v2442 = vsel %vm2204, %v2419, 0
        %v2444 = vsel %vm2204, %v2421, 0
        %v2446 = vsel %vm2204, %v2423, 0
        %v2448 = vsel %vm2204, %v2425, 0
        %v2450 = vsel %vm2204, %v2427, 0
        %v2452 = vsel %vm2204, %v2429, 0
        %v2454 = vsel %vm2204, %v2431, 0
        %v2456 = vsel %vm2204, %v2433, 0
        %v2458 = vsel %vm2204, %v2435, 0
        %v2460 = vsel %vm2204, %v2437, 0
        %v2462 = vsel %vm2204, %v2436, 0
        %2464 = vmatprep.subr.mxu0 0.0
        %2465 = vmatpush1.msra.mxu0 %v2388
        %2466 = vmatprep.subr.mxu0 0.0
        %2467 = vmatpush1.msra.mxu0 %v2389
        %2468 = vmatprep.subr.mxu0 0.0
        %2469 = vmatpush1.msra.mxu0 %v2390
        %2470 = vmatprep.subr.mxu0 0.0
        %2471 = vmatpush1.msra.mxu0 %v2391
        %2472 = vmatprep.subr.mxu0 0.0
        %2473 = vmatpush1.msra.mxu0 %v2392
        %2474 = vmatprep.subr.mxu0 0.0
        %2475 = vmatpush1.msra.mxu0 %v2393
        %2476 = vmatprep.subr.mxu0 0.0
        %2477 = vmatpush1.msra.mxu0 %v2394
        %2478 = vmatprep.subr.mxu0 0.0
        %2479 = vmatpush1.msra.mxu0 %v2395
        %2480 = vmatprep.subr.mxu0 0.0
        %2481 = vmatpush1.msra.mxu0 %v2396
        %2482 = vmatprep.subr.mxu0 0.0
        %2483 = vmatpush1.msra.mxu0 %v2397
        %2484 = vmatprep.subr.mxu0 0.0
        %2485 = vmatpush1.msra.mxu0 %v2398
        %2486 = vmatprep.subr.mxu0 0.0
        %2487 = vmatpush1.msra.mxu0 %v2399
        %2488 = vmatprep.subr.mxu0 0.0
        %2489 = vmatpush1.msra.mxu0 0.0
        %2490 = vmatprep.subr.mxu0 0.0
        %2491 = vmatpush1.msra.mxu0 0.0
        %2492 = vmatprep.subr.mxu0 0.0
        %2493 = vmatpush1.msra.mxu0 0.0
        %2494 = vmatprep.subr.mxu0 0.0
        %2495 = vmatpush1.msra.mxu0 0.0
        %2496 = vmatprep.subr.mxu0 0.0
        %2497 = vmatpush1.msra.mxu0 0.0
        %2498 = vmatprep.subr.mxu0 0.0
        %2499 = vmatpush1.msra.mxu0 0.0
        %2500 = vmatprep.subr.mxu0 0.0
        %2501 = vmatpush1.msra.mxu0 0.0
        %2502 = vmatprep.subr.mxu0 0.0
        %2503 = vmatpush1.msra.mxu0 0.0
        %2504 = vmatprep.subr.mxu0 0.0
        %2505 = vmatpush1.msra.mxu0 0.0
        %2506 = vmatprep.subr.mxu0 0.0
        %2507 = vmatpush1.msra.mxu0 0.0
        %2508 = vmatprep.subr.mxu0 0.0
        %2509 = vmatpush1.msra.mxu0 0.0
        %2510 = vmatprep.subr.mxu0 0.0
        %2511 = vmatpush1.msra.mxu0 0.0
        %2512 = vmatprep.subr.mxu0 0.0
        %2513 = vmatpush1.msra.mxu0 0.0
        %2514 = vmatprep.subr.mxu0 0.0
        %2515 = vmatpush1.msra.mxu0 0.0
        %2516 = vmatprep.subr.mxu0 0.0
        %2517 = vmatpush1.msra.mxu0 0.0
        %2518 = vmatprep.subr.mxu0 0.0
        %2519 = vmatpush1.msra.mxu0 0.0
        %2520 = vmatprep.subr.mxu0 0.0
        %2521 = vmatpush1.msra.mxu0 0.0
        %2522 = vmatprep.subr.mxu0 0.0
        %2523 = vmatpush1.msra.mxu0 0.0
        %2524 = vmatprep.subr.mxu0 0.0
        %2525 = vmatpush1.msra.mxu0 0.0
        %2526 = vmatprep.subr.mxu0 0.0
        %2527 = vmatpush1.msra.mxu0 0.0
        %2528 = vmatprep.mubr.f32.mxu0 0.0
        %2529 = vmatmul.mubr.f32.gmra.mrb[0].mxu0 %v2438
        %v2530 = vpop.f32.mrb[0].mxu0
        %v2531 = vadd.f32 0.0, %v2530
        %v2532 = vpop.f32.mrb[0].mxu0
        %2533 = vmatprep.mubr.f32.mxu0 0.0
        %2534 = vmatmul.mubr.f32.gmra.mrb[0].mxu0 %v2440
        %v2535 = vpop.f32.mrb[0].mxu0
        %v2536 = vadd.f32 0.0, %v2535
        %v2537 = vpop.f32.mrb[0].mxu0
        %2538 = vmatprep.mubr.f32.mxu0 0.0
        %2539 = vmatmul.mubr.f32.gmra.mrb[0].mxu0 %v2442
        %v2540 = vpop.f32.mrb[0].mxu0
        %v2541 = vadd.f32 0.0, %v2540
        %v2542 = vpop.f32.mrb[0].mxu0
        %2543 = vmatprep.mubr.f32.mxu0 0.0
        %2544 = vmatmul.mubr.f32.gmra.mrb[0].mxu0 %v2444
        %v2545 = vpop.f32.mrb[0].mxu0
        %v2546 = vadd.f32 0.0, %v2545
        %v2547 = vpop.f32.mrb[0].mxu0
        %2548 = vmatprep.mubr.f32.mxu0 0.0
        %2549 = vmatmul.mubr.f32.gmra.mrb[0].mxu0 %v2446
        %v2550 = vpop.f32.mrb[0].mxu0
        %v2551 = vadd.f32 0.0, %v2550
        %v2552 = vpop.f32.mrb[0].mxu0
        %2553 = vmatprep.mubr.f32.mxu0 0.0
        %2554 = vmatmul.mubr.f32.gmra.mrb[0].mxu0 %v2448
        %v2555 = vpop.f32.mrb[0].mxu0
        %v2556 = vadd.f32 0.0, %v2555
        %v2557 = vpop.f32.mrb[0].mxu0
        %2558 = vmatprep.mubr.f32.mxu0 0.0
        %2559 = vmatmul.mubr.f32.gmra.mrb[0].mxu0 %v2450
        %v2560 = vpop.f32.mrb[0].mxu0
        %v2561 = vadd.f32 0.0, %v2560
        %v2562 = vpop.f32.mrb[0].mxu0
        %2563 = vmatprep.mubr.f32.mxu0 0.0
        %2564 = vmatmul.mubr.f32.gmra.mrb[0].mxu0 %v2452
        %v2565 = vpop.f32.mrb[0].mxu0
        %v2566 = vadd.f32 0.0, %v2565
        %v2567 = vpop.f32.mrb[0].mxu0
        %2568 = vmatprep.mubr.f32.mxu0 0.0
        %2569 = vmatmul.mubr.f32.gmra.mrb[0].mxu0 %v2454
        %v2570 = vpop.f32.mrb[0].mxu0
        %v2571 = vadd.f32 0.0, %v2570
        %v2572 = vpop.f32.mrb[0].mxu0
        %2573 = vmatprep.mubr.f32.mxu0 0.0
        %2574 = vmatmul.mubr.f32.gmra.mrb[0].mxu0 %v2456
        %v2575 = vpop.f32.mrb[0].mxu0
        %v2576 = vadd.f32 0.0, %v2575
        %v2577 = vpop.f32.mrb[0].mxu0
        %2578 = vmatprep.mubr.f32.mxu0 0.0
        %2579 = vmatmul.mubr.f32.gmra.mrb[0].mxu0 %v2458
        %v2580 = vpop.f32.mrb[0].mxu0
        %v2581 = vadd.f32 0.0, %v2580
        %v2582 = vpop.f32.mrb[0].mxu0
        %2583 = vmatprep.mubr.f32.mxu0 0.0
        %2584 = vmatmul.mubr.f32.gmra.mrb[0].mxu0 %v2460
        %v2585 = vpop.f32.mrb[0].mxu0
        %v2586 = vadd.f32 0.0, %v2585
        %v2587 = vpop.f32.mrb[0].mxu0
        %2588 = vmatprep.mubr.f32.mxu0 0.0
        %2589 = vmatmul.mubr.f32.gmra.mrb[0].mxu0 %v2462
        %v2590 = vpop.f32.mrb[0].mxu0
        %v2591 = vadd.f32 0.0, %v2590
        %v2592 = vpop.f32.mrb[0].mxu0
        %2593 = vdwg.mxu0
        %v2594 = vadd.f32 %v2361, %v2531
        %v2595 = vadd.f32 %v2362, %v2536
        %v2596 = vadd.f32 %v2363, %v2541
        %v2597 = vadd.f32 %v2364, %v2546
        %v2598 = vadd.f32 %v2365, %v2551
        %v2599 = vadd.f32 %v2366, %v2556
        %v2600 = vadd.f32 %v2367, %v2561
        %v2601 = vadd.f32 %v2368, %v2566
        %v2602 = vadd.f32 %v2369, %v2571
        %v2603 = vadd.f32 %v2370, %v2576
        %v2604 = vadd.f32 %v2371, %v2581
        %v2605 = vadd.f32 %v2372, %v2586
        %v2606 = vadd.f32 %v2373, %v2591
        %v2607 = vld [vmem:[#allocation2 + $0x30] sm:$0xe0]
        %v2608 = vld [vmem:[#allocation2 + $0x48] sm:$0xff]
        %v2609 = vld [vmem:[#allocation2 + $0x60] sm:$0xff]
        %v2610 = vld [vmem:[#allocation2 + $0x78] sm:$0xff]
        %v2611 = vld [vmem:[#allocation2 + $0x90] sm:$0xff]
        %v2612 = vld [vmem:[#allocation2 + $0xa8] sm:$0xff]
        %v2613 = vld [vmem:[#allocation2 + $0xc0] sm:$0xff]
        %v2614 = vld [vmem:[#allocation2 + $0xd8] sm:$0xff]
        %v2615 = vld [vmem:[#allocation2 + $0xf0] sm:$0xff]
        %v2616 = vld [vmem:[#allocation2 + $0x108] sm:$0xff]
        %v2617 = vld [vmem:[#allocation2 + $0x120] sm:$0xff]
        %v2618 = vld [vmem:[#allocation2 + $0x138] sm:$0xff]
        %v2619 = vld [vmem:[#allocation2 + $0x150] sm:$0xff]
        %v2620 = vld [vmem:[#allocation2 + $0x168] sm:$0x1]
        %s2621 = scalar_lea.vmem [#allocation3], 192
        %v2622 = vld [vmem:[%s2621] sm:$0xff]
        %v2623 = vld [vmem:[%s2621 + $0x8] sm:$0xff]
        %v2624 = vld [vmem:[%s2621 + $0x10] sm:$0xff]
        %v2625 = vld [vmem:[%s2621 + $0x18] sm:$0xff]
        %v2626 = vld [vmem:[%s2621 + $0x20] sm:$0xff]
        %v2627 = vld [vmem:[%s2621 + $0x28] sm:$0xff]
        %v2628 = vld [vmem:[%s2621 + $0x30] sm:$0xff]
        %v2629 = vld [vmem:[%s2621 + $0x38] sm:$0xff]
        %v2630 = vld [vmem:[%s2621 + $0x40] sm:$0xff]
        %v2631 = vld [vmem:[%s2621 + $0x48] sm:$0xff]
        %v2632 = vld [vmem:[%s2621 + $0x50] sm:$0xff]
        %v2633 = vld [vmem:[%s2621 + $0x58] sm:$0xff]
        %v2648 = vrot.slane %v2607, 5
        %v2649 = vrot.slane %v2608, 5
        %v2650 = vsel %vm920, %v2648, %v2649
        %v2651 = vrot.slane %v2609, 5
        %v2652 = vsel %vm920, %v2649, %v2651
        %v2653 = vrot.slane %v2610, 5
        %v2654 = vsel %vm920, %v2651, %v2653
        %v2655 = vrot.slane %v2611, 5
        %v2656 = vsel %vm920, %v2653, %v2655
        %v2657 = vrot.slane %v2612, 5
        %v2658 = vsel %vm920, %v2655, %v2657
        %v2659 = vrot.slane %v2613, 5
        %v2660 = vsel %vm920, %v2657, %v2659
        %v2661 = vrot.slane %v2614, 5
        %v2662 = vsel %vm920, %v2659, %v2661
        %v2663 = vrot.slane %v2615, 5
        %v2664 = vsel %vm920, %v2661, %v2663
        %v2665 = vrot.slane %v2616, 5
        %v2666 = vsel %vm920, %v2663, %v2665
        %v2667 = vrot.slane %v2617, 5
        %v2668 = vsel %vm920, %v2665, %v2667
        %v2669 = vrot.slane %v2618, 5
        %v2670 = vsel %vm920, %v2667, %v2669
        %v2671 = vrot.slane %v2619, 5
        %v2672 = vsel %vm920, %v2669, %v2671
        %v2673 = vrot.slane %v2620, 5
        %v2674 = vsel %vm920, %v2671, %v2673
        %v2675 = vsel %vm2204, %v2650, 0
        %v2677 = vsel %vm2204, %v2652, 0
        %v2679 = vsel %vm2204, %v2654, 0
        %v2681 = vsel %vm2204, %v2656, 0
        %v2683 = vsel %vm2204, %v2658, 0
        %v2685 = vsel %vm2204, %v2660, 0
        %v2687 = vsel %vm2204, %v2662, 0
        %v2689 = vsel %vm2204, %v2664, 0
        %v2691 = vsel %vm2204, %v2666, 0
        %v2693 = vsel %vm2204, %v2668, 0
        %v2695 = vsel %vm2204, %v2670, 0
        %v2697 = vsel %vm2204, %v2672, 0
        %v2699 = vsel %vm2204, %v2674, 0
        %2701 = vmatprep.subr.mxu0 0.0
        %2702 = vmatpush1.msra.mxu0 %v2622
        %2703 = vmatprep.subr.mxu0 0.0
        %2704 = vmatpush1.msra.mxu0 %v2623
        %2705 = vmatprep.subr.mxu0 0.0
        %2706 = vmatpush1.msra.mxu0 %v2624
        %2707 = vmatprep.subr.mxu0 0.0
        %2708 = vmatpush1.msra.mxu0 %v2625
        %2709 = vmatprep.subr.mxu0 0.0
        %2710 = vmatpush1.msra.mxu0 %v2626
        %2711 = vmatprep.subr.mxu0 0.0
        %2712 = vmatpush1.msra.mxu0 %v2627
        %2713 = vmatprep.subr.mxu0 0.0
        %2714 = vmatpush1.msra.mxu0 %v2628
        %2715 = vmatprep.subr.mxu0 0.0
        %2716 = vmatpush1.msra.mxu0 %v2629
        %2717 = vmatprep.subr.mxu0 0.0
        %2718 = vmatpush1.msra.mxu0 %v2630
        %2719 = vmatprep.subr.mxu0 0.0
        %2720 = vmatpush1.msra.mxu0 %v2631
        %2721 = vmatprep.subr.mxu0 0.0
        %2722 = vmatpush1.msra.mxu0 %v2632
        %2723 = vmatprep.subr.mxu0 0.0
        %2724 = vmatpush1.msra.mxu0 %v2633
        %2725 = vmatprep.subr.mxu0 0.0
        %2726 = vmatpush1.msra.mxu0 0.0
        %2727 = vmatprep.subr.mxu0 0.0
        %2728 = vmatpush1.msra.mxu0 0.0
        %2729 = vmatprep.subr.mxu0 0.0
        %2730 = vmatpush1.msra.mxu0 0.0
        %2731 = vmatprep.subr.mxu0 0.0
        %2732 = vmatpush1.msra.mxu0 0.0
        %2733 = vmatprep.subr.mxu0 0.0
        %2734 = vmatpush1.msra.mxu0 0.0
        %2735 = vmatprep.subr.mxu0 0.0
        %2736 = vmatpush1.msra.mxu0 0.0
        %2737 = vmatprep.subr.mxu0 0.0
        %2738 = vmatpush1.msra.mxu0 0.0
        %2739 = vmatprep.subr.mxu0 0.0
        %2740 = vmatpush1.msra.mxu0 0.0
        %2741 = vmatprep.subr.mxu0 0.0
        %2742 = vmatpush1.msra.mxu0 0.0
        %2743 = vmatprep.subr.mxu0 0.0
        %2744 = vmatpush1.msra.mxu0 0.0
        %2745 = vmatprep.subr.mxu0 0.0
        %2746 = vmatpush1.msra.mxu0 0.0
        %2747 = vmatprep.subr.mxu0 0.0
        %2748 = vmatpush1.msra.mxu0 0.0
        %2749 = vmatprep.subr.mxu0 0.0
        %2750 = vmatpush1.msra.mxu0 0.0
        %2751 = vmatprep.subr.mxu0 0.0
        %2752 = vmatpush1.msra.mxu0 0.0
        %2753 = vmatprep.subr.mxu0 0.0
        %2754 = vmatpush1.msra.mxu0 0.0
        %2755 = vmatprep.subr.mxu0 0.0
        %2756 = vmatpush1.msra.mxu0 0.0
        %2757 = vmatprep.subr.mxu0 0.0
        %2758 = vmatpush1.msra.mxu0 0.0
        %2759 = vmatprep.subr.mxu0 0.0
        %2760 = vmatpush1.msra.mxu0 0.0
        %2761 = vmatprep.subr.mxu0 0.0
        %2762 = vmatpush1.msra.mxu0 0.0
        %2763 = vmatprep.subr.mxu0 0.0
        %2764 = vmatpush1.msra.mxu0 0.0
        %2765 = vmatprep.mubr.f32.mxu0 0.0
        %2766 = vmatmul.mubr.f32.gmra.mrb[0].mxu0 %v2675
        %v2767 = vpop.f32.mrb[0].mxu0
        %v2768 = vadd.f32 0.0, %v2767
        %v2769 = vpop.f32.mrb[0].mxu0
        %2770 = vmatprep.mubr.f32.mxu0 0.0
        %2771 = vmatmul.mubr.f32.gmra.mrb[0].mxu0 %v2677
        %v2772 = vpop.f32.mrb[0].mxu0
        %v2773 = vadd.f32 0.0, %v2772
        %v2774 = vpop.f32.mrb[0].mxu0
        %2775 = vmatprep.mubr.f32.mxu0 0.0
        %2776 = vmatmul.mubr.f32.gmra.mrb[0].mxu0 %v2679
        %v2777 = vpop.f32.mrb[0].mxu0
        %v2778 = vadd.f32 0.0, %v2777
        %v2779 = vpop.f32.mrb[0].mxu0
        %2780 = vmatprep.mubr.f32.mxu0 0.0
        %2781 = vmatmul.mubr.f32.gmra.mrb[0].mxu0 %v2681
        %v2782 = vpop.f32.mrb[0].mxu0
        %v2783 = vadd.f32 0.0, %v2782
        %v2784 = vpop.f32.mrb[0].mxu0
        %2785 = vmatprep.mubr.f32.mxu0 0.0
        %2786 = vmatmul.mubr.f32.gmra.mrb[0].mxu0 %v2683
        %v2787 = vpop.f32.mrb[0].mxu0
        %v2788 = vadd.f32 0.0, %v2787
        %v2789 = vpop.f32.mrb[0].mxu0
        %2790 = vmatprep.mubr.f32.mxu0 0.0
        %2791 = vmatmul.mubr.f32.gmra.mrb[0].mxu0 %v2685
        %v2792 = vpop.f32.mrb[0].mxu0
        %v2793 = vadd.f32 0.0, %v2792
        %v2794 = vpop.f32.mrb[0].mxu0
        %2795 = vmatprep.mubr.f32.mxu0 0.0
        %2796 = vmatmul.mubr.f32.gmra.mrb[0].mxu0 %v2687
        %v2797 = vpop.f32.mrb[0].mxu0
        %v2798 = vadd.f32 0.0, %v2797
        %v2799 = vpop.f32.mrb[0].mxu0
        %2800 = vmatprep.mubr.f32.mxu0 0.0
        %2801 = vmatmul.mubr.f32.gmra.mrb[0].mxu0 %v2689
        %v2802 = vpop.f32.mrb[0].mxu0
        %v2803 = vadd.f32 0.0, %v2802
        %v2804 = vpop.f32.mrb[0].mxu0
        %2805 = vmatprep.mubr.f32.mxu0 0.0
        %2806 = vmatmul.mubr.f32.gmra.mrb[0].mxu0 %v2691
        %v2807 = vpop.f32.mrb[0].mxu0
        %v2808 = vadd.f32 0.0, %v2807
        %v2809 = vpop.f32.mrb[0].mxu0
        %2810 = vmatprep.mubr.f32.mxu0 0.0
        %2811 = vmatmul.mubr.f32.gmra.mrb[0].mxu0 %v2693
        %v2812 = vpop.f32.mrb[0].mxu0
        %v2813 = vadd.f32 0.0, %v2812
        %v2814 = vpop.f32.mrb[0].mxu0
        %2815 = vmatprep.mubr.f32.mxu0 0.0
        %2816 = vmatmul.mubr.f32.gmra.mrb[0].mxu0 %v2695
        %v2817 = vpop.f32.mrb[0].mxu0
        %v2818 = vadd.f32 0.0, %v2817
        %v2819 = vpop.f32.mrb[0].mxu0
        %2820 = vmatprep.mubr.f32.mxu0 0.0
        %2821 = vmatmul.mubr.f32.gmra.mrb[0].mxu0 %v2697
        %v2822 = vpop.f32.mrb[0].mxu0
        %v2823 = vadd.f32 0.0, %v2822
        %v2824 = vpop.f32.mrb[0].mxu0
        %2825 = vmatprep.mubr.f32.mxu0 0.0
        %2826 = vmatmul.mubr.f32.gmra.mrb[0].mxu0 %v2699
        %v2827 = vpop.f32.mrb[0].mxu0
        %v2828 = vadd.f32 0.0, %v2827
        %v2829 = vpop.f32.mrb[0].mxu0
        %2830 = vdwg.mxu0
        %v2831 = vadd.f32 %v2594, %v2768
        %v2832 = vadd.f32 %v2595, %v2773
        %v2833 = vadd.f32 %v2596, %v2778
        %v2834 = vadd.f32 %v2597, %v2783
        %v2835 = vadd.f32 %v2598, %v2788
        %v2836 = vadd.f32 %v2599, %v2793
        %v2837 = vadd.f32 %v2600, %v2798
        %v2838 = vadd.f32 %v2601, %v2803
        %v2839 = vadd.f32 %v2602, %v2808
        %v2840 = vadd.f32 %v2603, %v2813
        %v2841 = vadd.f32 %v2604, %v2818
        %v2842 = vadd.f32 %v2605, %v2823
        %v2843 = vadd.f32 %v2606, %v2828
        %v2844 = vmax.f32 %v2831, 0.0
        %v2845 = vmax.f32 %v2832, 0.0
        %v2846 = vmax.f32 %v2833, 0.0
        %v2847 = vmax.f32 %v2834, 0.0
        %v2848 = vmax.f32 %v2835, 0.0
        %v2849 = vmax.f32 %v2836, 0.0
        %v2850 = vmax.f32 %v2837, 0.0
        %v2851 = vmax.f32 %v2838, 0.0
        %v2852 = vmax.f32 %v2839, 0.0
        %v2853 = vmax.f32 %v2840, 0.0
        %v2854 = vmax.f32 %v2841, 0.0
        %v2855 = vmax.f32 %v2842, 0.0
        %v2856 = vmax.f32 %v2843, 0.0
        %2857 = vst.msk [vmem:[%s756] ss:$8 sm:$0x7] %vm755, 0.0
        %2858 = vst.msk [vmem:[%s756] ss:$8 sm:$0x0] %vm755, 0.0
        %2859 = vst.msk [vmem:[%s759] ss:$8 sm:$0x7] %vm755, 0.0
        %2860 = vst.msk [vmem:[%s759] ss:$8 sm:$0x0] %vm755, 0.0
        %v2861 = vmul.f32 %v2844, %v765
        %v2862 = vmul.f32 %v2845, %v770
        %v2863 = vmul.f32 %v2846, %v775
        %v2864 = vmul.f32 %v2847, %v780
        %v2865 = vmul.f32 %v2848, %v785
        %v2866 = vmul.f32 %v2849, %v790
        %v2867 = vmul.f32 %v2850, %v795
        %v2868 = vmul.f32 %v2851, %v800
        %v2869 = vmul.f32 %v2852, %v805
        %v2870 = vmul.f32 %v2853, %v810
        %v2871 = vmul.f32 %v2854, %v815
        %v2872 = vmul.f32 %v2855, %v820
        %v2873 = vmul.f32 %v2856, %v825
        %v2887 = vrot.slane %v2861, 4
        %v2888 = vrot.slane %v2862, 4
        %v2889 = vsel %vm853, %v2887, %v2888
        %v2890 = vrot.slane %v2863, 4
        %v2891 = vsel %vm853, %v2888, %v2890
        %v2892 = vrot.slane %v2864, 4
        %v2893 = vsel %vm853, %v2890, %v2892
        %v2894 = vrot.slane %v2865, 4
        %v2895 = vsel %vm853, %v2892, %v2894
        %v2896 = vrot.slane %v2866, 4
        %v2897 = vsel %vm853, %v2894, %v2896
        %v2898 = vrot.slane %v2867, 4
        %v2899 = vsel %vm853, %v2896, %v2898
        %v2900 = vrot.slane %v2868, 4
        %v2901 = vsel %vm853, %v2898, %v2900
        %v2902 = vrot.slane %v2869, 4
        %v2903 = vsel %vm853, %v2900, %v2902
        %v2904 = vrot.slane %v2870, 4
        %v2905 = vsel %vm853, %v2902, %v2904
        %v2906 = vrot.slane %v2871, 4
        %v2907 = vsel %vm853, %v2904, %v2906
        %v2908 = vrot.slane %v2872, 4
        %v2909 = vsel %vm853, %v2906, %v2908
        %v2910 = vrot.slane %v2873, 4
        %v2911 = vsel %vm853, %v2908, %v2910
        %2925 = vst.msk [vmem:[#allocation2 + $0x18] sm:$0xf0] %vm1920, %v2887
        %2926 = vst.msk [vmem:[#allocation2 + $0x30] sm:$0xff] %vm1922, %v2889
        %2927 = vst.msk [vmem:[#allocation2 + $0x48] sm:$0xff] %vm1922, %v2891
        %2928 = vst.msk [vmem:[#allocation2 + $0x60] sm:$0xff] %vm1922, %v2893
        %2929 = vst.msk [vmem:[#allocation2 + $0x78] sm:$0xff] %vm1922, %v2895
        %2930 = vst.msk [vmem:[#allocation2 + $0x90] sm:$0xff] %vm1922, %v2897
        %2931 = vst.msk [vmem:[#allocation2 + $0xa8] sm:$0xff] %vm1922, %v2899
        %2932 = vst.msk [vmem:[#allocation2 + $0xc0] sm:$0xff] %vm1922, %v2901
        %2933 = vst.msk [vmem:[#allocation2 + $0xd8] sm:$0xff] %vm1922, %v2903
        %2934 = vst.msk [vmem:[#allocation2 + $0xf0] sm:$0xff] %vm1922, %v2905
        %2935 = vst.msk [vmem:[#allocation2 + $0x108] sm:$0xff] %vm1922, %v2907
        %2936 = vst.msk [vmem:[#allocation2 + $0x120] sm:$0xff] %vm1922, %v2909
        %2937 = vst.msk [vmem:[#allocation2 + $0x138] sm:$0xff] %vm1922, %v2911
        %v2951 = vrot.slane %v2844, 5
        %v2952 = vrot.slane %v2845, 5
        %v2953 = vsel %vm920, %v2951, %v2952
        %v2954 = vrot.slane %v2846, 5
        %v2955 = vsel %vm920, %v2952, %v2954
        %v2956 = vrot.slane %v2847, 5
        %v2957 = vsel %vm920, %v2954, %v2956
        %v2958 = vrot.slane %v2848, 5
        %v2959 = vsel %vm920, %v2956, %v2958
        %v2960 = vrot.slane %v2849, 5
        %v2961 = vsel %vm920, %v2958, %v2960
        %v2962 = vrot.slane %v2850, 5
        %v2963 = vsel %vm920, %v2960, %v2962
        %v2964 = vrot.slane %v2851, 5
        %v2965 = vsel %vm920, %v2962, %v2964
        %v2966 = vrot.slane %v2852, 5
        %v2967 = vsel %vm920, %v2964, %v2966
        %v2968 = vrot.slane %v2853, 5
        %v2969 = vsel %vm920, %v2966, %v2968
        %v2970 = vrot.slane %v2854, 5
        %v2971 = vsel %vm920, %v2968, %v2970
        %v2972 = vrot.slane %v2855, 5
        %v2973 = vsel %vm920, %v2970, %v2972
        %v2974 = vrot.slane %v2856, 5
        %v2975 = vsel %vm920, %v2972, %v2974
        %2976 = vrot.lane.b32.xlu0 %v2951, 32
        %v2977 = vpop.permute.xlu0 %2976
        %2978 = vrot.lane.b32.xlu0 %v2953, 32
        %v2979 = vpop.permute.xlu0 %2978
        %2980 = vrot.lane.b32.xlu0 %v2955, 32
        %v2981 = vpop.permute.xlu0 %2980
        %2982 = vrot.lane.b32.xlu0 %v2957, 32
        %v2983 = vpop.permute.xlu0 %2982
        %2984 = vrot.lane.b32.xlu0 %v2959, 32
        %v2985 = vpop.permute.xlu0 %2984
        %2986 = vrot.lane.b32.xlu0 %v2961, 32
        %v2987 = vpop.permute.xlu0 %2986
        %2988 = vrot.lane.b32.xlu0 %v2963, 32
        %v2989 = vpop.permute.xlu0 %2988
        %2990 = vrot.lane.b32.xlu0 %v2965, 32
        %v2991 = vpop.permute.xlu0 %2990
        %2992 = vrot.lane.b32.xlu0 %v2967, 32
        %v2993 = vpop.permute.xlu0 %2992
        %2994 = vrot.lane.b32.xlu0 %v2969, 32
        %v2995 = vpop.permute.xlu0 %2994
        %2996 = vrot.lane.b32.xlu0 %v2971, 32
        %v2997 = vpop.permute.xlu0 %2996
        %2998 = vrot.lane.b32.xlu0 %v2973, 32
        %v2999 = vpop.permute.xlu0 %2998
        %3000 = vrot.lane.b32.xlu0 %v2975, 32
        %v3001 = vpop.permute.xlu0 %3000
        %3015 = vst.msk [vmem:[#allocation2 + $0x18] sm:$0xf8] %vm2012, %v2977
        %3016 = vst.msk [vmem:[#allocation2 + $0x30] sm:$0xff] %vm2014, %v2979
        %3017 = vst.msk [vmem:[#allocation2 + $0x48] sm:$0xff] %vm2014, %v2981
        %3018 = vst.msk [vmem:[#allocation2 + $0x60] sm:$0xff] %vm2014, %v2983
        %3019 = vst.msk [vmem:[#allocation2 + $0x78] sm:$0xff] %vm2014, %v2985
        %3020 = vst.msk [vmem:[#allocation2 + $0x90] sm:$0xff] %vm2014, %v2987
        %3021 = vst.msk [vmem:[#allocation2 + $0xa8] sm:$0xff] %vm2014, %v2989
        %3022 = vst.msk [vmem:[#allocation2 + $0xc0] sm:$0xff] %vm2014, %v2991
        %3023 = vst.msk [vmem:[#allocation2 + $0xd8] sm:$0xff] %vm2014, %v2993
        %3024 = vst.msk [vmem:[#allocation2 + $0xf0] sm:$0xff] %vm2014, %v2995
        %3025 = vst.msk [vmem:[#allocation2 + $0x108] sm:$0xff] %vm2014, %v2997
        %3026 = vst.msk [vmem:[#allocation2 + $0x120] sm:$0xff] %vm2014, %v2999
        %3027 = vst.msk [vmem:[#allocation2 + $0x138] sm:$0x7f] %vm2026, %v3001
        %v3028 = vmul.f32 %v2844, %v1003
        %v3029 = vmul.f32 %v2845, %v1007
        %v3030 = vmul.f32 %v2846, %v1011
        %v3031 = vmul.f32 %v2847, %v1015
        %v3032 = vmul.f32 %v2848, %v1019
        %v3033 = vmul.f32 %v2849, %v1023
        %v3034 = vmul.f32 %v2850, %v1027
        %v3035 = vmul.f32 %v2851, %v1031
        %v3036 = vmul.f32 %v2852, %v1035
        %v3037 = vmul.f32 %v2853, %v1039
        %v3038 = vmul.f32 %v2854, %v1043
        %v3039 = vmul.f32 %v2855, %v1047
        %v3040 = vmul.f32 %v2856, %v1051
        %v3054 = vrot.slane %v3028, 6
        %v3055 = vrot.slane %v3029, 6
        %v3056 = vsel %vm1079, %v3054, %v3055
        %v3057 = vrot.slane %v3030, 6
        %v3058 = vsel %vm1079, %v3055, %v3057
        %v3059 = vrot.slane %v3031, 6
        %v3060 = vsel %vm1079, %v3057, %v3059
        %v3061 = vrot.slane %v3032, 6
        %v3062 = vsel %vm1079, %v3059, %v3061
        %v3063 = vrot.slane %v3033, 6
        %v3064 = vsel %vm1079, %v3061, %v3063
        %v3065 = vrot.slane %v3034, 6
        %v3066 = vsel %vm1079, %v3063, %v3065
        %v3067 = vrot.slane %v3035, 6
        %v3068 = vsel %vm1079, %v3065, %v3067
        %v3069 = vrot.slane %v3036, 6
        %v3070 = vsel %vm1079, %v3067, %v3069
        %v3071 = vrot.slane %v3037, 6
        %v3072 = vsel %vm1079, %v3069, %v3071
        %v3073 = vrot.slane %v3038, 6
        %v3074 = vsel %vm1079, %v3071, %v3073
        %v3075 = vrot.slane %v3039, 6
        %v3076 = vsel %vm1079, %v3073, %v3075
        %v3077 = vrot.slane %v3040, 6
        %v3078 = vsel %vm1079, %v3075, %v3077
        %3079 = vrot.lane.b32.xlu0 %v3054, 64
        %v3080 = vpop.permute.xlu0 %3079
        %3081 = vrot.lane.b32.xlu0 %v3056, 64
        %v3082 = vpop.permute.xlu0 %3081
        %3083 = vrot.lane.b32.xlu0 %v3058, 64
        %v3084 = vpop.permute.xlu0 %3083
        %3085 = vrot.lane.b32.xlu0 %v3060, 64
        %v3086 = vpop.permute.xlu0 %3085
        %3087 = vrot.lane.b32.xlu0 %v3062, 64
        %v3088 = vpop.permute.xlu0 %3087
        %3089 = vrot.lane.b32.xlu0 %v3064, 64
        %v3090 = vpop.permute.xlu0 %3089
        %3091 = vrot.lane.b32.xlu0 %v3066, 64
        %v3092 = vpop.permute.xlu0 %3091
        %3093 = vrot.lane.b32.xlu0 %v3068, 64
        %v3094 = vpop.permute.xlu0 %3093
        %3095 = vrot.lane.b32.xlu0 %v3070, 64
        %v3096 = vpop.permute.xlu0 %3095
        %3097 = vrot.lane.b32.xlu0 %v3072, 64
        %v3098 = vpop.permute.xlu0 %3097
        %3099 = vrot.lane.b32.xlu0 %v3074, 64
        %v3100 = vpop.permute.xlu0 %3099
        %3101 = vrot.lane.b32.xlu0 %v3076, 64
        %v3102 = vpop.permute.xlu0 %3101
        %3103 = vrot.lane.b32.xlu0 %v3078, 64
        %v3104 = vpop.permute.xlu0 %3103
        %3118 = vst.msk [vmem:[#allocation2 + $0x18] sm:$0xfc] %vm2118, %v3080
        %3119 = vst.msk [vmem:[#allocation2 + $0x30] sm:$0xff] %vm2120, %v3082
        %3120 = vst.msk [vmem:[#allocation2 + $0x48] sm:$0xff] %vm2120, %v3084
        %3121 = vst.msk [vmem:[#allocation2 + $0x60] sm:$0xff] %vm2120, %v3086
        %3122 = vst.msk [vmem:[#allocation2 + $0x78] sm:$0xff] %vm2120, %v3088
        %3123 = vst.msk [vmem:[#allocation2 + $0x90] sm:$0xff] %vm2120, %v3090
        %3124 = vst.msk [vmem:[#allocation2 + $0xa8] sm:$0xff] %vm2120, %v3092
        %3125 = vst.msk [vmem:[#allocation2 + $0xc0] sm:$0xff] %vm2120, %v3094
        %3126 = vst.msk [vmem:[#allocation2 + $0xd8] sm:$0xff] %vm2120, %v3096
        %3127 = vst.msk [vmem:[#allocation2 + $0xf0] sm:$0xff] %vm2120, %v3098
        %3128 = vst.msk [vmem:[#allocation2 + $0x108] sm:$0xff] %vm2120, %v3100
        %3129 = vst.msk [vmem:[#allocation2 + $0x120] sm:$0xff] %vm2120, %v3102
        %3130 = vst.msk [vmem:[#allocation2 + $0x138] sm:$0x3f] %vm2132, %v3104
        %v3131 = vld [vmem:[%s8] sm:$0x1]
        %v3133 = vlaneseq
        %v3134 = vshrl.u32 %v3133, 7
        %v3135 = vsub.s32 0, %v3134
        %v3136 = vrot.slane %v3131, %v3135
        %v3138 = vld [vmem:[#allocation2] sm:$0xfe]
        %v3139 = vld [vmem:[#allocation2 + $0x18] sm:$0xff]
        %v3140 = vld [vmem:[#allocation2 + $0x30] sm:$0xff]
        %v3141 = vld [vmem:[#allocation2 + $0x48] sm:$0xff]
        %v3142 = vld [vmem:[#allocation2 + $0x60] sm:$0xff]
        %v3143 = vld [vmem:[#allocation2 + $0x78] sm:$0xff]
        %v3144 = vld [vmem:[#allocation2 + $0x90] sm:$0xff]
        %v3145 = vld [vmem:[#allocation2 + $0xa8] sm:$0xff]
        %v3146 = vld [vmem:[#allocation2 + $0xc0] sm:$0xff]
        %v3147 = vld [vmem:[#allocation2 + $0xd8] sm:$0xff]
        %v3148 = vld [vmem:[#allocation2 + $0xf0] sm:$0xff]
        %v3149 = vld [vmem:[#allocation2 + $0x108] sm:$0xff]
        %v3150 = vld [vmem:[#allocation2 + $0x120] sm:$0x1f]
        %v3151 = vld [vmem:[#allocation5] sm:$0xff]
        %v3152 = vld [vmem:[#allocation5 + $0x8] sm:$0xff]
        %v3153 = vld [vmem:[#allocation5 + $0x10] sm:$0xff]
        %v3154 = vld [vmem:[#allocation5 + $0x18] sm:$0xff]
        %v3155 = vld [vmem:[#allocation5 + $0x20] sm:$0xff]
        %v3156 = vld [vmem:[#allocation5 + $0x28] sm:$0xff]
        %v3157 = vld [vmem:[#allocation5 + $0x30] sm:$0xff]
        %v3158 = vld [vmem:[#allocation5 + $0x38] sm:$0xff]
        %v3159 = vld [vmem:[#allocation5 + $0x40] sm:$0xff]
        %v3160 = vld [vmem:[#allocation5 + $0x48] sm:$0xff]
        %v3161 = vld [vmem:[#allocation5 + $0x50] sm:$0xff]
        %v3162 = vld [vmem:[#allocation5 + $0x58] sm:$0xff]
        %v3176 = vrot.slane %v3138, 1
        %v3177 = vrot.slane %v3139, 1
        %v3178 = vsel %vm1195, %v3176, %v3177
        %v3179 = vrot.slane %v3140, 1
        %v3180 = vsel %vm1195, %v3177, %v3179
        %v3181 = vrot.slane %v3141, 1
        %v3182 = vsel %vm1195, %v3179, %v3181
        %v3183 = vrot.slane %v3142, 1
        %v3184 = vsel %vm1195, %v3181, %v3183
        %v3185 = vrot.slane %v3143, 1
        %v3186 = vsel %vm1195, %v3183, %v3185
        %v3187 = vrot.slane %v3144, 1
        %v3188 = vsel %vm1195, %v3185, %v3187
        %v3189 = vrot.slane %v3145, 1
        %v3190 = vsel %vm1195, %v3187, %v3189
        %v3191 = vrot.slane %v3146, 1
        %v3192 = vsel %vm1195, %v3189, %v3191
        %v3193 = vrot.slane %v3147, 1
        %v3194 = vsel %vm1195, %v3191, %v3193
        %v3195 = vrot.slane %v3148, 1
        %v3196 = vsel %vm1195, %v3193, %v3195
        %v3197 = vrot.slane %v3149, 1
        %v3198 = vsel %vm1195, %v3195, %v3197
        %v3199 = vrot.slane %v3150, 1
        %v3200 = vsel %vm1195, %v3197, %v3199
        %v3201 = vsel %vm2204, %v3178, 0
        %v3203 = vsel %vm2204, %v3180, 0
        %v3205 = vsel %vm2204, %v3182, 0
        %v3207 = vsel %vm2204, %v3184, 0
        %v3209 = vsel %vm2204, %v3186, 0
        %v3211 = vsel %vm2204, %v3188, 0
        %v3213 = vsel %vm2204, %v3190, 0
        %v3215 = vsel %vm2204, %v3192, 0
        %v3217 = vsel %vm2204, %v3194, 0
        %v3219 = vsel %vm2204, %v3196, 0
        %v3221 = vsel %vm2204, %v3198, 0
        %v3223 = vsel %vm2204, %v3200, 0
        %v3225 = vsel %vm2204, %v3199, 0
        %3227 = vmatprep.subr.mxu0 0.0
        %3228 = vmatpush1.msra.mxu0 %v3151
        %3229 = vmatprep.subr.mxu0 0.0
        %3230 = vmatpush1.msra.mxu0 %v3152
        %3231 = vmatprep.subr.mxu0 0.0
        %3232 = vmatpush1.msra.mxu0 %v3153
        %3233 = vmatprep.subr.mxu0 0.0
        %3234 = vmatpush1.msra.mxu0 %v3154
        %3235 = vmatprep.subr.mxu0 0.0
        %3236 = vmatpush1.msra.mxu0 %v3155
        %3237 = vmatprep.subr.mxu0 0.0
        %3238 = vmatpush1.msra.mxu0 %v3156
        %3239 = vmatprep.subr.mxu0 0.0
        %3240 = vmatpush1.msra.mxu0 %v3157
        %3241 = vmatprep.subr.mxu0 0.0
        %3242 = vmatpush1.msra.mxu0 %v3158
        %3243 = vmatprep.subr.mxu0 0.0
        %3244 = vmatpush1.msra.mxu0 %v3159
        %3245 = vmatprep.subr.mxu0 0.0
        %3246 = vmatpush1.msra.mxu0 %v3160
        %3247 = vmatprep.subr.mxu0 0.0
        %3248 = vmatpush1.msra.mxu0 %v3161
        %3249 = vmatprep.subr.mxu0 0.0
        %3250 = vmatpush1.msra.mxu0 %v3162
        %3251 = vmatprep.subr.mxu0 0.0
        %3252 = vmatpush1.msra.mxu0 0.0
        %3253 = vmatprep.subr.mxu0 0.0
        %3254 = vmatpush1.msra.mxu0 0.0
        %3255 = vmatprep.subr.mxu0 0.0
        %3256 = vmatpush1.msra.mxu0 0.0
        %3257 = vmatprep.subr.mxu0 0.0
        %3258 = vmatpush1.msra.mxu0 0.0
        %3259 = vmatprep.subr.mxu0 0.0
        %3260 = vmatpush1.msra.mxu0 0.0
        %3261 = vmatprep.subr.mxu0 0.0
        %3262 = vmatpush1.msra.mxu0 0.0
        %3263 = vmatprep.subr.mxu0 0.0
        %3264 = vmatpush1.msra.mxu0 0.0
        %3265 = vmatprep.subr.mxu0 0.0
        %3266 = vmatpush1.msra.mxu0 0.0
        %3267 = vmatprep.subr.mxu0 0.0
        %3268 = vmatpush1.msra.mxu0 0.0
        %3269 = vmatprep.subr.mxu0 0.0
        %3270 = vmatpush1.msra.mxu0 0.0
        %3271 = vmatprep.subr.mxu0 0.0
        %3272 = vmatpush1.msra.mxu0 0.0
        %3273 = vmatprep.subr.mxu0 0.0
        %3274 = vmatpush1.msra.mxu0 0.0
        %3275 = vmatprep.subr.mxu0 0.0
        %3276 = vmatpush1.msra.mxu0 0.0
        %3277 = vmatprep.subr.mxu0 0.0
        %3278 = vmatpush1.msra.mxu0 0.0
        %3279 = vmatprep.subr.mxu0 0.0
        %3280 = vmatpush1.msra.mxu0 0.0
        %3281 = vmatprep.subr.mxu0 0.0
        %3282 = vmatpush1.msra.mxu0 0.0
        %3283 = vmatprep.subr.mxu0 0.0
        %3284 = vmatpush1.msra.mxu0 0.0
        %3285 = vmatprep.subr.mxu0 0.0
        %3286 = vmatpush1.msra.mxu0 0.0
        %3287 = vmatprep.subr.mxu0 0.0
        %3288 = vmatpush1.msra.mxu0 0.0
        %3289 = vmatprep.subr.mxu0 0.0
        %3290 = vmatpush1.msra.mxu0 0.0
        %3291 = vmatprep.mubr.f32.mxu0 0.0
        %3292 = vmatmul.mubr.f32.gmra.mrb[0].mxu0 %v3201
        %v3293 = vpop.f32.mrb[0].mxu0
        %v3294 = vadd.f32 0.0, %v3293
        %v3295 = vpop.f32.mrb[0].mxu0
        %3296 = vmatprep.mubr.f32.mxu0 0.0
        %3297 = vmatmul.mubr.f32.gmra.mrb[0].mxu0 %v3203
        %v3298 = vpop.f32.mrb[0].mxu0
        %v3299 = vadd.f32 0.0, %v3298
        %v3300 = vpop.f32.mrb[0].mxu0
        %3301 = vmatprep.mubr.f32.mxu0 0.0
        %3302 = vmatmul.mubr.f32.gmra.mrb[0].mxu0 %v3205
        %v3303 = vpop.f32.mrb[0].mxu0
        %v3304 = vadd.f32 0.0, %v3303
        %v3305 = vpop.f32.mrb[0].mxu0
        %3306 = vmatprep.mubr.f32.mxu0 0.0
        %3307 = vmatmul.mubr.f32.gmra.mrb[0].mxu0 %v3207
        %v3308 = vpop.f32.mrb[0].mxu0
        %v3309 = vadd.f32 0.0, %v3308
        %v3310 = vpop.f32.mrb[0].mxu0
        %3311 = vmatprep.mubr.f32.mxu0 0.0
        %3312 = vmatmul.mubr.f32.gmra.mrb[0].mxu0 %v3209
        %v3313 = vpop.f32.mrb[0].mxu0
        %v3314 = vadd.f32 0.0, %v3313
        %v3315 = vpop.f32.mrb[0].mxu0
        %3316 = vmatprep.mubr.f32.mxu0 0.0
        %3317 = vmatmul.mubr.f32.gmra.mrb[0].mxu0 %v3211
        %v3318 = vpop.f32.mrb[0].mxu0
        %v3319 = vadd.f32 0.0, %v3318
        %v3320 = vpop.f32.mrb[0].mxu0
        %3321 = vmatprep.mubr.f32.mxu0 0.0
        %3322 = vmatmul.mubr.f32.gmra.mrb[0].mxu0 %v3213
        %v3323 = vpop.f32.mrb[0].mxu0
        %v3324 = vadd.f32 0.0, %v3323
        %v3325 = vpop.f32.mrb[0].mxu0
        %3326 = vmatprep.mubr.f32.mxu0 0.0
        %3327 = vmatmul.mubr.f32.gmra.mrb[0].mxu0 %v3215
        %v3328 = vpop.f32.mrb[0].mxu0
        %v3329 = vadd.f32 0.0, %v3328
        %v3330 = vpop.f32.mrb[0].mxu0
        %3331 = vmatprep.mubr.f32.mxu0 0.0
        %3332 = vmatmul.mubr.f32.gmra.mrb[0].mxu0 %v3217
        %v3333 = vpop.f32.mrb[0].mxu0
        %v3334 = vadd.f32 0.0, %v3333
        %v3335 = vpop.f32.mrb[0].mxu0
        %3336 = vmatprep.mubr.f32.mxu0 0.0
        %3337 = vmatmul.mubr.f32.gmra.mrb[0].mxu0 %v3219
        %v3338 = vpop.f32.mrb[0].mxu0
        %v3339 = vadd.f32 0.0, %v3338
        %v3340 = vpop.f32.mrb[0].mxu0
        %3341 = vmatprep.mubr.f32.mxu0 0.0
        %3342 = vmatmul.mubr.f32.gmra.mrb[0].mxu0 %v3221
        %v3343 = vpop.f32.mrb[0].mxu0
        %v3344 = vadd.f32 0.0, %v3343
        %v3345 = vpop.f32.mrb[0].mxu0
        %3346 = vmatprep.mubr.f32.mxu0 0.0
        %3347 = vmatmul.mubr.f32.gmra.mrb[0].mxu0 %v3223
        %v3348 = vpop.f32.mrb[0].mxu0
        %v3349 = vadd.f32 0.0, %v3348
        %v3350 = vpop.f32.mrb[0].mxu0
        %3351 = vmatprep.mubr.f32.mxu0 0.0
        %3352 = vmatmul.mubr.f32.gmra.mrb[0].mxu0 %v3225
        %v3353 = vpop.f32.mrb[0].mxu0
        %v3354 = vadd.f32 0.0, %v3353
        %v3355 = vpop.f32.mrb[0].mxu0
        %3356 = vdwg.mxu0
        %v3357 = vadd.f32 %v3136, %v3294
        %v3358 = vadd.f32 %v3136, %v3299
        %v3359 = vadd.f32 %v3136, %v3304
        %v3360 = vadd.f32 %v3136, %v3309
        %v3361 = vadd.f32 %v3136, %v3314
        %v3362 = vadd.f32 %v3136, %v3319
        %v3363 = vadd.f32 %v3136, %v3324
        %v3364 = vadd.f32 %v3136, %v3329
        %v3365 = vadd.f32 %v3136, %v3334
        %v3366 = vadd.f32 %v3136, %v3339
        %v3367 = vadd.f32 %v3136, %v3344
        %v3368 = vadd.f32 %v3136, %v3349
        %v3369 = vadd.f32 %v3136, %v3354
        %v3370 = vld [vmem:[#allocation2 + $0x18] sm:$0xf8]
        %v3371 = vld [vmem:[#allocation2 + $0x30] sm:$0xff]
        %v3372 = vld [vmem:[#allocation2 + $0x48] sm:$0xff]
        %v3373 = vld [vmem:[#allocation2 + $0x60] sm:$0xff]
        %v3374 = vld [vmem:[#allocation2 + $0x78] sm:$0xff]
        %v3375 = vld [vmem:[#allocation2 + $0x90] sm:$0xff]
        %v3376 = vld [vmem:[#allocation2 + $0xa8] sm:$0xff]
        %v3377 = vld [vmem:[#allocation2 + $0xc0] sm:$0xff]
        %v3378 = vld [vmem:[#allocation2 + $0xd8] sm:$0xff]
        %v3379 = vld [vmem:[#allocation2 + $0xf0] sm:$0xff]
        %v3380 = vld [vmem:[#allocation2 + $0x108] sm:$0xff]
        %v3381 = vld [vmem:[#allocation2 + $0x120] sm:$0xff]
        %v3382 = vld [vmem:[#allocation2 + $0x138] sm:$0x7f]
        %s3383 = scalar_lea.vmem [#allocation5], 96
        %v3384 = vld [vmem:[%s3383] sm:$0xff]
        %v3385 = vld [vmem:[%s3383 + $0x8] sm:$0xff]
        %v3386 = vld [vmem:[%s3383 + $0x10] sm:$0xff]
        %v3387 = vld [vmem:[%s3383 + $0x18] sm:$0xff]
        %v3388 = vld [vmem:[%s3383 + $0x20] sm:$0xff]
        %v3389 = vld [vmem:[%s3383 + $0x28] sm:$0xff]
        %v3390 = vld [vmem:[%s3383 + $0x30] sm:$0xff]
        %v3391 = vld [vmem:[%s3383 + $0x38] sm:$0xff]
        %v3392 = vld [vmem:[%s3383 + $0x40] sm:$0xff]
        %v3393 = vld [vmem:[%s3383 + $0x48] sm:$0xff]
        %v3394 = vld [vmem:[%s3383 + $0x50] sm:$0xff]
        %v3395 = vld [vmem:[%s3383 + $0x58] sm:$0xff]
        %v3409 = vrot.slane %v3370, 3
        %v3410 = vrot.slane %v3371, 3
        %v3411 = vsel %vm1424, %v3409, %v3410
        %v3412 = vrot.slane %v3372, 3
        %v3413 = vsel %vm1424, %v3410, %v3412
        %v3414 = vrot.slane %v3373, 3
        %v3415 = vsel %vm1424, %v3412, %v3414
        %v3416 = vrot.slane %v3374, 3
        %v3417 = vsel %vm1424, %v3414, %v3416
        %v3418 = vrot.slane %v3375, 3
        %v3419 = vsel %vm1424, %v3416, %v3418
        %v3420 = vrot.slane %v3376, 3
        %v3421 = vsel %vm1424, %v3418, %v3420
        %v3422 = vrot.slane %v3377, 3
        %v3423 = vsel %vm1424, %v3420, %v3422
        %v3424 = vrot.slane %v3378, 3
        %v3425 = vsel %vm1424, %v3422, %v3424
        %v3426 = vrot.slane %v3379, 3
        %v3427 = vsel %vm1424, %v3424, %v3426
        %v3428 = vrot.slane %v3380, 3
        %v3429 = vsel %vm1424, %v3426, %v3428
        %v3430 = vrot.slane %v3381, 3
        %v3431 = vsel %vm1424, %v3428, %v3430
        %v3432 = vrot.slane %v3382, 3
        %v3433 = vsel %vm1424, %v3430, %v3432
        %v3434 = vsel %vm2204, %v3411, 0
        %v3436 = vsel %vm2204, %v3413, 0
        %v3438 = vsel %vm2204, %v3415, 0
        %v3440 = vsel %vm2204, %v3417, 0
        %v3442 = vsel %vm2204, %v3419, 0
        %v3444 = vsel %vm2204, %v3421, 0
        %v3446 = vsel %vm2204, %v3423, 0
        %v3448 = vsel %vm2204, %v3425, 0
        %v3450 = vsel %vm2204, %v3427, 0
        %v3452 = vsel %vm2204, %v3429, 0
        %v3454 = vsel %vm2204, %v3431, 0
        %v3456 = vsel %vm2204, %v3433, 0
        %v3458 = vsel %vm2204, %v3432, 0
        %3460 = vmatprep.subr.mxu0 0.0
        %3461 = vmatpush1.msra.mxu0 %v3384
        %3462 = vmatprep.subr.mxu0 0.0
        %3463 = vmatpush1.msra.mxu0 %v3385
        %3464 = vmatprep.subr.mxu0 0.0
        %3465 = vmatpush1.msra.mxu0 %v3386
        %3466 = vmatprep.subr.mxu0 0.0
        %3467 = vmatpush1.msra.mxu0 %v3387
        %3468 = vmatprep.subr.mxu0 0.0
        %3469 = vmatpush1.msra.mxu0 %v3388
        %3470 = vmatprep.subr.mxu0 0.0
        %3471 = vmatpush1.msra.mxu0 %v3389
        %3472 = vmatprep.subr.mxu0 0.0
        %3473 = vmatpush1.msra.mxu0 %v3390
        %3474 = vmatprep.subr.mxu0 0.0
        %3475 = vmatpush1.msra.mxu0 %v3391
        %3476 = vmatprep.subr.mxu0 0.0
        %3477 = vmatpush1.msra.mxu0 %v3392
        %3478 = vmatprep.subr.mxu0 0.0
        %3479 = vmatpush1.msra.mxu0 %v3393
        %3480 = vmatprep.subr.mxu0 0.0
        %3481 = vmatpush1.msra.mxu0 %v3394
        %3482 = vmatprep.subr.mxu0 0.0
        %3483 = vmatpush1.msra.mxu0 %v3395
        %3484 = vmatprep.subr.mxu0 0.0
        %3485 = vmatpush1.msra.mxu0 0.0
        %3486 = vmatprep.subr.mxu0 0.0
        %3487 = vmatpush1.msra.mxu0 0.0
        %3488 = vmatprep.subr.mxu0 0.0
        %3489 = vmatpush1.msra.mxu0 0.0
        %3490 = vmatprep.subr.mxu0 0.0
        %3491 = vmatpush1.msra.mxu0 0.0
        %3492 = vmatprep.subr.mxu0 0.0
        %3493 = vmatpush1.msra.mxu0 0.0
        %3494 = vmatprep.subr.mxu0 0.0
        %3495 = vmatpush1.msra.mxu0 0.0
        %3496 = vmatprep.subr.mxu0 0.0
        %3497 = vmatpush1.msra.mxu0 0.0
        %3498 = vmatprep.subr.mxu0 0.0
        %3499 = vmatpush1.msra.mxu0 0.0
        %3500 = vmatprep.subr.mxu0 0.0
        %3501 = vmatpush1.msra.mxu0 0.0
        %3502 = vmatprep.subr.mxu0 0.0
        %3503 = vmatpush1.msra.mxu0 0.0
        %3504 = vmatprep.subr.mxu0 0.0
        %3505 = vmatpush1.msra.mxu0 0.0
        %3506 = vmatprep.subr.mxu0 0.0
        %3507 = vmatpush1.msra.mxu0 0.0
        %3508 = vmatprep.subr.mxu0 0.0
        %3509 = vmatpush1.msra.mxu0 0.0
        %3510 = vmatprep.subr.mxu0 0.0
        %3511 = vmatpush1.msra.mxu0 0.0
        %3512 = vmatprep.subr.mxu0 0.0
        %3513 = vmatpush1.msra.mxu0 0.0
        %3514 = vmatprep.subr.mxu0 0.0
        %3515 = vmatpush1.msra.mxu0 0.0
        %3516 = vmatprep.subr.mxu0 0.0
        %3517 = vmatpush1.msra.mxu0 0.0
        %3518 = vmatprep.subr.mxu0 0.0
        %3519 = vmatpush1.msra.mxu0 0.0
        %3520 = vmatprep.subr.mxu0 0.0
        %3521 = vmatpush1.msra.mxu0 0.0
        %3522 = vmatprep.subr.mxu0 0.0
        %3523 = vmatpush1.msra.mxu0 0.0
        %3524 = vmatprep.mubr.f32.mxu0 0.0
        %3525 = vmatmul.mubr.f32.gmra.mrb[0].mxu0 %v3434
        %v3526 = vpop.f32.mrb[0].mxu0
        %v3527 = vadd.f32 0.0, %v3526
        %v3528 = vpop.f32.mrb[0].mxu0
        %3529 = vmatprep.mubr.f32.mxu0 0.0
        %3530 = vmatmul.mubr.f32.gmra.mrb[0].mxu0 %v3436
        %v3531 = vpop.f32.mrb[0].mxu0
        %v3532 = vadd.f32 0.0, %v3531
        %v3533 = vpop.f32.mrb[0].mxu0
        %3534 = vmatprep.mubr.f32.mxu0 0.0
        %3535 = vmatmul.mubr.f32.gmra.mrb[0].mxu0 %v3438
        %v3536 = vpop.f32.mrb[0].mxu0
        %v3537 = vadd.f32 0.0, %v3536
        %v3538 = vpop.f32.mrb[0].mxu0
        %3539 = vmatprep.mubr.f32.mxu0 0.0
        %3540 = vmatmul.mubr.f32.gmra.mrb[0].mxu0 %v3440
        %v3541 = vpop.f32.mrb[0].mxu0
        %v3542 = vadd.f32 0.0, %v3541
        %v3543 = vpop.f32.mrb[0].mxu0
        %3544 = vmatprep.mubr.f32.mxu0 0.0
        %3545 = vmatmul.mubr.f32.gmra.mrb[0].mxu0 %v3442
        %v3546 = vpop.f32.mrb[0].mxu0
        %v3547 = vadd.f32 0.0, %v3546
        %v3548 = vpop.f32.mrb[0].mxu0
        %3549 = vmatprep.mubr.f32.mxu0 0.0
        %3550 = vmatmul.mubr.f32.gmra.mrb[0].mxu0 %v3444
        %v3551 = vpop.f32.mrb[0].mxu0
        %v3552 = vadd.f32 0.0, %v3551
        %v3553 = vpop.f32.mrb[0].mxu0
        %3554 = vmatprep.mubr.f32.mxu0 0.0
        %3555 = vmatmul.mubr.f32.gmra.mrb[0].mxu0 %v3446
        %v3556 = vpop.f32.mrb[0].mxu0
        %v3557 = vadd.f32 0.0, %v3556
        %v3558 = vpop.f32.mrb[0].mxu0
        %3559 = vmatprep.mubr.f32.mxu0 0.0
        %3560 = vmatmul.mubr.f32.gmra.mrb[0].mxu0 %v3448
        %v3561 = vpop.f32.mrb[0].mxu0
        %v3562 = vadd.f32 0.0, %v3561
        %v3563 = vpop.f32.mrb[0].mxu0
        %3564 = vmatprep.mubr.f32.mxu0 0.0
        %3565 = vmatmul.mubr.f32.gmra.mrb[0].mxu0 %v3450
        %v3566 = vpop.f32.mrb[0].mxu0
        %v3567 = vadd.f32 0.0, %v3566
        %v3568 = vpop.f32.mrb[0].mxu0
        %3569 = vmatprep.mubr.f32.mxu0 0.0
        %3570 = vmatmul.mubr.f32.gmra.mrb[0].mxu0 %v3452
        %v3571 = vpop.f32.mrb[0].mxu0
        %v3572 = vadd.f32 0.0, %v3571
        %v3573 = vpop.f32.mrb[0].mxu0
        %3574 = vmatprep.mubr.f32.mxu0 0.0
        %3575 = vmatmul.mubr.f32.gmra.mrb[0].mxu0 %v3454
        %v3576 = vpop.f32.mrb[0].mxu0
        %v3577 = vadd.f32 0.0, %v3576
        %v3578 = vpop.f32.mrb[0].mxu0
        %3579 = vmatprep.mubr.f32.mxu0 0.0
        %3580 = vmatmul.mubr.f32.gmra.mrb[0].mxu0 %v3456
        %v3581 = vpop.f32.mrb[0].mxu0
        %v3582 = vadd.f32 0.0, %v3581
        %v3583 = vpop.f32.mrb[0].mxu0
        %3584 = vmatprep.mubr.f32.mxu0 0.0
        %3585 = vmatmul.mubr.f32.gmra.mrb[0].mxu0 %v3458
        %v3586 = vpop.f32.mrb[0].mxu0
        %v3587 = vadd.f32 0.0, %v3586
        %v3588 = vpop.f32.mrb[0].mxu0
        %3589 = vdwg.mxu0
        %v3590 = vadd.f32 %v3357, %v3527
        %v3591 = vadd.f32 %v3358, %v3532
        %v3592 = vadd.f32 %v3359, %v3537
        %v3593 = vadd.f32 %v3360, %v3542
        %v3594 = vadd.f32 %v3361, %v3547
        %v3595 = vadd.f32 %v3362, %v3552
        %v3596 = vadd.f32 %v3363, %v3557
        %v3597 = vadd.f32 %v3364, %v3562
        %v3598 = vadd.f32 %v3365, %v3567
        %v3599 = vadd.f32 %v3366, %v3572
        %v3600 = vadd.f32 %v3367, %v3577
        %v3601 = vadd.f32 %v3368, %v3582
        %v3602 = vadd.f32 %v3369, %v3587
        %v3603 = vld [vmem:[#allocation2 + $0x30] sm:$0xe0]
        %v3604 = vld [vmem:[#allocation2 + $0x48] sm:$0xff]
        %v3605 = vld [vmem:[#allocation2 + $0x60] sm:$0xff]
        %v3606 = vld [vmem:[#allocation2 + $0x78] sm:$0xff]
        %v3607 = vld [vmem:[#allocation2 + $0x90] sm:$0xff]
        %v3608 = vld [vmem:[#allocation2 + $0xa8] sm:$0xff]
        %v3609 = vld [vmem:[#allocation2 + $0xc0] sm:$0xff]
        %v3610 = vld [vmem:[#allocation2 + $0xd8] sm:$0xff]
        %v3611 = vld [vmem:[#allocation2 + $0xf0] sm:$0xff]
        %v3612 = vld [vmem:[#allocation2 + $0x108] sm:$0xff]
        %v3613 = vld [vmem:[#allocation2 + $0x120] sm:$0xff]
        %v3614 = vld [vmem:[#allocation2 + $0x138] sm:$0xff]
        %v3615 = vld [vmem:[#allocation2 + $0x150] sm:$0xff]
        %v3616 = vld [vmem:[#allocation2 + $0x168] sm:$0x1]
        %s3617 = scalar_lea.vmem [#allocation5], 192
        %v3618 = vld [vmem:[%s3617] sm:$0xff]
        %v3619 = vld [vmem:[%s3617 + $0x8] sm:$0xff]
        %v3620 = vld [vmem:[%s3617 + $0x10] sm:$0xff]
        %v3621 = vld [vmem:[%s3617 + $0x18] sm:$0xff]
        %v3622 = vld [vmem:[%s3617 + $0x20] sm:$0xff]
        %v3623 = vld [vmem:[%s3617 + $0x28] sm:$0xff]
        %v3624 = vld [vmem:[%s3617 + $0x30] sm:$0xff]
        %v3625 = vld [vmem:[%s3617 + $0x38] sm:$0xff]
        %v3626 = vld [vmem:[%s3617 + $0x40] sm:$0xff]
        %v3627 = vld [vmem:[%s3617 + $0x48] sm:$0xff]
        %v3628 = vld [vmem:[%s3617 + $0x50] sm:$0xff]
        %v3629 = vld [vmem:[%s3617 + $0x58] sm:$0xff]
        %v3644 = vrot.slane %v3603, 5
        %v3645 = vrot.slane %v3604, 5
        %v3646 = vsel %vm920, %v3644, %v3645
        %v3647 = vrot.slane %v3605, 5
        %v3648 = vsel %vm920, %v3645, %v3647
        %v3649 = vrot.slane %v3606, 5
        %v3650 = vsel %vm920, %v3647, %v3649
        %v3651 = vrot.slane %v3607, 5
        %v3652 = vsel %vm920, %v3649, %v3651
        %v3653 = vrot.slane %v3608, 5
        %v3654 = vsel %vm920, %v3651, %v3653
        %v3655 = vrot.slane %v3609, 5
        %v3656 = vsel %vm920, %v3653, %v3655
        %v3657 = vrot.slane %v3610, 5
        %v3658 = vsel %vm920, %v3655, %v3657
        %v3659 = vrot.slane %v3611, 5
        %v3660 = vsel %vm920, %v3657, %v3659
        %v3661 = vrot.slane %v3612, 5
        %v3662 = vsel %vm920, %v3659, %v3661
        %v3663 = vrot.slane %v3613, 5
        %v3664 = vsel %vm920, %v3661, %v3663
        %v3665 = vrot.slane %v3614, 5
        %v3666 = vsel %vm920, %v3663, %v3665
        %v3667 = vrot.slane %v3615, 5
        %v3668 = vsel %vm920, %v3665, %v3667
        %v3669 = vrot.slane %v3616, 5
        %v3670 = vsel %vm920, %v3667, %v3669
        %v3671 = vsel %vm2204, %v3646, 0
        %v3673 = vsel %vm2204, %v3648, 0
        %v3675 = vsel %vm2204, %v3650, 0
        %v3677 = vsel %vm2204, %v3652, 0
        %v3679 = vsel %vm2204, %v3654, 0
        %v3681 = vsel %vm2204, %v3656, 0
        %v3683 = vsel %vm2204, %v3658, 0
        %v3685 = vsel %vm2204, %v3660, 0
        %v3687 = vsel %vm2204, %v3662, 0
        %v3689 = vsel %vm2204, %v3664, 0
        %v3691 = vsel %vm2204, %v3666, 0
        %v3693 = vsel %vm2204, %v3668, 0
        %v3695 = vsel %vm2204, %v3670, 0
        %3697 = vmatprep.subr.mxu0 0.0
        %3698 = vmatpush1.msra.mxu0 %v3618
        %3699 = vmatprep.subr.mxu0 0.0
        %3700 = vmatpush1.msra.mxu0 %v3619
        %3701 = vmatprep.subr.mxu0 0.0
        %3702 = vmatpush1.msra.mxu0 %v3620
        %3703 = vmatprep.subr.mxu0 0.0
        %3704 = vmatpush1.msra.mxu0 %v3621
        %3705 = vmatprep.subr.mxu0 0.0
        %3706 = vmatpush1.msra.mxu0 %v3622
        %3707 = vmatprep.subr.mxu0 0.0
        %3708 = vmatpush1.msra.mxu0 %v3623
        %3709 = vmatprep.subr.mxu0 0.0
        %3710 = vmatpush1.msra.mxu0 %v3624
        %3711 = vmatprep.subr.mxu0 0.0
        %3712 = vmatpush1.msra.mxu0 %v3625
        %3713 = vmatprep.subr.mxu0 0.0
        %3714 = vmatpush1.msra.mxu0 %v3626
        %3715 = vmatprep.subr.mxu0 0.0
        %3716 = vmatpush1.msra.mxu0 %v3627
        %3717 = vmatprep.subr.mxu0 0.0
        %3718 = vmatpush1.msra.mxu0 %v3628
        %3719 = vmatprep.subr.mxu0 0.0
        %3720 = vmatpush1.msra.mxu0 %v3629
        %3721 = vmatprep.subr.mxu0 0.0
        %3722 = vmatpush1.msra.mxu0 0.0
        %3723 = vmatprep.subr.mxu0 0.0
        %3724 = vmatpush1.msra.mxu0 0.0
        %3725 = vmatprep.subr.mxu0 0.0
        %3726 = vmatpush1.msra.mxu0 0.0
        %3727 = vmatprep.subr.mxu0 0.0
        %3728 = vmatpush1.msra.mxu0 0.0
        %3729 = vmatprep.subr.mxu0 0.0
        %3730 = vmatpush1.msra.mxu0 0.0
        %3731 = vmatprep.subr.mxu0 0.0
        %3732 = vmatpush1.msra.mxu0 0.0
        %3733 = vmatprep.subr.mxu0 0.0
        %3734 = vmatpush1.msra.mxu0 0.0
        %3735 = vmatprep.subr.mxu0 0.0
        %3736 = vmatpush1.msra.mxu0 0.0
        %3737 = vmatprep.subr.mxu0 0.0
        %3738 = vmatpush1.msra.mxu0 0.0
        %3739 = vmatprep.subr.mxu0 0.0
        %3740 = vmatpush1.msra.mxu0 0.0
        %3741 = vmatprep.subr.mxu0 0.0
        %3742 = vmatpush1.msra.mxu0 0.0
        %3743 = vmatprep.subr.mxu0 0.0
        %3744 = vmatpush1.msra.mxu0 0.0
        %3745 = vmatprep.subr.mxu0 0.0
        %3746 = vmatpush1.msra.mxu0 0.0
        %3747 = vmatprep.subr.mxu0 0.0
        %3748 = vmatpush1.msra.mxu0 0.0
        %3749 = vmatprep.subr.mxu0 0.0
        %3750 = vmatpush1.msra.mxu0 0.0
        %3751 = vmatprep.subr.mxu0 0.0
        %3752 = vmatpush1.msra.mxu0 0.0
        %3753 = vmatprep.subr.mxu0 0.0
        %3754 = vmatpush1.msra.mxu0 0.0
        %3755 = vmatprep.subr.mxu0 0.0
        %3756 = vmatpush1.msra.mxu0 0.0
        %3757 = vmatprep.subr.mxu0 0.0
        %3758 = vmatpush1.msra.mxu0 0.0
        %3759 = vmatprep.subr.mxu0 0.0
        %3760 = vmatpush1.msra.mxu0 0.0
        %3761 = vmatprep.mubr.f32.mxu0 0.0
        %3762 = vmatmul.mubr.f32.gmra.mrb[0].mxu0 %v3671
        %v3763 = vpop.f32.mrb[0].mxu0
        %v3764 = vadd.f32 0.0, %v3763
        %v3765 = vpop.f32.mrb[0].mxu0
        %3766 = vmatprep.mubr.f32.mxu0 0.0
        %3767 = vmatmul.mubr.f32.gmra.mrb[0].mxu0 %v3673
        %v3768 = vpop.f32.mrb[0].mxu0
        %v3769 = vadd.f32 0.0, %v3768
        %v3770 = vpop.f32.mrb[0].mxu0
        %3771 = vmatprep.mubr.f32.mxu0 0.0
        %3772 = vmatmul.mubr.f32.gmra.mrb[0].mxu0 %v3675
        %v3773 = vpop.f32.mrb[0].mxu0
        %v3774 = vadd.f32 0.0, %v3773
        %v3775 = vpop.f32.mrb[0].mxu0
        %3776 = vmatprep.mubr.f32.mxu0 0.0
        %3777 = vmatmul.mubr.f32.gmra.mrb[0].mxu0 %v3677
        %v3778 = vpop.f32.mrb[0].mxu0
        %v3779 = vadd.f32 0.0, %v3778
        %v3780 = vpop.f32.mrb[0].mxu0
        %3781 = vmatprep.mubr.f32.mxu0 0.0
        %3782 = vmatmul.mubr.f32.gmra.mrb[0].mxu0 %v3679
        %v3783 = vpop.f32.mrb[0].mxu0
        %v3784 = vadd.f32 0.0, %v3783
        %v3785 = vpop.f32.mrb[0].mxu0
        %3786 = vmatprep.mubr.f32.mxu0 0.0
        %3787 = vmatmul.mubr.f32.gmra.mrb[0].mxu0 %v3681
        %v3788 = vpop.f32.mrb[0].mxu0
        %v3789 = vadd.f32 0.0, %v3788
        %v3790 = vpop.f32.mrb[0].mxu0
        %3791 = vmatprep.mubr.f32.mxu0 0.0
        %3792 = vmatmul.mubr.f32.gmra.mrb[0].mxu0 %v3683
        %v3793 = vpop.f32.mrb[0].mxu0
        %v3794 = vadd.f32 0.0, %v3793
        %v3795 = vpop.f32.mrb[0].mxu0
        %3796 = vmatprep.mubr.f32.mxu0 0.0
        %3797 = vmatmul.mubr.f32.gmra.mrb[0].mxu0 %v3685
        %v3798 = vpop.f32.mrb[0].mxu0
        %v3799 = vadd.f32 0.0, %v3798
        %v3800 = vpop.f32.mrb[0].mxu0
        %3801 = vmatprep.mubr.f32.mxu0 0.0
        %3802 = vmatmul.mubr.f32.gmra.mrb[0].mxu0 %v3687
        %v3803 = vpop.f32.mrb[0].mxu0
        %v3804 = vadd.f32 0.0, %v3803
        %v3805 = vpop.f32.mrb[0].mxu0
        %3806 = vmatprep.mubr.f32.mxu0 0.0
        %3807 = vmatmul.mubr.f32.gmra.mrb[0].mxu0 %v3689
        %v3808 = vpop.f32.mrb[0].mxu0
        %v3809 = vadd.f32 0.0, %v3808
        %v3810 = vpop.f32.mrb[0].mxu0
        %3811 = vmatprep.mubr.f32.mxu0 0.0
        %3812 = vmatmul.mubr.f32.gmra.mrb[0].mxu0 %v3691
        %v3813 = vpop.f32.mrb[0].mxu0
        %v3814 = vadd.f32 0.0, %v3813
        %v3815 = vpop.f32.mrb[0].mxu0
        %3816 = vmatprep.mubr.f32.mxu0 0.0
        %3817 = vmatmul.mubr.f32.gmra.mrb[0].mxu0 %v3693
        %v3818 = vpop.f32.mrb[0].mxu0
        %v3819 = vadd.f32 0.0, %v3818
        %v3820 = vpop.f32.mrb[0].mxu0
        %3821 = vmatprep.mubr.f32.mxu0 0.0
        %3822 = vmatmul.mubr.f32.gmra.mrb[0].mxu0 %v3695
        %v3823 = vpop.f32.mrb[0].mxu0
        %v3824 = vadd.f32 0.0, %v3823
        %v3825 = vpop.f32.mrb[0].mxu0
        %3826 = vdwg.mxu0
        %v3827 = vadd.f32 %v3590, %v3764
        %v3828 = vadd.f32 %v3591, %v3769
        %v3829 = vadd.f32 %v3592, %v3774
        %v3830 = vadd.f32 %v3593, %v3779
        %v3831 = vadd.f32 %v3594, %v3784
        %v3832 = vadd.f32 %v3595, %v3789
        %v3833 = vadd.f32 %v3596, %v3794
        %v3834 = vadd.f32 %v3597, %v3799
        %v3835 = vadd.f32 %v3598, %v3804
        %v3836 = vadd.f32 %v3599, %v3809
        %v3837 = vadd.f32 %v3600, %v3814
        %v3838 = vadd.f32 %v3601, %v3819
        %v3839 = vadd.f32 %v3602, %v3824
        %v3840 = vadd.f32 %v1839, %v3827
        %v3841 = vadd.f32 %v1840, %v3828
        %v3842 = vadd.f32 %v1841, %v3829
        %v3843 = vadd.f32 %v1842, %v3830
        %v3844 = vadd.f32 %v1843, %v3831
        %v3845 = vadd.f32 %v1844, %v3832
        %v3846 = vadd.f32 %v1845, %v3833
        %v3847 = vadd.f32 %v1846, %v3834
        %v3848 = vadd.f32 %v1847, %v3835
        %v3849 = vadd.f32 %v1848, %v3836
        %v3850 = vadd.f32 %v1849, %v3837
        %v3851 = vadd.f32 %v1850, %v3838
        %v3852 = vadd.f32 %v1851, %v3839
        %3853 = vst.msk [vmem:[%s756] ss:$8 sm:$0x7] %vm755, 0.0
        %3854 = vst.msk [vmem:[%s756] ss:$8 sm:$0x0] %vm755, 0.0
        %3855 = vst.msk [vmem:[%s759] ss:$8 sm:$0x7] %vm755, 0.0
        %3856 = vst.msk [vmem:[%s759] ss:$8 sm:$0x0] %vm755, 0.0
        %v3857 = vmul.f32 %v3840, %v765
        %v3858 = vmul.f32 %v3841, %v770
        %v3859 = vmul.f32 %v3842, %v775
        %v3860 = vmul.f32 %v3843, %v780
        %v3861 = vmul.f32 %v3844, %v785
        %v3862 = vmul.f32 %v3845, %v790
        %v3863 = vmul.f32 %v3846, %v795
        %v3864 = vmul.f32 %v3847, %v800
        %v3865 = vmul.f32 %v3848, %v805
        %v3866 = vmul.f32 %v3849, %v810
        %v3867 = vmul.f32 %v3850, %v815
        %v3868 = vmul.f32 %v3851, %v820
        %v3869 = vmul.f32 %v3852, %v825
        %v3883 = vrot.slane %v3857, 4
        %v3884 = vrot.slane %v3858, 4
        %v3885 = vsel %vm853, %v3883, %v3884
        %v3886 = vrot.slane %v3859, 4
        %v3887 = vsel %vm853, %v3884, %v3886
        %v3888 = vrot.slane %v3860, 4
        %v3889 = vsel %vm853, %v3886, %v3888
        %v3890 = vrot.slane %v3861, 4
        %v3891 = vsel %vm853, %v3888, %v3890
        %v3892 = vrot.slane %v3862, 4
        %v3893 = vsel %vm853, %v3890, %v3892
        %v3894 = vrot.slane %v3863, 4
        %v3895 = vsel %vm853, %v3892, %v3894
        %v3896 = vrot.slane %v3864, 4
        %v3897 = vsel %vm853, %v3894, %v3896
        %v3898 = vrot.slane %v3865, 4
        %v3899 = vsel %vm853, %v3896, %v3898
        %v3900 = vrot.slane %v3866, 4
        %v3901 = vsel %vm853, %v3898, %v3900
        %v3902 = vrot.slane %v3867, 4
        %v3903 = vsel %vm853, %v3900, %v3902
        %v3904 = vrot.slane %v3868, 4
        %v3905 = vsel %vm853, %v3902, %v3904
        %v3906 = vrot.slane %v3869, 4
        %v3907 = vsel %vm853, %v3904, %v3906
        %3921 = vst.msk [vmem:[#allocation2 + $0x18] sm:$0xf0] %vm1920, %v3883
        %3922 = vst.msk [vmem:[#allocation2 + $0x30] sm:$0xff] %vm1922, %v3885
        %3923 = vst.msk [vmem:[#allocation2 + $0x48] sm:$0xff] %vm1922, %v3887
        %3924 = vst.msk [vmem:[#allocation2 + $0x60] sm:$0xff] %vm1922, %v3889
        %3925 = vst.msk [vmem:[#allocation2 + $0x78] sm:$0xff] %vm1922, %v3891
        %3926 = vst.msk [vmem:[#allocation2 + $0x90] sm:$0xff] %vm1922, %v3893
        %3927 = vst.msk [vmem:[#allocation2 + $0xa8] sm:$0xff] %vm1922, %v3895
        %3928 = vst.msk [vmem:[#allocation2 + $0xc0] sm:$0xff] %vm1922, %v3897
        %3929 = vst.msk [vmem:[#allocation2 + $0xd8] sm:$0xff] %vm1922, %v3899
        %3930 = vst.msk [vmem:[#allocation2 + $0xf0] sm:$0xff] %vm1922, %v3901
        %3931 = vst.msk [vmem:[#allocation2 + $0x108] sm:$0xff] %vm1922, %v3903
        %3932 = vst.msk [vmem:[#allocation2 + $0x120] sm:$0xff] %vm1922, %v3905
        %3933 = vst.msk [vmem:[#allocation2 + $0x138] sm:$0xff] %vm1922, %v3907
        %v3947 = vrot.slane %v3840, 5
        %v3948 = vrot.slane %v3841, 5
        %v3949 = vsel %vm920, %v3947, %v3948
        %v3950 = vrot.slane %v3842, 5
        %v3951 = vsel %vm920, %v3948, %v3950
        %v3952 = vrot.slane %v3843, 5
        %v3953 = vsel %vm920, %v3950, %v3952
        %v3954 = vrot.slane %v3844, 5
        %v3955 = vsel %vm920, %v3952, %v3954
        %v3956 = vrot.slane %v3845, 5
        %v3957 = vsel %vm920, %v3954, %v3956
        %v3958 = vrot.slane %v3846, 5
        %v3959 = vsel %vm920, %v3956, %v3958
        %v3960 = vrot.slane %v3847, 5
        %v3961 = vsel %vm920, %v3958, %v3960
        %v3962 = vrot.slane %v3848, 5
        %v3963 = vsel %vm920, %v3960, %v3962
        %v3964 = vrot.slane %v3849, 5
        %v3965 = vsel %vm920, %v3962, %v3964
        %v3966 = vrot.slane %v3850, 5
        %v3967 = vsel %vm920, %v3964, %v3966
        %v3968 = vrot.slane %v3851, 5
        %v3969 = vsel %vm920, %v3966, %v3968
        %v3970 = vrot.slane %v3852, 5
        %v3971 = vsel %vm920, %v3968, %v3970
        %3972 = vrot.lane.b32.xlu0 %v3947, 32
        %v3973 = vpop.permute.xlu0 %3972
        %3974 = vrot.lane.b32.xlu0 %v3949, 32
        %v3975 = vpop.permute.xlu0 %3974
        %3976 = vrot.lane.b32.xlu0 %v3951, 32
        %v3977 = vpop.permute.xlu0 %3976
        %3978 = vrot.lane.b32.xlu0 %v3953, 32
        %v3979 = vpop.permute.xlu0 %3978
        %3980 = vrot.lane.b32.xlu0 %v3955, 32
        %v3981 = vpop.permute.xlu0 %3980
        %3982 = vrot.lane.b32.xlu0 %v3957, 32
        %v3983 = vpop.permute.xlu0 %3982
        %3984 = vrot.lane.b32.xlu0 %v3959, 32
        %v3985 = vpop.permute.xlu0 %3984
        %3986 = vrot.lane.b32.xlu0 %v3961, 32
        %v3987 = vpop.permute.xlu0 %3986
        %3988 = vrot.lane.b32.xlu0 %v3963, 32
        %v3989 = vpop.permute.xlu0 %3988
        %3990 = vrot.lane.b32.xlu0 %v3965, 32
        %v3991 = vpop.permute.xlu0 %3990
        %3992 = vrot.lane.b32.xlu0 %v3967, 32
        %v3993 = vpop.permute.xlu0 %3992
        %3994 = vrot.lane.b32.xlu0 %v3969, 32
        %v3995 = vpop.permute.xlu0 %3994
        %3996 = vrot.lane.b32.xlu0 %v3971, 32
        %v3997 = vpop.permute.xlu0 %3996
        %4011 = vst.msk [vmem:[#allocation2 + $0x18] sm:$0xf8] %vm2012, %v3973
        %4012 = vst.msk [vmem:[#allocation2 + $0x30] sm:$0xff] %vm2014, %v3975
        %4013 = vst.msk [vmem:[#allocation2 + $0x48] sm:$0xff] %vm2014, %v3977
        %4014 = vst.msk [vmem:[#allocation2 + $0x60] sm:$0xff] %vm2014, %v3979
        %4015 = vst.msk [vmem:[#allocation2 + $0x78] sm:$0xff] %vm2014, %v3981
        %4016 = vst.msk [vmem:[#allocation2 + $0x90] sm:$0xff] %vm2014, %v3983
        %4017 = vst.msk [vmem:[#allocation2 + $0xa8] sm:$0xff] %vm2014, %v3985
        %4018 = vst.msk [vmem:[#allocation2 + $0xc0] sm:$0xff] %vm2014, %v3987
        %4019 = vst.msk [vmem:[#allocation2 + $0xd8] sm:$0xff] %vm2014, %v3989
        %4020 = vst.msk [vmem:[#allocation2 + $0xf0] sm:$0xff] %vm2014, %v3991
        %4021 = vst.msk [vmem:[#allocation2 + $0x108] sm:$0xff] %vm2014, %v3993
        %4022 = vst.msk [vmem:[#allocation2 + $0x120] sm:$0xff] %vm2014, %v3995
        %4023 = vst.msk [vmem:[#allocation2 + $0x138] sm:$0x7f] %vm2026, %v3997
        %v4024 = vmul.f32 %v3840, %v1003
        %v4025 = vmul.f32 %v3841, %v1007
        %v4026 = vmul.f32 %v3842, %v1011
        %v4027 = vmul.f32 %v3843, %v1015
        %v4028 = vmul.f32 %v3844, %v1019
        %v4029 = vmul.f32 %v3845, %v1023
        %v4030 = vmul.f32 %v3846, %v1027
        %v4031 = vmul.f32 %v3847, %v1031
        %v4032 = vmul.f32 %v3848, %v1035
        %v4033 = vmul.f32 %v3849, %v1039
        %v4034 = vmul.f32 %v3850, %v1043
        %v4035 = vmul.f32 %v3851, %v1047
        %v4036 = vmul.f32 %v3852, %v1051
        %v4050 = vrot.slane %v4024, 6
        %v4051 = vrot.slane %v4025, 6
        %v4052 = vsel %vm1079, %v4050, %v4051
        %v4053 = vrot.slane %v4026, 6
        %v4054 = vsel %vm1079, %v4051, %v4053
        %v4055 = vrot.slane %v4027, 6
        %v4056 = vsel %vm1079, %v4053, %v4055
        %v4057 = vrot.slane %v4028, 6
        %v4058 = vsel %vm1079, %v4055, %v4057
        %v4059 = vrot.slane %v4029, 6
        %v4060 = vsel %vm1079, %v4057, %v4059
        %v4061 = vrot.slane %v4030, 6
        %v4062 = vsel %vm1079, %v4059, %v4061
        %v4063 = vrot.slane %v4031, 6
        %v4064 = vsel %vm1079, %v4061, %v4063
        %v4065 = vrot.slane %v4032, 6
        %v4066 = vsel %vm1079, %v4063, %v4065
        %v4067 = vrot.slane %v4033, 6
        %v4068 = vsel %vm1079, %v4065, %v4067
        %v4069 = vrot.slane %v4034, 6
        %v4070 = vsel %vm1079, %v4067, %v4069
        %v4071 = vrot.slane %v4035, 6
        %v4072 = vsel %vm1079, %v4069, %v4071
        %v4073 = vrot.slane %v4036, 6
        %v4074 = vsel %vm1079, %v4071, %v4073
        %4075 = vrot.lane.b32.xlu0 %v4050, 64
        %v4076 = vpop.permute.xlu0 %4075
        %4077 = vrot.lane.b32.xlu0 %v4052, 64
        %v4078 = vpop.permute.xlu0 %4077
        %4079 = vrot.lane.b32.xlu0 %v4054, 64
        %v4080 = vpop.permute.xlu0 %4079
        %4081 = vrot.lane.b32.xlu0 %v4056, 64
        %v4082 = vpop.permute.xlu0 %4081
        %4083 = vrot.lane.b32.xlu0 %v4058, 64
        %v4084 = vpop.permute.xlu0 %4083
        %4085 = vrot.lane.b32.xlu0 %v4060, 64
        %v4086 = vpop.permute.xlu0 %4085
        %4087 = vrot.lane.b32.xlu0 %v4062, 64
        %v4088 = vpop.permute.xlu0 %4087
        %4089 = vrot.lane.b32.xlu0 %v4064, 64
        %v4090 = vpop.permute.xlu0 %4089
        %4091 = vrot.lane.b32.xlu0 %v4066, 64
        %v4092 = vpop.permute.xlu0 %4091
        %4093 = vrot.lane.b32.xlu0 %v4068, 64
        %v4094 = vpop.permute.xlu0 %4093
        %4095 = vrot.lane.b32.xlu0 %v4070, 64
        %v4096 = vpop.permute.xlu0 %4095
        %4097 = vrot.lane.b32.xlu0 %v4072, 64
        %v4098 = vpop.permute.xlu0 %4097
        %4099 = vrot.lane.b32.xlu0 %v4074, 64
        %v4100 = vpop.permute.xlu0 %4099
        %4114 = vst.msk [vmem:[#allocation2 + $0x18] sm:$0xfc] %vm2118, %v4076
        %4115 = vst.msk [vmem:[#allocation2 + $0x30] sm:$0xff] %vm2120, %v4078
        %4116 = vst.msk [vmem:[#allocation2 + $0x48] sm:$0xff] %vm2120, %v4080
        %4117 = vst.msk [vmem:[#allocation2 + $0x60] sm:$0xff] %vm2120, %v4082
        %4118 = vst.msk [vmem:[#allocation2 + $0x78] sm:$0xff] %vm2120, %v4084
        %4119 = vst.msk [vmem:[#allocation2 + $0x90] sm:$0xff] %vm2120, %v4086
        %4120 = vst.msk [vmem:[#allocation2 + $0xa8] sm:$0xff] %vm2120, %v4088
        %4121 = vst.msk [vmem:[#allocation2 + $0xc0] sm:$0xff] %vm2120, %v4090
        %4122 = vst.msk [vmem:[#allocation2 + $0xd8] sm:$0xff] %vm2120, %v4092
        %4123 = vst.msk [vmem:[#allocation2 + $0xf0] sm:$0xff] %vm2120, %v4094
        %4124 = vst.msk [vmem:[#allocation2 + $0x108] sm:$0xff] %vm2120, %v4096
        %4125 = vst.msk [vmem:[#allocation2 + $0x120] sm:$0xff] %vm2120, %v4098
        %4126 = vst.msk [vmem:[#allocation2 + $0x138] sm:$0x3f] %vm2132, %v4100
        %v4127 = vld [vmem:[%s10] sm:$0x1]
        %v4129 = vlaneseq
        %v4130 = vshrl.u32 %v4129, 7
        %v4131 = vsub.s32 0, %v4130
        %v4132 = vrot.slane %v4127, %v4131
        %v4134 = vld [vmem:[#allocation2] sm:$0xfe]
        %v4135 = vld [vmem:[#allocation2 + $0x18] sm:$0xff]
        %v4136 = vld [vmem:[#allocation2 + $0x30] sm:$0xff]
        %v4137 = vld [vmem:[#allocation2 + $0x48] sm:$0xff]
        %v4138 = vld [vmem:[#allocation2 + $0x60] sm:$0xff]
        %v4139 = vld [vmem:[#allocation2 + $0x78] sm:$0xff]
        %v4140 = vld [vmem:[#allocation2 + $0x90] sm:$0xff]
        %v4141 = vld [vmem:[#allocation2 + $0xa8] sm:$0xff]
        %v4142 = vld [vmem:[#allocation2 + $0xc0] sm:$0xff]
        %v4143 = vld [vmem:[#allocation2 + $0xd8] sm:$0xff]
        %v4144 = vld [vmem:[#allocation2 + $0xf0] sm:$0xff]
        %v4145 = vld [vmem:[#allocation2 + $0x108] sm:$0xff]
        %v4146 = vld [vmem:[#allocation2 + $0x120] sm:$0x1f]
        %v4147 = vld [vmem:[#allocation7] sm:$0xff]
        %v4148 = vld [vmem:[#allocation7 + $0x8] sm:$0xff]
        %v4149 = vld [vmem:[#allocation7 + $0x10] sm:$0xff]
        %v4150 = vld [vmem:[#allocation7 + $0x18] sm:$0xff]
        %v4151 = vld [vmem:[#allocation7 + $0x20] sm:$0xff]
        %v4152 = vld [vmem:[#allocation7 + $0x28] sm:$0xff]
        %v4153 = vld [vmem:[#allocation7 + $0x30] sm:$0xff]
        %v4154 = vld [vmem:[#allocation7 + $0x38] sm:$0xff]
        %v4155 = vld [vmem:[#allocation7 + $0x40] sm:$0xff]
        %v4156 = vld [vmem:[#allocation7 + $0x48] sm:$0xff]
        %v4157 = vld [vmem:[#allocation7 + $0x50] sm:$0xff]
        %v4158 = vld [vmem:[#allocation7 + $0x58] sm:$0xff]
        %v4172 = vrot.slane %v4134, 1
        %v4173 = vrot.slane %v4135, 1
        %v4174 = vsel %vm1195, %v4172, %v4173
        %v4175 = vrot.slane %v4136, 1
        %v4176 = vsel %vm1195, %v4173, %v4175
        %v4177 = vrot.slane %v4137, 1
        %v4178 = vsel %vm1195, %v4175, %v4177
        %v4179 = vrot.slane %v4138, 1
        %v4180 = vsel %vm1195, %v4177, %v4179
        %v4181 = vrot.slane %v4139, 1
        %v4182 = vsel %vm1195, %v4179, %v4181
        %v4183 = vrot.slane %v4140, 1
        %v4184 = vsel %vm1195, %v4181, %v4183
        %v4185 = vrot.slane %v4141, 1
        %v4186 = vsel %vm1195, %v4183, %v4185
        %v4187 = vrot.slane %v4142, 1
        %v4188 = vsel %vm1195, %v4185, %v4187
        %v4189 = vrot.slane %v4143, 1
        %v4190 = vsel %vm1195, %v4187, %v4189
        %v4191 = vrot.slane %v4144, 1
        %v4192 = vsel %vm1195, %v4189, %v4191
        %v4193 = vrot.slane %v4145, 1
        %v4194 = vsel %vm1195, %v4191, %v4193
        %v4195 = vrot.slane %v4146, 1
        %v4196 = vsel %vm1195, %v4193, %v4195
        %v4197 = vsel %vm2204, %v4174, 0
        %v4199 = vsel %vm2204, %v4176, 0
        %v4201 = vsel %vm2204, %v4178, 0
        %v4203 = vsel %vm2204, %v4180, 0
        %v4205 = vsel %vm2204, %v4182, 0
        %v4207 = vsel %vm2204, %v4184, 0
        %v4209 = vsel %vm2204, %v4186, 0
        %v4211 = vsel %vm2204, %v4188, 0
        %v4213 = vsel %vm2204, %v4190, 0
        %v4215 = vsel %vm2204, %v4192, 0
        %v4217 = vsel %vm2204, %v4194, 0
        %v4219 = vsel %vm2204, %v4196, 0
        %v4221 = vsel %vm2204, %v4195, 0
        %4223 = vmatprep.subr.mxu0 0.0
        %4224 = vmatpush1.msra.mxu0 %v4147
        %4225 = vmatprep.subr.mxu0 0.0
        %4226 = vmatpush1.msra.mxu0 %v4148
        %4227 = vmatprep.subr.mxu0 0.0
        %4228 = vmatpush1.msra.mxu0 %v4149
        %4229 = vmatprep.subr.mxu0 0.0
        %4230 = vmatpush1.msra.mxu0 %v4150
        %4231 = vmatprep.subr.mxu0 0.0
        %4232 = vmatpush1.msra.mxu0 %v4151
        %4233 = vmatprep.subr.mxu0 0.0
        %4234 = vmatpush1.msra.mxu0 %v4152
        %4235 = vmatprep.subr.mxu0 0.0
        %4236 = vmatpush1.msra.mxu0 %v4153
        %4237 = vmatprep.subr.mxu0 0.0
        %4238 = vmatpush1.msra.mxu0 %v4154
        %4239 = vmatprep.subr.mxu0 0.0
        %4240 = vmatpush1.msra.mxu0 %v4155
        %4241 = vmatprep.subr.mxu0 0.0
        %4242 = vmatpush1.msra.mxu0 %v4156
        %4243 = vmatprep.subr.mxu0 0.0
        %4244 = vmatpush1.msra.mxu0 %v4157
        %4245 = vmatprep.subr.mxu0 0.0
        %4246 = vmatpush1.msra.mxu0 %v4158
        %4247 = vmatprep.subr.mxu0 0.0
        %4248 = vmatpush1.msra.mxu0 0.0
        %4249 = vmatprep.subr.mxu0 0.0
        %4250 = vmatpush1.msra.mxu0 0.0
        %4251 = vmatprep.subr.mxu0 0.0
        %4252 = vmatpush1.msra.mxu0 0.0
        %4253 = vmatprep.subr.mxu0 0.0
        %4254 = vmatpush1.msra.mxu0 0.0
        %4255 = vmatprep.subr.mxu0 0.0
        %4256 = vmatpush1.msra.mxu0 0.0
        %4257 = vmatprep.subr.mxu0 0.0
        %4258 = vmatpush1.msra.mxu0 0.0
        %4259 = vmatprep.subr.mxu0 0.0
        %4260 = vmatpush1.msra.mxu0 0.0
        %4261 = vmatprep.subr.mxu0 0.0
        %4262 = vmatpush1.msra.mxu0 0.0
        %4263 = vmatprep.subr.mxu0 0.0
        %4264 = vmatpush1.msra.mxu0 0.0
        %4265 = vmatprep.subr.mxu0 0.0
        %4266 = vmatpush1.msra.mxu0 0.0
        %4267 = vmatprep.subr.mxu0 0.0
        %4268 = vmatpush1.msra.mxu0 0.0
        %4269 = vmatprep.subr.mxu0 0.0
        %4270 = vmatpush1.msra.mxu0 0.0
        %4271 = vmatprep.subr.mxu0 0.0
        %4272 = vmatpush1.msra.mxu0 0.0
        %4273 = vmatprep.subr.mxu0 0.0
        %4274 = vmatpush1.msra.mxu0 0.0
        %4275 = vmatprep.subr.mxu0 0.0
        %4276 = vmatpush1.msra.mxu0 0.0
        %4277 = vmatprep.subr.mxu0 0.0
        %4278 = vmatpush1.msra.mxu0 0.0
        %4279 = vmatprep.subr.mxu0 0.0
        %4280 = vmatpush1.msra.mxu0 0.0
        %4281 = vmatprep.subr.mxu0 0.0
        %4282 = vmatpush1.msra.mxu0 0.0
        %4283 = vmatprep.subr.mxu0 0.0
        %4284 = vmatpush1.msra.mxu0 0.0
        %4285 = vmatprep.subr.mxu0 0.0
        %4286 = vmatpush1.msra.mxu0 0.0
        %4287 = vmatprep.mubr.f32.mxu0 0.0
        %4288 = vmatmul.mubr.f32.gmra.mrb[0].mxu0 %v4197
        %v4289 = vpop.f32.mrb[0].mxu0
        %v4290 = vadd.f32 0.0, %v4289
        %v4291 = vpop.f32.mrb[0].mxu0
        %4292 = vmatprep.mubr.f32.mxu0 0.0
        %4293 = vmatmul.mubr.f32.gmra.mrb[0].mxu0 %v4199
        %v4294 = vpop.f32.mrb[0].mxu0
        %v4295 = vadd.f32 0.0, %v4294
        %v4296 = vpop.f32.mrb[0].mxu0
        %4297 = vmatprep.mubr.f32.mxu0 0.0
        %4298 = vmatmul.mubr.f32.gmra.mrb[0].mxu0 %v4201
        %v4299 = vpop.f32.mrb[0].mxu0
        %v4300 = vadd.f32 0.0, %v4299
        %v4301 = vpop.f32.mrb[0].mxu0
        %4302 = vmatprep.mubr.f32.mxu0 0.0
        %4303 = vmatmul.mubr.f32.gmra.mrb[0].mxu0 %v4203
        %v4304 = vpop.f32.mrb[0].mxu0
        %v4305 = vadd.f32 0.0, %v4304
        %v4306 = vpop.f32.mrb[0].mxu0
        %4307 = vmatprep.mubr.f32.mxu0 0.0
        %4308 = vmatmul.mubr.f32.gmra.mrb[0].mxu0 %v4205
        %v4309 = vpop.f32.mrb[0].mxu0
        %v4310 = vadd.f32 0.0, %v4309
        %v4311 = vpop.f32.mrb[0].mxu0
        %4312 = vmatprep.mubr.f32.mxu0 0.0
        %4313 = vmatmul.mubr.f32.gmra.mrb[0].mxu0 %v4207
        %v4314 = vpop.f32.mrb[0].mxu0
        %v4315 = vadd.f32 0.0, %v4314
        %v4316 = vpop.f32.mrb[0].mxu0
        %4317 = vmatprep.mubr.f32.mxu0 0.0
        %4318 = vmatmul.mubr.f32.gmra.mrb[0].mxu0 %v4209
        %v4319 = vpop.f32.mrb[0].mxu0
        %v4320 = vadd.f32 0.0, %v4319
        %v4321 = vpop.f32.mrb[0].mxu0
        %4322 = vmatprep.mubr.f32.mxu0 0.0
        %4323 = vmatmul.mubr.f32.gmra.mrb[0].mxu0 %v4211
        %v4324 = vpop.f32.mrb[0].mxu0
        %v4325 = vadd.f32 0.0, %v4324
        %v4326 = vpop.f32.mrb[0].mxu0
        %4327 = vmatprep.mubr.f32.mxu0 0.0
        %4328 = vmatmul.mubr.f32.gmra.mrb[0].mxu0 %v4213
        %v4329 = vpop.f32.mrb[0].mxu0
        %v4330 = vadd.f32 0.0, %v4329
        %v4331 = vpop.f32.mrb[0].mxu0
        %4332 = vmatprep.mubr.f32.mxu0 0.0
        %4333 = vmatmul.mubr.f32.gmra.mrb[0].mxu0 %v4215
        %v4334 = vpop.f32.mrb[0].mxu0
        %v4335 = vadd.f32 0.0, %v4334
        %v4336 = vpop.f32.mrb[0].mxu0
        %4337 = vmatprep.mubr.f32.mxu0 0.0
        %4338 = vmatmul.mubr.f32.gmra.mrb[0].mxu0 %v4217
        %v4339 = vpop.f32.mrb[0].mxu0
        %v4340 = vadd.f32 0.0, %v4339
        %v4341 = vpop.f32.mrb[0].mxu0
        %4342 = vmatprep.mubr.f32.mxu0 0.0
        %4343 = vmatmul.mubr.f32.gmra.mrb[0].mxu0 %v4219
        %v4344 = vpop.f32.mrb[0].mxu0
        %v4345 = vadd.f32 0.0, %v4344
        %v4346 = vpop.f32.mrb[0].mxu0
        %4347 = vmatprep.mubr.f32.mxu0 0.0
        %4348 = vmatmul.mubr.f32.gmra.mrb[0].mxu0 %v4221
        %v4349 = vpop.f32.mrb[0].mxu0
        %v4350 = vadd.f32 0.0, %v4349
        %v4351 = vpop.f32.mrb[0].mxu0
        %4352 = vdwg.mxu0
        %v4353 = vadd.f32 %v4132, %v4290
        %v4354 = vadd.f32 %v4132, %v4295
        %v4355 = vadd.f32 %v4132, %v4300
        %v4356 = vadd.f32 %v4132, %v4305
        %v4357 = vadd.f32 %v4132, %v4310
        %v4358 = vadd.f32 %v4132, %v4315
        %v4359 = vadd.f32 %v4132, %v4320
        %v4360 = vadd.f32 %v4132, %v4325
        %v4361 = vadd.f32 %v4132, %v4330
        %v4362 = vadd.f32 %v4132, %v4335
        %v4363 = vadd.f32 %v4132, %v4340
        %v4364 = vadd.f32 %v4132, %v4345
        %v4365 = vadd.f32 %v4132, %v4350
        %v4366 = vld [vmem:[#allocation2 + $0x18] sm:$0xf8]
        %v4367 = vld [vmem:[#allocation2 + $0x30] sm:$0xff]
        %v4368 = vld [vmem:[#allocation2 + $0x48] sm:$0xff]
        %v4369 = vld [vmem:[#allocation2 + $0x60] sm:$0xff]
        %v4370 = vld [vmem:[#allocation2 + $0x78] sm:$0xff]
        %v4371 = vld [vmem:[#allocation2 + $0x90] sm:$0xff]
        %v4372 = vld [vmem:[#allocation2 + $0xa8] sm:$0xff]
        %v4373 = vld [vmem:[#allocation2 + $0xc0] sm:$0xff]
        %v4374 = vld [vmem:[#allocation2 + $0xd8] sm:$0xff]
        %v4375 = vld [vmem:[#allocation2 + $0xf0] sm:$0xff]
        %v4376 = vld [vmem:[#allocation2 + $0x108] sm:$0xff]
        %v4377 = vld [vmem:[#allocation2 + $0x120] sm:$0xff]
        %v4378 = vld [vmem:[#allocation2 + $0x138] sm:$0x7f]
        %s4379 = scalar_lea.vmem [#allocation7], 96
        %v4380 = vld [vmem:[%s4379] sm:$0xff]
        %v4381 = vld [vmem:[%s4379 + $0x8] sm:$0xff]
        %v4382 = vld [vmem:[%s4379 + $0x10] sm:$0xff]
        %v4383 = vld [vmem:[%s4379 + $0x18] sm:$0xff]
        %v4384 = vld [vmem:[%s4379 + $0x20] sm:$0xff]
        %v4385 = vld [vmem:[%s4379 + $0x28] sm:$0xff]
        %v4386 = vld [vmem:[%s4379 + $0x30] sm:$0xff]
        %v4387 = vld [vmem:[%s4379 + $0x38] sm:$0xff]
        %v4388 = vld [vmem:[%s4379 + $0x40] sm:$0xff]
        %v4389 = vld [vmem:[%s4379 + $0x48] sm:$0xff]
        %v4390 = vld [vmem:[%s4379 + $0x50] sm:$0xff]
        %v4391 = vld [vmem:[%s4379 + $0x58] sm:$0xff]
        %v4405 = vrot.slane %v4366, 3
        %v4406 = vrot.slane %v4367, 3
        %v4407 = vsel %vm1424, %v4405, %v4406
        %v4408 = vrot.slane %v4368, 3
        %v4409 = vsel %vm1424, %v4406, %v4408
        %v4410 = vrot.slane %v4369, 3
        %v4411 = vsel %vm1424, %v4408, %v4410
        %v4412 = vrot.slane %v4370, 3
        %v4413 = vsel %vm1424, %v4410, %v4412
        %v4414 = vrot.slane %v4371, 3
        %v4415 = vsel %vm1424, %v4412, %v4414
        %v4416 = vrot.slane %v4372, 3
        %v4417 = vsel %vm1424, %v4414, %v4416
        %v4418 = vrot.slane %v4373, 3
        %v4419 = vsel %vm1424, %v4416, %v4418
        %v4420 = vrot.slane %v4374, 3
        %v4421 = vsel %vm1424, %v4418, %v4420
        %v4422 = vrot.slane %v4375, 3
        %v4423 = vsel %vm1424, %v4420, %v4422
        %v4424 = vrot.slane %v4376, 3
        %v4425 = vsel %vm1424, %v4422, %v4424
        %v4426 = vrot.slane %v4377, 3
        %v4427 = vsel %vm1424, %v4424, %v4426
        %v4428 = vrot.slane %v4378, 3
        %v4429 = vsel %vm1424, %v4426, %v4428
        %v4430 = vsel %vm2204, %v4407, 0
        %v4432 = vsel %vm2204, %v4409, 0
        %v4434 = vsel %vm2204, %v4411, 0
        %v4436 = vsel %vm2204, %v4413, 0
        %v4438 = vsel %vm2204, %v4415, 0
        %v4440 = vsel %vm2204, %v4417, 0
        %v4442 = vsel %vm2204, %v4419, 0
        %v4444 = vsel %vm2204, %v4421, 0
        %v4446 = vsel %vm2204, %v4423, 0
        %v4448 = vsel %vm2204, %v4425, 0
        %v4450 = vsel %vm2204, %v4427, 0
        %v4452 = vsel %vm2204, %v4429, 0
        %v4454 = vsel %vm2204, %v4428, 0
        %4456 = vmatprep.subr.mxu0 0.0
        %4457 = vmatpush1.msra.mxu0 %v4380
        %4458 = vmatprep.subr.mxu0 0.0
        %4459 = vmatpush1.msra.mxu0 %v4381
        %4460 = vmatprep.subr.mxu0 0.0
        %4461 = vmatpush1.msra.mxu0 %v4382
        %4462 = vmatprep.subr.mxu0 0.0
        %4463 = vmatpush1.msra.mxu0 %v4383
        %4464 = vmatprep.subr.mxu0 0.0
        %4465 = vmatpush1.msra.mxu0 %v4384
        %4466 = vmatprep.subr.mxu0 0.0
        %4467 = vmatpush1.msra.mxu0 %v4385
        %4468 = vmatprep.subr.mxu0 0.0
        %4469 = vmatpush1.msra.mxu0 %v4386
        %4470 = vmatprep.subr.mxu0 0.0
        %4471 = vmatpush1.msra.mxu0 %v4387
        %4472 = vmatprep.subr.mxu0 0.0
        %4473 = vmatpush1.msra.mxu0 %v4388
        %4474 = vmatprep.subr.mxu0 0.0
        %4475 = vmatpush1.msra.mxu0 %v4389
        %4476 = vmatprep.subr.mxu0 0.0
        %4477 = vmatpush1.msra.mxu0 %v4390
        %4478 = vmatprep.subr.mxu0 0.0
        %4479 = vmatpush1.msra.mxu0 %v4391
        %4480 = vmatprep.subr.mxu0 0.0
        %4481 = vmatpush1.msra.mxu0 0.0
        %4482 = vmatprep.subr.mxu0 0.0
        %4483 = vmatpush1.msra.mxu0 0.0
        %4484 = vmatprep.subr.mxu0 0.0
        %4485 = vmatpush1.msra.mxu0 0.0
        %4486 = vmatprep.subr.mxu0 0.0
        %4487 = vmatpush1.msra.mxu0 0.0
        %4488 = vmatprep.subr.mxu0 0.0
        %4489 = vmatpush1.msra.mxu0 0.0
        %4490 = vmatprep.subr.mxu0 0.0
        %4491 = vmatpush1.msra.mxu0 0.0
        %4492 = vmatprep.subr.mxu0 0.0
        %4493 = vmatpush1.msra.mxu0 0.0
        %4494 = vmatprep.subr.mxu0 0.0
        %4495 = vmatpush1.msra.mxu0 0.0
        %4496 = vmatprep.subr.mxu0 0.0
        %4497 = vmatpush1.msra.mxu0 0.0
        %4498 = vmatprep.subr.mxu0 0.0
        %4499 = vmatpush1.msra.mxu0 0.0
        %4500 = vmatprep.subr.mxu0 0.0
        %4501 = vmatpush1.msra.mxu0 0.0
        %4502 = vmatprep.subr.mxu0 0.0
        %4503 = vmatpush1.msra.mxu0 0.0
        %4504 = vmatprep.subr.mxu0 0.0
        %4505 = vmatpush1.msra.mxu0 0.0
        %4506 = vmatprep.subr.mxu0 0.0
        %4507 = vmatpush1.msra.mxu0 0.0
        %4508 = vmatprep.subr.mxu0 0.0
        %4509 = vmatpush1.msra.mxu0 0.0
        %4510 = vmatprep.subr.mxu0 0.0
        %4511 = vmatpush1.msra.mxu0 0.0
        %4512 = vmatprep.subr.mxu0 0.0
        %4513 = vmatpush1.msra.mxu0 0.0
        %4514 = vmatprep.subr.mxu0 0.0
        %4515 = vmatpush1.msra.mxu0 0.0
        %4516 = vmatprep.subr.mxu0 0.0
        %4517 = vmatpush1.msra.mxu0 0.0
        %4518 = vmatprep.subr.mxu0 0.0
        %4519 = vmatpush1.msra.mxu0 0.0
        %4520 = vmatprep.mubr.f32.mxu0 0.0
        %4521 = vmatmul.mubr.f32.gmra.mrb[0].mxu0 %v4430
        %v4522 = vpop.f32.mrb[0].mxu0
        %v4523 = vadd.f32 0.0, %v4522
        %v4524 = vpop.f32.mrb[0].mxu0
        %4525 = vmatprep.mubr.f32.mxu0 0.0
        %4526 = vmatmul.mubr.f32.gmra.mrb[0].mxu0 %v4432
        %v4527 = vpop.f32.mrb[0].mxu0
        %v4528 = vadd.f32 0.0, %v4527
        %v4529 = vpop.f32.mrb[0].mxu0
        %4530 = vmatprep.mubr.f32.mxu0 0.0
        %4531 = vmatmul.mubr.f32.gmra.mrb[0].mxu0 %v4434
        %v4532 = vpop.f32.mrb[0].mxu0
        %v4533 = vadd.f32 0.0, %v4532
        %v4534 = vpop.f32.mrb[0].mxu0
        %4535 = vmatprep.mubr.f32.mxu0 0.0
        %4536 = vmatmul.mubr.f32.gmra.mrb[0].mxu0 %v4436
        %v4537 = vpop.f32.mrb[0].mxu0
        %v4538 = vadd.f32 0.0, %v4537
        %v4539 = vpop.f32.mrb[0].mxu0
        %4540 = vmatprep.mubr.f32.mxu0 0.0
        %4541 = vmatmul.mubr.f32.gmra.mrb[0].mxu0 %v4438
        %v4542 = vpop.f32.mrb[0].mxu0
        %v4543 = vadd.f32 0.0, %v4542
        %v4544 = vpop.f32.mrb[0].mxu0
        %4545 = vmatprep.mubr.f32.mxu0 0.0
        %4546 = vmatmul.mubr.f32.gmra.mrb[0].mxu0 %v4440
        %v4547 = vpop.f32.mrb[0].mxu0
        %v4548 = vadd.f32 0.0, %v4547
        %v4549 = vpop.f32.mrb[0].mxu0
        %4550 = vmatprep.mubr.f32.mxu0 0.0
        %4551 = vmatmul.mubr.f32.gmra.mrb[0].mxu0 %v4442
        %v4552 = vpop.f32.mrb[0].mxu0
        %v4553 = vadd.f32 0.0, %v4552
        %v4554 = vpop.f32.mrb[0].mxu0
        %4555 = vmatprep.mubr.f32.mxu0 0.0
        %4556 = vmatmul.mubr.f32.gmra.mrb[0].mxu0 %v4444
        %v4557 = vpop.f32.mrb[0].mxu0
        %v4558 = vadd.f32 0.0, %v4557
        %v4559 = vpop.f32.mrb[0].mxu0
        %4560 = vmatprep.mubr.f32.mxu0 0.0
        %4561 = vmatmul.mubr.f32.gmra.mrb[0].mxu0 %v4446
        %v4562 = vpop.f32.mrb[0].mxu0
        %v4563 = vadd.f32 0.0, %v4562
        %v4564 = vpop.f32.mrb[0].mxu0
        %4565 = vmatprep.mubr.f32.mxu0 0.0
        %4566 = vmatmul.mubr.f32.gmra.mrb[0].mxu0 %v4448
        %v4567 = vpop.f32.mrb[0].mxu0
        %v4568 = vadd.f32 0.0, %v4567
        %v4569 = vpop.f32.mrb[0].mxu0
        %4570 = vmatprep.mubr.f32.mxu0 0.0
        %4571 = vmatmul.mubr.f32.gmra.mrb[0].mxu0 %v4450
        %v4572 = vpop.f32.mrb[0].mxu0
        %v4573 = vadd.f32 0.0, %v4572
        %v4574 = vpop.f32.mrb[0].mxu0
        %4575 = vmatprep.mubr.f32.mxu0 0.0
        %4576 = vmatmul.mubr.f32.gmra.mrb[0].mxu0 %v4452
        %v4577 = vpop.f32.mrb[0].mxu0
        %v4578 = vadd.f32 0.0, %v4577
        %v4579 = vpop.f32.mrb[0].mxu0
        %4580 = vmatprep.mubr.f32.mxu0 0.0
        %4581 = vmatmul.mubr.f32.gmra.mrb[0].mxu0 %v4454
        %v4582 = vpop.f32.mrb[0].mxu0
        %v4583 = vadd.f32 0.0, %v4582
        %v4584 = vpop.f32.mrb[0].mxu0
        %4585 = vdwg.mxu0
        %v4586 = vadd.f32 %v4353, %v4523
        %v4587 = vadd.f32 %v4354, %v4528
        %v4588 = vadd.f32 %v4355, %v4533
        %v4589 = vadd.f32 %v4356, %v4538
        %v4590 = vadd.f32 %v4357, %v4543
        %v4591 = vadd.f32 %v4358, %v4548
        %v4592 = vadd.f32 %v4359, %v4553
        %v4593 = vadd.f32 %v4360, %v4558
        %v4594 = vadd.f32 %v4361, %v4563
        %v4595 = vadd.f32 %v4362, %v4568
        %v4596 = vadd.f32 %v4363, %v4573
        %v4597 = vadd.f32 %v4364, %v4578
        %v4598 = vadd.f32 %v4365, %v4583
        %v4599 = vld [vmem:[#allocation2 + $0x30] sm:$0xe0]
        %v4600 = vld [vmem:[#allocation2 + $0x48] sm:$0xff]
        %v4601 = vld [vmem:[#allocation2 + $0x60] sm:$0xff]
        %v4602 = vld [vmem:[#allocation2 + $0x78] sm:$0xff]
        %v4603 = vld [vmem:[#allocation2 + $0x90] sm:$0xff]
        %v4604 = vld [vmem:[#allocation2 + $0xa8] sm:$0xff]
        %v4605 = vld [vmem:[#allocation2 + $0xc0] sm:$0xff]
        %v4606 = vld [vmem:[#allocation2 + $0xd8] sm:$0xff]
        %v4607 = vld [vmem:[#allocation2 + $0xf0] sm:$0xff]
        %v4608 = vld [vmem:[#allocation2 + $0x108] sm:$0xff]
        %v4609 = vld [vmem:[#allocation2 + $0x120] sm:$0xff]
        %v4610 = vld [vmem:[#allocation2 + $0x138] sm:$0xff]
        %v4611 = vld [vmem:[#allocation2 + $0x150] sm:$0xff]
        %v4612 = vld [vmem:[#allocation2 + $0x168] sm:$0x1]
        %s4613 = scalar_lea.vmem [#allocation7], 192
        %v4614 = vld [vmem:[%s4613] sm:$0xff]
        %v4615 = vld [vmem:[%s4613 + $0x8] sm:$0xff]
        %v4616 = vld [vmem:[%s4613 + $0x10] sm:$0xff]
        %v4617 = vld [vmem:[%s4613 + $0x18] sm:$0xff]
        %v4618 = vld [vmem:[%s4613 + $0x20] sm:$0xff]
        %v4619 = vld [vmem:[%s4613 + $0x28] sm:$0xff]
        %v4620 = vld [vmem:[%s4613 + $0x30] sm:$0xff]
        %v4621 = vld [vmem:[%s4613 + $0x38] sm:$0xff]
        %v4622 = vld [vmem:[%s4613 + $0x40] sm:$0xff]
        %v4623 = vld [vmem:[%s4613 + $0x48] sm:$0xff]
        %v4624 = vld [vmem:[%s4613 + $0x50] sm:$0xff]
        %v4625 = vld [vmem:[%s4613 + $0x58] sm:$0xff]
        %v4640 = vrot.slane %v4599, 5
        %v4641 = vrot.slane %v4600, 5
        %v4642 = vsel %vm920, %v4640, %v4641
        %v4643 = vrot.slane %v4601, 5
        %v4644 = vsel %vm920, %v4641, %v4643
        %v4645 = vrot.slane %v4602, 5
        %v4646 = vsel %vm920, %v4643, %v4645
        %v4647 = vrot.slane %v4603, 5
        %v4648 = vsel %vm920, %v4645, %v4647
        %v4649 = vrot.slane %v4604, 5
        %v4650 = vsel %vm920, %v4647, %v4649
        %v4651 = vrot.slane %v4605, 5
        %v4652 = vsel %vm920, %v4649, %v4651
        %v4653 = vrot.slane %v4606, 5
        %v4654 = vsel %vm920, %v4651, %v4653
        %v4655 = vrot.slane %v4607, 5
        %v4656 = vsel %vm920, %v4653, %v4655
        %v4657 = vrot.slane %v4608, 5
        %v4658 = vsel %vm920, %v4655, %v4657
        %v4659 = vrot.slane %v4609, 5
        %v4660 = vsel %vm920, %v4657, %v4659
        %v4661 = vrot.slane %v4610, 5
        %v4662 = vsel %vm920, %v4659, %v4661
        %v4663 = vrot.slane %v4611, 5
        %v4664 = vsel %vm920, %v4661, %v4663
        %v4665 = vrot.slane %v4612, 5
        %v4666 = vsel %vm920, %v4663, %v4665
        %v4667 = vsel %vm2204, %v4642, 0
        %v4669 = vsel %vm2204, %v4644, 0
        %v4671 = vsel %vm2204, %v4646, 0
        %v4673 = vsel %vm2204, %v4648, 0
        %v4675 = vsel %vm2204, %v4650, 0
        %v4677 = vsel %vm2204, %v4652, 0
        %v4679 = vsel %vm2204, %v4654, 0
        %v4681 = vsel %vm2204, %v4656, 0
        %v4683 = vsel %vm2204, %v4658, 0
        %v4685 = vsel %vm2204, %v4660, 0
        %v4687 = vsel %vm2204, %v4662, 0
        %v4689 = vsel %vm2204, %v4664, 0
        %v4691 = vsel %vm2204, %v4666, 0
        %4693 = vmatprep.subr.mxu0 0.0
        %4694 = vmatpush1.msra.mxu0 %v4614
        %4695 = vmatprep.subr.mxu0 0.0
        %4696 = vmatpush1.msra.mxu0 %v4615
        %4697 = vmatprep.subr.mxu0 0.0
        %4698 = vmatpush1.msra.mxu0 %v4616
        %4699 = vmatprep.subr.mxu0 0.0
        %4700 = vmatpush1.msra.mxu0 %v4617
        %4701 = vmatprep.subr.mxu0 0.0
        %4702 = vmatpush1.msra.mxu0 %v4618
        %4703 = vmatprep.subr.mxu0 0.0
        %4704 = vmatpush1.msra.mxu0 %v4619
        %4705 = vmatprep.subr.mxu0 0.0
        %4706 = vmatpush1.msra.mxu0 %v4620
        %4707 = vmatprep.subr.mxu0 0.0
        %4708 = vmatpush1.msra.mxu0 %v4621
        %4709 = vmatprep.subr.mxu0 0.0
        %4710 = vmatpush1.msra.mxu0 %v4622
        %4711 = vmatprep.subr.mxu0 0.0
        %4712 = vmatpush1.msra.mxu0 %v4623
        %4713 = vmatprep.subr.mxu0 0.0
        %4714 = vmatpush1.msra.mxu0 %v4624
        %4715 = vmatprep.subr.mxu0 0.0
        %4716 = vmatpush1.msra.mxu0 %v4625
        %4717 = vmatprep.subr.mxu0 0.0
        %4718 = vmatpush1.msra.mxu0 0.0
        %4719 = vmatprep.subr.mxu0 0.0
        %4720 = vmatpush1.msra.mxu0 0.0
        %4721 = vmatprep.subr.mxu0 0.0
        %4722 = vmatpush1.msra.mxu0 0.0
        %4723 = vmatprep.subr.mxu0 0.0
        %4724 = vmatpush1.msra.mxu0 0.0
        %4725 = vmatprep.subr.mxu0 0.0
        %4726 = vmatpush1.msra.mxu0 0.0
        %4727 = vmatprep.subr.mxu0 0.0
        %4728 = vmatpush1.msra.mxu0 0.0
        %4729 = vmatprep.subr.mxu0 0.0
        %4730 = vmatpush1.msra.mxu0 0.0
        %4731 = vmatprep.subr.mxu0 0.0
        %4732 = vmatpush1.msra.mxu0 0.0
        %4733 = vmatprep.subr.mxu0 0.0
        %4734 = vmatpush1.msra.mxu0 0.0
        %4735 = vmatprep.subr.mxu0 0.0
        %4736 = vmatpush1.msra.mxu0 0.0
        %4737 = vmatprep.subr.mxu0 0.0
        %4738 = vmatpush1.msra.mxu0 0.0
        %4739 = vmatprep.subr.mxu0 0.0
        %4740 = vmatpush1.msra.mxu0 0.0
        %4741 = vmatprep.subr.mxu0 0.0
        %4742 = vmatpush1.msra.mxu0 0.0
        %4743 = vmatprep.subr.mxu0 0.0
        %4744 = vmatpush1.msra.mxu0 0.0
        %4745 = vmatprep.subr.mxu0 0.0
        %4746 = vmatpush1.msra.mxu0 0.0
        %4747 = vmatprep.subr.mxu0 0.0
        %4748 = vmatpush1.msra.mxu0 0.0
        %4749 = vmatprep.subr.mxu0 0.0
        %4750 = vmatpush1.msra.mxu0 0.0
        %4751 = vmatprep.subr.mxu0 0.0
        %4752 = vmatpush1.msra.mxu0 0.0
        %4753 = vmatprep.subr.mxu0 0.0
        %4754 = vmatpush1.msra.mxu0 0.0
        %4755 = vmatprep.subr.mxu0 0.0
        %4756 = vmatpush1.msra.mxu0 0.0
        %4757 = vmatprep.mubr.f32.mxu0 0.0
        %4758 = vmatmul.mubr.f32.gmra.mrb[0].mxu0 %v4667
        %v4759 = vpop.f32.mrb[0].mxu0
        %v4760 = vadd.f32 0.0, %v4759
        %v4761 = vpop.f32.mrb[0].mxu0
        %4762 = vmatprep.mubr.f32.mxu0 0.0
        %4763 = vmatmul.mubr.f32.gmra.mrb[0].mxu0 %v4669
        %v4764 = vpop.f32.mrb[0].mxu0
        %v4765 = vadd.f32 0.0, %v4764
        %v4766 = vpop.f32.mrb[0].mxu0
        %4767 = vmatprep.mubr.f32.mxu0 0.0
        %4768 = vmatmul.mubr.f32.gmra.mrb[0].mxu0 %v4671
        %v4769 = vpop.f32.mrb[0].mxu0
        %v4770 = vadd.f32 0.0, %v4769
        %v4771 = vpop.f32.mrb[0].mxu0
        %4772 = vmatprep.mubr.f32.mxu0 0.0
        %4773 = vmatmul.mubr.f32.gmra.mrb[0].mxu0 %v4673
        %v4774 = vpop.f32.mrb[0].mxu0
        %v4775 = vadd.f32 0.0, %v4774
        %v4776 = vpop.f32.mrb[0].mxu0
        %4777 = vmatprep.mubr.f32.mxu0 0.0
        %4778 = vmatmul.mubr.f32.gmra.mrb[0].mxu0 %v4675
        %v4779 = vpop.f32.mrb[0].mxu0
        %v4780 = vadd.f32 0.0, %v4779
        %v4781 = vpop.f32.mrb[0].mxu0
        %4782 = vmatprep.mubr.f32.mxu0 0.0
        %4783 = vmatmul.mubr.f32.gmra.mrb[0].mxu0 %v4677
        %v4784 = vpop.f32.mrb[0].mxu0
        %v4785 = vadd.f32 0.0, %v4784
        %v4786 = vpop.f32.mrb[0].mxu0
        %4787 = vmatprep.mubr.f32.mxu0 0.0
        %4788 = vmatmul.mubr.f32.gmra.mrb[0].mxu0 %v4679
        %v4789 = vpop.f32.mrb[0].mxu0
        %v4790 = vadd.f32 0.0, %v4789
        %v4791 = vpop.f32.mrb[0].mxu0
        %4792 = vmatprep.mubr.f32.mxu0 0.0
        %4793 = vmatmul.mubr.f32.gmra.mrb[0].mxu0 %v4681
        %v4794 = vpop.f32.mrb[0].mxu0
        %v4795 = vadd.f32 0.0, %v4794
        %v4796 = vpop.f32.mrb[0].mxu0
        %4797 = vmatprep.mubr.f32.mxu0 0.0
        %4798 = vmatmul.mubr.f32.gmra.mrb[0].mxu0 %v4683
        %v4799 = vpop.f32.mrb[0].mxu0
        %v4800 = vadd.f32 0.0, %v4799
        %v4801 = vpop.f32.mrb[0].mxu0
        %4802 = vmatprep.mubr.f32.mxu0 0.0
        %4803 = vmatmul.mubr.f32.gmra.mrb[0].mxu0 %v4685
        %v4804 = vpop.f32.mrb[0].mxu0
        %v4805 = vadd.f32 0.0, %v4804
        %v4806 = vpop.f32.mrb[0].mxu0
        %4807 = vmatprep.mubr.f32.mxu0 0.0
        %4808 = vmatmul.mubr.f32.gmra.mrb[0].mxu0 %v4687
        %v4809 = vpop.f32.mrb[0].mxu0
        %v4810 = vadd.f32 0.0, %v4809
        %v4811 = vpop.f32.mrb[0].mxu0
        %4812 = vmatprep.mubr.f32.mxu0 0.0
        %4813 = vmatmul.mubr.f32.gmra.mrb[0].mxu0 %v4689
        %v4814 = vpop.f32.mrb[0].mxu0
        %v4815 = vadd.f32 0.0, %v4814
        %v4816 = vpop.f32.mrb[0].mxu0
        %4817 = vmatprep.mubr.f32.mxu0 0.0
        %4818 = vmatmul.mubr.f32.gmra.mrb[0].mxu0 %v4691
        %v4819 = vpop.f32.mrb[0].mxu0
        %v4820 = vadd.f32 0.0, %v4819
        %v4821 = vpop.f32.mrb[0].mxu0
        %4822 = vdwg.mxu0
        %v4823 = vadd.f32 %v4586, %v4760
        %v4824 = vadd.f32 %v4587, %v4765
        %v4825 = vadd.f32 %v4588, %v4770
        %v4826 = vadd.f32 %v4589, %v4775
        %v4827 = vadd.f32 %v4590, %v4780
        %v4828 = vadd.f32 %v4591, %v4785
        %v4829 = vadd.f32 %v4592, %v4790
        %v4830 = vadd.f32 %v4593, %v4795
        %v4831 = vadd.f32 %v4594, %v4800
        %v4832 = vadd.f32 %v4595, %v4805
        %v4833 = vadd.f32 %v4596, %v4810
        %v4834 = vadd.f32 %v4597, %v4815
        %v4835 = vadd.f32 %v4598, %v4820
        %v4836 = vmax.f32 %v4823, 0.0
        %v4837 = vmax.f32 %v4824, 0.0
        %v4838 = vmax.f32 %v4825, 0.0
        %v4839 = vmax.f32 %v4826, 0.0
        %v4840 = vmax.f32 %v4827, 0.0
        %v4841 = vmax.f32 %v4828, 0.0
        %v4842 = vmax.f32 %v4829, 0.0
        %v4843 = vmax.f32 %v4830, 0.0
        %v4844 = vmax.f32 %v4831, 0.0
        %v4845 = vmax.f32 %v4832, 0.0
        %v4846 = vmax.f32 %v4833, 0.0
        %v4847 = vmax.f32 %v4834, 0.0
        %v4848 = vmax.f32 %v4835, 0.0
        %4849 = vst.msk [vmem:[%s756] ss:$8 sm:$0x7] %vm755, 0.0
        %4850 = vst.msk [vmem:[%s756] ss:$8 sm:$0x0] %vm755, 0.0
        %4851 = vst.msk [vmem:[%s759] ss:$8 sm:$0x7] %vm755, 0.0
        %4852 = vst.msk [vmem:[%s759] ss:$8 sm:$0x0] %vm755, 0.0
        %v4853 = vmul.f32 %v4836, %v765
        %v4854 = vmul.f32 %v4837, %v770
        %v4855 = vmul.f32 %v4838, %v775
        %v4856 = vmul.f32 %v4839, %v780
        %v4857 = vmul.f32 %v4840, %v785
        %v4858 = vmul.f32 %v4841, %v790
        %v4859 = vmul.f32 %v4842, %v795
        %v4860 = vmul.f32 %v4843, %v800
        %v4861 = vmul.f32 %v4844, %v805
        %v4862 = vmul.f32 %v4845, %v810
        %v4863 = vmul.f32 %v4846, %v815
        %v4864 = vmul.f32 %v4847, %v820
        %v4865 = vmul.f32 %v4848, %v825
        %v4879 = vrot.slane %v4853, 4
        %v4880 = vrot.slane %v4854, 4
        %v4881 = vsel %vm853, %v4879, %v4880
        %v4882 = vrot.slane %v4855, 4
        %v4883 = vsel %vm853, %v4880, %v4882
        %v4884 = vrot.slane %v4856, 4
        %v4885 = vsel %vm853, %v4882, %v4884
        %v4886 = vrot.slane %v4857, 4
        %v4887 = vsel %vm853, %v4884, %v4886
        %v4888 = vrot.slane %v4858, 4
        %v4889 = vsel %vm853, %v4886, %v4888
        %v4890 = vrot.slane %v4859, 4
        %v4891 = vsel %vm853, %v4888, %v4890
        %v4892 = vrot.slane %v4860, 4
        %v4893 = vsel %vm853, %v4890, %v4892
        %v4894 = vrot.slane %v4861, 4
        %v4895 = vsel %vm853, %v4892, %v4894
        %v4896 = vrot.slane %v4862, 4
        %v4897 = vsel %vm853, %v4894, %v4896
        %v4898 = vrot.slane %v4863, 4
        %v4899 = vsel %vm853, %v4896, %v4898
        %v4900 = vrot.slane %v4864, 4
        %v4901 = vsel %vm853, %v4898, %v4900
        %v4902 = vrot.slane %v4865, 4
        %v4903 = vsel %vm853, %v4900, %v4902
        %4917 = vst.msk [vmem:[#allocation2 + $0x18] sm:$0xf0] %vm1920, %v4879
        %4918 = vst.msk [vmem:[#allocation2 + $0x30] sm:$0xff] %vm1922, %v4881
        %4919 = vst.msk [vmem:[#allocation2 + $0x48] sm:$0xff] %vm1922, %v4883
        %4920 = vst.msk [vmem:[#allocation2 + $0x60] sm:$0xff] %vm1922, %v4885
        %4921 = vst.msk [vmem:[#allocation2 + $0x78] sm:$0xff] %vm1922, %v4887
        %4922 = vst.msk [vmem:[#allocation2 + $0x90] sm:$0xff] %vm1922, %v4889
        %4923 = vst.msk [vmem:[#allocation2 + $0xa8] sm:$0xff] %vm1922, %v4891
        %4924 = vst.msk [vmem:[#allocation2 + $0xc0] sm:$0xff] %vm1922, %v4893
        %4925 = vst.msk [vmem:[#allocation2 + $0xd8] sm:$0xff] %vm1922, %v4895
        %4926 = vst.msk [vmem:[#allocation2 + $0xf0] sm:$0xff] %vm1922, %v4897
        %4927 = vst.msk [vmem:[#allocation2 + $0x108] sm:$0xff] %vm1922, %v4899
        %4928 = vst.msk [vmem:[#allocation2 + $0x120] sm:$0xff] %vm1922, %v4901
        %4929 = vst.msk [vmem:[#allocation2 + $0x138] sm:$0xff] %vm1922, %v4903
        %v4943 = vrot.slane %v4836, 5
        %v4944 = vrot.slane %v4837, 5
        %v4945 = vsel %vm920, %v4943, %v4944
        %v4946 = vrot.slane %v4838, 5
        %v4947 = vsel %vm920, %v4944, %v4946
        %v4948 = vrot.slane %v4839, 5
        %v4949 = vsel %vm920, %v4946, %v4948
        %v4950 = vrot.slane %v4840, 5
        %v4951 = vsel %vm920, %v4948, %v4950
        %v4952 = vrot.slane %v4841, 5
        %v4953 = vsel %vm920, %v4950, %v4952
        %v4954 = vrot.slane %v4842, 5
        %v4955 = vsel %vm920, %v4952, %v4954
        %v4956 = vrot.slane %v4843, 5
        %v4957 = vsel %vm920, %v4954, %v4956
        %v4958 = vrot.slane %v4844, 5
        %v4959 = vsel %vm920, %v4956, %v4958
        %v4960 = vrot.slane %v4845, 5
        %v4961 = vsel %vm920, %v4958, %v4960
        %v4962 = vrot.slane %v4846, 5
        %v4963 = vsel %vm920, %v4960, %v4962
        %v4964 = vrot.slane %v4847, 5
        %v4965 = vsel %vm920, %v4962, %v4964
        %v4966 = vrot.slane %v4848, 5
        %v4967 = vsel %vm920, %v4964, %v4966
        %4968 = vrot.lane.b32.xlu0 %v4943, 32
        %v4969 = vpop.permute.xlu0 %4968
        %4970 = vrot.lane.b32.xlu0 %v4945, 32
        %v4971 = vpop.permute.xlu0 %4970
        %4972 = vrot.lane.b32.xlu0 %v4947, 32
        %v4973 = vpop.permute.xlu0 %4972
        %4974 = vrot.lane.b32.xlu0 %v4949, 32
        %v4975 = vpop.permute.xlu0 %4974
        %4976 = vrot.lane.b32.xlu0 %v4951, 32
        %v4977 = vpop.permute.xlu0 %4976
        %4978 = vrot.lane.b32.xlu0 %v4953, 32
        %v4979 = vpop.permute.xlu0 %4978
        %4980 = vrot.lane.b32.xlu0 %v4955, 32
        %v4981 = vpop.permute.xlu0 %4980
        %4982 = vrot.lane.b32.xlu0 %v4957, 32
        %v4983 = vpop.permute.xlu0 %4982
        %4984 = vrot.lane.b32.xlu0 %v4959, 32
        %v4985 = vpop.permute.xlu0 %4984
        %4986 = vrot.lane.b32.xlu0 %v4961, 32
        %v4987 = vpop.permute.xlu0 %4986
        %4988 = vrot.lane.b32.xlu0 %v4963, 32
        %v4989 = vpop.permute.xlu0 %4988
        %4990 = vrot.lane.b32.xlu0 %v4965, 32
        %v4991 = vpop.permute.xlu0 %4990
        %4992 = vrot.lane.b32.xlu0 %v4967, 32
        %v4993 = vpop.permute.xlu0 %4992
        %5007 = vst.msk [vmem:[#allocation2 + $0x18] sm:$0xf8] %vm2012, %v4969
        %5008 = vst.msk [vmem:[#allocation2 + $0x30] sm:$0xff] %vm2014, %v4971
        %5009 = vst.msk [vmem:[#allocation2 + $0x48] sm:$0xff] %vm2014, %v4973
        %5010 = vst.msk [vmem:[#allocation2 + $0x60] sm:$0xff] %vm2014, %v4975
        %5011 = vst.msk [vmem:[#allocation2 + $0x78] sm:$0xff] %vm2014, %v4977
        %5012 = vst.msk [vmem:[#allocation2 + $0x90] sm:$0xff] %vm2014, %v4979
        %5013 = vst.msk [vmem:[#allocation2 + $0xa8] sm:$0xff] %vm2014, %v4981
        %5014 = vst.msk [vmem:[#allocation2 + $0xc0] sm:$0xff] %vm2014, %v4983
        %5015 = vst.msk [vmem:[#allocation2 + $0xd8] sm:$0xff] %vm2014, %v4985
        %5016 = vst.msk [vmem:[#allocation2 + $0xf0] sm:$0xff] %vm2014, %v4987
        %5017 = vst.msk [vmem:[#allocation2 + $0x108] sm:$0xff] %vm2014, %v4989
        %5018 = vst.msk [vmem:[#allocation2 + $0x120] sm:$0xff] %vm2014, %v4991
        %5019 = vst.msk [vmem:[#allocation2 + $0x138] sm:$0x7f] %vm2026, %v4993
        %v5020 = vmul.f32 %v4836, %v1003
        %v5021 = vmul.f32 %v4837, %v1007
        %v5022 = vmul.f32 %v4838, %v1011
        %v5023 = vmul.f32 %v4839, %v1015
        %v5024 = vmul.f32 %v4840, %v1019
        %v5025 = vmul.f32 %v4841, %v1023
        %v5026 = vmul.f32 %v4842, %v1027
        %v5027 = vmul.f32 %v4843, %v1031
        %v5028 = vmul.f32 %v4844, %v1035
        %v5029 = vmul.f32 %v4845, %v1039
        %v5030 = vmul.f32 %v4846, %v1043
        %v5031 = vmul.f32 %v4847, %v1047
        %v5032 = vmul.f32 %v4848, %v1051
        %v5046 = vrot.slane %v5020, 6
        %v5047 = vrot.slane %v5021, 6
        %v5048 = vsel %vm1079, %v5046, %v5047
        %v5049 = vrot.slane %v5022, 6
        %v5050 = vsel %vm1079, %v5047, %v5049
        %v5051 = vrot.slane %v5023, 6
        %v5052 = vsel %vm1079, %v5049, %v5051
        %v5053 = vrot.slane %v5024, 6
        %v5054 = vsel %vm1079, %v5051, %v5053
        %v5055 = vrot.slane %v5025, 6
        %v5056 = vsel %vm1079, %v5053, %v5055
        %v5057 = vrot.slane %v5026, 6
        %v5058 = vsel %vm1079, %v5055, %v5057
        %v5059 = vrot.slane %v5027, 6
        %v5060 = vsel %vm1079, %v5057, %v5059
        %v5061 = vrot.slane %v5028, 6
        %v5062 = vsel %vm1079, %v5059, %v5061
        %v5063 = vrot.slane %v5029, 6
        %v5064 = vsel %vm1079, %v5061, %v5063
        %v5065 = vrot.slane %v5030, 6
        %v5066 = vsel %vm1079, %v5063, %v5065
        %v5067 = vrot.slane %v5031, 6
        %v5068 = vsel %vm1079, %v5065, %v5067
        %v5069 = vrot.slane %v5032, 6
        %v5070 = vsel %vm1079, %v5067, %v5069
        %5071 = vrot.lane.b32.xlu0 %v5046, 64
        %v5072 = vpop.permute.xlu0 %5071
        %5073 = vrot.lane.b32.xlu0 %v5048, 64
        %v5074 = vpop.permute.xlu0 %5073
        %5075 = vrot.lane.b32.xlu0 %v5050, 64
        %v5076 = vpop.permute.xlu0 %5075
        %5077 = vrot.lane.b32.xlu0 %v5052, 64
        %v5078 = vpop.permute.xlu0 %5077
        %5079 = vrot.lane.b32.xlu0 %v5054, 64
        %v5080 = vpop.permute.xlu0 %5079
        %5081 = vrot.lane.b32.xlu0 %v5056, 64
        %v5082 = vpop.permute.xlu0 %5081
        %5083 = vrot.lane.b32.xlu0 %v5058, 64
        %v5084 = vpop.permute.xlu0 %5083
        %5085 = vrot.lane.b32.xlu0 %v5060, 64
        %v5086 = vpop.permute.xlu0 %5085
        %5087 = vrot.lane.b32.xlu0 %v5062, 64
        %v5088 = vpop.permute.xlu0 %5087
        %5089 = vrot.lane.b32.xlu0 %v5064, 64
        %v5090 = vpop.permute.xlu0 %5089
        %5091 = vrot.lane.b32.xlu0 %v5066, 64
        %v5092 = vpop.permute.xlu0 %5091
        %5093 = vrot.lane.b32.xlu0 %v5068, 64
        %v5094 = vpop.permute.xlu0 %5093
        %5095 = vrot.lane.b32.xlu0 %v5070, 64
        %v5096 = vpop.permute.xlu0 %5095
        %5110 = vst.msk [vmem:[#allocation2 + $0x18] sm:$0xfc] %vm2118, %v5072
        %5111 = vst.msk [vmem:[#allocation2 + $0x30] sm:$0xff] %vm2120, %v5074
        %5112 = vst.msk [vmem:[#allocation2 + $0x48] sm:$0xff] %vm2120, %v5076
        %5113 = vst.msk [vmem:[#allocation2 + $0x60] sm:$0xff] %vm2120, %v5078
        %5114 = vst.msk [vmem:[#allocation2 + $0x78] sm:$0xff] %vm2120, %v5080
        %5115 = vst.msk [vmem:[#allocation2 + $0x90] sm:$0xff] %vm2120, %v5082
        %5116 = vst.msk [vmem:[#allocation2 + $0xa8] sm:$0xff] %vm2120, %v5084
        %5117 = vst.msk [vmem:[#allocation2 + $0xc0] sm:$0xff] %vm2120, %v5086
        %5118 = vst.msk [vmem:[#allocation2 + $0xd8] sm:$0xff] %vm2120, %v5088
        %5119 = vst.msk [vmem:[#allocation2 + $0xf0] sm:$0xff] %vm2120, %v5090
        %5120 = vst.msk [vmem:[#allocation2 + $0x108] sm:$0xff] %vm2120, %v5092
        %5121 = vst.msk [vmem:[#allocation2 + $0x120] sm:$0xff] %vm2120, %v5094
        %5122 = vst.msk [vmem:[#allocation2 + $0x138] sm:$0x3f] %vm2132, %v5096
        %v5123 = vld [vmem:[%s12] sm:$0x1]
        %v5125 = vlaneseq
        %v5126 = vshrl.u32 %v5125, 7
        %v5127 = vsub.s32 0, %v5126
        %v5128 = vrot.slane %v5123, %v5127
        %v5130 = vld [vmem:[#allocation2] sm:$0xfe]
        %v5131 = vld [vmem:[#allocation2 + $0x18] sm:$0xff]
        %v5132 = vld [vmem:[#allocation2 + $0x30] sm:$0xff]
        %v5133 = vld [vmem:[#allocation2 + $0x48] sm:$0xff]
        %v5134 = vld [vmem:[#allocation2 + $0x60] sm:$0xff]
        %v5135 = vld [vmem:[#allocation2 + $0x78] sm:$0xff]
        %v5136 = vld [vmem:[#allocation2 + $0x90] sm:$0xff]
        %v5137 = vld [vmem:[#allocation2 + $0xa8] sm:$0xff]
        %v5138 = vld [vmem:[#allocation2 + $0xc0] sm:$0xff]
        %v5139 = vld [vmem:[#allocation2 + $0xd8] sm:$0xff]
        %v5140 = vld [vmem:[#allocation2 + $0xf0] sm:$0xff]
        %v5141 = vld [vmem:[#allocation2 + $0x108] sm:$0xff]
        %v5142 = vld [vmem:[#allocation2 + $0x120] sm:$0x1f]
        %v5143 = vld [vmem:[#allocation8] sm:$0xff]
        %v5144 = vld [vmem:[#allocation8 + $0x8] sm:$0xff]
        %v5145 = vld [vmem:[#allocation8 + $0x10] sm:$0xff]
        %v5146 = vld [vmem:[#allocation8 + $0x18] sm:$0xff]
        %v5147 = vld [vmem:[#allocation8 + $0x20] sm:$0xff]
        %v5148 = vld [vmem:[#allocation8 + $0x28] sm:$0xff]
        %v5149 = vld [vmem:[#allocation8 + $0x30] sm:$0xff]
        %v5150 = vld [vmem:[#allocation8 + $0x38] sm:$0xff]
        %v5151 = vld [vmem:[#allocation8 + $0x40] sm:$0xff]
        %v5152 = vld [vmem:[#allocation8 + $0x48] sm:$0xff]
        %v5153 = vld [vmem:[#allocation8 + $0x50] sm:$0xff]
        %v5154 = vld [vmem:[#allocation8 + $0x58] sm:$0xff]
        %v5168 = vrot.slane %v5130, 1
        %v5169 = vrot.slane %v5131, 1
        %v5170 = vsel %vm1195, %v5168, %v5169
        %v5171 = vrot.slane %v5132, 1
        %v5172 = vsel %vm1195, %v5169, %v5171
        %v5173 = vrot.slane %v5133, 1
        %v5174 = vsel %vm1195, %v5171, %v5173
        %v5175 = vrot.slane %v5134, 1
        %v5176 = vsel %vm1195, %v5173, %v5175
        %v5177 = vrot.slane %v5135, 1
        %v5178 = vsel %vm1195, %v5175, %v5177
        %v5179 = vrot.slane %v5136, 1
        %v5180 = vsel %vm1195, %v5177, %v5179
        %v5181 = vrot.slane %v5137, 1
        %v5182 = vsel %vm1195, %v5179, %v5181
        %v5183 = vrot.slane %v5138, 1
        %v5184 = vsel %vm1195, %v5181, %v5183
        %v5185 = vrot.slane %v5139, 1
        %v5186 = vsel %vm1195, %v5183, %v5185
        %v5187 = vrot.slane %v5140, 1
        %v5188 = vsel %vm1195, %v5185, %v5187
        %v5189 = vrot.slane %v5141, 1
        %v5190 = vsel %vm1195, %v5187, %v5189
        %v5191 = vrot.slane %v5142, 1
        %v5192 = vsel %vm1195, %v5189, %v5191
        %v5193 = vsel %vm2204, %v5170, 0
        %v5195 = vsel %vm2204, %v5172, 0
        %v5197 = vsel %vm2204, %v5174, 0
        %v5199 = vsel %vm2204, %v5176, 0
        %v5201 = vsel %vm2204, %v5178, 0
        %v5203 = vsel %vm2204, %v5180, 0
        %v5205 = vsel %vm2204, %v5182, 0
        %v5207 = vsel %vm2204, %v5184, 0
        %v5209 = vsel %vm2204, %v5186, 0
        %v5211 = vsel %vm2204, %v5188, 0
        %v5213 = vsel %vm2204, %v5190, 0
        %v5215 = vsel %vm2204, %v5192, 0
        %v5217 = vsel %vm2204, %v5191, 0
        %5219 = vmatprep.subr.mxu0 0.0
        %5220 = vmatpush1.msra.mxu0 %v5143
        %5221 = vmatprep.subr.mxu0 0.0
        %5222 = vmatpush1.msra.mxu0 %v5144
        %5223 = vmatprep.subr.mxu0 0.0
        %5224 = vmatpush1.msra.mxu0 %v5145
        %5225 = vmatprep.subr.mxu0 0.0
        %5226 = vmatpush1.msra.mxu0 %v5146
        %5227 = vmatprep.subr.mxu0 0.0
        %5228 = vmatpush1.msra.mxu0 %v5147
        %5229 = vmatprep.subr.mxu0 0.0
        %5230 = vmatpush1.msra.mxu0 %v5148
        %5231 = vmatprep.subr.mxu0 0.0
        %5232 = vmatpush1.msra.mxu0 %v5149
        %5233 = vmatprep.subr.mxu0 0.0
        %5234 = vmatpush1.msra.mxu0 %v5150
        %5235 = vmatprep.subr.mxu0 0.0
        %5236 = vmatpush1.msra.mxu0 %v5151
        %5237 = vmatprep.subr.mxu0 0.0
        %5238 = vmatpush1.msra.mxu0 %v5152
        %5239 = vmatprep.subr.mxu0 0.0
        %5240 = vmatpush1.msra.mxu0 %v5153
        %5241 = vmatprep.subr.mxu0 0.0
        %5242 = vmatpush1.msra.mxu0 %v5154
        %5243 = vmatprep.subr.mxu0 0.0
        %5244 = vmatpush1.msra.mxu0 0.0
        %5245 = vmatprep.subr.mxu0 0.0
        %5246 = vmatpush1.msra.mxu0 0.0
        %5247 = vmatprep.subr.mxu0 0.0
        %5248 = vmatpush1.msra.mxu0 0.0
        %5249 = vmatprep.subr.mxu0 0.0
        %5250 = vmatpush1.msra.mxu0 0.0
        %5251 = vmatprep.subr.mxu0 0.0
        %5252 = vmatpush1.msra.mxu0 0.0
        %5253 = vmatprep.subr.mxu0 0.0
        %5254 = vmatpush1.msra.mxu0 0.0
        %5255 = vmatprep.subr.mxu0 0.0
        %5256 = vmatpush1.msra.mxu0 0.0
        %5257 = vmatprep.subr.mxu0 0.0
        %5258 = vmatpush1.msra.mxu0 0.0
        %5259 = vmatprep.subr.mxu0 0.0
        %5260 = vmatpush1.msra.mxu0 0.0
        %5261 = vmatprep.subr.mxu0 0.0
        %5262 = vmatpush1.msra.mxu0 0.0
        %5263 = vmatprep.subr.mxu0 0.0
        %5264 = vmatpush1.msra.mxu0 0.0
        %5265 = vmatprep.subr.mxu0 0.0
        %5266 = vmatpush1.msra.mxu0 0.0
        %5267 = vmatprep.subr.mxu0 0.0
        %5268 = vmatpush1.msra.mxu0 0.0
        %5269 = vmatprep.subr.mxu0 0.0
        %5270 = vmatpush1.msra.mxu0 0.0
        %5271 = vmatprep.subr.mxu0 0.0
        %5272 = vmatpush1.msra.mxu0 0.0
        %5273 = vmatprep.subr.mxu0 0.0
        %5274 = vmatpush1.msra.mxu0 0.0
        %5275 = vmatprep.subr.mxu0 0.0
        %5276 = vmatpush1.msra.mxu0 0.0
        %5277 = vmatprep.subr.mxu0 0.0
        %5278 = vmatpush1.msra.mxu0 0.0
        %5279 = vmatprep.subr.mxu0 0.0
        %5280 = vmatpush1.msra.mxu0 0.0
        %5281 = vmatprep.subr.mxu0 0.0
        %5282 = vmatpush1.msra.mxu0 0.0
        %5283 = vmatprep.mubr.f32.mxu0 0.0
        %5284 = vmatmul.mubr.f32.gmra.mrb[0].mxu0 %v5193
        %v5285 = vpop.f32.mrb[0].mxu0
        %v5286 = vadd.f32 0.0, %v5285
        %v5287 = vpop.f32.mrb[0].mxu0
        %5288 = vmatprep.mubr.f32.mxu0 0.0
        %5289 = vmatmul.mubr.f32.gmra.mrb[0].mxu0 %v5195
        %v5290 = vpop.f32.mrb[0].mxu0
        %v5291 = vadd.f32 0.0, %v5290
        %v5292 = vpop.f32.mrb[0].mxu0
        %5293 = vmatprep.mubr.f32.mxu0 0.0
        %5294 = vmatmul.mubr.f32.gmra.mrb[0].mxu0 %v5197
        %v5295 = vpop.f32.mrb[0].mxu0
        %v5296 = vadd.f32 0.0, %v5295
        %v5297 = vpop.f32.mrb[0].mxu0
        %5298 = vmatprep.mubr.f32.mxu0 0.0
        %5299 = vmatmul.mubr.f32.gmra.mrb[0].mxu0 %v5199
        %v5300 = vpop.f32.mrb[0].mxu0
        %v5301 = vadd.f32 0.0, %v5300
        %v5302 = vpop.f32.mrb[0].mxu0
        %5303 = vmatprep.mubr.f32.mxu0 0.0
        %5304 = vmatmul.mubr.f32.gmra.mrb[0].mxu0 %v5201
        %v5305 = vpop.f32.mrb[0].mxu0
        %v5306 = vadd.f32 0.0, %v5305
        %v5307 = vpop.f32.mrb[0].mxu0
        %5308 = vmatprep.mubr.f32.mxu0 0.0
        %5309 = vmatmul.mubr.f32.gmra.mrb[0].mxu0 %v5203
        %v5310 = vpop.f32.mrb[0].mxu0
        %v5311 = vadd.f32 0.0, %v5310
        %v5312 = vpop.f32.mrb[0].mxu0
        %5313 = vmatprep.mubr.f32.mxu0 0.0
        %5314 = vmatmul.mubr.f32.gmra.mrb[0].mxu0 %v5205
        %v5315 = vpop.f32.mrb[0].mxu0
        %v5316 = vadd.f32 0.0, %v5315
        %v5317 = vpop.f32.mrb[0].mxu0
        %5318 = vmatprep.mubr.f32.mxu0 0.0
        %5319 = vmatmul.mubr.f32.gmra.mrb[0].mxu0 %v5207
        %v5320 = vpop.f32.mrb[0].mxu0
        %v5321 = vadd.f32 0.0, %v5320
        %v5322 = vpop.f32.mrb[0].mxu0
        %5323 = vmatprep.mubr.f32.mxu0 0.0
        %5324 = vmatmul.mubr.f32.gmra.mrb[0].mxu0 %v5209
        %v5325 = vpop.f32.mrb[0].mxu0
        %v5326 = vadd.f32 0.0, %v5325
        %v5327 = vpop.f32.mrb[0].mxu0
        %5328 = vmatprep.mubr.f32.mxu0 0.0
        %5329 = vmatmul.mubr.f32.gmra.mrb[0].mxu0 %v5211
        %v5330 = vpop.f32.mrb[0].mxu0
        %v5331 = vadd.f32 0.0, %v5330
        %v5332 = vpop.f32.mrb[0].mxu0
        %5333 = vmatprep.mubr.f32.mxu0 0.0
        %5334 = vmatmul.mubr.f32.gmra.mrb[0].mxu0 %v5213
        %v5335 = vpop.f32.mrb[0].mxu0
        %v5336 = vadd.f32 0.0, %v5335
        %v5337 = vpop.f32.mrb[0].mxu0
        %5338 = vmatprep.mubr.f32.mxu0 0.0
        %5339 = vmatmul.mubr.f32.gmra.mrb[0].mxu0 %v5215
        %v5340 = vpop.f32.mrb[0].mxu0
        %v5341 = vadd.f32 0.0, %v5340
        %v5342 = vpop.f32.mrb[0].mxu0
        %5343 = vmatprep.mubr.f32.mxu0 0.0
        %5344 = vmatmul.mubr.f32.gmra.mrb[0].mxu0 %v5217
        %v5345 = vpop.f32.mrb[0].mxu0
        %v5346 = vadd.f32 0.0, %v5345
        %v5347 = vpop.f32.mrb[0].mxu0
        %5348 = vdwg.mxu0
        %v5349 = vadd.f32 %v5128, %v5286
        %v5350 = vadd.f32 %v5128, %v5291
        %v5351 = vadd.f32 %v5128, %v5296
        %v5352 = vadd.f32 %v5128, %v5301
        %v5353 = vadd.f32 %v5128, %v5306
        %v5354 = vadd.f32 %v5128, %v5311
        %v5355 = vadd.f32 %v5128, %v5316
        %v5356 = vadd.f32 %v5128, %v5321
        %v5357 = vadd.f32 %v5128, %v5326
        %v5358 = vadd.f32 %v5128, %v5331
        %v5359 = vadd.f32 %v5128, %v5336
        %v5360 = vadd.f32 %v5128, %v5341
        %v5361 = vadd.f32 %v5128, %v5346
        %v5362 = vld [vmem:[#allocation2 + $0x18] sm:$0xf8]
        %v5363 = vld [vmem:[#allocation2 + $0x30] sm:$0xff]
        %v5364 = vld [vmem:[#allocation2 + $0x48] sm:$0xff]
        %v5365 = vld [vmem:[#allocation2 + $0x60] sm:$0xff]
        %v5366 = vld [vmem:[#allocation2 + $0x78] sm:$0xff]
        %v5367 = vld [vmem:[#allocation2 + $0x90] sm:$0xff]
        %v5368 = vld [vmem:[#allocation2 + $0xa8] sm:$0xff]
        %v5369 = vld [vmem:[#allocation2 + $0xc0] sm:$0xff]
        %v5370 = vld [vmem:[#allocation2 + $0xd8] sm:$0xff]
        %v5371 = vld [vmem:[#allocation2 + $0xf0] sm:$0xff]
        %v5372 = vld [vmem:[#allocation2 + $0x108] sm:$0xff]
        %v5373 = vld [vmem:[#allocation2 + $0x120] sm:$0xff]
        %v5374 = vld [vmem:[#allocation2 + $0x138] sm:$0x7f]
        %s5375 = scalar_lea.vmem [#allocation8], 96
        %v5376 = vld [vmem:[%s5375] sm:$0xff]
        %v5377 = vld [vmem:[%s5375 + $0x8] sm:$0xff]
        %v5378 = vld [vmem:[%s5375 + $0x10] sm:$0xff]
        %v5379 = vld [vmem:[%s5375 + $0x18] sm:$0xff]
        %v5380 = vld [vmem:[%s5375 + $0x20] sm:$0xff]
        %v5381 = vld [vmem:[%s5375 + $0x28] sm:$0xff]
        %v5382 = vld [vmem:[%s5375 + $0x30] sm:$0xff]
        %v5383 = vld [vmem:[%s5375 + $0x38] sm:$0xff]
        %v5384 = vld [vmem:[%s5375 + $0x40] sm:$0xff]
        %v5385 = vld [vmem:[%s5375 + $0x48] sm:$0xff]
        %v5386 = vld [vmem:[%s5375 + $0x50] sm:$0xff]
        %v5387 = vld [vmem:[%s5375 + $0x58] sm:$0xff]
        %v5401 = vrot.slane %v5362, 3
        %v5402 = vrot.slane %v5363, 3
        %v5403 = vsel %vm1424, %v5401, %v5402
        %v5404 = vrot.slane %v5364, 3
        %v5405 = vsel %vm1424, %v5402, %v5404
        %v5406 = vrot.slane %v5365, 3
        %v5407 = vsel %vm1424, %v5404, %v5406
        %v5408 = vrot.slane %v5366, 3
        %v5409 = vsel %vm1424, %v5406, %v5408
        %v5410 = vrot.slane %v5367, 3
        %v5411 = vsel %vm1424, %v5408, %v5410
        %v5412 = vrot.slane %v5368, 3
        %v5413 = vsel %vm1424, %v5410, %v5412
        %v5414 = vrot.slane %v5369, 3
        %v5415 = vsel %vm1424, %v5412, %v5414
        %v5416 = vrot.slane %v5370, 3
        %v5417 = vsel %vm1424, %v5414, %v5416
        %v5418 = vrot.slane %v5371, 3
        %v5419 = vsel %vm1424, %v5416, %v5418
        %v5420 = vrot.slane %v5372, 3
        %v5421 = vsel %vm1424, %v5418, %v5420
        %v5422 = vrot.slane %v5373, 3
        %v5423 = vsel %vm1424, %v5420, %v5422
        %v5424 = vrot.slane %v5374, 3
        %v5425 = vsel %vm1424, %v5422, %v5424
        %v5426 = vsel %vm2204, %v5403, 0
        %v5428 = vsel %vm2204, %v5405, 0
        %v5430 = vsel %vm2204, %v5407, 0
        %v5432 = vsel %vm2204, %v5409, 0
        %v5434 = vsel %vm2204, %v5411, 0
        %v5436 = vsel %vm2204, %v5413, 0
        %v5438 = vsel %vm2204, %v5415, 0
        %v5440 = vsel %vm2204, %v5417, 0
        %v5442 = vsel %vm2204, %v5419, 0
        %v5444 = vsel %vm2204, %v5421, 0
        %v5446 = vsel %vm2204, %v5423, 0
        %v5448 = vsel %vm2204, %v5425, 0
        %v5450 = vsel %vm2204, %v5424, 0
        %5452 = vmatprep.subr.mxu0 0.0
        %5453 = vmatpush1.msra.mxu0 %v5376
        %5454 = vmatprep.subr.mxu0 0.0
        %5455 = vmatpush1.msra.mxu0 %v5377
        %5456 = vmatprep.subr.mxu0 0.0
        %5457 = vmatpush1.msra.mxu0 %v5378
        %5458 = vmatprep.subr.mxu0 0.0
        %5459 = vmatpush1.msra.mxu0 %v5379
        %5460 = vmatprep.subr.mxu0 0.0
        %5461 = vmatpush1.msra.mxu0 %v5380
        %5462 = vmatprep.subr.mxu0 0.0
        %5463 = vmatpush1.msra.mxu0 %v5381
        %5464 = vmatprep.subr.mxu0 0.0
        %5465 = vmatpush1.msra.mxu0 %v5382
        %5466 = vmatprep.subr.mxu0 0.0
        %5467 = vmatpush1.msra.mxu0 %v5383
        %5468 = vmatprep.subr.mxu0 0.0
        %5469 = vmatpush1.msra.mxu0 %v5384
        %5470 = vmatprep.subr.mxu0 0.0
        %5471 = vmatpush1.msra.mxu0 %v5385
        %5472 = vmatprep.subr.mxu0 0.0
        %5473 = vmatpush1.msra.mxu0 %v5386
        %5474 = vmatprep.subr.mxu0 0.0
        %5475 = vmatpush1.msra.mxu0 %v5387
        %5476 = vmatprep.subr.mxu0 0.0
        %5477 = vmatpush1.msra.mxu0 0.0
        %5478 = vmatprep.subr.mxu0 0.0
        %5479 = vmatpush1.msra.mxu0 0.0
        %5480 = vmatprep.subr.mxu0 0.0
        %5481 = vmatpush1.msra.mxu0 0.0
        %5482 = vmatprep.subr.mxu0 0.0
        %5483 = vmatpush1.msra.mxu0 0.0
        %5484 = vmatprep.subr.mxu0 0.0
        %5485 = vmatpush1.msra.mxu0 0.0
        %5486 = vmatprep.subr.mxu0 0.0
        %5487 = vmatpush1.msra.mxu0 0.0
        %5488 = vmatprep.subr.mxu0 0.0
        %5489 = vmatpush1.msra.mxu0 0.0
        %5490 = vmatprep.subr.mxu0 0.0
        %5491 = vmatpush1.msra.mxu0 0.0
        %5492 = vmatprep.subr.mxu0 0.0
        %5493 = vmatpush1.msra.mxu0 0.0
        %5494 = vmatprep.subr.mxu0 0.0
        %5495 = vmatpush1.msra.mxu0 0.0
        %5496 = vmatprep.subr.mxu0 0.0
        %5497 = vmatpush1.msra.mxu0 0.0
        %5498 = vmatprep.subr.mxu0 0.0
        %5499 = vmatpush1.msra.mxu0 0.0
        %5500 = vmatprep.subr.mxu0 0.0
        %5501 = vmatpush1.msra.mxu0 0.0
        %5502 = vmatprep.subr.mxu0 0.0
        %5503 = vmatpush1.msra.mxu0 0.0
        %5504 = vmatprep.subr.mxu0 0.0
        %5505 = vmatpush1.msra.mxu0 0.0
        %5506 = vmatprep.subr.mxu0 0.0
        %5507 = vmatpush1.msra.mxu0 0.0
        %5508 = vmatprep.subr.mxu0 0.0
        %5509 = vmatpush1.msra.mxu0 0.0
        %5510 = vmatprep.subr.mxu0 0.0
        %5511 = vmatpush1.msra.mxu0 0.0
        %5512 = vmatprep.subr.mxu0 0.0
        %5513 = vmatpush1.msra.mxu0 0.0
        %5514 = vmatprep.subr.mxu0 0.0
        %5515 = vmatpush1.msra.mxu0 0.0
        %5516 = vmatprep.mubr.f32.mxu0 0.0
        %5517 = vmatmul.mubr.f32.gmra.mrb[0].mxu0 %v5426
        %v5518 = vpop.f32.mrb[0].mxu0
        %v5519 = vadd.f32 0.0, %v5518
        %v5520 = vpop.f32.mrb[0].mxu0
        %5521 = vmatprep.mubr.f32.mxu0 0.0
        %5522 = vmatmul.mubr.f32.gmra.mrb[0].mxu0 %v5428
        %v5523 = vpop.f32.mrb[0].mxu0
        %v5524 = vadd.f32 0.0, %v5523
        %v5525 = vpop.f32.mrb[0].mxu0
        %5526 = vmatprep.mubr.f32.mxu0 0.0
        %5527 = vmatmul.mubr.f32.gmra.mrb[0].mxu0 %v5430
        %v5528 = vpop.f32.mrb[0].mxu0
        %v5529 = vadd.f32 0.0, %v5528
        %v5530 = vpop.f32.mrb[0].mxu0
        %5531 = vmatprep.mubr.f32.mxu0 0.0
        %5532 = vmatmul.mubr.f32.gmra.mrb[0].mxu0 %v5432
        %v5533 = vpop.f32.mrb[0].mxu0
        %v5534 = vadd.f32 0.0, %v5533
        %v5535 = vpop.f32.mrb[0].mxu0
        %5536 = vmatprep.mubr.f32.mxu0 0.0
        %5537 = vmatmul.mubr.f32.gmra.mrb[0].mxu0 %v5434
        %v5538 = vpop.f32.mrb[0].mxu0
        %v5539 = vadd.f32 0.0, %v5538
        %v5540 = vpop.f32.mrb[0].mxu0
        %5541 = vmatprep.mubr.f32.mxu0 0.0
        %5542 = vmatmul.mubr.f32.gmra.mrb[0].mxu0 %v5436
        %v5543 = vpop.f32.mrb[0].mxu0
        %v5544 = vadd.f32 0.0, %v5543
        %v5545 = vpop.f32.mrb[0].mxu0
        %5546 = vmatprep.mubr.f32.mxu0 0.0
        %5547 = vmatmul.mubr.f32.gmra.mrb[0].mxu0 %v5438
        %v5548 = vpop.f32.mrb[0].mxu0
        %v5549 = vadd.f32 0.0, %v5548
        %v5550 = vpop.f32.mrb[0].mxu0
        %5551 = vmatprep.mubr.f32.mxu0 0.0
        %5552 = vmatmul.mubr.f32.gmra.mrb[0].mxu0 %v5440
        %v5553 = vpop.f32.mrb[0].mxu0
        %v5554 = vadd.f32 0.0, %v5553
        %v5555 = vpop.f32.mrb[0].mxu0
        %5556 = vmatprep.mubr.f32.mxu0 0.0
        %5557 = vmatmul.mubr.f32.gmra.mrb[0].mxu0 %v5442
        %v5558 = vpop.f32.mrb[0].mxu0
        %v5559 = vadd.f32 0.0, %v5558
        %v5560 = vpop.f32.mrb[0].mxu0
        %5561 = vmatprep.mubr.f32.mxu0 0.0
        %5562 = vmatmul.mubr.f32.gmra.mrb[0].mxu0 %v5444
        %v5563 = vpop.f32.mrb[0].mxu0
        %v5564 = vadd.f32 0.0, %v5563
        %v5565 = vpop.f32.mrb[0].mxu0
        %5566 = vmatprep.mubr.f32.mxu0 0.0
        %5567 = vmatmul.mubr.f32.gmra.mrb[0].mxu0 %v5446
        %v5568 = vpop.f32.mrb[0].mxu0
        %v5569 = vadd.f32 0.0, %v5568
        %v5570 = vpop.f32.mrb[0].mxu0
        %5571 = vmatprep.mubr.f32.mxu0 0.0
        %5572 = vmatmul.mubr.f32.gmra.mrb[0].mxu0 %v5448
        %v5573 = vpop.f32.mrb[0].mxu0
        %v5574 = vadd.f32 0.0, %v5573
        %v5575 = vpop.f32.mrb[0].mxu0
        %5576 = vmatprep.mubr.f32.mxu0 0.0
        %5577 = vmatmul.mubr.f32.gmra.mrb[0].mxu0 %v5450
        %v5578 = vpop.f32.mrb[0].mxu0
        %v5579 = vadd.f32 0.0, %v5578
        %v5580 = vpop.f32.mrb[0].mxu0
        %5581 = vdwg.mxu0
        %v5582 = vadd.f32 %v5349, %v5519
        %v5583 = vadd.f32 %v5350, %v5524
        %v5584 = vadd.f32 %v5351, %v5529
        %v5585 = vadd.f32 %v5352, %v5534
        %v5586 = vadd.f32 %v5353, %v5539
        %v5587 = vadd.f32 %v5354, %v5544
        %v5588 = vadd.f32 %v5355, %v5549
        %v5589 = vadd.f32 %v5356, %v5554
        %v5590 = vadd.f32 %v5357, %v5559
        %v5591 = vadd.f32 %v5358, %v5564
        %v5592 = vadd.f32 %v5359, %v5569
        %v5593 = vadd.f32 %v5360, %v5574
        %v5594 = vadd.f32 %v5361, %v5579
        %v5595 = vld [vmem:[#allocation2 + $0x30] sm:$0xe0]
        %v5596 = vld [vmem:[#allocation2 + $0x48] sm:$0xff]
        %v5597 = vld [vmem:[#allocation2 + $0x60] sm:$0xff]
        %v5598 = vld [vmem:[#allocation2 + $0x78] sm:$0xff]
        %v5599 = vld [vmem:[#allocation2 + $0x90] sm:$0xff]
        %v5600 = vld [vmem:[#allocation2 + $0xa8] sm:$0xff]
        %v5601 = vld [vmem:[#allocation2 + $0xc0] sm:$0xff]
        %v5602 = vld [vmem:[#allocation2 + $0xd8] sm:$0xff]
        %v5603 = vld [vmem:[#allocation2 + $0xf0] sm:$0xff]
        %v5604 = vld [vmem:[#allocation2 + $0x108] sm:$0xff]
        %v5605 = vld [vmem:[#allocation2 + $0x120] sm:$0xff]
        %v5606 = vld [vmem:[#allocation2 + $0x138] sm:$0xff]
        %v5607 = vld [vmem:[#allocation2 + $0x150] sm:$0xff]
        %v5608 = vld [vmem:[#allocation2 + $0x168] sm:$0x1]
        %s5609 = scalar_lea.vmem [#allocation8], 192
        %v5610 = vld [vmem:[%s5609] sm:$0xff]
        %v5611 = vld [vmem:[%s5609 + $0x8] sm:$0xff]
        %v5612 = vld [vmem:[%s5609 + $0x10] sm:$0xff]
        %v5613 = vld [vmem:[%s5609 + $0x18] sm:$0xff]
        %v5614 = vld [vmem:[%s5609 + $0x20] sm:$0xff]
        %v5615 = vld [vmem:[%s5609 + $0x28] sm:$0xff]
        %v5616 = vld [vmem:[%s5609 + $0x30] sm:$0xff]
        %v5617 = vld [vmem:[%s5609 + $0x38] sm:$0xff]
        %v5618 = vld [vmem:[%s5609 + $0x40] sm:$0xff]
        %v5619 = vld [vmem:[%s5609 + $0x48] sm:$0xff]
        %v5620 = vld [vmem:[%s5609 + $0x50] sm:$0xff]
        %v5621 = vld [vmem:[%s5609 + $0x58] sm:$0xff]
        %v5636 = vrot.slane %v5595, 5
        %v5637 = vrot.slane %v5596, 5
        %v5638 = vsel %vm920, %v5636, %v5637
        %v5639 = vrot.slane %v5597, 5
        %v5640 = vsel %vm920, %v5637, %v5639
        %v5641 = vrot.slane %v5598, 5
        %v5642 = vsel %vm920, %v5639, %v5641
        %v5643 = vrot.slane %v5599, 5
        %v5644 = vsel %vm920, %v5641, %v5643
        %v5645 = vrot.slane %v5600, 5
        %v5646 = vsel %vm920, %v5643, %v5645
        %v5647 = vrot.slane %v5601, 5
        %v5648 = vsel %vm920, %v5645, %v5647
        %v5649 = vrot.slane %v5602, 5
        %v5650 = vsel %vm920, %v5647, %v5649
        %v5651 = vrot.slane %v5603, 5
        %v5652 = vsel %vm920, %v5649, %v5651
        %v5653 = vrot.slane %v5604, 5
        %v5654 = vsel %vm920, %v5651, %v5653
        %v5655 = vrot.slane %v5605, 5
        %v5656 = vsel %vm920, %v5653, %v5655
        %v5657 = vrot.slane %v5606, 5
        %v5658 = vsel %vm920, %v5655, %v5657
        %v5659 = vrot.slane %v5607, 5
        %v5660 = vsel %vm920, %v5657, %v5659
        %v5661 = vrot.slane %v5608, 5
        %v5662 = vsel %vm920, %v5659, %v5661
        %v5663 = vsel %vm2204, %v5638, 0
        %v5665 = vsel %vm2204, %v5640, 0
        %v5667 = vsel %vm2204, %v5642, 0
        %v5669 = vsel %vm2204, %v5644, 0
        %v5671 = vsel %vm2204, %v5646, 0
        %v5673 = vsel %vm2204, %v5648, 0
        %v5675 = vsel %vm2204, %v5650, 0
        %v5677 = vsel %vm2204, %v5652, 0
        %v5679 = vsel %vm2204, %v5654, 0
        %v5681 = vsel %vm2204, %v5656, 0
        %v5683 = vsel %vm2204, %v5658, 0
        %v5685 = vsel %vm2204, %v5660, 0
        %v5687 = vsel %vm2204, %v5662, 0
        %5689 = vmatprep.subr.mxu0 0.0
        %5690 = vmatpush1.msra.mxu0 %v5610
        %5691 = vmatprep.subr.mxu0 0.0
        %5692 = vmatpush1.msra.mxu0 %v5611
        %5693 = vmatprep.subr.mxu0 0.0
        %5694 = vmatpush1.msra.mxu0 %v5612
        %5695 = vmatprep.subr.mxu0 0.0
        %5696 = vmatpush1.msra.mxu0 %v5613
        %5697 = vmatprep.subr.mxu0 0.0
        %5698 = vmatpush1.msra.mxu0 %v5614
        %5699 = vmatprep.subr.mxu0 0.0
        %5700 = vmatpush1.msra.mxu0 %v5615
        %5701 = vmatprep.subr.mxu0 0.0
        %5702 = vmatpush1.msra.mxu0 %v5616
        %5703 = vmatprep.subr.mxu0 0.0
        %5704 = vmatpush1.msra.mxu0 %v5617
        %5705 = vmatprep.subr.mxu0 0.0
        %5706 = vmatpush1.msra.mxu0 %v5618
        %5707 = vmatprep.subr.mxu0 0.0
        %5708 = vmatpush1.msra.mxu0 %v5619
        %5709 = vmatprep.subr.mxu0 0.0
        %5710 = vmatpush1.msra.mxu0 %v5620
        %5711 = vmatprep.subr.mxu0 0.0
        %5712 = vmatpush1.msra.mxu0 %v5621
        %5713 = vmatprep.subr.mxu0 0.0
        %5714 = vmatpush1.msra.mxu0 0.0
        %5715 = vmatprep.subr.mxu0 0.0
        %5716 = vmatpush1.msra.mxu0 0.0
        %5717 = vmatprep.subr.mxu0 0.0
        %5718 = vmatpush1.msra.mxu0 0.0
        %5719 = vmatprep.subr.mxu0 0.0
        %5720 = vmatpush1.msra.mxu0 0.0
        %5721 = vmatprep.subr.mxu0 0.0
        %5722 = vmatpush1.msra.mxu0 0.0
        %5723 = vmatprep.subr.mxu0 0.0
        %5724 = vmatpush1.msra.mxu0 0.0
        %5725 = vmatprep.subr.mxu0 0.0
        %5726 = vmatpush1.msra.mxu0 0.0
        %5727 = vmatprep.subr.mxu0 0.0
        %5728 = vmatpush1.msra.mxu0 0.0
        %5729 = vmatprep.subr.mxu0 0.0
        %5730 = vmatpush1.msra.mxu0 0.0
        %5731 = vmatprep.subr.mxu0 0.0
        %5732 = vmatpush1.msra.mxu0 0.0
        %5733 = vmatprep.subr.mxu0 0.0
        %5734 = vmatpush1.msra.mxu0 0.0
        %5735 = vmatprep.subr.mxu0 0.0
        %5736 = vmatpush1.msra.mxu0 0.0
        %5737 = vmatprep.subr.mxu0 0.0
        %5738 = vmatpush1.msra.mxu0 0.0
        %5739 = vmatprep.subr.mxu0 0.0
        %5740 = vmatpush1.msra.mxu0 0.0
        %5741 = vmatprep.subr.mxu0 0.0
        %5742 = vmatpush1.msra.mxu0 0.0
        %5743 = vmatprep.subr.mxu0 0.0
        %5744 = vmatpush1.msra.mxu0 0.0
        %5745 = vmatprep.subr.mxu0 0.0
        %5746 = vmatpush1.msra.mxu0 0.0
        %5747 = vmatprep.subr.mxu0 0.0
        %5748 = vmatpush1.msra.mxu0 0.0
        %5749 = vmatprep.subr.mxu0 0.0
        %5750 = vmatpush1.msra.mxu0 0.0
        %5751 = vmatprep.subr.mxu0 0.0
        %5752 = vmatpush1.msra.mxu0 0.0
        %5753 = vmatprep.mubr.f32.mxu0 0.0
        %5754 = vmatmul.mubr.f32.gmra.mrb[0].mxu0 %v5663
        %v5755 = vpop.f32.mrb[0].mxu0
        %v5756 = vadd.f32 0.0, %v5755
        %v5757 = vpop.f32.mrb[0].mxu0
        %5758 = vmatprep.mubr.f32.mxu0 0.0
        %5759 = vmatmul.mubr.f32.gmra.mrb[0].mxu0 %v5665
        %v5760 = vpop.f32.mrb[0].mxu0
        %v5761 = vadd.f32 0.0, %v5760
        %v5762 = vpop.f32.mrb[0].mxu0
        %5763 = vmatprep.mubr.f32.mxu0 0.0
        %5764 = vmatmul.mubr.f32.gmra.mrb[0].mxu0 %v5667
        %v5765 = vpop.f32.mrb[0].mxu0
        %v5766 = vadd.f32 0.0, %v5765
        %v5767 = vpop.f32.mrb[0].mxu0
        %5768 = vmatprep.mubr.f32.mxu0 0.0
        %5769 = vmatmul.mubr.f32.gmra.mrb[0].mxu0 %v5669
        %v5770 = vpop.f32.mrb[0].mxu0
        %v5771 = vadd.f32 0.0, %v5770
        %v5772 = vpop.f32.mrb[0].mxu0
        %5773 = vmatprep.mubr.f32.mxu0 0.0
        %5774 = vmatmul.mubr.f32.gmra.mrb[0].mxu0 %v5671
        %v5775 = vpop.f32.mrb[0].mxu0
        %v5776 = vadd.f32 0.0, %v5775
        %v5777 = vpop.f32.mrb[0].mxu0
        %5778 = vmatprep.mubr.f32.mxu0 0.0
        %5779 = vmatmul.mubr.f32.gmra.mrb[0].mxu0 %v5673
        %v5780 = vpop.f32.mrb[0].mxu0
        %v5781 = vadd.f32 0.0, %v5780
        %v5782 = vpop.f32.mrb[0].mxu0
        %5783 = vmatprep.mubr.f32.mxu0 0.0
        %5784 = vmatmul.mubr.f32.gmra.mrb[0].mxu0 %v5675
        %v5785 = vpop.f32.mrb[0].mxu0
        %v5786 = vadd.f32 0.0, %v5785
        %v5787 = vpop.f32.mrb[0].mxu0
        %5788 = vmatprep.mubr.f32.mxu0 0.0
        %5789 = vmatmul.mubr.f32.gmra.mrb[0].mxu0 %v5677
        %v5790 = vpop.f32.mrb[0].mxu0
        %v5791 = vadd.f32 0.0, %v5790
        %v5792 = vpop.f32.mrb[0].mxu0
        %5793 = vmatprep.mubr.f32.mxu0 0.0
        %5794 = vmatmul.mubr.f32.gmra.mrb[0].mxu0 %v5679
        %v5795 = vpop.f32.mrb[0].mxu0
        %v5796 = vadd.f32 0.0, %v5795
        %v5797 = vpop.f32.mrb[0].mxu0
        %5798 = vmatprep.mubr.f32.mxu0 0.0
        %5799 = vmatmul.mubr.f32.gmra.mrb[0].mxu0 %v5681
        %v5800 = vpop.f32.mrb[0].mxu0
        %v5801 = vadd.f32 0.0, %v5800
        %v5802 = vpop.f32.mrb[0].mxu0
        %5803 = vmatprep.mubr.f32.mxu0 0.0
        %5804 = vmatmul.mubr.f32.gmra.mrb[0].mxu0 %v5683
        %v5805 = vpop.f32.mrb[0].mxu0
        %v5806 = vadd.f32 0.0, %v5805
        %v5807 = vpop.f32.mrb[0].mxu0
        %5808 = vmatprep.mubr.f32.mxu0 0.0
        %5809 = vmatmul.mubr.f32.gmra.mrb[0].mxu0 %v5685
        %v5810 = vpop.f32.mrb[0].mxu0
        %v5811 = vadd.f32 0.0, %v5810
        %v5812 = vpop.f32.mrb[0].mxu0
        %5813 = vmatprep.mubr.f32.mxu0 0.0
        %5814 = vmatmul.mubr.f32.gmra.mrb[0].mxu0 %v5687
        %v5815 = vpop.f32.mrb[0].mxu0
        %v5816 = vadd.f32 0.0, %v5815
        %v5817 = vpop.f32.mrb[0].mxu0
        %5818 = vdwg.mxu0
        %v5819 = vadd.f32 %v5582, %v5756
        %v5820 = vadd.f32 %v5583, %v5761
        %v5821 = vadd.f32 %v5584, %v5766
        %v5822 = vadd.f32 %v5585, %v5771
        %v5823 = vadd.f32 %v5586, %v5776
        %v5824 = vadd.f32 %v5587, %v5781
        %v5825 = vadd.f32 %v5588, %v5786
        %v5826 = vadd.f32 %v5589, %v5791
        %v5827 = vadd.f32 %v5590, %v5796
        %v5828 = vadd.f32 %v5591, %v5801
        %v5829 = vadd.f32 %v5592, %v5806
        %v5830 = vadd.f32 %v5593, %v5811
        %v5831 = vadd.f32 %v5594, %v5816
        %v5832 = vadd.f32 %v3840, %v5819
        %v5833 = vadd.f32 %v3841, %v5820
        %v5834 = vadd.f32 %v3842, %v5821
        %v5835 = vadd.f32 %v3843, %v5822
        %v5836 = vadd.f32 %v3844, %v5823
        %v5837 = vadd.f32 %v3845, %v5824
        %v5838 = vadd.f32 %v3846, %v5825
        %v5839 = vadd.f32 %v3847, %v5826
        %v5840 = vadd.f32 %v3848, %v5827
        %v5841 = vadd.f32 %v3849, %v5828
        %v5842 = vadd.f32 %v3850, %v5829
        %v5843 = vadd.f32 %v3851, %v5830
        %v5844 = vadd.f32 %v3852, %v5831
        %5845 = vst.msk [vmem:[%s756] ss:$8 sm:$0x7] %vm755, 0.0
        %5846 = vst.msk [vmem:[%s756] ss:$8 sm:$0x0] %vm755, 0.0
        %5847 = vst.msk [vmem:[%s759] ss:$8 sm:$0x7] %vm755, 0.0
        %5848 = vst.msk [vmem:[%s759] ss:$8 sm:$0x0] %vm755, 0.0
        %v5849 = vmul.f32 %v5832, %v765
        %v5850 = vmul.f32 %v5833, %v770
        %v5851 = vmul.f32 %v5834, %v775
        %v5852 = vmul.f32 %v5835, %v780
        %v5853 = vmul.f32 %v5836, %v785
        %v5854 = vmul.f32 %v5837, %v790
        %v5855 = vmul.f32 %v5838, %v795
        %v5856 = vmul.f32 %v5839, %v800
        %v5857 = vmul.f32 %v5840, %v805
        %v5858 = vmul.f32 %v5841, %v810
        %v5859 = vmul.f32 %v5842, %v815
        %v5860 = vmul.f32 %v5843, %v820
        %v5861 = vmul.f32 %v5844, %v825
        %v5875 = vrot.slane %v5849, 4
        %v5876 = vrot.slane %v5850, 4
        %v5877 = vsel %vm853, %v5875, %v5876
        %v5878 = vrot.slane %v5851, 4
        %v5879 = vsel %vm853, %v5876, %v5878
        %v5880 = vrot.slane %v5852, 4
        %v5881 = vsel %vm853, %v5878, %v5880
        %v5882 = vrot.slane %v5853, 4
        %v5883 = vsel %vm853, %v5880, %v5882
        %v5884 = vrot.slane %v5854, 4
        %v5885 = vsel %vm853, %v5882, %v5884
        %v5886 = vrot.slane %v5855, 4
        %v5887 = vsel %vm853, %v5884, %v5886
        %v5888 = vrot.slane %v5856, 4
        %v5889 = vsel %vm853, %v5886, %v5888
        %v5890 = vrot.slane %v5857, 4
        %v5891 = vsel %vm853, %v5888, %v5890
        %v5892 = vrot.slane %v5858, 4
        %v5893 = vsel %vm853, %v5890, %v5892
        %v5894 = vrot.slane %v5859, 4
        %v5895 = vsel %vm853, %v5892, %v5894
        %v5896 = vrot.slane %v5860, 4
        %v5897 = vsel %vm853, %v5894, %v5896
        %v5898 = vrot.slane %v5861, 4
        %v5899 = vsel %vm853, %v5896, %v5898
        %5913 = vst.msk [vmem:[#allocation2 + $0x18] sm:$0xf0] %vm1920, %v5875
        %5914 = vst.msk [vmem:[#allocation2 + $0x30] sm:$0xff] %vm1922, %v5877
        %5915 = vst.msk [vmem:[#allocation2 + $0x48] sm:$0xff] %vm1922, %v5879
        %5916 = vst.msk [vmem:[#allocation2 + $0x60] sm:$0xff] %vm1922, %v5881
        %5917 = vst.msk [vmem:[#allocation2 + $0x78] sm:$0xff] %vm1922, %v5883
        %5918 = vst.msk [vmem:[#allocation2 + $0x90] sm:$0xff] %vm1922, %v5885
        %5919 = vst.msk [vmem:[#allocation2 + $0xa8] sm:$0xff] %vm1922, %v5887
        %5920 = vst.msk [vmem:[#allocation2 + $0xc0] sm:$0xff] %vm1922, %v5889
        %5921 = vst.msk [vmem:[#allocation2 + $0xd8] sm:$0xff] %vm1922, %v5891
        %5922 = vst.msk [vmem:[#allocation2 + $0xf0] sm:$0xff] %vm1922, %v5893
        %5923 = vst.msk [vmem:[#allocation2 + $0x108] sm:$0xff] %vm1922, %v5895
        %5924 = vst.msk [vmem:[#allocation2 + $0x120] sm:$0xff] %vm1922, %v5897
        %5925 = vst.msk [vmem:[#allocation2 + $0x138] sm:$0xff] %vm1922, %v5899
        %v5939 = vrot.slane %v5832, 5
        %v5940 = vrot.slane %v5833, 5
        %v5941 = vsel %vm920, %v5939, %v5940
        %v5942 = vrot.slane %v5834, 5
        %v5943 = vsel %vm920, %v5940, %v5942
        %v5944 = vrot.slane %v5835, 5
        %v5945 = vsel %vm920, %v5942, %v5944
        %v5946 = vrot.slane %v5836, 5
        %v5947 = vsel %vm920, %v5944, %v5946
        %v5948 = vrot.slane %v5837, 5
        %v5949 = vsel %vm920, %v5946, %v5948
        %v5950 = vrot.slane %v5838, 5
        %v5951 = vsel %vm920, %v5948, %v5950
        %v5952 = vrot.slane %v5839, 5
        %v5953 = vsel %vm920, %v5950, %v5952
        %v5954 = vrot.slane %v5840, 5
        %v5955 = vsel %vm920, %v5952, %v5954
        %v5956 = vrot.slane %v5841, 5
        %v5957 = vsel %vm920, %v5954, %v5956
        %v5958 = vrot.slane %v5842, 5
        %v5959 = vsel %vm920, %v5956, %v5958
        %v5960 = vrot.slane %v5843, 5
        %v5961 = vsel %vm920, %v5958, %v5960
        %v5962 = vrot.slane %v5844, 5
        %v5963 = vsel %vm920, %v5960, %v5962
        %5964 = vrot.lane.b32.xlu0 %v5939, 32
        %v5965 = vpop.permute.xlu0 %5964
        %5966 = vrot.lane.b32.xlu0 %v5941, 32
        %v5967 = vpop.permute.xlu0 %5966
        %5968 = vrot.lane.b32.xlu0 %v5943, 32
        %v5969 = vpop.permute.xlu0 %5968
        %5970 = vrot.lane.b32.xlu0 %v5945, 32
        %v5971 = vpop.permute.xlu0 %5970
        %5972 = vrot.lane.b32.xlu0 %v5947, 32
        %v5973 = vpop.permute.xlu0 %5972
        %5974 = vrot.lane.b32.xlu0 %v5949, 32
        %v5975 = vpop.permute.xlu0 %5974
        %5976 = vrot.lane.b32.xlu0 %v5951, 32
        %v5977 = vpop.permute.xlu0 %5976
        %5978 = vrot.lane.b32.xlu0 %v5953, 32
        %v5979 = vpop.permute.xlu0 %5978
        %5980 = vrot.lane.b32.xlu0 %v5955, 32
        %v5981 = vpop.permute.xlu0 %5980
        %5982 = vrot.lane.b32.xlu0 %v5957, 32
        %v5983 = vpop.permute.xlu0 %5982
        %5984 = vrot.lane.b32.xlu0 %v5959, 32
        %v5985 = vpop.permute.xlu0 %5984
        %5986 = vrot.lane.b32.xlu0 %v5961, 32
        %v5987 = vpop.permute.xlu0 %5986
        %5988 = vrot.lane.b32.xlu0 %v5963, 32
        %v5989 = vpop.permute.xlu0 %5988
        %6003 = vst.msk [vmem:[#allocation2 + $0x18] sm:$0xf8] %vm2012, %v5965
        %6004 = vst.msk [vmem:[#allocation2 + $0x30] sm:$0xff] %vm2014, %v5967
        %6005 = vst.msk [vmem:[#allocation2 + $0x48] sm:$0xff] %vm2014, %v5969
        %6006 = vst.msk [vmem:[#allocation2 + $0x60] sm:$0xff] %vm2014, %v5971
        %6007 = vst.msk [vmem:[#allocation2 + $0x78] sm:$0xff] %vm2014, %v5973
        %6008 = vst.msk [vmem:[#allocation2 + $0x90] sm:$0xff] %vm2014, %v5975
        %6009 = vst.msk [vmem:[#allocation2 + $0xa8] sm:$0xff] %vm2014, %v5977
        %6010 = vst.msk [vmem:[#allocation2 + $0xc0] sm:$0xff] %vm2014, %v5979
        %6011 = vst.msk [vmem:[#allocation2 + $0xd8] sm:$0xff] %vm2014, %v5981
        %6012 = vst.msk [vmem:[#allocation2 + $0xf0] sm:$0xff] %vm2014, %v5983
        %6013 = vst.msk [vmem:[#allocation2 + $0x108] sm:$0xff] %vm2014, %v5985
        %6014 = vst.msk [vmem:[#allocation2 + $0x120] sm:$0xff] %vm2014, %v5987
        %6015 = vst.msk [vmem:[#allocation2 + $0x138] sm:$0x7f] %vm2026, %v5989
        %v6016 = vmul.f32 %v5832, %v1003
        %v6017 = vmul.f32 %v5833, %v1007
        %v6018 = vmul.f32 %v5834, %v1011
        %v6019 = vmul.f32 %v5835, %v1015
        %v6020 = vmul.f32 %v5836, %v1019
        %v6021 = vmul.f32 %v5837, %v1023
        %v6022 = vmul.f32 %v5838, %v1027
        %v6023 = vmul.f32 %v5839, %v1031
        %v6024 = vmul.f32 %v5840, %v1035
        %v6025 = vmul.f32 %v5841, %v1039
        %v6026 = vmul.f32 %v5842, %v1043
        %v6027 = vmul.f32 %v5843, %v1047
        %v6028 = vmul.f32 %v5844, %v1051
        %v6042 = vrot.slane %v6016, 6
        %v6043 = vrot.slane %v6017, 6
        %v6044 = vsel %vm1079, %v6042, %v6043
        %v6045 = vrot.slane %v6018, 6
        %v6046 = vsel %vm1079, %v6043, %v6045
        %v6047 = vrot.slane %v6019, 6
        %v6048 = vsel %vm1079, %v6045, %v6047
        %v6049 = vrot.slane %v6020, 6
        %v6050 = vsel %vm1079, %v6047, %v6049
        %v6051 = vrot.slane %v6021, 6
        %v6052 = vsel %vm1079, %v6049, %v6051
        %v6053 = vrot.slane %v6022, 6
        %v6054 = vsel %vm1079, %v6051, %v6053
        %v6055 = vrot.slane %v6023, 6
        %v6056 = vsel %vm1079, %v6053, %v6055
        %v6057 = vrot.slane %v6024, 6
        %v6058 = vsel %vm1079, %v6055, %v6057
        %v6059 = vrot.slane %v6025, 6
        %v6060 = vsel %vm1079, %v6057, %v6059
        %v6061 = vrot.slane %v6026, 6
        %v6062 = vsel %vm1079, %v6059, %v6061
        %v6063 = vrot.slane %v6027, 6
        %v6064 = vsel %vm1079, %v6061, %v6063
        %v6065 = vrot.slane %v6028, 6
        %v6066 = vsel %vm1079, %v6063, %v6065
        %6067 = vrot.lane.b32.xlu0 %v6042, 64
        %v6068 = vpop.permute.xlu0 %6067
        %6069 = vrot.lane.b32.xlu0 %v6044, 64
        %v6070 = vpop.permute.xlu0 %6069
        %6071 = vrot.lane.b32.xlu0 %v6046, 64
        %v6072 = vpop.permute.xlu0 %6071
        %6073 = vrot.lane.b32.xlu0 %v6048, 64
        %v6074 = vpop.permute.xlu0 %6073
        %6075 = vrot.lane.b32.xlu0 %v6050, 64
        %v6076 = vpop.permute.xlu0 %6075
        %6077 = vrot.lane.b32.xlu0 %v6052, 64
        %v6078 = vpop.permute.xlu0 %6077
        %6079 = vrot.lane.b32.xlu0 %v6054, 64
        %v6080 = vpop.permute.xlu0 %6079
        %6081 = vrot.lane.b32.xlu0 %v6056, 64
        %v6082 = vpop.permute.xlu0 %6081
        %6083 = vrot.lane.b32.xlu0 %v6058, 64
        %v6084 = vpop.permute.xlu0 %6083
        %6085 = vrot.lane.b32.xlu0 %v6060, 64
        %v6086 = vpop.permute.xlu0 %6085
        %6087 = vrot.lane.b32.xlu0 %v6062, 64
        %v6088 = vpop.permute.xlu0 %6087
        %6089 = vrot.lane.b32.xlu0 %v6064, 64
        %v6090 = vpop.permute.xlu0 %6089
        %6091 = vrot.lane.b32.xlu0 %v6066, 64
        %v6092 = vpop.permute.xlu0 %6091
        %6106 = vst.msk [vmem:[#allocation2 + $0x18] sm:$0xfc] %vm2118, %v6068
        %6107 = vst.msk [vmem:[#allocation2 + $0x30] sm:$0xff] %vm2120, %v6070
        %6108 = vst.msk [vmem:[#allocation2 + $0x48] sm:$0xff] %vm2120, %v6072
        %6109 = vst.msk [vmem:[#allocation2 + $0x60] sm:$0xff] %vm2120, %v6074
        %6110 = vst.msk [vmem:[#allocation2 + $0x78] sm:$0xff] %vm2120, %v6076
        %6111 = vst.msk [vmem:[#allocation2 + $0x90] sm:$0xff] %vm2120, %v6078
        %6112 = vst.msk [vmem:[#allocation2 + $0xa8] sm:$0xff] %vm2120, %v6080
        %6113 = vst.msk [vmem:[#allocation2 + $0xc0] sm:$0xff] %vm2120, %v6082
        %6114 = vst.msk [vmem:[#allocation2 + $0xd8] sm:$0xff] %vm2120, %v6084
        %6115 = vst.msk [vmem:[#allocation2 + $0xf0] sm:$0xff] %vm2120, %v6086
        %6116 = vst.msk [vmem:[#allocation2 + $0x108] sm:$0xff] %vm2120, %v6088
        %6117 = vst.msk [vmem:[#allocation2 + $0x120] sm:$0xff] %vm2120, %v6090
        %6118 = vst.msk [vmem:[#allocation2 + $0x138] sm:$0x3f] %vm2132, %v6092
        %v6119 = vld [vmem:[%s14] sm:$0x1]
        %v6121 = vlaneseq
        %v6122 = vshrl.u32 %v6121, 7
        %v6123 = vsub.s32 0, %v6122
        %v6124 = vrot.slane %v6119, %v6123
        %v6126 = vld [vmem:[#allocation2] sm:$0xfe]
        %v6127 = vld [vmem:[#allocation2 + $0x18] sm:$0xff]
        %v6128 = vld [vmem:[#allocation2 + $0x30] sm:$0xff]
        %v6129 = vld [vmem:[#allocation2 + $0x48] sm:$0xff]
        %v6130 = vld [vmem:[#allocation2 + $0x60] sm:$0xff]
        %v6131 = vld [vmem:[#allocation2 + $0x78] sm:$0xff]
        %v6132 = vld [vmem:[#allocation2 + $0x90] sm:$0xff]
        %v6133 = vld [vmem:[#allocation2 + $0xa8] sm:$0xff]
        %v6134 = vld [vmem:[#allocation2 + $0xc0] sm:$0xff]
        %v6135 = vld [vmem:[#allocation2 + $0xd8] sm:$0xff]
        %v6136 = vld [vmem:[#allocation2 + $0xf0] sm:$0xff]
        %v6137 = vld [vmem:[#allocation2 + $0x108] sm:$0xff]
        %v6138 = vld [vmem:[#allocation2 + $0x120] sm:$0x1f]
        %v6139 = vld [vmem:[#allocation10] sm:$0xff]
        %v6140 = vld [vmem:[#allocation10 + $0x8] sm:$0xff]
        %v6141 = vld [vmem:[#allocation10 + $0x10] sm:$0xff]
        %v6142 = vld [vmem:[#allocation10 + $0x18] sm:$0xff]
        %v6143 = vld [vmem:[#allocation10 + $0x20] sm:$0xff]
        %v6144 = vld [vmem:[#allocation10 + $0x28] sm:$0xff]
        %v6145 = vld [vmem:[#allocation10 + $0x30] sm:$0xff]
        %v6146 = vld [vmem:[#allocation10 + $0x38] sm:$0xff]
        %v6147 = vld [vmem:[#allocation10 + $0x40] sm:$0xff]
        %v6148 = vld [vmem:[#allocation10 + $0x48] sm:$0xff]
        %v6149 = vld [vmem:[#allocation10 + $0x50] sm:$0xff]
        %v6150 = vld [vmem:[#allocation10 + $0x58] sm:$0xff]
        %v6164 = vrot.slane %v6126, 1
        %v6165 = vrot.slane %v6127, 1
        %v6166 = vsel %vm1195, %v6164, %v6165
        %v6167 = vrot.slane %v6128, 1
        %v6168 = vsel %vm1195, %v6165, %v6167
        %v6169 = vrot.slane %v6129, 1
        %v6170 = vsel %vm1195, %v6167, %v6169
        %v6171 = vrot.slane %v6130, 1
        %v6172 = vsel %vm1195, %v6169, %v6171
        %v6173 = vrot.slane %v6131, 1
        %v6174 = vsel %vm1195, %v6171, %v6173
        %v6175 = vrot.slane %v6132, 1
        %v6176 = vsel %vm1195, %v6173, %v6175
        %v6177 = vrot.slane %v6133, 1
        %v6178 = vsel %vm1195, %v6175, %v6177
        %v6179 = vrot.slane %v6134, 1
        %v6180 = vsel %vm1195, %v6177, %v6179
        %v6181 = vrot.slane %v6135, 1
        %v6182 = vsel %vm1195, %v6179, %v6181
        %v6183 = vrot.slane %v6136, 1
        %v6184 = vsel %vm1195, %v6181, %v6183
        %v6185 = vrot.slane %v6137, 1
        %v6186 = vsel %vm1195, %v6183, %v6185
        %v6187 = vrot.slane %v6138, 1
        %v6188 = vsel %vm1195, %v6185, %v6187
        %v6189 = vsel %vm2204, %v6166, 0
        %v6191 = vsel %vm2204, %v6168, 0
        %v6193 = vsel %vm2204, %v6170, 0
        %v6195 = vsel %vm2204, %v6172, 0
        %v6197 = vsel %vm2204, %v6174, 0
        %v6199 = vsel %vm2204, %v6176, 0
        %v6201 = vsel %vm2204, %v6178, 0
        %v6203 = vsel %vm2204, %v6180, 0
        %v6205 = vsel %vm2204, %v6182, 0
        %v6207 = vsel %vm2204, %v6184, 0
        %v6209 = vsel %vm2204, %v6186, 0
        %v6211 = vsel %vm2204, %v6188, 0
        %v6213 = vsel %vm2204, %v6187, 0
        %6215 = vmatprep.subr.mxu0 0.0
        %6216 = vmatpush1.msra.mxu0 %v6139
        %6217 = vmatprep.subr.mxu0 0.0
        %6218 = vmatpush1.msra.mxu0 %v6140
        %6219 = vmatprep.subr.mxu0 0.0
        %6220 = vmatpush1.msra.mxu0 %v6141
        %6221 = vmatprep.subr.mxu0 0.0
        %6222 = vmatpush1.msra.mxu0 %v6142
        %6223 = vmatprep.subr.mxu0 0.0
        %6224 = vmatpush1.msra.mxu0 %v6143
        %6225 = vmatprep.subr.mxu0 0.0
        %6226 = vmatpush1.msra.mxu0 %v6144
        %6227 = vmatprep.subr.mxu0 0.0
        %6228 = vmatpush1.msra.mxu0 %v6145
        %6229 = vmatprep.subr.mxu0 0.0
        %6230 = vmatpush1.msra.mxu0 %v6146
        %6231 = vmatprep.subr.mxu0 0.0
        %6232 = vmatpush1.msra.mxu0 %v6147
        %6233 = vmatprep.subr.mxu0 0.0
        %6234 = vmatpush1.msra.mxu0 %v6148
        %6235 = vmatprep.subr.mxu0 0.0
        %6236 = vmatpush1.msra.mxu0 %v6149
        %6237 = vmatprep.subr.mxu0 0.0
        %6238 = vmatpush1.msra.mxu0 %v6150
        %6239 = vmatprep.subr.mxu0 0.0
        %6240 = vmatpush1.msra.mxu0 0.0
        %6241 = vmatprep.subr.mxu0 0.0
        %6242 = vmatpush1.msra.mxu0 0.0
        %6243 = vmatprep.subr.mxu0 0.0
        %6244 = vmatpush1.msra.mxu0 0.0
        %6245 = vmatprep.subr.mxu0 0.0
        %6246 = vmatpush1.msra.mxu0 0.0
        %6247 = vmatprep.subr.mxu0 0.0
        %6248 = vmatpush1.msra.mxu0 0.0
        %6249 = vmatprep.subr.mxu0 0.0
        %6250 = vmatpush1.msra.mxu0 0.0
        %6251 = vmatprep.subr.mxu0 0.0
        %6252 = vmatpush1.msra.mxu0 0.0
        %6253 = vmatprep.subr.mxu0 0.0
        %6254 = vmatpush1.msra.mxu0 0.0
        %6255 = vmatprep.subr.mxu0 0.0
        %6256 = vmatpush1.msra.mxu0 0.0
        %6257 = vmatprep.subr.mxu0 0.0
        %6258 = vmatpush1.msra.mxu0 0.0
        %6259 = vmatprep.subr.mxu0 0.0
        %6260 = vmatpush1.msra.mxu0 0.0
        %6261 = vmatprep.subr.mxu0 0.0
        %6262 = vmatpush1.msra.mxu0 0.0
        %6263 = vmatprep.subr.mxu0 0.0
        %6264 = vmatpush1.msra.mxu0 0.0
        %6265 = vmatprep.subr.mxu0 0.0
        %6266 = vmatpush1.msra.mxu0 0.0
        %6267 = vmatprep.subr.mxu0 0.0
        %6268 = vmatpush1.msra.mxu0 0.0
        %6269 = vmatprep.subr.mxu0 0.0
        %6270 = vmatpush1.msra.mxu0 0.0
        %6271 = vmatprep.subr.mxu0 0.0
        %6272 = vmatpush1.msra.mxu0 0.0
        %6273 = vmatprep.subr.mxu0 0.0
        %6274 = vmatpush1.msra.mxu0 0.0
        %6275 = vmatprep.subr.mxu0 0.0
        %6276 = vmatpush1.msra.mxu0 0.0
        %6277 = vmatprep.subr.mxu0 0.0
        %6278 = vmatpush1.msra.mxu0 0.0
        %6279 = vmatprep.mubr.f32.mxu0 0.0
        %6280 = vmatmul.mubr.f32.gmra.mrb[0].mxu0 %v6189
        %v6281 = vpop.f32.mrb[0].mxu0
        %v6282 = vadd.f32 0.0, %v6281
        %v6283 = vpop.f32.mrb[0].mxu0
        %6284 = vmatprep.mubr.f32.mxu0 0.0
        %6285 = vmatmul.mubr.f32.gmra.mrb[0].mxu0 %v6191
        %v6286 = vpop.f32.mrb[0].mxu0
        %v6287 = vadd.f32 0.0, %v6286
        %v6288 = vpop.f32.mrb[0].mxu0
        %6289 = vmatprep.mubr.f32.mxu0 0.0
        %6290 = vmatmul.mubr.f32.gmra.mrb[0].mxu0 %v6193
        %v6291 = vpop.f32.mrb[0].mxu0
        %v6292 = vadd.f32 0.0, %v6291
        %v6293 = vpop.f32.mrb[0].mxu0
        %6294 = vmatprep.mubr.f32.mxu0 0.0
        %6295 = vmatmul.mubr.f32.gmra.mrb[0].mxu0 %v6195
        %v6296 = vpop.f32.mrb[0].mxu0
        %v6297 = vadd.f32 0.0, %v6296
        %v6298 = vpop.f32.mrb[0].mxu0
        %6299 = vmatprep.mubr.f32.mxu0 0.0
        %6300 = vmatmul.mubr.f32.gmra.mrb[0].mxu0 %v6197
        %v6301 = vpop.f32.mrb[0].mxu0
        %v6302 = vadd.f32 0.0, %v6301
        %v6303 = vpop.f32.mrb[0].mxu0
        %6304 = vmatprep.mubr.f32.mxu0 0.0
        %6305 = vmatmul.mubr.f32.gmra.mrb[0].mxu0 %v6199
        %v6306 = vpop.f32.mrb[0].mxu0
        %v6307 = vadd.f32 0.0, %v6306
        %v6308 = vpop.f32.mrb[0].mxu0
        %6309 = vmatprep.mubr.f32.mxu0 0.0
        %6310 = vmatmul.mubr.f32.gmra.mrb[0].mxu0 %v6201
        %v6311 = vpop.f32.mrb[0].mxu0
        %v6312 = vadd.f32 0.0, %v6311
        %v6313 = vpop.f32.mrb[0].mxu0
        %6314 = vmatprep.mubr.f32.mxu0 0.0
        %6315 = vmatmul.mubr.f32.gmra.mrb[0].mxu0 %v6203
        %v6316 = vpop.f32.mrb[0].mxu0
        %v6317 = vadd.f32 0.0, %v6316
        %v6318 = vpop.f32.mrb[0].mxu0
        %6319 = vmatprep.mubr.f32.mxu0 0.0
        %6320 = vmatmul.mubr.f32.gmra.mrb[0].mxu0 %v6205
        %v6321 = vpop.f32.mrb[0].mxu0
        %v6322 = vadd.f32 0.0, %v6321
        %v6323 = vpop.f32.mrb[0].mxu0
        %6324 = vmatprep.mubr.f32.mxu0 0.0
        %6325 = vmatmul.mubr.f32.gmra.mrb[0].mxu0 %v6207
        %v6326 = vpop.f32.mrb[0].mxu0
        %v6327 = vadd.f32 0.0, %v6326
        %v6328 = vpop.f32.mrb[0].mxu0
        %6329 = vmatprep.mubr.f32.mxu0 0.0
        %6330 = vmatmul.mubr.f32.gmra.mrb[0].mxu0 %v6209
        %v6331 = vpop.f32.mrb[0].mxu0
        %v6332 = vadd.f32 0.0, %v6331
        %v6333 = vpop.f32.mrb[0].mxu0
        %6334 = vmatprep.mubr.f32.mxu0 0.0
        %6335 = vmatmul.mubr.f32.gmra.mrb[0].mxu0 %v6211
        %v6336 = vpop.f32.mrb[0].mxu0
        %v6337 = vadd.f32 0.0, %v6336
        %v6338 = vpop.f32.mrb[0].mxu0
        %6339 = vmatprep.mubr.f32.mxu0 0.0
        %6340 = vmatmul.mubr.f32.gmra.mrb[0].mxu0 %v6213
        %v6341 = vpop.f32.mrb[0].mxu0
        %v6342 = vadd.f32 0.0, %v6341
        %v6343 = vpop.f32.mrb[0].mxu0
        %6344 = vdwg.mxu0
        %v6345 = vadd.f32 %v6124, %v6282
        %v6346 = vadd.f32 %v6124, %v6287
        %v6347 = vadd.f32 %v6124, %v6292
        %v6348 = vadd.f32 %v6124, %v6297
        %v6349 = vadd.f32 %v6124, %v6302
        %v6350 = vadd.f32 %v6124, %v6307
        %v6351 = vadd.f32 %v6124, %v6312
        %v6352 = vadd.f32 %v6124, %v6317
        %v6353 = vadd.f32 %v6124, %v6322
        %v6354 = vadd.f32 %v6124, %v6327
        %v6355 = vadd.f32 %v6124, %v6332
        %v6356 = vadd.f32 %v6124, %v6337
        %v6357 = vadd.f32 %v6124, %v6342
        %v6358 = vld [vmem:[#allocation2 + $0x18] sm:$0xf8]
        %v6359 = vld [vmem:[#allocation2 + $0x30] sm:$0xff]
        %v6360 = vld [vmem:[#allocation2 + $0x48] sm:$0xff]
        %v6361 = vld [vmem:[#allocation2 + $0x60] sm:$0xff]
        %v6362 = vld [vmem:[#allocation2 + $0x78] sm:$0xff]
        %v6363 = vld [vmem:[#allocation2 + $0x90] sm:$0xff]
        %v6364 = vld [vmem:[#allocation2 + $0xa8] sm:$0xff]
        %v6365 = vld [vmem:[#allocation2 + $0xc0] sm:$0xff]
        %v6366 = vld [vmem:[#allocation2 + $0xd8] sm:$0xff]
        %v6367 = vld [vmem:[#allocation2 + $0xf0] sm:$0xff]
        %v6368 = vld [vmem:[#allocation2 + $0x108] sm:$0xff]
        %v6369 = vld [vmem:[#allocation2 + $0x120] sm:$0xff]
        %v6370 = vld [vmem:[#allocation2 + $0x138] sm:$0x7f]
        %s6371 = scalar_lea.vmem [#allocation10], 96
        %v6372 = vld [vmem:[%s6371] sm:$0xff]
        %v6373 = vld [vmem:[%s6371 + $0x8] sm:$0xff]
        %v6374 = vld [vmem:[%s6371 + $0x10] sm:$0xff]
        %v6375 = vld [vmem:[%s6371 + $0x18] sm:$0xff]
        %v6376 = vld [vmem:[%s6371 + $0x20] sm:$0xff]
        %v6377 = vld [vmem:[%s6371 + $0x28] sm:$0xff]
        %v6378 = vld [vmem:[%s6371 + $0x30] sm:$0xff]
        %v6379 = vld [vmem:[%s6371 + $0x38] sm:$0xff]
        %v6380 = vld [vmem:[%s6371 + $0x40] sm:$0xff]
        %v6381 = vld [vmem:[%s6371 + $0x48] sm:$0xff]
        %v6382 = vld [vmem:[%s6371 + $0x50] sm:$0xff]
        %v6383 = vld [vmem:[%s6371 + $0x58] sm:$0xff]
        %v6397 = vrot.slane %v6358, 3
        %v6398 = vrot.slane %v6359, 3
        %v6399 = vsel %vm1424, %v6397, %v6398
        %v6400 = vrot.slane %v6360, 3
        %v6401 = vsel %vm1424, %v6398, %v6400
        %v6402 = vrot.slane %v6361, 3
        %v6403 = vsel %vm1424, %v6400, %v6402
        %v6404 = vrot.slane %v6362, 3
        %v6405 = vsel %vm1424, %v6402, %v6404
        %v6406 = vrot.slane %v6363, 3
        %v6407 = vsel %vm1424, %v6404, %v6406
        %v6408 = vrot.slane %v6364, 3
        %v6409 = vsel %vm1424, %v6406, %v6408
        %v6410 = vrot.slane %v6365, 3
        %v6411 = vsel %vm1424, %v6408, %v6410
        %v6412 = vrot.slane %v6366, 3
        %v6413 = vsel %vm1424, %v6410, %v6412
        %v6414 = vrot.slane %v6367, 3
        %v6415 = vsel %vm1424, %v6412, %v6414
        %v6416 = vrot.slane %v6368, 3
        %v6417 = vsel %vm1424, %v6414, %v6416
        %v6418 = vrot.slane %v6369, 3
        %v6419 = vsel %vm1424, %v6416, %v6418
        %v6420 = vrot.slane %v6370, 3
        %v6421 = vsel %vm1424, %v6418, %v6420
        %v6422 = vsel %vm2204, %v6399, 0
        %v6424 = vsel %vm2204, %v6401, 0
        %v6426 = vsel %vm2204, %v6403, 0
        %v6428 = vsel %vm2204, %v6405, 0
        %v6430 = vsel %vm2204, %v6407, 0
        %v6432 = vsel %vm2204, %v6409, 0
        %v6434 = vsel %vm2204, %v6411, 0
        %v6436 = vsel %vm2204, %v6413, 0
        %v6438 = vsel %vm2204, %v6415, 0
        %v6440 = vsel %vm2204, %v6417, 0
        %v6442 = vsel %vm2204, %v6419, 0
        %v6444 = vsel %vm2204, %v6421, 0
        %v6446 = vsel %vm2204, %v6420, 0
        %6448 = vmatprep.subr.mxu0 0.0
        %6449 = vmatpush1.msra.mxu0 %v6372
        %6450 = vmatprep.subr.mxu0 0.0
        %6451 = vmatpush1.msra.mxu0 %v6373
        %6452 = vmatprep.subr.mxu0 0.0
        %6453 = vmatpush1.msra.mxu0 %v6374
        %6454 = vmatprep.subr.mxu0 0.0
        %6455 = vmatpush1.msra.mxu0 %v6375
        %6456 = vmatprep.subr.mxu0 0.0
        %6457 = vmatpush1.msra.mxu0 %v6376
        %6458 = vmatprep.subr.mxu0 0.0
        %6459 = vmatpush1.msra.mxu0 %v6377
        %6460 = vmatprep.subr.mxu0 0.0
        %6461 = vmatpush1.msra.mxu0 %v6378
        %6462 = vmatprep.subr.mxu0 0.0
        %6463 = vmatpush1.msra.mxu0 %v6379
        %6464 = vmatprep.subr.mxu0 0.0
        %6465 = vmatpush1.msra.mxu0 %v6380
        %6466 = vmatprep.subr.mxu0 0.0
        %6467 = vmatpush1.msra.mxu0 %v6381
        %6468 = vmatprep.subr.mxu0 0.0
        %6469 = vmatpush1.msra.mxu0 %v6382
        %6470 = vmatprep.subr.mxu0 0.0
        %6471 = vmatpush1.msra.mxu0 %v6383
        %6472 = vmatprep.subr.mxu0 0.0
        %6473 = vmatpush1.msra.mxu0 0.0
        %6474 = vmatprep.subr.mxu0 0.0
        %6475 = vmatpush1.msra.mxu0 0.0
        %6476 = vmatprep.subr.mxu0 0.0
        %6477 = vmatpush1.msra.mxu0 0.0
        %6478 = vmatprep.subr.mxu0 0.0
        %6479 = vmatpush1.msra.mxu0 0.0
        %6480 = vmatprep.subr.mxu0 0.0
        %6481 = vmatpush1.msra.mxu0 0.0
        %6482 = vmatprep.subr.mxu0 0.0
        %6483 = vmatpush1.msra.mxu0 0.0
        %6484 = vmatprep.subr.mxu0 0.0
        %6485 = vmatpush1.msra.mxu0 0.0
        %6486 = vmatprep.subr.mxu0 0.0
        %6487 = vmatpush1.msra.mxu0 0.0
        %6488 = vmatprep.subr.mxu0 0.0
        %6489 = vmatpush1.msra.mxu0 0.0
        %6490 = vmatprep.subr.mxu0 0.0
        %6491 = vmatpush1.msra.mxu0 0.0
        %6492 = vmatprep.subr.mxu0 0.0
        %6493 = vmatpush1.msra.mxu0 0.0
        %6494 = vmatprep.subr.mxu0 0.0
        %6495 = vmatpush1.msra.mxu0 0.0
        %6496 = vmatprep.subr.mxu0 0.0
        %6497 = vmatpush1.msra.mxu0 0.0
        %6498 = vmatprep.subr.mxu0 0.0
        %6499 = vmatpush1.msra.mxu0 0.0
        %6500 = vmatprep.subr.mxu0 0.0
        %6501 = vmatpush1.msra.mxu0 0.0
        %6502 = vmatprep.subr.mxu0 0.0
        %6503 = vmatpush1.msra.mxu0 0.0
        %6504 = vmatprep.subr.mxu0 0.0
        %6505 = vmatpush1.msra.mxu0 0.0
        %6506 = vmatprep.subr.mxu0 0.0
        %6507 = vmatpush1.msra.mxu0 0.0
        %6508 = vmatprep.subr.mxu0 0.0
        %6509 = vmatpush1.msra.mxu0 0.0
        %6510 = vmatprep.subr.mxu0 0.0
        %6511 = vmatpush1.msra.mxu0 0.0
        %6512 = vmatprep.mubr.f32.mxu0 0.0
        %6513 = vmatmul.mubr.f32.gmra.mrb[0].mxu0 %v6422
        %v6514 = vpop.f32.mrb[0].mxu0
        %v6515 = vadd.f32 0.0, %v6514
        %v6516 = vpop.f32.mrb[0].mxu0
        %6517 = vmatprep.mubr.f32.mxu0 0.0
        %6518 = vmatmul.mubr.f32.gmra.mrb[0].mxu0 %v6424
        %v6519 = vpop.f32.mrb[0].mxu0
        %v6520 = vadd.f32 0.0, %v6519
        %v6521 = vpop.f32.mrb[0].mxu0
        %6522 = vmatprep.mubr.f32.mxu0 0.0
        %6523 = vmatmul.mubr.f32.gmra.mrb[0].mxu0 %v6426
        %v6524 = vpop.f32.mrb[0].mxu0
        %v6525 = vadd.f32 0.0, %v6524
        %v6526 = vpop.f32.mrb[0].mxu0
        %6527 = vmatprep.mubr.f32.mxu0 0.0
        %6528 = vmatmul.mubr.f32.gmra.mrb[0].mxu0 %v6428
        %v6529 = vpop.f32.mrb[0].mxu0
        %v6530 = vadd.f32 0.0, %v6529
        %v6531 = vpop.f32.mrb[0].mxu0
        %6532 = vmatprep.mubr.f32.mxu0 0.0
        %6533 = vmatmul.mubr.f32.gmra.mrb[0].mxu0 %v6430
        %v6534 = vpop.f32.mrb[0].mxu0
        %v6535 = vadd.f32 0.0, %v6534
        %v6536 = vpop.f32.mrb[0].mxu0
        %6537 = vmatprep.mubr.f32.mxu0 0.0
        %6538 = vmatmul.mubr.f32.gmra.mrb[0].mxu0 %v6432
        %v6539 = vpop.f32.mrb[0].mxu0
        %v6540 = vadd.f32 0.0, %v6539
        %v6541 = vpop.f32.mrb[0].mxu0
        %6542 = vmatprep.mubr.f32.mxu0 0.0
        %6543 = vmatmul.mubr.f32.gmra.mrb[0].mxu0 %v6434
        %v6544 = vpop.f32.mrb[0].mxu0
        %v6545 = vadd.f32 0.0, %v6544
        %v6546 = vpop.f32.mrb[0].mxu0
        %6547 = vmatprep.mubr.f32.mxu0 0.0
        %6548 = vmatmul.mubr.f32.gmra.mrb[0].mxu0 %v6436
        %v6549 = vpop.f32.mrb[0].mxu0
        %v6550 = vadd.f32 0.0, %v6549
        %v6551 = vpop.f32.mrb[0].mxu0
        %6552 = vmatprep.mubr.f32.mxu0 0.0
        %6553 = vmatmul.mubr.f32.gmra.mrb[0].mxu0 %v6438
        %v6554 = vpop.f32.mrb[0].mxu0
        %v6555 = vadd.f32 0.0, %v6554
        %v6556 = vpop.f32.mrb[0].mxu0
        %6557 = vmatprep.mubr.f32.mxu0 0.0
        %6558 = vmatmul.mubr.f32.gmra.mrb[0].mxu0 %v6440
        %v6559 = vpop.f32.mrb[0].mxu0
        %v6560 = vadd.f32 0.0, %v6559
        %v6561 = vpop.f32.mrb[0].mxu0
        %6562 = vmatprep.mubr.f32.mxu0 0.0
        %6563 = vmatmul.mubr.f32.gmra.mrb[0].mxu0 %v6442
        %v6564 = vpop.f32.mrb[0].mxu0
        %v6565 = vadd.f32 0.0, %v6564
        %v6566 = vpop.f32.mrb[0].mxu0
        %6567 = vmatprep.mubr.f32.mxu0 0.0
        %6568 = vmatmul.mubr.f32.gmra.mrb[0].mxu0 %v6444
        %v6569 = vpop.f32.mrb[0].mxu0
        %v6570 = vadd.f32 0.0, %v6569
        %v6571 = vpop.f32.mrb[0].mxu0
        %6572 = vmatprep.mubr.f32.mxu0 0.0
        %6573 = vmatmul.mubr.f32.gmra.mrb[0].mxu0 %v6446
        %v6574 = vpop.f32.mrb[0].mxu0
        %v6575 = vadd.f32 0.0, %v6574
        %v6576 = vpop.f32.mrb[0].mxu0
        %6577 = vdwg.mxu0
        %v6578 = vadd.f32 %v6345, %v6515
        %v6579 = vadd.f32 %v6346, %v6520
        %v6580 = vadd.f32 %v6347, %v6525
        %v6581 = vadd.f32 %v6348, %v6530
        %v6582 = vadd.f32 %v6349, %v6535
        %v6583 = vadd.f32 %v6350, %v6540
        %v6584 = vadd.f32 %v6351, %v6545
        %v6585 = vadd.f32 %v6352, %v6550
        %v6586 = vadd.f32 %v6353, %v6555
        %v6587 = vadd.f32 %v6354, %v6560
        %v6588 = vadd.f32 %v6355, %v6565
        %v6589 = vadd.f32 %v6356, %v6570
        %v6590 = vadd.f32 %v6357, %v6575
        %v6591 = vld [vmem:[#allocation2 + $0x30] sm:$0xe0]
        %v6592 = vld [vmem:[#allocation2 + $0x48] sm:$0xff]
        %v6593 = vld [vmem:[#allocation2 + $0x60] sm:$0xff]
        %v6594 = vld [vmem:[#allocation2 + $0x78] sm:$0xff]
        %v6595 = vld [vmem:[#allocation2 + $0x90] sm:$0xff]
        %v6596 = vld [vmem:[#allocation2 + $0xa8] sm:$0xff]
        %v6597 = vld [vmem:[#allocation2 + $0xc0] sm:$0xff]
        %v6598 = vld [vmem:[#allocation2 + $0xd8] sm:$0xff]
        %v6599 = vld [vmem:[#allocation2 + $0xf0] sm:$0xff]
        %v6600 = vld [vmem:[#allocation2 + $0x108] sm:$0xff]
        %v6601 = vld [vmem:[#allocation2 + $0x120] sm:$0xff]
        %v6602 = vld [vmem:[#allocation2 + $0x138] sm:$0xff]
        %v6603 = vld [vmem:[#allocation2 + $0x150] sm:$0xff]
        %v6604 = vld [vmem:[#allocation2 + $0x168] sm:$0x1]
        %s6605 = scalar_lea.vmem [#allocation10], 192
        %v6606 = vld [vmem:[%s6605] sm:$0xff]
        %v6607 = vld [vmem:[%s6605 + $0x8] sm:$0xff]
        %v6608 = vld [vmem:[%s6605 + $0x10] sm:$0xff]
        %v6609 = vld [vmem:[%s6605 + $0x18] sm:$0xff]
        %v6610 = vld [vmem:[%s6605 + $0x20] sm:$0xff]
        %v6611 = vld [vmem:[%s6605 + $0x28] sm:$0xff]
        %v6612 = vld [vmem:[%s6605 + $0x30] sm:$0xff]
        %v6613 = vld [vmem:[%s6605 + $0x38] sm:$0xff]
        %v6614 = vld [vmem:[%s6605 + $0x40] sm:$0xff]
        %v6615 = vld [vmem:[%s6605 + $0x48] sm:$0xff]
        %v6616 = vld [vmem:[%s6605 + $0x50] sm:$0xff]
        %v6617 = vld [vmem:[%s6605 + $0x58] sm:$0xff]
        %v6632 = vrot.slane %v6591, 5
        %v6633 = vrot.slane %v6592, 5
        %v6634 = vsel %vm920, %v6632, %v6633
        %v6635 = vrot.slane %v6593, 5
        %v6636 = vsel %vm920, %v6633, %v6635
        %v6637 = vrot.slane %v6594, 5
        %v6638 = vsel %vm920, %v6635, %v6637
        %v6639 = vrot.slane %v6595, 5
        %v6640 = vsel %vm920, %v6637, %v6639
        %v6641 = vrot.slane %v6596, 5
        %v6642 = vsel %vm920, %v6639, %v6641
        %v6643 = vrot.slane %v6597, 5
        %v6644 = vsel %vm920, %v6641, %v6643
        %v6645 = vrot.slane %v6598, 5
        %v6646 = vsel %vm920, %v6643, %v6645
        %v6647 = vrot.slane %v6599, 5
        %v6648 = vsel %vm920, %v6645, %v6647
        %v6649 = vrot.slane %v6600, 5
        %v6650 = vsel %vm920, %v6647, %v6649
        %v6651 = vrot.slane %v6601, 5
        %v6652 = vsel %vm920, %v6649, %v6651
        %v6653 = vrot.slane %v6602, 5
        %v6654 = vsel %vm920, %v6651, %v6653
        %v6655 = vrot.slane %v6603, 5
        %v6656 = vsel %vm920, %v6653, %v6655
        %v6657 = vrot.slane %v6604, 5
        %v6658 = vsel %vm920, %v6655, %v6657
        %v6659 = vsel %vm2204, %v6634, 0
        %v6661 = vsel %vm2204, %v6636, 0
        %v6663 = vsel %vm2204, %v6638, 0
        %v6665 = vsel %vm2204, %v6640, 0
        %v6667 = vsel %vm2204, %v6642, 0
        %v6669 = vsel %vm2204, %v6644, 0
        %v6671 = vsel %vm2204, %v6646, 0
        %v6673 = vsel %vm2204, %v6648, 0
        %v6675 = vsel %vm2204, %v6650, 0
        %v6677 = vsel %vm2204, %v6652, 0
        %v6679 = vsel %vm2204, %v6654, 0
        %v6681 = vsel %vm2204, %v6656, 0
        %v6683 = vsel %vm2204, %v6658, 0
        %6685 = vmatprep.subr.mxu0 0.0
        %6686 = vmatpush1.msra.mxu0 %v6606
        %6687 = vmatprep.subr.mxu0 0.0
        %6688 = vmatpush1.msra.mxu0 %v6607
        %6689 = vmatprep.subr.mxu0 0.0
        %6690 = vmatpush1.msra.mxu0 %v6608
        %6691 = vmatprep.subr.mxu0 0.0
        %6692 = vmatpush1.msra.mxu0 %v6609
        %6693 = vmatprep.subr.mxu0 0.0
        %6694 = vmatpush1.msra.mxu0 %v6610
        %6695 = vmatprep.subr.mxu0 0.0
        %6696 = vmatpush1.msra.mxu0 %v6611
        %6697 = vmatprep.subr.mxu0 0.0
        %6698 = vmatpush1.msra.mxu0 %v6612
        %6699 = vmatprep.subr.mxu0 0.0
        %6700 = vmatpush1.msra.mxu0 %v6613
        %6701 = vmatprep.subr.mxu0 0.0
        %6702 = vmatpush1.msra.mxu0 %v6614
        %6703 = vmatprep.subr.mxu0 0.0
        %6704 = vmatpush1.msra.mxu0 %v6615
        %6705 = vmatprep.subr.mxu0 0.0
        %6706 = vmatpush1.msra.mxu0 %v6616
        %6707 = vmatprep.subr.mxu0 0.0
        %6708 = vmatpush1.msra.mxu0 %v6617
        %6709 = vmatprep.subr.mxu0 0.0
        %6710 = vmatpush1.msra.mxu0 0.0
        %6711 = vmatprep.subr.mxu0 0.0
        %6712 = vmatpush1.msra.mxu0 0.0
        %6713 = vmatprep.subr.mxu0 0.0
        %6714 = vmatpush1.msra.mxu0 0.0
        %6715 = vmatprep.subr.mxu0 0.0
        %6716 = vmatpush1.msra.mxu0 0.0
        %6717 = vmatprep.subr.mxu0 0.0
        %6718 = vmatpush1.msra.mxu0 0.0
        %6719 = vmatprep.subr.mxu0 0.0
        %6720 = vmatpush1.msra.mxu0 0.0
        %6721 = vmatprep.subr.mxu0 0.0
        %6722 = vmatpush1.msra.mxu0 0.0
        %6723 = vmatprep.subr.mxu0 0.0
        %6724 = vmatpush1.msra.mxu0 0.0
        %6725 = vmatprep.subr.mxu0 0.0
        %6726 = vmatpush1.msra.mxu0 0.0
        %6727 = vmatprep.subr.mxu0 0.0
        %6728 = vmatpush1.msra.mxu0 0.0
        %6729 = vmatprep.subr.mxu0 0.0
        %6730 = vmatpush1.msra.mxu0 0.0
        %6731 = vmatprep.subr.mxu0 0.0
        %6732 = vmatpush1.msra.mxu0 0.0
        %6733 = vmatprep.subr.mxu0 0.0
        %6734 = vmatpush1.msra.mxu0 0.0
        %6735 = vmatprep.subr.mxu0 0.0
        %6736 = vmatpush1.msra.mxu0 0.0
        %6737 = vmatprep.subr.mxu0 0.0
        %6738 = vmatpush1.msra.mxu0 0.0
        %6739 = vmatprep.subr.mxu0 0.0
        %6740 = vmatpush1.msra.mxu0 0.0
        %6741 = vmatprep.subr.mxu0 0.0
        %6742 = vmatpush1.msra.mxu0 0.0
        %6743 = vmatprep.subr.mxu0 0.0
        %6744 = vmatpush1.msra.mxu0 0.0
        %6745 = vmatprep.subr.mxu0 0.0
        %6746 = vmatpush1.msra.mxu0 0.0
        %6747 = vmatprep.subr.mxu0 0.0
        %6748 = vmatpush1.msra.mxu0 0.0
        %6749 = vmatprep.mubr.f32.mxu0 0.0
        %6750 = vmatmul.mubr.f32.gmra.mrb[0].mxu0 %v6659
        %v6751 = vpop.f32.mrb[0].mxu0
        %v6752 = vadd.f32 0.0, %v6751
        %v6753 = vpop.f32.mrb[0].mxu0
        %6754 = vmatprep.mubr.f32.mxu0 0.0
        %6755 = vmatmul.mubr.f32.gmra.mrb[0].mxu0 %v6661
        %v6756 = vpop.f32.mrb[0].mxu0
        %v6757 = vadd.f32 0.0, %v6756
        %v6758 = vpop.f32.mrb[0].mxu0
        %6759 = vmatprep.mubr.f32.mxu0 0.0
        %6760 = vmatmul.mubr.f32.gmra.mrb[0].mxu0 %v6663
        %v6761 = vpop.f32.mrb[0].mxu0
        %v6762 = vadd.f32 0.0, %v6761
        %v6763 = vpop.f32.mrb[0].mxu0
        %6764 = vmatprep.mubr.f32.mxu0 0.0
        %6765 = vmatmul.mubr.f32.gmra.mrb[0].mxu0 %v6665
        %v6766 = vpop.f32.mrb[0].mxu0
        %v6767 = vadd.f32 0.0, %v6766
        %v6768 = vpop.f32.mrb[0].mxu0
        %6769 = vmatprep.mubr.f32.mxu0 0.0
        %6770 = vmatmul.mubr.f32.gmra.mrb[0].mxu0 %v6667
        %v6771 = vpop.f32.mrb[0].mxu0
        %v6772 = vadd.f32 0.0, %v6771
        %v6773 = vpop.f32.mrb[0].mxu0
        %6774 = vmatprep.mubr.f32.mxu0 0.0
        %6775 = vmatmul.mubr.f32.gmra.mrb[0].mxu0 %v6669
        %v6776 = vpop.f32.mrb[0].mxu0
        %v6777 = vadd.f32 0.0, %v6776
        %v6778 = vpop.f32.mrb[0].mxu0
        %6779 = vmatprep.mubr.f32.mxu0 0.0
        %6780 = vmatmul.mubr.f32.gmra.mrb[0].mxu0 %v6671
        %v6781 = vpop.f32.mrb[0].mxu0
        %v6782 = vadd.f32 0.0, %v6781
        %v6783 = vpop.f32.mrb[0].mxu0
        %6784 = vmatprep.mubr.f32.mxu0 0.0
        %6785 = vmatmul.mubr.f32.gmra.mrb[0].mxu0 %v6673
        %v6786 = vpop.f32.mrb[0].mxu0
        %v6787 = vadd.f32 0.0, %v6786
        %v6788 = vpop.f32.mrb[0].mxu0
        %6789 = vmatprep.mubr.f32.mxu0 0.0
        %6790 = vmatmul.mubr.f32.gmra.mrb[0].mxu0 %v6675
        %v6791 = vpop.f32.mrb[0].mxu0
        %v6792 = vadd.f32 0.0, %v6791
        %v6793 = vpop.f32.mrb[0].mxu0
        %6794 = vmatprep.mubr.f32.mxu0 0.0
        %6795 = vmatmul.mubr.f32.gmra.mrb[0].mxu0 %v6677
        %v6796 = vpop.f32.mrb[0].mxu0
        %v6797 = vadd.f32 0.0, %v6796
        %v6798 = vpop.f32.mrb[0].mxu0
        %6799 = vmatprep.mubr.f32.mxu0 0.0
        %6800 = vmatmul.mubr.f32.gmra.mrb[0].mxu0 %v6679
        %v6801 = vpop.f32.mrb[0].mxu0
        %v6802 = vadd.f32 0.0, %v6801
        %v6803 = vpop.f32.mrb[0].mxu0
        %6804 = vmatprep.mubr.f32.mxu0 0.0
        %6805 = vmatmul.mubr.f32.gmra.mrb[0].mxu0 %v6681
        %v6806 = vpop.f32.mrb[0].mxu0
        %v6807 = vadd.f32 0.0, %v6806
        %v6808 = vpop.f32.mrb[0].mxu0
        %6809 = vmatprep.mubr.f32.mxu0 0.0
        %6810 = vmatmul.mubr.f32.gmra.mrb[0].mxu0 %v6683
        %v6811 = vpop.f32.mrb[0].mxu0
        %v6812 = vadd.f32 0.0, %v6811
        %v6813 = vpop.f32.mrb[0].mxu0
        %6814 = vdwg.mxu0
        %v6815 = vadd.f32 %v6578, %v6752
        %v6816 = vadd.f32 %v6579, %v6757
        %v6817 = vadd.f32 %v6580, %v6762
        %v6818 = vadd.f32 %v6581, %v6767
        %v6819 = vadd.f32 %v6582, %v6772
        %v6820 = vadd.f32 %v6583, %v6777
        %v6821 = vadd.f32 %v6584, %v6782
        %v6822 = vadd.f32 %v6585, %v6787
        %v6823 = vadd.f32 %v6586, %v6792
        %v6824 = vadd.f32 %v6587, %v6797
        %v6825 = vadd.f32 %v6588, %v6802
        %v6826 = vadd.f32 %v6589, %v6807
        %v6827 = vadd.f32 %v6590, %v6812
        %v6828 = vadd.f32 %v6815, %v1839
        %v6829 = vadd.f32 %v6816, %v1840
        %v6830 = vadd.f32 %v6817, %v1841
        %v6831 = vadd.f32 %v6818, %v1842
        %v6832 = vadd.f32 %v6819, %v1843
        %v6833 = vadd.f32 %v6820, %v1844
        %v6834 = vadd.f32 %v6821, %v1845
        %v6835 = vadd.f32 %v6822, %v1846
        %v6836 = vadd.f32 %v6823, %v1847
        %v6837 = vadd.f32 %v6824, %v1848
        %v6838 = vadd.f32 %v6825, %v1849
        %v6839 = vadd.f32 %v6826, %v1850
        %v6840 = vadd.f32 %v6827, %v1851
        %6841 = vst.msk [vmem:[%s756] ss:$8 sm:$0x7] %vm755, 0.0
        %6842 = vst.msk [vmem:[%s756] ss:$8 sm:$0x0] %vm755, 0.0
        %6843 = vst.msk [vmem:[%s759] ss:$8 sm:$0x7] %vm755, 0.0
        %6844 = vst.msk [vmem:[%s759] ss:$8 sm:$0x0] %vm755, 0.0
        %v6845 = vmul.f32 %v6828, %v765
        %v6846 = vmul.f32 %v6829, %v770
        %v6847 = vmul.f32 %v6830, %v775
        %v6848 = vmul.f32 %v6831, %v780
        %v6849 = vmul.f32 %v6832, %v785
        %v6850 = vmul.f32 %v6833, %v790
        %v6851 = vmul.f32 %v6834, %v795
        %v6852 = vmul.f32 %v6835, %v800
        %v6853 = vmul.f32 %v6836, %v805
        %v6854 = vmul.f32 %v6837, %v810
        %v6855 = vmul.f32 %v6838, %v815
        %v6856 = vmul.f32 %v6839, %v820
        %v6857 = vmul.f32 %v6840, %v825
        %v6871 = vrot.slane %v6845, 4
        %v6872 = vrot.slane %v6846, 4
        %v6873 = vsel %vm853, %v6871, %v6872
        %v6874 = vrot.slane %v6847, 4
        %v6875 = vsel %vm853, %v6872, %v6874
        %v6876 = vrot.slane %v6848, 4
        %v6877 = vsel %vm853, %v6874, %v6876
        %v6878 = vrot.slane %v6849, 4
        %v6879 = vsel %vm853, %v6876, %v6878
        %v6880 = vrot.slane %v6850, 4
        %v6881 = vsel %vm853, %v6878, %v6880
        %v6882 = vrot.slane %v6851, 4
        %v6883 = vsel %vm853, %v6880, %v6882
        %v6884 = vrot.slane %v6852, 4
        %v6885 = vsel %vm853, %v6882, %v6884
        %v6886 = vrot.slane %v6853, 4
        %v6887 = vsel %vm853, %v6884, %v6886
        %v6888 = vrot.slane %v6854, 4
        %v6889 = vsel %vm853, %v6886, %v6888
        %v6890 = vrot.slane %v6855, 4
        %v6891 = vsel %vm853, %v6888, %v6890
        %v6892 = vrot.slane %v6856, 4
        %v6893 = vsel %vm853, %v6890, %v6892
        %v6894 = vrot.slane %v6857, 4
        %v6895 = vsel %vm853, %v6892, %v6894
        %6909 = vst.msk [vmem:[#allocation2 + $0x18] sm:$0xf0] %vm1920, %v6871
        %6910 = vst.msk [vmem:[#allocation2 + $0x30] sm:$0xff] %vm1922, %v6873
        %6911 = vst.msk [vmem:[#allocation2 + $0x48] sm:$0xff] %vm1922, %v6875
        %6912 = vst.msk [vmem:[#allocation2 + $0x60] sm:$0xff] %vm1922, %v6877
        %6913 = vst.msk [vmem:[#allocation2 + $0x78] sm:$0xff] %vm1922, %v6879
        %6914 = vst.msk [vmem:[#allocation2 + $0x90] sm:$0xff] %vm1922, %v6881
        %6915 = vst.msk [vmem:[#allocation2 + $0xa8] sm:$0xff] %vm1922, %v6883
        %6916 = vst.msk [vmem:[#allocation2 + $0xc0] sm:$0xff] %vm1922, %v6885
        %6917 = vst.msk [vmem:[#allocation2 + $0xd8] sm:$0xff] %vm1922, %v6887
        %6918 = vst.msk [vmem:[#allocation2 + $0xf0] sm:$0xff] %vm1922, %v6889
        %6919 = vst.msk [vmem:[#allocation2 + $0x108] sm:$0xff] %vm1922, %v6891
        %6920 = vst.msk [vmem:[#allocation2 + $0x120] sm:$0xff] %vm1922, %v6893
        %6921 = vst.msk [vmem:[#allocation2 + $0x138] sm:$0xff] %vm1922, %v6895
        %v6935 = vrot.slane %v6828, 5
        %v6936 = vrot.slane %v6829, 5
        %v6937 = vsel %vm920, %v6935, %v6936
        %v6938 = vrot.slane %v6830, 5
        %v6939 = vsel %vm920, %v6936, %v6938
        %v6940 = vrot.slane %v6831, 5
        %v6941 = vsel %vm920, %v6938, %v6940
        %v6942 = vrot.slane %v6832, 5
        %v6943 = vsel %vm920, %v6940, %v6942
        %v6944 = vrot.slane %v6833, 5
        %v6945 = vsel %vm920, %v6942, %v6944
        %v6946 = vrot.slane %v6834, 5
        %v6947 = vsel %vm920, %v6944, %v6946
        %v6948 = vrot.slane %v6835, 5
        %v6949 = vsel %vm920, %v6946, %v6948
        %v6950 = vrot.slane %v6836, 5
        %v6951 = vsel %vm920, %v6948, %v6950
        %v6952 = vrot.slane %v6837, 5
        %v6953 = vsel %vm920, %v6950, %v6952
        %v6954 = vrot.slane %v6838, 5
        %v6955 = vsel %vm920, %v6952, %v6954
        %v6956 = vrot.slane %v6839, 5
        %v6957 = vsel %vm920, %v6954, %v6956
        %v6958 = vrot.slane %v6840, 5
        %v6959 = vsel %vm920, %v6956, %v6958
        %6960 = vrot.lane.b32.xlu0 %v6935, 32
        %v6961 = vpop.permute.xlu0 %6960
        %6962 = vrot.lane.b32.xlu0 %v6937, 32
        %v6963 = vpop.permute.xlu0 %6962
        %6964 = vrot.lane.b32.xlu0 %v6939, 32
        %v6965 = vpop.permute.xlu0 %6964
        %6966 = vrot.lane.b32.xlu0 %v6941, 32
        %v6967 = vpop.permute.xlu0 %6966
        %6968 = vrot.lane.b32.xlu0 %v6943, 32
        %v6969 = vpop.permute.xlu0 %6968
        %6970 = vrot.lane.b32.xlu0 %v6945, 32
        %v6971 = vpop.permute.xlu0 %6970
        %6972 = vrot.lane.b32.xlu0 %v6947, 32
        %v6973 = vpop.permute.xlu0 %6972
        %6974 = vrot.lane.b32.xlu0 %v6949, 32
        %v6975 = vpop.permute.xlu0 %6974
        %6976 = vrot.lane.b32.xlu0 %v6951, 32
        %v6977 = vpop.permute.xlu0 %6976
        %6978 = vrot.lane.b32.xlu0 %v6953, 32
        %v6979 = vpop.permute.xlu0 %6978
        %6980 = vrot.lane.b32.xlu0 %v6955, 32
        %v6981 = vpop.permute.xlu0 %6980
        %6982 = vrot.lane.b32.xlu0 %v6957, 32
        %v6983 = vpop.permute.xlu0 %6982
        %6984 = vrot.lane.b32.xlu0 %v6959, 32
        %v6985 = vpop.permute.xlu0 %6984
        %6999 = vst.msk [vmem:[#allocation2 + $0x18] sm:$0xf8] %vm2012, %v6961
        %7000 = vst.msk [vmem:[#allocation2 + $0x30] sm:$0xff] %vm2014, %v6963
        %7001 = vst.msk [vmem:[#allocation2 + $0x48] sm:$0xff] %vm2014, %v6965
        %7002 = vst.msk [vmem:[#allocation2 + $0x60] sm:$0xff] %vm2014, %v6967
        %7003 = vst.msk [vmem:[#allocation2 + $0x78] sm:$0xff] %vm2014, %v6969
        %7004 = vst.msk [vmem:[#allocation2 + $0x90] sm:$0xff] %vm2014, %v6971
        %7005 = vst.msk [vmem:[#allocation2 + $0xa8] sm:$0xff] %vm2014, %v6973
        %7006 = vst.msk [vmem:[#allocation2 + $0xc0] sm:$0xff] %vm2014, %v6975
        %7007 = vst.msk [vmem:[#allocation2 + $0xd8] sm:$0xff] %vm2014, %v6977
        %7008 = vst.msk [vmem:[#allocation2 + $0xf0] sm:$0xff] %vm2014, %v6979
        %7009 = vst.msk [vmem:[#allocation2 + $0x108] sm:$0xff] %vm2014, %v6981
        %7010 = vst.msk [vmem:[#allocation2 + $0x120] sm:$0xff] %vm2014, %v6983
        %7011 = vst.msk [vmem:[#allocation2 + $0x138] sm:$0x7f] %vm2026, %v6985
        %v7012 = vmul.f32 %v6828, %v1003
        %v7013 = vmul.f32 %v6829, %v1007
        %v7014 = vmul.f32 %v6830, %v1011
        %v7015 = vmul.f32 %v6831, %v1015
        %v7016 = vmul.f32 %v6832, %v1019
        %v7017 = vmul.f32 %v6833, %v1023
        %v7018 = vmul.f32 %v6834, %v1027
        %v7019 = vmul.f32 %v6835, %v1031
        %v7020 = vmul.f32 %v6836, %v1035
        %v7021 = vmul.f32 %v6837, %v1039
        %v7022 = vmul.f32 %v6838, %v1043
        %v7023 = vmul.f32 %v6839, %v1047
        %v7024 = vmul.f32 %v6840, %v1051
        %v7038 = vrot.slane %v7012, 6
        %v7039 = vrot.slane %v7013, 6
        %v7040 = vsel %vm1079, %v7038, %v7039
        %v7041 = vrot.slane %v7014, 6
        %v7042 = vsel %vm1079, %v7039, %v7041
        %v7043 = vrot.slane %v7015, 6
        %v7044 = vsel %vm1079, %v7041, %v7043
        %v7045 = vrot.slane %v7016, 6
        %v7046 = vsel %vm1079, %v7043, %v7045
        %v7047 = vrot.slane %v7017, 6
        %v7048 = vsel %vm1079, %v7045, %v7047
        %v7049 = vrot.slane %v7018, 6
        %v7050 = vsel %vm1079, %v7047, %v7049
        %v7051 = vrot.slane %v7019, 6
        %v7052 = vsel %vm1079, %v7049, %v7051
        %v7053 = vrot.slane %v7020, 6
        %v7054 = vsel %vm1079, %v7051, %v7053
        %v7055 = vrot.slane %v7021, 6
        %v7056 = vsel %vm1079, %v7053, %v7055
        %v7057 = vrot.slane %v7022, 6
        %v7058 = vsel %vm1079, %v7055, %v7057
        %v7059 = vrot.slane %v7023, 6
        %v7060 = vsel %vm1079, %v7057, %v7059
        %v7061 = vrot.slane %v7024, 6
        %v7062 = vsel %vm1079, %v7059, %v7061
        %7063 = vrot.lane.b32.xlu0 %v7038, 64
        %v7064 = vpop.permute.xlu0 %7063
        %7065 = vrot.lane.b32.xlu0 %v7040, 64
        %v7066 = vpop.permute.xlu0 %7065
        %7067 = vrot.lane.b32.xlu0 %v7042, 64
        %v7068 = vpop.permute.xlu0 %7067
        %7069 = vrot.lane.b32.xlu0 %v7044, 64
        %v7070 = vpop.permute.xlu0 %7069
        %7071 = vrot.lane.b32.xlu0 %v7046, 64
        %v7072 = vpop.permute.xlu0 %7071
        %7073 = vrot.lane.b32.xlu0 %v7048, 64
        %v7074 = vpop.permute.xlu0 %7073
        %7075 = vrot.lane.b32.xlu0 %v7050, 64
        %v7076 = vpop.permute.xlu0 %7075
        %7077 = vrot.lane.b32.xlu0 %v7052, 64
        %v7078 = vpop.permute.xlu0 %7077
        %7079 = vrot.lane.b32.xlu0 %v7054, 64
        %v7080 = vpop.permute.xlu0 %7079
        %7081 = vrot.lane.b32.xlu0 %v7056, 64
        %v7082 = vpop.permute.xlu0 %7081
        %7083 = vrot.lane.b32.xlu0 %v7058, 64
        %v7084 = vpop.permute.xlu0 %7083
        %7085 = vrot.lane.b32.xlu0 %v7060, 64
        %v7086 = vpop.permute.xlu0 %7085
        %7087 = vrot.lane.b32.xlu0 %v7062, 64
        %v7088 = vpop.permute.xlu0 %7087
        %7102 = vst.msk [vmem:[#allocation2 + $0x18] sm:$0xfc] %vm2118, %v7064
        %7103 = vst.msk [vmem:[#allocation2 + $0x30] sm:$0xff] %vm2120, %v7066
        %7104 = vst.msk [vmem:[#allocation2 + $0x48] sm:$0xff] %vm2120, %v7068
        %7105 = vst.msk [vmem:[#allocation2 + $0x60] sm:$0xff] %vm2120, %v7070
        %7106 = vst.msk [vmem:[#allocation2 + $0x78] sm:$0xff] %vm2120, %v7072
        %7107 = vst.msk [vmem:[#allocation2 + $0x90] sm:$0xff] %vm2120, %v7074
        %7108 = vst.msk [vmem:[#allocation2 + $0xa8] sm:$0xff] %vm2120, %v7076
        %7109 = vst.msk [vmem:[#allocation2 + $0xc0] sm:$0xff] %vm2120, %v7078
        %7110 = vst.msk [vmem:[#allocation2 + $0xd8] sm:$0xff] %vm2120, %v7080
        %7111 = vst.msk [vmem:[#allocation2 + $0xf0] sm:$0xff] %vm2120, %v7082
        %7112 = vst.msk [vmem:[#allocation2 + $0x108] sm:$0xff] %vm2120, %v7084
        %7113 = vst.msk [vmem:[#allocation2 + $0x120] sm:$0xff] %vm2120, %v7086
        %7114 = vst.msk [vmem:[#allocation2 + $0x138] sm:$0x3f] %vm2132, %v7088
        %v7115 = vld [vmem:[%s16] sm:$0x1]
        %v7117 = vlaneseq
        %v7118 = vshrl.u32 %v7117, 7
        %v7119 = vsub.s32 0, %v7118
        %v7120 = vrot.slane %v7115, %v7119
        %v7122 = vld [vmem:[#allocation2] sm:$0xfe]
        %v7123 = vld [vmem:[#allocation2 + $0x18] sm:$0xff]
        %v7124 = vld [vmem:[#allocation2 + $0x30] sm:$0xff]
        %v7125 = vld [vmem:[#allocation2 + $0x48] sm:$0xff]
        %v7126 = vld [vmem:[#allocation2 + $0x60] sm:$0xff]
        %v7127 = vld [vmem:[#allocation2 + $0x78] sm:$0xff]
        %v7128 = vld [vmem:[#allocation2 + $0x90] sm:$0xff]
        %v7129 = vld [vmem:[#allocation2 + $0xa8] sm:$0xff]
        %v7130 = vld [vmem:[#allocation2 + $0xc0] sm:$0xff]
        %v7131 = vld [vmem:[#allocation2 + $0xd8] sm:$0xff]
        %v7132 = vld [vmem:[#allocation2 + $0xf0] sm:$0xff]
        %v7133 = vld [vmem:[#allocation2 + $0x108] sm:$0xff]
        %v7134 = vld [vmem:[#allocation2 + $0x120] sm:$0x1f]
        %v7135 = vld [vmem:[%s15] sm:$0xff]
        %v7136 = vld [vmem:[%s15 + $0x8] sm:$0xff]
        %v7137 = vld [vmem:[%s15 + $0x10] sm:$0xff]
        %v7138 = vld [vmem:[%s15 + $0x18] sm:$0xff]
        %v7139 = vld [vmem:[%s15 + $0x20] sm:$0xff]
        %v7140 = vld [vmem:[%s15 + $0x28] sm:$0xff]
        %v7141 = vld [vmem:[%s15 + $0x30] sm:$0xff]
        %v7142 = vld [vmem:[%s15 + $0x38] sm:$0xff]
        %v7143 = vld [vmem:[%s15 + $0x40] sm:$0xff]
        %v7144 = vld [vmem:[%s15 + $0x48] sm:$0xff]
        %v7145 = vld [vmem:[%s15 + $0x50] sm:$0xff]
        %v7146 = vld [vmem:[%s15 + $0x58] sm:$0xff]
        %v7160 = vrot.slane %v7122, 1
        %v7161 = vrot.slane %v7123, 1
        %v7162 = vsel %vm1195, %v7160, %v7161
        %v7163 = vrot.slane %v7124, 1
        %v7164 = vsel %vm1195, %v7161, %v7163
        %v7165 = vrot.slane %v7125, 1
        %v7166 = vsel %vm1195, %v7163, %v7165
        %v7167 = vrot.slane %v7126, 1
        %v7168 = vsel %vm1195, %v7165, %v7167
        %v7169 = vrot.slane %v7127, 1
        %v7170 = vsel %vm1195, %v7167, %v7169
        %v7171 = vrot.slane %v7128, 1
        %v7172 = vsel %vm1195, %v7169, %v7171
        %v7173 = vrot.slane %v7129, 1
        %v7174 = vsel %vm1195, %v7171, %v7173
        %v7175 = vrot.slane %v7130, 1
        %v7176 = vsel %vm1195, %v7173, %v7175
        %v7177 = vrot.slane %v7131, 1
        %v7178 = vsel %vm1195, %v7175, %v7177
        %v7179 = vrot.slane %v7132, 1
        %v7180 = vsel %vm1195, %v7177, %v7179
        %v7181 = vrot.slane %v7133, 1
        %v7182 = vsel %vm1195, %v7179, %v7181
        %v7183 = vrot.slane %v7134, 1
        %v7184 = vsel %vm1195, %v7181, %v7183
        %v7185 = vsel %vm2204, %v7162, 0
        %v7187 = vsel %vm2204, %v7164, 0
        %v7189 = vsel %vm2204, %v7166, 0
        %v7191 = vsel %vm2204, %v7168, 0
        %v7193 = vsel %vm2204, %v7170, 0
        %v7195 = vsel %vm2204, %v7172, 0
        %v7197 = vsel %vm2204, %v7174, 0
        %v7199 = vsel %vm2204, %v7176, 0
        %v7201 = vsel %vm2204, %v7178, 0
        %v7203 = vsel %vm2204, %v7180, 0
        %v7205 = vsel %vm2204, %v7182, 0
        %v7207 = vsel %vm2204, %v7184, 0
        %v7209 = vsel %vm2204, %v7183, 0
        %7211 = vmatprep.subr.mxu0 0.0
        %7212 = vmatpush1.msra.mxu0 %v7135
        %7213 = vmatprep.subr.mxu0 0.0
        %7214 = vmatpush1.msra.mxu0 %v7136
        %7215 = vmatprep.subr.mxu0 0.0
        %7216 = vmatpush1.msra.mxu0 %v7137
        %7217 = vmatprep.subr.mxu0 0.0
        %7218 = vmatpush1.msra.mxu0 %v7138
        %7219 = vmatprep.subr.mxu0 0.0
        %7220 = vmatpush1.msra.mxu0 %v7139
        %7221 = vmatprep.subr.mxu0 0.0
        %7222 = vmatpush1.msra.mxu0 %v7140
        %7223 = vmatprep.subr.mxu0 0.0
        %7224 = vmatpush1.msra.mxu0 %v7141
        %7225 = vmatprep.subr.mxu0 0.0
        %7226 = vmatpush1.msra.mxu0 %v7142
        %7227 = vmatprep.subr.mxu0 0.0
        %7228 = vmatpush1.msra.mxu0 %v7143
        %7229 = vmatprep.subr.mxu0 0.0
        %7230 = vmatpush1.msra.mxu0 %v7144
        %7231 = vmatprep.subr.mxu0 0.0
        %7232 = vmatpush1.msra.mxu0 %v7145
        %7233 = vmatprep.subr.mxu0 0.0
        %7234 = vmatpush1.msra.mxu0 %v7146
        %7235 = vmatprep.subr.mxu0 0.0
        %7236 = vmatpush1.msra.mxu0 0.0
        %7237 = vmatprep.subr.mxu0 0.0
        %7238 = vmatpush1.msra.mxu0 0.0
        %7239 = vmatprep.subr.mxu0 0.0
        %7240 = vmatpush1.msra.mxu0 0.0
        %7241 = vmatprep.subr.mxu0 0.0
        %7242 = vmatpush1.msra.mxu0 0.0
        %7243 = vmatprep.subr.mxu0 0.0
        %7244 = vmatpush1.msra.mxu0 0.0
        %7245 = vmatprep.subr.mxu0 0.0
        %7246 = vmatpush1.msra.mxu0 0.0
        %7247 = vmatprep.subr.mxu0 0.0
        %7248 = vmatpush1.msra.mxu0 0.0
        %7249 = vmatprep.subr.mxu0 0.0
        %7250 = vmatpush1.msra.mxu0 0.0
        %7251 = vmatprep.subr.mxu0 0.0
        %7252 = vmatpush1.msra.mxu0 0.0
        %7253 = vmatprep.subr.mxu0 0.0
        %7254 = vmatpush1.msra.mxu0 0.0
        %7255 = vmatprep.subr.mxu0 0.0
        %7256 = vmatpush1.msra.mxu0 0.0
        %7257 = vmatprep.subr.mxu0 0.0
        %7258 = vmatpush1.msra.mxu0 0.0
        %7259 = vmatprep.subr.mxu0 0.0
        %7260 = vmatpush1.msra.mxu0 0.0
        %7261 = vmatprep.subr.mxu0 0.0
        %7262 = vmatpush1.msra.mxu0 0.0
        %7263 = vmatprep.subr.mxu0 0.0
        %7264 = vmatpush1.msra.mxu0 0.0
        %7265 = vmatprep.subr.mxu0 0.0
        %7266 = vmatpush1.msra.mxu0 0.0
        %7267 = vmatprep.subr.mxu0 0.0
        %7268 = vmatpush1.msra.mxu0 0.0
        %7269 = vmatprep.subr.mxu0 0.0
        %7270 = vmatpush1.msra.mxu0 0.0
        %7271 = vmatprep.subr.mxu0 0.0
        %7272 = vmatpush1.msra.mxu0 0.0
        %7273 = vmatprep.subr.mxu0 0.0
        %7274 = vmatpush1.msra.mxu0 0.0
        %7275 = vmatprep.mubr.f32.mxu0 0.0
        %7276 = vmatmul.mubr.f32.gmra.mrb[0].mxu0 %v7185
        %v7277 = vpop.f32.mrb[0].mxu0
        %v7278 = vadd.f32 0.0, %v7277
        %v7279 = vpop.f32.mrb[0].mxu0
        %7280 = vmatprep.mubr.f32.mxu0 0.0
        %7281 = vmatmul.mubr.f32.gmra.mrb[0].mxu0 %v7187
        %v7282 = vpop.f32.mrb[0].mxu0
        %v7283 = vadd.f32 0.0, %v7282
        %v7284 = vpop.f32.mrb[0].mxu0
        %7285 = vmatprep.mubr.f32.mxu0 0.0
        %7286 = vmatmul.mubr.f32.gmra.mrb[0].mxu0 %v7189
        %v7287 = vpop.f32.mrb[0].mxu0
        %v7288 = vadd.f32 0.0, %v7287
        %v7289 = vpop.f32.mrb[0].mxu0
        %7290 = vmatprep.mubr.f32.mxu0 0.0
        %7291 = vmatmul.mubr.f32.gmra.mrb[0].mxu0 %v7191
        %v7292 = vpop.f32.mrb[0].mxu0
        %v7293 = vadd.f32 0.0, %v7292
        %v7294 = vpop.f32.mrb[0].mxu0
        %7295 = vmatprep.mubr.f32.mxu0 0.0
        %7296 = vmatmul.mubr.f32.gmra.mrb[0].mxu0 %v7193
        %v7297 = vpop.f32.mrb[0].mxu0
        %v7298 = vadd.f32 0.0, %v7297
        %v7299 = vpop.f32.mrb[0].mxu0
        %7300 = vmatprep.mubr.f32.mxu0 0.0
        %7301 = vmatmul.mubr.f32.gmra.mrb[0].mxu0 %v7195
        %v7302 = vpop.f32.mrb[0].mxu0
        %v7303 = vadd.f32 0.0, %v7302
        %v7304 = vpop.f32.mrb[0].mxu0
        %7305 = vmatprep.mubr.f32.mxu0 0.0
        %7306 = vmatmul.mubr.f32.gmra.mrb[0].mxu0 %v7197
        %v7307 = vpop.f32.mrb[0].mxu0
        %v7308 = vadd.f32 0.0, %v7307
        %v7309 = vpop.f32.mrb[0].mxu0
        %7310 = vmatprep.mubr.f32.mxu0 0.0
        %7311 = vmatmul.mubr.f32.gmra.mrb[0].mxu0 %v7199
        %v7312 = vpop.f32.mrb[0].mxu0
        %v7313 = vadd.f32 0.0, %v7312
        %v7314 = vpop.f32.mrb[0].mxu0
        %7315 = vmatprep.mubr.f32.mxu0 0.0
        %7316 = vmatmul.mubr.f32.gmra.mrb[0].mxu0 %v7201
        %v7317 = vpop.f32.mrb[0].mxu0
        %v7318 = vadd.f32 0.0, %v7317
        %v7319 = vpop.f32.mrb[0].mxu0
        %7320 = vmatprep.mubr.f32.mxu0 0.0
        %7321 = vmatmul.mubr.f32.gmra.mrb[0].mxu0 %v7203
        %v7322 = vpop.f32.mrb[0].mxu0
        %v7323 = vadd.f32 0.0, %v7322
        %v7324 = vpop.f32.mrb[0].mxu0
        %7325 = vmatprep.mubr.f32.mxu0 0.0
        %7326 = vmatmul.mubr.f32.gmra.mrb[0].mxu0 %v7205
        %v7327 = vpop.f32.mrb[0].mxu0
        %v7328 = vadd.f32 0.0, %v7327
        %v7329 = vpop.f32.mrb[0].mxu0
        %7330 = vmatprep.mubr.f32.mxu0 0.0
        %7331 = vmatmul.mubr.f32.gmra.mrb[0].mxu0 %v7207
        %v7332 = vpop.f32.mrb[0].mxu0
        %v7333 = vadd.f32 0.0, %v7332
        %v7334 = vpop.f32.mrb[0].mxu0
        %7335 = vmatprep.mubr.f32.mxu0 0.0
        %7336 = vmatmul.mubr.f32.gmra.mrb[0].mxu0 %v7209
        %v7337 = vpop.f32.mrb[0].mxu0
        %v7338 = vadd.f32 0.0, %v7337
        %v7339 = vpop.f32.mrb[0].mxu0
        %7340 = vdwg.mxu0
        %v7341 = vadd.f32 %v7120, %v7278
        %v7342 = vadd.f32 %v7120, %v7283
        %v7343 = vadd.f32 %v7120, %v7288
        %v7344 = vadd.f32 %v7120, %v7293
        %v7345 = vadd.f32 %v7120, %v7298
        %v7346 = vadd.f32 %v7120, %v7303
        %v7347 = vadd.f32 %v7120, %v7308
        %v7348 = vadd.f32 %v7120, %v7313
        %v7349 = vadd.f32 %v7120, %v7318
        %v7350 = vadd.f32 %v7120, %v7323
        %v7351 = vadd.f32 %v7120, %v7328
        %v7352 = vadd.f32 %v7120, %v7333
        %v7353 = vadd.f32 %v7120, %v7338
        %v7354 = vld [vmem:[#allocation2 + $0x18] sm:$0xf8]
        %v7355 = vld [vmem:[#allocation2 + $0x30] sm:$0xff]
        %v7356 = vld [vmem:[#allocation2 + $0x48] sm:$0xff]
        %v7357 = vld [vmem:[#allocation2 + $0x60] sm:$0xff]
        %v7358 = vld [vmem:[#allocation2 + $0x78] sm:$0xff]
        %v7359 = vld [vmem:[#allocation2 + $0x90] sm:$0xff]
        %v7360 = vld [vmem:[#allocation2 + $0xa8] sm:$0xff]
        %v7361 = vld [vmem:[#allocation2 + $0xc0] sm:$0xff]
        %v7362 = vld [vmem:[#allocation2 + $0xd8] sm:$0xff]
        %v7363 = vld [vmem:[#allocation2 + $0xf0] sm:$0xff]
        %v7364 = vld [vmem:[#allocation2 + $0x108] sm:$0xff]
        %v7365 = vld [vmem:[#allocation2 + $0x120] sm:$0xff]
        %v7366 = vld [vmem:[#allocation2 + $0x138] sm:$0x7f]
        %s7367 = scalar_lea.vmem %s15, 96
        %v7368 = vld [vmem:[%s7367] sm:$0xff]
        %v7369 = vld [vmem:[%s7367 + $0x8] sm:$0xff]
        %v7370 = vld [vmem:[%s7367 + $0x10] sm:$0xff]
        %v7371 = vld [vmem:[%s7367 + $0x18] sm:$0xff]
        %v7372 = vld [vmem:[%s7367 + $0x20] sm:$0xff]
        %v7373 = vld [vmem:[%s7367 + $0x28] sm:$0xff]
        %v7374 = vld [vmem:[%s7367 + $0x30] sm:$0xff]
        %v7375 = vld [vmem:[%s7367 + $0x38] sm:$0xff]
        %v7376 = vld [vmem:[%s7367 + $0x40] sm:$0xff]
        %v7377 = vld [vmem:[%s7367 + $0x48] sm:$0xff]
        %v7378 = vld [vmem:[%s7367 + $0x50] sm:$0xff]
        %v7379 = vld [vmem:[%s7367 + $0x58] sm:$0xff]
        %v7393 = vrot.slane %v7354, 3
        %v7394 = vrot.slane %v7355, 3
        %v7395 = vsel %vm1424, %v7393, %v7394
        %v7396 = vrot.slane %v7356, 3
        %v7397 = vsel %vm1424, %v7394, %v7396
        %v7398 = vrot.slane %v7357, 3
        %v7399 = vsel %vm1424, %v7396, %v7398
        %v7400 = vrot.slane %v7358, 3
        %v7401 = vsel %vm1424, %v7398, %v7400
        %v7402 = vrot.slane %v7359, 3
        %v7403 = vsel %vm1424, %v7400, %v7402
        %v7404 = vrot.slane %v7360, 3
        %v7405 = vsel %vm1424, %v7402, %v7404
        %v7406 = vrot.slane %v7361, 3
        %v7407 = vsel %vm1424, %v7404, %v7406
        %v7408 = vrot.slane %v7362, 3
        %v7409 = vsel %vm1424, %v7406, %v7408
        %v7410 = vrot.slane %v7363, 3
        %v7411 = vsel %vm1424, %v7408, %v7410
        %v7412 = vrot.slane %v7364, 3
        %v7413 = vsel %vm1424, %v7410, %v7412
        %v7414 = vrot.slane %v7365, 3
        %v7415 = vsel %vm1424, %v7412, %v7414
        %v7416 = vrot.slane %v7366, 3
        %v7417 = vsel %vm1424, %v7414, %v7416
        %v7418 = vsel %vm2204, %v7395, 0
        %v7420 = vsel %vm2204, %v7397, 0
        %v7422 = vsel %vm2204, %v7399, 0
        %v7424 = vsel %vm2204, %v7401, 0
        %v7426 = vsel %vm2204, %v7403, 0
        %v7428 = vsel %vm2204, %v7405, 0
        %v7430 = vsel %vm2204, %v7407, 0
        %v7432 = vsel %vm2204, %v7409, 0
        %v7434 = vsel %vm2204, %v7411, 0
        %v7436 = vsel %vm2204, %v7413, 0
        %v7438 = vsel %vm2204, %v7415, 0
        %v7440 = vsel %vm2204, %v7417, 0
        %v7442 = vsel %vm2204, %v7416, 0
        %7444 = vmatprep.subr.mxu0 0.0
        %7445 = vmatpush1.msra.mxu0 %v7368
        %7446 = vmatprep.subr.mxu0 0.0
        %7447 = vmatpush1.msra.mxu0 %v7369
        %7448 = vmatprep.subr.mxu0 0.0
        %7449 = vmatpush1.msra.mxu0 %v7370
        %7450 = vmatprep.subr.mxu0 0.0
        %7451 = vmatpush1.msra.mxu0 %v7371
        %7452 = vmatprep.subr.mxu0 0.0
        %7453 = vmatpush1.msra.mxu0 %v7372
        %7454 = vmatprep.subr.mxu0 0.0
        %7455 = vmatpush1.msra.mxu0 %v7373
        %7456 = vmatprep.subr.mxu0 0.0
        %7457 = vmatpush1.msra.mxu0 %v7374
        %7458 = vmatprep.subr.mxu0 0.0
        %7459 = vmatpush1.msra.mxu0 %v7375
        %7460 = vmatprep.subr.mxu0 0.0
        %7461 = vmatpush1.msra.mxu0 %v7376
        %7462 = vmatprep.subr.mxu0 0.0
        %7463 = vmatpush1.msra.mxu0 %v7377
        %7464 = vmatprep.subr.mxu0 0.0
        %7465 = vmatpush1.msra.mxu0 %v7378
        %7466 = vmatprep.subr.mxu0 0.0
        %7467 = vmatpush1.msra.mxu0 %v7379
        %7468 = vmatprep.subr.mxu0 0.0
        %7469 = vmatpush1.msra.mxu0 0.0
        %7470 = vmatprep.subr.mxu0 0.0
        %7471 = vmatpush1.msra.mxu0 0.0
        %7472 = vmatprep.subr.mxu0 0.0
        %7473 = vmatpush1.msra.mxu0 0.0
        %7474 = vmatprep.subr.mxu0 0.0
        %7475 = vmatpush1.msra.mxu0 0.0
        %7476 = vmatprep.subr.mxu0 0.0
        %7477 = vmatpush1.msra.mxu0 0.0
        %7478 = vmatprep.subr.mxu0 0.0
        %7479 = vmatpush1.msra.mxu0 0.0
        %7480 = vmatprep.subr.mxu0 0.0
        %7481 = vmatpush1.msra.mxu0 0.0
        %7482 = vmatprep.subr.mxu0 0.0
        %7483 = vmatpush1.msra.mxu0 0.0
        %7484 = vmatprep.subr.mxu0 0.0
        %7485 = vmatpush1.msra.mxu0 0.0
        %7486 = vmatprep.subr.mxu0 0.0
        %7487 = vmatpush1.msra.mxu0 0.0
        %7488 = vmatprep.subr.mxu0 0.0
        %7489 = vmatpush1.msra.mxu0 0.0
        %7490 = vmatprep.subr.mxu0 0.0
        %7491 = vmatpush1.msra.mxu0 0.0
        %7492 = vmatprep.subr.mxu0 0.0
        %7493 = vmatpush1.msra.mxu0 0.0
        %7494 = vmatprep.subr.mxu0 0.0
        %7495 = vmatpush1.msra.mxu0 0.0
        %7496 = vmatprep.subr.mxu0 0.0
        %7497 = vmatpush1.msra.mxu0 0.0
        %7498 = vmatprep.subr.mxu0 0.0
        %7499 = vmatpush1.msra.mxu0 0.0
        %7500 = vmatprep.subr.mxu0 0.0
        %7501 = vmatpush1.msra.mxu0 0.0
        %7502 = vmatprep.subr.mxu0 0.0
        %7503 = vmatpush1.msra.mxu0 0.0
        %7504 = vmatprep.subr.mxu0 0.0
        %7505 = vmatpush1.msra.mxu0 0.0
        %7506 = vmatprep.subr.mxu0 0.0
        %7507 = vmatpush1.msra.mxu0 0.0
        %7508 = vmatprep.mubr.f32.mxu0 0.0
        %7509 = vmatmul.mubr.f32.gmra.mrb[0].mxu0 %v7418
        %v7510 = vpop.f32.mrb[0].mxu0
        %v7511 = vadd.f32 0.0, %v7510
        %v7512 = vpop.f32.mrb[0].mxu0
        %7513 = vmatprep.mubr.f32.mxu0 0.0
        %7514 = vmatmul.mubr.f32.gmra.mrb[0].mxu0 %v7420
        %v7515 = vpop.f32.mrb[0].mxu0
        %v7516 = vadd.f32 0.0, %v7515
        %v7517 = vpop.f32.mrb[0].mxu0
        %7518 = vmatprep.mubr.f32.mxu0 0.0
        %7519 = vmatmul.mubr.f32.gmra.mrb[0].mxu0 %v7422
        %v7520 = vpop.f32.mrb[0].mxu0
        %v7521 = vadd.f32 0.0, %v7520
        %v7522 = vpop.f32.mrb[0].mxu0
        %7523 = vmatprep.mubr.f32.mxu0 0.0
        %7524 = vmatmul.mubr.f32.gmra.mrb[0].mxu0 %v7424
        %v7525 = vpop.f32.mrb[0].mxu0
        %v7526 = vadd.f32 0.0, %v7525
        %v7527 = vpop.f32.mrb[0].mxu0
        %7528 = vmatprep.mubr.f32.mxu0 0.0
        %7529 = vmatmul.mubr.f32.gmra.mrb[0].mxu0 %v7426
        %v7530 = vpop.f32.mrb[0].mxu0
        %v7531 = vadd.f32 0.0, %v7530
        %v7532 = vpop.f32.mrb[0].mxu0
        %7533 = vmatprep.mubr.f32.mxu0 0.0
        %7534 = vmatmul.mubr.f32.gmra.mrb[0].mxu0 %v7428
        %v7535 = vpop.f32.mrb[0].mxu0
        %v7536 = vadd.f32 0.0, %v7535
        %v7537 = vpop.f32.mrb[0].mxu0
        %7538 = vmatprep.mubr.f32.mxu0 0.0
        %7539 = vmatmul.mubr.f32.gmra.mrb[0].mxu0 %v7430
        %v7540 = vpop.f32.mrb[0].mxu0
        %v7541 = vadd.f32 0.0, %v7540
        %v7542 = vpop.f32.mrb[0].mxu0
        %7543 = vmatprep.mubr.f32.mxu0 0.0
        %7544 = vmatmul.mubr.f32.gmra.mrb[0].mxu0 %v7432
        %v7545 = vpop.f32.mrb[0].mxu0
        %v7546 = vadd.f32 0.0, %v7545
        %v7547 = vpop.f32.mrb[0].mxu0
        %7548 = vmatprep.mubr.f32.mxu0 0.0
        %7549 = vmatmul.mubr.f32.gmra.mrb[0].mxu0 %v7434
        %v7550 = vpop.f32.mrb[0].mxu0
        %v7551 = vadd.f32 0.0, %v7550
        %v7552 = vpop.f32.mrb[0].mxu0
        %7553 = vmatprep.mubr.f32.mxu0 0.0
        %7554 = vmatmul.mubr.f32.gmra.mrb[0].mxu0 %v7436
        %v7555 = vpop.f32.mrb[0].mxu0
        %v7556 = vadd.f32 0.0, %v7555
        %v7557 = vpop.f32.mrb[0].mxu0
        %7558 = vmatprep.mubr.f32.mxu0 0.0
        %7559 = vmatmul.mubr.f32.gmra.mrb[0].mxu0 %v7438
        %v7560 = vpop.f32.mrb[0].mxu0
        %v7561 = vadd.f32 0.0, %v7560
        %v7562 = vpop.f32.mrb[0].mxu0
        %7563 = vmatprep.mubr.f32.mxu0 0.0
        %7564 = vmatmul.mubr.f32.gmra.mrb[0].mxu0 %v7440
        %v7565 = vpop.f32.mrb[0].mxu0
        %v7566 = vadd.f32 0.0, %v7565
        %v7567 = vpop.f32.mrb[0].mxu0
        %7568 = vmatprep.mubr.f32.mxu0 0.0
        %7569 = vmatmul.mubr.f32.gmra.mrb[0].mxu0 %v7442
        %v7570 = vpop.f32.mrb[0].mxu0
        %v7571 = vadd.f32 0.0, %v7570
        %v7572 = vpop.f32.mrb[0].mxu0
        %7573 = vdwg.mxu0
        %v7574 = vadd.f32 %v7341, %v7511
        %v7575 = vadd.f32 %v7342, %v7516
        %v7576 = vadd.f32 %v7343, %v7521
        %v7577 = vadd.f32 %v7344, %v7526
        %v7578 = vadd.f32 %v7345, %v7531
        %v7579 = vadd.f32 %v7346, %v7536
        %v7580 = vadd.f32 %v7347, %v7541
        %v7581 = vadd.f32 %v7348, %v7546
        %v7582 = vadd.f32 %v7349, %v7551
        %v7583 = vadd.f32 %v7350, %v7556
        %v7584 = vadd.f32 %v7351, %v7561
        %v7585 = vadd.f32 %v7352, %v7566
        %v7586 = vadd.f32 %v7353, %v7571
        %v7587 = vld [vmem:[#allocation2 + $0x30] sm:$0xe0]
        %v7588 = vld [vmem:[#allocation2 + $0x48] sm:$0xff]
        %v7589 = vld [vmem:[#allocation2 + $0x60] sm:$0xff]
        %v7590 = vld [vmem:[#allocation2 + $0x78] sm:$0xff]
        %v7591 = vld [vmem:[#allocation2 + $0x90] sm:$0xff]
        %v7592 = vld [vmem:[#allocation2 + $0xa8] sm:$0xff]
        %v7593 = vld [vmem:[#allocation2 + $0xc0] sm:$0xff]
        %v7594 = vld [vmem:[#allocation2 + $0xd8] sm:$0xff]
        %v7595 = vld [vmem:[#allocation2 + $0xf0] sm:$0xff]
        %v7596 = vld [vmem:[#allocation2 + $0x108] sm:$0xff]
        %v7597 = vld [vmem:[#allocation2 + $0x120] sm:$0xff]
        %v7598 = vld [vmem:[#allocation2 + $0x138] sm:$0xff]
        %v7599 = vld [vmem:[#allocation2 + $0x150] sm:$0xff]
        %v7600 = vld [vmem:[#allocation2 + $0x168] sm:$0x1]
        %s7601 = scalar_lea.vmem %s15, 192
        %v7602 = vld [vmem:[%s7601] sm:$0xff]
        %v7603 = vld [vmem:[%s7601 + $0x8] sm:$0xff]
        %v7604 = vld [vmem:[%s7601 + $0x10] sm:$0xff]
        %v7605 = vld [vmem:[%s7601 + $0x18] sm:$0xff]
        %v7606 = vld [vmem:[%s7601 + $0x20] sm:$0xff]
        %v7607 = vld [vmem:[%s7601 + $0x28] sm:$0xff]
        %v7608 = vld [vmem:[%s7601 + $0x30] sm:$0xff]
        %v7609 = vld [vmem:[%s7601 + $0x38] sm:$0xff]
        %v7610 = vld [vmem:[%s7601 + $0x40] sm:$0xff]
        %v7611 = vld [vmem:[%s7601 + $0x48] sm:$0xff]
        %v7612 = vld [vmem:[%s7601 + $0x50] sm:$0xff]
        %v7613 = vld [vmem:[%s7601 + $0x58] sm:$0xff]
        %v7628 = vrot.slane %v7587, 5
        %v7629 = vrot.slane %v7588, 5
        %v7630 = vsel %vm920, %v7628, %v7629
        %v7631 = vrot.slane %v7589, 5
        %v7632 = vsel %vm920, %v7629, %v7631
        %v7633 = vrot.slane %v7590, 5
        %v7634 = vsel %vm920, %v7631, %v7633
        %v7635 = vrot.slane %v7591, 5
        %v7636 = vsel %vm920, %v7633, %v7635
        %v7637 = vrot.slane %v7592, 5
        %v7638 = vsel %vm920, %v7635, %v7637
        %v7639 = vrot.slane %v7593, 5
        %v7640 = vsel %vm920, %v7637, %v7639
        %v7641 = vrot.slane %v7594, 5
        %v7642 = vsel %vm920, %v7639, %v7641
        %v7643 = vrot.slane %v7595, 5
        %v7644 = vsel %vm920, %v7641, %v7643
        %v7645 = vrot.slane %v7596, 5
        %v7646 = vsel %vm920, %v7643, %v7645
        %v7647 = vrot.slane %v7597, 5
        %v7648 = vsel %vm920, %v7645, %v7647
        %v7649 = vrot.slane %v7598, 5
        %v7650 = vsel %vm920, %v7647, %v7649
        %v7651 = vrot.slane %v7599, 5
        %v7652 = vsel %vm920, %v7649, %v7651
        %v7653 = vrot.slane %v7600, 5
        %v7654 = vsel %vm920, %v7651, %v7653
        %v7655 = vsel %vm2204, %v7630, 0
        %v7657 = vsel %vm2204, %v7632, 0
        %v7659 = vsel %vm2204, %v7634, 0
        %v7661 = vsel %vm2204, %v7636, 0
        %v7663 = vsel %vm2204, %v7638, 0
        %v7665 = vsel %vm2204, %v7640, 0
        %v7667 = vsel %vm2204, %v7642, 0
        %v7669 = vsel %vm2204, %v7644, 0
        %v7671 = vsel %vm2204, %v7646, 0
        %v7673 = vsel %vm2204, %v7648, 0
        %v7675 = vsel %vm2204, %v7650, 0
        %v7677 = vsel %vm2204, %v7652, 0
        %v7679 = vsel %vm2204, %v7654, 0
        %7681 = vmatprep.subr.mxu0 0.0
        %7682 = vmatpush1.msra.mxu0 %v7602
        %7683 = vmatprep.subr.mxu0 0.0
        %7684 = vmatpush1.msra.mxu0 %v7603
        %7685 = vmatprep.subr.mxu0 0.0
        %7686 = vmatpush1.msra.mxu0 %v7604
        %7687 = vmatprep.subr.mxu0 0.0
        %7688 = vmatpush1.msra.mxu0 %v7605
        %7689 = vmatprep.subr.mxu0 0.0
        %7690 = vmatpush1.msra.mxu0 %v7606
        %7691 = vmatprep.subr.mxu0 0.0
        %7692 = vmatpush1.msra.mxu0 %v7607
        %7693 = vmatprep.subr.mxu0 0.0
        %7694 = vmatpush1.msra.mxu0 %v7608
        %7695 = vmatprep.subr.mxu0 0.0
        %7696 = vmatpush1.msra.mxu0 %v7609
        %7697 = vmatprep.subr.mxu0 0.0
        %7698 = vmatpush1.msra.mxu0 %v7610
        %7699 = vmatprep.subr.mxu0 0.0
        %7700 = vmatpush1.msra.mxu0 %v7611
        %7701 = vmatprep.subr.mxu0 0.0
        %7702 = vmatpush1.msra.mxu0 %v7612
        %7703 = vmatprep.subr.mxu0 0.0
        %7704 = vmatpush1.msra.mxu0 %v7613
        %7705 = vmatprep.subr.mxu0 0.0
        %7706 = vmatpush1.msra.mxu0 0.0
        %7707 = vmatprep.subr.mxu0 0.0
        %7708 = vmatpush1.msra.mxu0 0.0
        %7709 = vmatprep.subr.mxu0 0.0
        %7710 = vmatpush1.msra.mxu0 0.0
        %7711 = vmatprep.subr.mxu0 0.0
        %7712 = vmatpush1.msra.mxu0 0.0
        %7713 = vmatprep.subr.mxu0 0.0
        %7714 = vmatpush1.msra.mxu0 0.0
        %7715 = vmatprep.subr.mxu0 0.0
        %7716 = vmatpush1.msra.mxu0 0.0
        %7717 = vmatprep.subr.mxu0 0.0
        %7718 = vmatpush1.msra.mxu0 0.0
        %7719 = vmatprep.subr.mxu0 0.0
        %7720 = vmatpush1.msra.mxu0 0.0
        %7721 = vmatprep.subr.mxu0 0.0
        %7722 = vmatpush1.msra.mxu0 0.0
        %7723 = vmatprep.subr.mxu0 0.0
        %7724 = vmatpush1.msra.mxu0 0.0
        %7725 = vmatprep.subr.mxu0 0.0
        %7726 = vmatpush1.msra.mxu0 0.0
        %7727 = vmatprep.subr.mxu0 0.0
        %7728 = vmatpush1.msra.mxu0 0.0
        %7729 = vmatprep.subr.mxu0 0.0
        %7730 = vmatpush1.msra.mxu0 0.0
        %7731 = vmatprep.subr.mxu0 0.0
        %7732 = vmatpush1.msra.mxu0 0.0
        %7733 = vmatprep.subr.mxu0 0.0
        %7734 = vmatpush1.msra.mxu0 0.0
        %7735 = vmatprep.subr.mxu0 0.0
        %7736 = vmatpush1.msra.mxu0 0.0
        %7737 = vmatprep.subr.mxu0 0.0
        %7738 = vmatpush1.msra.mxu0 0.0
        %7739 = vmatprep.subr.mxu0 0.0
        %7740 = vmatpush1.msra.mxu0 0.0
        %7741 = vmatprep.subr.mxu0 0.0
        %7742 = vmatpush1.msra.mxu0 0.0
        %7743 = vmatprep.subr.mxu0 0.0
        %7744 = vmatpush1.msra.mxu0 0.0
        %7745 = vmatprep.mubr.f32.mxu0 0.0
        %7746 = vmatmul.mubr.f32.gmra.mrb[0].mxu0 %v7655
        %v7747 = vpop.f32.mrb[0].mxu0
        %v7748 = vadd.f32 0.0, %v7747
        %v7749 = vpop.f32.mrb[0].mxu0
        %7750 = vmatprep.mubr.f32.mxu0 0.0
        %7751 = vmatmul.mubr.f32.gmra.mrb[0].mxu0 %v7657
        %v7752 = vpop.f32.mrb[0].mxu0
        %v7753 = vadd.f32 0.0, %v7752
        %v7754 = vpop.f32.mrb[0].mxu0
        %7755 = vmatprep.mubr.f32.mxu0 0.0
        %7756 = vmatmul.mubr.f32.gmra.mrb[0].mxu0 %v7659
        %v7757 = vpop.f32.mrb[0].mxu0
        %v7758 = vadd.f32 0.0, %v7757
        %v7759 = vpop.f32.mrb[0].mxu0
        %7760 = vmatprep.mubr.f32.mxu0 0.0
        %7761 = vmatmul.mubr.f32.gmra.mrb[0].mxu0 %v7661
        %v7762 = vpop.f32.mrb[0].mxu0
        %v7763 = vadd.f32 0.0, %v7762
        %v7764 = vpop.f32.mrb[0].mxu0
        %7765 = vmatprep.mubr.f32.mxu0 0.0
        %7766 = vmatmul.mubr.f32.gmra.mrb[0].mxu0 %v7663
        %v7767 = vpop.f32.mrb[0].mxu0
        %v7768 = vadd.f32 0.0, %v7767
        %v7769 = vpop.f32.mrb[0].mxu0
        %7770 = vmatprep.mubr.f32.mxu0 0.0
        %7771 = vmatmul.mubr.f32.gmra.mrb[0].mxu0 %v7665
        %v7772 = vpop.f32.mrb[0].mxu0
        %v7773 = vadd.f32 0.0, %v7772
        %v7774 = vpop.f32.mrb[0].mxu0
        %7775 = vmatprep.mubr.f32.mxu0 0.0
        %7776 = vmatmul.mubr.f32.gmra.mrb[0].mxu0 %v7667
        %v7777 = vpop.f32.mrb[0].mxu0
        %v7778 = vadd.f32 0.0, %v7777
        %v7779 = vpop.f32.mrb[0].mxu0
        %7780 = vmatprep.mubr.f32.mxu0 0.0
        %7781 = vmatmul.mubr.f32.gmra.mrb[0].mxu0 %v7669
        %v7782 = vpop.f32.mrb[0].mxu0
        %v7783 = vadd.f32 0.0, %v7782
        %v7784 = vpop.f32.mrb[0].mxu0
        %7785 = vmatprep.mubr.f32.mxu0 0.0
        %7786 = vmatmul.mubr.f32.gmra.mrb[0].mxu0 %v7671
        %v7787 = vpop.f32.mrb[0].mxu0
        %v7788 = vadd.f32 0.0, %v7787
        %v7789 = vpop.f32.mrb[0].mxu0
        %7790 = vmatprep.mubr.f32.mxu0 0.0
        %7791 = vmatmul.mubr.f32.gmra.mrb[0].mxu0 %v7673
        %v7792 = vpop.f32.mrb[0].mxu0
        %v7793 = vadd.f32 0.0, %v7792
        %v7794 = vpop.f32.mrb[0].mxu0
        %7795 = vmatprep.mubr.f32.mxu0 0.0
        %7796 = vmatmul.mubr.f32.gmra.mrb[0].mxu0 %v7675
        %v7797 = vpop.f32.mrb[0].mxu0
        %v7798 = vadd.f32 0.0, %v7797
        %v7799 = vpop.f32.mrb[0].mxu0
        %7800 = vmatprep.mubr.f32.mxu0 0.0
        %7801 = vmatmul.mubr.f32.gmra.mrb[0].mxu0 %v7677
        %v7802 = vpop.f32.mrb[0].mxu0
        %v7803 = vadd.f32 0.0, %v7802
        %v7804 = vpop.f32.mrb[0].mxu0
        %7805 = vmatprep.mubr.f32.mxu0 0.0
        %7806 = vmatmul.mubr.f32.gmra.mrb[0].mxu0 %v7679
        %v7807 = vpop.f32.mrb[0].mxu0
        %v7808 = vadd.f32 0.0, %v7807
        %v7809 = vpop.f32.mrb[0].mxu0
        %7810 = vdwg.mxu0
        %v7811 = vadd.f32 %v7574, %v7748
        %v7812 = vadd.f32 %v7575, %v7753
        %v7813 = vadd.f32 %v7576, %v7758
        %v7814 = vadd.f32 %v7577, %v7763
        %v7815 = vadd.f32 %v7578, %v7768
        %v7816 = vadd.f32 %v7579, %v7773
        %v7817 = vadd.f32 %v7580, %v7778
        %v7818 = vadd.f32 %v7581, %v7783
        %v7819 = vadd.f32 %v7582, %v7788
        %v7820 = vadd.f32 %v7583, %v7793
        %v7821 = vadd.f32 %v7584, %v7798
        %v7822 = vadd.f32 %v7585, %v7803
        %v7823 = vadd.f32 %v7586, %v7808
        %7824 = vst.msk [vmem:[%s756] ss:$8 sm:$0x7] %vm755, 0.0
        %7825 = vst.msk [vmem:[%s756] ss:$8 sm:$0x0] %vm755, 0.0
        %7826 = vst.msk [vmem:[%s759] ss:$8 sm:$0x7] %vm755, 0.0
        %7827 = vst.msk [vmem:[%s759] ss:$8 sm:$0x0] %vm755, 0.0
        %v7828 = vmul.f32 %v7811, %v765
        %v7829 = vmul.f32 %v7812, %v770
        %v7830 = vmul.f32 %v7813, %v775
        %v7831 = vmul.f32 %v7814, %v780
        %v7832 = vmul.f32 %v7815, %v785
        %v7833 = vmul.f32 %v7816, %v790
        %v7834 = vmul.f32 %v7817, %v795
        %v7835 = vmul.f32 %v7818, %v800
        %v7836 = vmul.f32 %v7819, %v805
        %v7837 = vmul.f32 %v7820, %v810
        %v7838 = vmul.f32 %v7821, %v815
        %v7839 = vmul.f32 %v7822, %v820
        %v7840 = vmul.f32 %v7823, %v825
        %v7854 = vrot.slane %v7828, 4
        %v7855 = vrot.slane %v7829, 4
        %v7856 = vsel %vm853, %v7854, %v7855
        %v7857 = vrot.slane %v7830, 4
        %v7858 = vsel %vm853, %v7855, %v7857
        %v7859 = vrot.slane %v7831, 4
        %v7860 = vsel %vm853, %v7857, %v7859
        %v7861 = vrot.slane %v7832, 4
        %v7862 = vsel %vm853, %v7859, %v7861
        %v7863 = vrot.slane %v7833, 4
        %v7864 = vsel %vm853, %v7861, %v7863
        %v7865 = vrot.slane %v7834, 4
        %v7866 = vsel %vm853, %v7863, %v7865
        %v7867 = vrot.slane %v7835, 4
        %v7868 = vsel %vm853, %v7865, %v7867
        %v7869 = vrot.slane %v7836, 4
        %v7870 = vsel %vm853, %v7867, %v7869
        %v7871 = vrot.slane %v7837, 4
        %v7872 = vsel %vm853, %v7869, %v7871
        %v7873 = vrot.slane %v7838, 4
        %v7874 = vsel %vm853, %v7871, %v7873
        %v7875 = vrot.slane %v7839, 4
        %v7876 = vsel %vm853, %v7873, %v7875
        %v7877 = vrot.slane %v7840, 4
        %v7878 = vsel %vm853, %v7875, %v7877
        %7892 = vst [vmem:[#allocation2 + $0x18] sm:$0xf0] %v7854
        %7893 = vst [vmem:[#allocation2 + $0x30] sm:$0xff] %v7856
        %7894 = vst [vmem:[#allocation2 + $0x48] sm:$0xff] %v7858
        %7895 = vst [vmem:[#allocation2 + $0x60] sm:$0xff] %v7860
        %7896 = vst [vmem:[#allocation2 + $0x78] sm:$0xff] %v7862
        %7897 = vst [vmem:[#allocation2 + $0x90] sm:$0xff] %v7864
        %7898 = vst [vmem:[#allocation2 + $0xa8] sm:$0xff] %v7866
        %7899 = vst [vmem:[#allocation2 + $0xc0] sm:$0xff] %v7868
        %7900 = vst [vmem:[#allocation2 + $0xd8] sm:$0xff] %v7870
        %7901 = vst [vmem:[#allocation2 + $0xf0] sm:$0xff] %v7872
        %7902 = vst [vmem:[#allocation2 + $0x108] sm:$0xff] %v7874
        %7903 = vst [vmem:[#allocation2 + $0x120] sm:$0xff] %v7876
        %7904 = vst [vmem:[#allocation2 + $0x138] sm:$0xff] %v7878
        %v7918 = vrot.slane %v7811, 5
        %v7919 = vrot.slane %v7812, 5
        %v7920 = vsel %vm920, %v7918, %v7919
        %v7921 = vrot.slane %v7813, 5
        %v7922 = vsel %vm920, %v7919, %v7921
        %v7923 = vrot.slane %v7814, 5
        %v7924 = vsel %vm920, %v7921, %v7923
        %v7925 = vrot.slane %v7815, 5
        %v7926 = vsel %vm920, %v7923, %v7925
        %v7927 = vrot.slane %v7816, 5
        %v7928 = vsel %vm920, %v7925, %v7927
        %v7929 = vrot.slane %v7817, 5
        %v7930 = vsel %vm920, %v7927, %v7929
        %v7931 = vrot.slane %v7818, 5
        %v7932 = vsel %vm920, %v7929, %v7931
        %v7933 = vrot.slane %v7819, 5
        %v7934 = vsel %vm920, %v7931, %v7933
        %v7935 = vrot.slane %v7820, 5
        %v7936 = vsel %vm920, %v7933, %v7935
        %v7937 = vrot.slane %v7821, 5
        %v7938 = vsel %vm920, %v7935, %v7937
        %v7939 = vrot.slane %v7822, 5
        %v7940 = vsel %vm920, %v7937, %v7939
        %v7941 = vrot.slane %v7823, 5
        %v7942 = vsel %vm920, %v7939, %v7941
        %7956 = vst [vmem:[#allocation2 + $0x20] sm:$0xf8] %v7918
        %7957 = vst [vmem:[#allocation2 + $0x38] sm:$0xff] %v7920
        %7958 = vst [vmem:[#allocation2 + $0x50] sm:$0xff] %v7922
        %7959 = vst [vmem:[#allocation2 + $0x68] sm:$0xff] %v7924
        %7960 = vst [vmem:[#allocation2 + $0x80] sm:$0xff] %v7926
        %7961 = vst [vmem:[#allocation2 + $0x98] sm:$0xff] %v7928
        %7962 = vst [vmem:[#allocation2 + $0xb0] sm:$0xff] %v7930
        %7963 = vst [vmem:[#allocation2 + $0xc8] sm:$0xff] %v7932
        %7964 = vst [vmem:[#allocation2 + $0xe0] sm:$0xff] %v7934
        %7965 = vst [vmem:[#allocation2 + $0xf8] sm:$0xff] %v7936
        %7966 = vst [vmem:[#allocation2 + $0x110] sm:$0xff] %v7938
        %7967 = vst [vmem:[#allocation2 + $0x128] sm:$0xff] %v7940
        %7968 = vst [vmem:[#allocation2 + $0x140] sm:$0x7f] %v7942
        %v7969 = vmul.f32 %v7811, %v1003
        %v7970 = vmul.f32 %v7812, %v1007
        %v7971 = vmul.f32 %v7813, %v1011
        %v7972 = vmul.f32 %v7814, %v1015
        %v7973 = vmul.f32 %v7815, %v1019
        %v7974 = vmul.f32 %v7816, %v1023
        %v7975 = vmul.f32 %v7817, %v1027
        %v7976 = vmul.f32 %v7818, %v1031
        %v7977 = vmul.f32 %v7819, %v1035
        %v7978 = vmul.f32 %v7820, %v1039
        %v7979 = vmul.f32 %v7821, %v1043
        %v7980 = vmul.f32 %v7822, %v1047
        %v7981 = vmul.f32 %v7823, %v1051
        %v7995 = vrot.slane %v7969, 6
        %v7996 = vrot.slane %v7970, 6
        %v7997 = vsel %vm1079, %v7995, %v7996
        %v7998 = vrot.slane %v7971, 6
        %v7999 = vsel %vm1079, %v7996, %v7998
        %v8000 = vrot.slane %v7972, 6
        %v8001 = vsel %vm1079, %v7998, %v8000
        %v8002 = vrot.slane %v7973, 6
        %v8003 = vsel %vm1079, %v8000, %v8002
        %v8004 = vrot.slane %v7974, 6
        %v8005 = vsel %vm1079, %v8002, %v8004
        %v8006 = vrot.slane %v7975, 6
        %v8007 = vsel %vm1079, %v8004, %v8006
        %v8008 = vrot.slane %v7976, 6
        %v8009 = vsel %vm1079, %v8006, %v8008
        %v8010 = vrot.slane %v7977, 6
        %v8011 = vsel %vm1079, %v8008, %v8010
        %v8012 = vrot.slane %v7978, 6
        %v8013 = vsel %vm1079, %v8010, %v8012
        %v8014 = vrot.slane %v7979, 6
        %v8015 = vsel %vm1079, %v8012, %v8014
        %v8016 = vrot.slane %v7980, 6
        %v8017 = vsel %vm1079, %v8014, %v8016
        %v8018 = vrot.slane %v7981, 6
        %v8019 = vsel %vm1079, %v8016, %v8018
        %8033 = vst [vmem:[#allocation2 + $0x28] sm:$0xfc] %v7995
        %8034 = vst [vmem:[#allocation2 + $0x40] sm:$0xff] %v7997
        %8035 = vst [vmem:[#allocation2 + $0x58] sm:$0xff] %v7999
        %8036 = vst [vmem:[#allocation2 + $0x70] sm:$0xff] %v8001
        %8037 = vst [vmem:[#allocation2 + $0x88] sm:$0xff] %v8003
        %8038 = vst [vmem:[#allocation2 + $0xa0] sm:$0xff] %v8005
        %8039 = vst [vmem:[#allocation2 + $0xb8] sm:$0xff] %v8007
        %8040 = vst [vmem:[#allocation2 + $0xd0] sm:$0xff] %v8009
        %8041 = vst [vmem:[#allocation2 + $0xe8] sm:$0xff] %v8011
        %8042 = vst [vmem:[#allocation2 + $0x100] sm:$0xff] %v8013
        %8043 = vst [vmem:[#allocation2 + $0x118] sm:$0xff] %v8015
        %8044 = vst [vmem:[#allocation2 + $0x130] sm:$0xff] %v8017
        %8045 = vst [vmem:[#allocation2 + $0x148] sm:$0x3f] %v8019
        %v8046 = vld [vmem:[%s18] sm:$0x1]
        %v8048 = vlaneseq
        %v8049 = vshrl.u32 %v8048, 7
        %v8050 = vsub.s32 0, %v8049
        %v8051 = vrot.slane %v8046, %v8050
        %v8053 = vld [vmem:[#allocation2] sm:$0xfe]
        %v8054 = vld [vmem:[#allocation2 + $0x8] sm:$0xfe]
        %v8055 = vld [vmem:[#allocation2 + $0x10] sm:$0xfe]
        %v8056 = vld [vmem:[#allocation2 + $0x18] sm:$0xff]
        %v8057 = vld [vmem:[#allocation2 + $0x20] sm:$0xff]
        %v8058 = vld [vmem:[#allocation2 + $0x28] sm:$0xff]
        %v8059 = vld [vmem:[#allocation2 + $0x30] sm:$0xff]
        %v8060 = vld [vmem:[#allocation2 + $0x38] sm:$0xff]
        %v8061 = vld [vmem:[#allocation2 + $0x40] sm:$0xff]
        %v8062 = vld [vmem:[#allocation2 + $0x48] sm:$0xff]
        %v8063 = vld [vmem:[#allocation2 + $0x50] sm:$0xff]
        %v8064 = vld [vmem:[#allocation2 + $0x58] sm:$0xff]
        %v8065 = vld [vmem:[#allocation2 + $0x60] sm:$0xff]
        %v8066 = vld [vmem:[#allocation2 + $0x68] sm:$0xff]
        %v8067 = vld [vmem:[#allocation2 + $0x70] sm:$0xff]
        %v8068 = vld [vmem:[#allocation2 + $0x78] sm:$0xff]
        %v8069 = vld [vmem:[#allocation2 + $0x80] sm:$0xff]
        %v8070 = vld [vmem:[#allocation2 + $0x88] sm:$0xff]
        %v8071 = vld [vmem:[#allocation2 + $0x90] sm:$0xff]
        %v8072 = vld [vmem:[#allocation2 + $0x98] sm:$0xff]
        %v8073 = vld [vmem:[#allocation2 + $0xa0] sm:$0xff]
        %v8074 = vld [vmem:[#allocation2 + $0xa8] sm:$0xff]
        %v8075 = vld [vmem:[#allocation2 + $0xb0] sm:$0xff]
        %v8076 = vld [vmem:[#allocation2 + $0xb8] sm:$0xff]
        %v8077 = vld [vmem:[#allocation2 + $0xc0] sm:$0xff]
        %v8078 = vld [vmem:[#allocation2 + $0xc8] sm:$0xff]
        %v8079 = vld [vmem:[#allocation2 + $0xd0] sm:$0xff]
        %v8080 = vld [vmem:[#allocation2 + $0xd8] sm:$0xff]
        %v8081 = vld [vmem:[#allocation2 + $0xe0] sm:$0xff]
        %v8082 = vld [vmem:[#allocation2 + $0xe8] sm:$0xff]
        %v8083 = vld [vmem:[#allocation2 + $0xf0] sm:$0xff]
        %v8084 = vld [vmem:[#allocation2 + $0xf8] sm:$0xff]
        %v8085 = vld [vmem:[#allocation2 + $0x100] sm:$0xff]
        %v8086 = vld [vmem:[#allocation2 + $0x108] sm:$0xff]
        %v8087 = vld [vmem:[#allocation2 + $0x110] sm:$0xff]
        %v8088 = vld [vmem:[#allocation2 + $0x118] sm:$0xff]
        %v8089 = vld [vmem:[#allocation2 + $0x120] sm:$0x1f]
        %v8090 = vld [vmem:[#allocation2 + $0x128] sm:$0x1f]
        %v8091 = vld [vmem:[#allocation2 + $0x130] sm:$0x1f]
        %v8092 = vld [vmem:[#allocation11] sm:$0xff]
        %v8093 = vld [vmem:[#allocation11 + $0x8] sm:$0xff]
        %v8094 = vld [vmem:[#allocation11 + $0x10] sm:$0xff]
        %v8095 = vld [vmem:[#allocation11 + $0x18] sm:$0xff]
        %v8096 = vld [vmem:[#allocation11 + $0x20] sm:$0xff]
        %v8097 = vld [vmem:[#allocation11 + $0x28] sm:$0xff]
        %v8098 = vld [vmem:[#allocation11 + $0x30] sm:$0xff]
        %v8099 = vld [vmem:[#allocation11 + $0x38] sm:$0xff]
        %v8100 = vld [vmem:[#allocation11 + $0x40] sm:$0xff]
        %v8101 = vld [vmem:[#allocation11 + $0x48] sm:$0xff]
        %v8102 = vld [vmem:[#allocation11 + $0x50] sm:$0xff]
        %v8103 = vld [vmem:[#allocation11 + $0x58] sm:$0xff]
        %v8104 = vld [vmem:[#allocation11 + $0x60] sm:$0xff]
        %v8105 = vld [vmem:[#allocation11 + $0x68] sm:$0xff]
        %v8106 = vld [vmem:[#allocation11 + $0x70] sm:$0xff]
        %v8107 = vld [vmem:[#allocation11 + $0x78] sm:$0xff]
        %v8108 = vld [vmem:[#allocation11 + $0x80] sm:$0xff]
        %v8109 = vld [vmem:[#allocation11 + $0x88] sm:$0xff]
        %v8110 = vld [vmem:[#allocation11 + $0x90] sm:$0xff]
        %v8111 = vld [vmem:[#allocation11 + $0x98] sm:$0xff]
        %v8112 = vld [vmem:[#allocation11 + $0xa0] sm:$0xff]
        %v8113 = vld [vmem:[#allocation11 + $0xa8] sm:$0xff]
        %v8114 = vld [vmem:[#allocation11 + $0xb0] sm:$0xff]
        %v8115 = vld [vmem:[#allocation11 + $0xb8] sm:$0xff]
        %v8116 = vld [vmem:[#allocation11 + $0xc0] sm:$0xff]
        %v8117 = vld [vmem:[#allocation11 + $0xc8] sm:$0xff]
        %v8118 = vld [vmem:[#allocation11 + $0xd0] sm:$0xff]
        %v8119 = vld [vmem:[#allocation11 + $0xd8] sm:$0xff]
        %v8120 = vld [vmem:[#allocation11 + $0xe0] sm:$0xff]
        %v8121 = vld [vmem:[#allocation11 + $0xe8] sm:$0xff]
        %v8122 = vld [vmem:[#allocation11 + $0xf0] sm:$0xff]
        %v8123 = vld [vmem:[#allocation11 + $0xf8] sm:$0xff]
        %v8124 = vld [vmem:[#allocation11 + $0x100] sm:$0xff]
        %v8125 = vld [vmem:[#allocation11 + $0x108] sm:$0xff]
        %v8126 = vld [vmem:[#allocation11 + $0x110] sm:$0xff]
        %v8127 = vld [vmem:[#allocation11 + $0x118] sm:$0xff]
        %v8128 = vld [vmem:[#allocation11 + $0x120] sm:$0xff]
        %v8129 = vld [vmem:[#allocation11 + $0x128] sm:$0xff]
        %v8130 = vld [vmem:[#allocation11 + $0x130] sm:$0xff]
        %v8131 = vld [vmem:[#allocation11 + $0x138] sm:$0xff]
        %v8132 = vld [vmem:[#allocation11 + $0x140] sm:$0xff]
        %v8133 = vld [vmem:[#allocation11 + $0x148] sm:$0xff]
        %v8134 = vld [vmem:[#allocation11 + $0x150] sm:$0xff]
        %v8135 = vld [vmem:[#allocation11 + $0x158] sm:$0xff]
        %v8136 = vld [vmem:[#allocation11 + $0x160] sm:$0xff]
        %v8137 = vld [vmem:[#allocation11 + $0x168] sm:$0xff]
        %v8138 = vld [vmem:[#allocation11 + $0x170] sm:$0xff]
        %v8139 = vld [vmem:[#allocation11 + $0x178] sm:$0xff]
        %v8179 = vrot.slane %v8053, 1
        %v8180 = vrot.slane %v8056, 1
        %v8181 = vsel %vm1195, %v8179, %v8180
        %v8182 = vrot.slane %v8054, 1
        %v8183 = vrot.slane %v8057, 1
        %v8184 = vsel %vm1195, %v8182, %v8183
        %v8185 = vrot.slane %v8055, 1
        %v8186 = vrot.slane %v8058, 1
        %v8187 = vsel %vm1195, %v8185, %v8186
        %v8188 = vrot.slane %v8059, 1
        %v8189 = vsel %vm1195, %v8180, %v8188
        %v8190 = vrot.slane %v8060, 1
        %v8191 = vsel %vm1195, %v8183, %v8190
        %v8192 = vrot.slane %v8061, 1
        %v8193 = vsel %vm1195, %v8186, %v8192
        %v8194 = vrot.slane %v8062, 1
        %v8195 = vsel %vm1195, %v8188, %v8194
        %v8196 = vrot.slane %v8063, 1
        %v8197 = vsel %vm1195, %v8190, %v8196
        %v8198 = vrot.slane %v8064, 1
        %v8199 = vsel %vm1195, %v8192, %v8198
        %v8200 = vrot.slane %v8065, 1
        %v8201 = vsel %vm1195, %v8194, %v8200
        %v8202 = vrot.slane %v8066, 1
        %v8203 = vsel %vm1195, %v8196, %v8202
        %v8204 = vrot.slane %v8067, 1
        %v8205 = vsel %vm1195, %v8198, %v8204
        %v8206 = vrot.slane %v8068, 1
        %v8207 = vsel %vm1195, %v8200, %v8206
        %v8208 = vrot.slane %v8069, 1
        %v8209 = vsel %vm1195, %v8202, %v8208
        %v8210 = vrot.slane %v8070, 1
        %v8211 = vsel %vm1195, %v8204, %v8210
        %v8212 = vrot.slane %v8071, 1
        %v8213 = vsel %vm1195, %v8206, %v8212
        %v8214 = vrot.slane %v8072, 1
        %v8215 = vsel %vm1195, %v8208, %v8214
        %v8216 = vrot.slane %v8073, 1
        %v8217 = vsel %vm1195, %v8210, %v8216
        %v8218 = vrot.slane %v8074, 1
        %v8219 = vsel %vm1195, %v8212, %v8218
        %v8220 = vrot.slane %v8075, 1
        %v8221 = vsel %vm1195, %v8214, %v8220
        %v8222 = vrot.slane %v8076, 1
        %v8223 = vsel %vm1195, %v8216, %v8222
        %v8224 = vrot.slane %v8077, 1
        %v8225 = vsel %vm1195, %v8218, %v8224
        %v8226 = vrot.slane %v8078, 1
        %v8227 = vsel %vm1195, %v8220, %v8226
        %v8228 = vrot.slane %v8079, 1
        %v8229 = vsel %vm1195, %v8222, %v8228
        %v8230 = vrot.slane %v8080, 1
        %v8231 = vsel %vm1195, %v8224, %v8230
        %v8232 = vrot.slane %v8081, 1
        %v8233 = vsel %vm1195, %v8226, %v8232
        %v8234 = vrot.slane %v8082, 1
        %v8235 = vsel %vm1195, %v8228, %v8234
        %v8236 = vrot.slane %v8083, 1
        %v8237 = vsel %vm1195, %v8230, %v8236
        %v8238 = vrot.slane %v8084, 1
        %v8239 = vsel %vm1195, %v8232, %v8238
        %v8240 = vrot.slane %v8085, 1
        %v8241 = vsel %vm1195, %v8234, %v8240
        %v8242 = vrot.slane %v8086, 1
        %v8243 = vsel %vm1195, %v8236, %v8242
        %v8244 = vrot.slane %v8087, 1
        %v8245 = vsel %vm1195, %v8238, %v8244
        %v8246 = vrot.slane %v8088, 1
        %v8247 = vsel %vm1195, %v8240, %v8246
        %v8248 = vrot.slane %v8089, 1
        %v8249 = vsel %vm1195, %v8242, %v8248
        %v8250 = vrot.slane %v8090, 1
        %v8251 = vsel %vm1195, %v8244, %v8250
        %v8252 = vrot.slane %v8091, 1
        %v8253 = vsel %vm1195, %v8246, %v8252
        %8293 = vmatprep.subr.mxu0 0.0
        %8294 = vmatpush1.msra.mxu0 %v8092
        %8295 = vmatprep.subr.mxu0 0.0
        %8296 = vmatpush1.msra.mxu0 %v8093
        %8297 = vmatprep.subr.mxu0 0.0
        %8298 = vmatpush1.msra.mxu0 %v8094
        %8299 = vmatprep.subr.mxu0 0.0
        %8300 = vmatpush1.msra.mxu0 %v8095
        %8301 = vmatprep.subr.mxu0 0.0
        %8302 = vmatpush1.msra.mxu0 %v8096
        %8303 = vmatprep.subr.mxu0 0.0
        %8304 = vmatpush1.msra.mxu0 %v8097
        %8305 = vmatprep.subr.mxu0 0.0
        %8306 = vmatpush1.msra.mxu0 %v8098
        %8307 = vmatprep.subr.mxu0 0.0
        %8308 = vmatpush1.msra.mxu0 %v8099
        %8309 = vmatprep.subr.mxu0 0.0
        %8310 = vmatpush1.msra.mxu0 %v8100
        %8311 = vmatprep.subr.mxu0 0.0
        %8312 = vmatpush1.msra.mxu0 %v8101
        %8313 = vmatprep.subr.mxu0 0.0
        %8314 = vmatpush1.msra.mxu0 %v8102
        %8315 = vmatprep.subr.mxu0 0.0
        %8316 = vmatpush1.msra.mxu0 %v8103
        %8317 = vmatprep.subr.mxu0 0.0
        %8318 = vmatpush1.msra.mxu0 %v8104
        %8319 = vmatprep.subr.mxu0 0.0
        %8320 = vmatpush1.msra.mxu0 %v8105
        %8321 = vmatprep.subr.mxu0 0.0
        %8322 = vmatpush1.msra.mxu0 %v8106
        %8323 = vmatprep.subr.mxu0 0.0
        %8324 = vmatpush1.msra.mxu0 %v8107
        %8325 = vmatprep.subr.mxu0 0.0
        %8326 = vmatpush1.msra.mxu0 %v8108
        %8327 = vmatprep.subr.mxu0 0.0
        %8328 = vmatpush1.msra.mxu0 %v8109
        %8329 = vmatprep.subr.mxu0 0.0
        %8330 = vmatpush1.msra.mxu0 %v8110
        %8331 = vmatprep.subr.mxu0 0.0
        %8332 = vmatpush1.msra.mxu0 %v8111
        %8333 = vmatprep.subr.mxu0 0.0
        %8334 = vmatpush1.msra.mxu0 %v8112
        %8335 = vmatprep.subr.mxu0 0.0
        %8336 = vmatpush1.msra.mxu0 %v8113
        %8337 = vmatprep.subr.mxu0 0.0
        %8338 = vmatpush1.msra.mxu0 %v8114
        %8339 = vmatprep.subr.mxu0 0.0
        %8340 = vmatpush1.msra.mxu0 %v8115
        %8341 = vmatprep.subr.mxu0 0.0
        %8342 = vmatpush1.msra.mxu0 %v8116
        %8343 = vmatprep.subr.mxu0 0.0
        %8344 = vmatpush1.msra.mxu0 %v8117
        %8345 = vmatprep.subr.mxu0 0.0
        %8346 = vmatpush1.msra.mxu0 %v8118
        %8347 = vmatprep.subr.mxu0 0.0
        %8348 = vmatpush1.msra.mxu0 %v8119
        %8349 = vmatprep.subr.mxu0 0.0
        %8350 = vmatpush1.msra.mxu0 %v8120
        %8351 = vmatprep.subr.mxu0 0.0
        %8352 = vmatpush1.msra.mxu0 %v8121
        %8353 = vmatprep.subr.mxu0 0.0
        %8354 = vmatpush1.msra.mxu0 %v8122
        %8355 = vmatprep.subr.mxu0 0.0
        %8356 = vmatpush1.msra.mxu0 %v8123
        %8357 = vmatprep.mubr.f32.mxu0 %v8184
        %8358 = vmatmul.mubr.f32.gmra.mrb[0].mxu0 %v8181
        %v8359 = vpop.f32.mrb[0].mxu0
        %v8360 = vadd.f32 0.0, %v8359
        %v8361 = vpop.f32.mrb[0].mxu0
        %8362 = vmatprep.mubr.f32.mxu0 %v8191
        %8363 = vmatmul.mubr.f32.gmra.mrb[0].mxu0 %v8189
        %v8364 = vpop.f32.mrb[0].mxu0
        %v8365 = vadd.f32 0.0, %v8364
        %v8366 = vpop.f32.mrb[0].mxu0
        %8367 = vmatprep.mubr.f32.mxu0 %v8197
        %8368 = vmatmul.mubr.f32.gmra.mrb[0].mxu0 %v8195
        %v8369 = vpop.f32.mrb[0].mxu0
        %v8370 = vadd.f32 0.0, %v8369
        %v8371 = vpop.f32.mrb[0].mxu0
        %8372 = vmatprep.mubr.f32.mxu0 %v8203
        %8373 = vmatmul.mubr.f32.gmra.mrb[0].mxu0 %v8201
        %v8374 = vpop.f32.mrb[0].mxu0
        %v8375 = vadd.f32 0.0, %v8374
        %v8376 = vpop.f32.mrb[0].mxu0
        %8377 = vmatprep.mubr.f32.mxu0 %v8209
        %8378 = vmatmul.mubr.f32.gmra.mrb[0].mxu0 %v8207
        %v8379 = vpop.f32.mrb[0].mxu0
        %v8380 = vadd.f32 0.0, %v8379
        %v8381 = vpop.f32.mrb[0].mxu0
        %8382 = vmatprep.mubr.f32.mxu0 %v8215
        %8383 = vmatmul.mubr.f32.gmra.mrb[0].mxu0 %v8213
        %v8384 = vpop.f32.mrb[0].mxu0
        %v8385 = vadd.f32 0.0, %v8384
        %v8386 = vpop.f32.mrb[0].mxu0
        %8387 = vmatprep.mubr.f32.mxu0 %v8221
        %8388 = vmatmul.mubr.f32.gmra.mrb[0].mxu0 %v8219
        %v8389 = vpop.f32.mrb[0].mxu0
        %v8390 = vadd.f32 0.0, %v8389
        %v8391 = vpop.f32.mrb[0].mxu0
        %8392 = vmatprep.mubr.f32.mxu0 %v8227
        %8393 = vmatmul.mubr.f32.gmra.mrb[0].mxu0 %v8225
        %v8394 = vpop.f32.mrb[0].mxu0
        %v8395 = vadd.f32 0.0, %v8394
        %v8396 = vpop.f32.mrb[0].mxu0
        %8397 = vmatprep.mubr.f32.mxu0 %v8233
        %8398 = vmatmul.mubr.f32.gmra.mrb[0].mxu0 %v8231
        %v8399 = vpop.f32.mrb[0].mxu0
        %v8400 = vadd.f32 0.0, %v8399
        %v8401 = vpop.f32.mrb[0].mxu0
        %8402 = vmatprep.mubr.f32.mxu0 %v8239
        %8403 = vmatmul.mubr.f32.gmra.mrb[0].mxu0 %v8237
        %v8404 = vpop.f32.mrb[0].mxu0
        %v8405 = vadd.f32 0.0, %v8404
        %v8406 = vpop.f32.mrb[0].mxu0
        %8407 = vmatprep.mubr.f32.mxu0 %v8245
        %8408 = vmatmul.mubr.f32.gmra.mrb[0].mxu0 %v8243
        %v8409 = vpop.f32.mrb[0].mxu0
        %v8410 = vadd.f32 0.0, %v8409
        %v8411 = vpop.f32.mrb[0].mxu0
        %8412 = vmatprep.mubr.f32.mxu0 %v8251
        %8413 = vmatmul.mubr.f32.gmra.mrb[0].mxu0 %v8249
        %v8414 = vpop.f32.mrb[0].mxu0
        %v8415 = vadd.f32 0.0, %v8414
        %v8416 = vpop.f32.mrb[0].mxu0
        %8417 = vmatprep.mubr.f32.mxu0 %v8250
        %8418 = vmatmul.mubr.f32.gmra.mrb[0].mxu0 %v8248
        %v8419 = vpop.f32.mrb[0].mxu0
        %v8420 = vadd.f32 0.0, %v8419
        %v8421 = vpop.f32.mrb[0].mxu0
        %8422 = vdwg.mxu0
        %8423 = vmatprep.subr.mxu0 0.0
        %8424 = vmatpush1.msra.mxu0 %v8124
        %8425 = vmatprep.subr.mxu0 0.0
        %8426 = vmatpush1.msra.mxu0 %v8125
        %8427 = vmatprep.subr.mxu0 0.0
        %8428 = vmatpush1.msra.mxu0 %v8126
        %8429 = vmatprep.subr.mxu0 0.0
        %8430 = vmatpush1.msra.mxu0 %v8127
        %8431 = vmatprep.subr.mxu0 0.0
        %8432 = vmatpush1.msra.mxu0 %v8128
        %8433 = vmatprep.subr.mxu0 0.0
        %8434 = vmatpush1.msra.mxu0 %v8129
        %8435 = vmatprep.subr.mxu0 0.0
        %8436 = vmatpush1.msra.mxu0 %v8130
        %8437 = vmatprep.subr.mxu0 0.0
        %8438 = vmatpush1.msra.mxu0 %v8131
        %8439 = vmatprep.subr.mxu0 0.0
        %8440 = vmatpush1.msra.mxu0 %v8132
        %8441 = vmatprep.subr.mxu0 0.0
        %8442 = vmatpush1.msra.mxu0 %v8133
        %8443 = vmatprep.subr.mxu0 0.0
        %8444 = vmatpush1.msra.mxu0 %v8134
        %8445 = vmatprep.subr.mxu0 0.0
        %8446 = vmatpush1.msra.mxu0 %v8135
        %8447 = vmatprep.subr.mxu0 0.0
        %8448 = vmatpush1.msra.mxu0 %v8136
        %8449 = vmatprep.subr.mxu0 0.0
        %8450 = vmatpush1.msra.mxu0 %v8137
        %8451 = vmatprep.subr.mxu0 0.0
        %8452 = vmatpush1.msra.mxu0 %v8138
        %8453 = vmatprep.subr.mxu0 0.0
        %8454 = vmatpush1.msra.mxu0 %v8139
        %8455 = vmatprep.subr.mxu0 0.0
        %8456 = vmatpush1.msra.mxu0 0.0
        %8457 = vmatprep.subr.mxu0 0.0
        %8458 = vmatpush1.msra.mxu0 0.0
        %8459 = vmatprep.subr.mxu0 0.0
        %8460 = vmatpush1.msra.mxu0 0.0
        %8461 = vmatprep.subr.mxu0 0.0
        %8462 = vmatpush1.msra.mxu0 0.0
        %8463 = vmatprep.subr.mxu0 0.0
        %8464 = vmatpush1.msra.mxu0 0.0
        %8465 = vmatprep.subr.mxu0 0.0
        %8466 = vmatpush1.msra.mxu0 0.0
        %8467 = vmatprep.subr.mxu0 0.0
        %8468 = vmatpush1.msra.mxu0 0.0
        %8469 = vmatprep.subr.mxu0 0.0
        %8470 = vmatpush1.msra.mxu0 0.0
        %8471 = vmatprep.subr.mxu0 0.0
        %8472 = vmatpush1.msra.mxu0 0.0
        %8473 = vmatprep.subr.mxu0 0.0
        %8474 = vmatpush1.msra.mxu0 0.0
        %8475 = vmatprep.subr.mxu0 0.0
        %8476 = vmatpush1.msra.mxu0 0.0
        %8477 = vmatprep.subr.mxu0 0.0
        %8478 = vmatpush1.msra.mxu0 0.0
        %8479 = vmatprep.subr.mxu0 0.0
        %8480 = vmatpush1.msra.mxu0 0.0
        %8481 = vmatprep.subr.mxu0 0.0
        %8482 = vmatpush1.msra.mxu0 0.0
        %8483 = vmatprep.subr.mxu0 0.0
        %8484 = vmatpush1.msra.mxu0 0.0
        %8485 = vmatprep.subr.mxu0 0.0
        %8486 = vmatpush1.msra.mxu0 0.0
        %8487 = vmatprep.mubr.f32.mxu0 0.0
        %8488 = vmatmul.mubr.f32.gmra.mrb[0].mxu0 %v8187
        %v8489 = vpop.f32.mrb[0].mxu0
        %v8490 = vadd.f32 %v8360, %v8489
        %v8491 = vpop.f32.mrb[0].mxu0
        %8492 = vmatprep.mubr.f32.mxu0 0.0
        %8493 = vmatmul.mubr.f32.gmra.mrb[0].mxu0 %v8193
        %v8494 = vpop.f32.mrb[0].mxu0
        %v8495 = vadd.f32 %v8365, %v8494
        %v8496 = vpop.f32.mrb[0].mxu0
        %8497 = vmatprep.mubr.f32.mxu0 0.0
        %8498 = vmatmul.mubr.f32.gmra.mrb[0].mxu0 %v8199
        %v8499 = vpop.f32.mrb[0].mxu0
        %v8500 = vadd.f32 %v8370, %v8499
        %v8501 = vpop.f32.mrb[0].mxu0
        %8502 = vmatprep.mubr.f32.mxu0 0.0
        %8503 = vmatmul.mubr.f32.gmra.mrb[0].mxu0 %v8205
        %v8504 = vpop.f32.mrb[0].mxu0
        %v8505 = vadd.f32 %v8375, %v8504
        %v8506 = vpop.f32.mrb[0].mxu0
        %8507 = vmatprep.mubr.f32.mxu0 0.0
        %8508 = vmatmul.mubr.f32.gmra.mrb[0].mxu0 %v8211
        %v8509 = vpop.f32.mrb[0].mxu0
        %v8510 = vadd.f32 %v8380, %v8509
        %v8511 = vpop.f32.mrb[0].mxu0
        %8512 = vmatprep.mubr.f32.mxu0 0.0
        %8513 = vmatmul.mubr.f32.gmra.mrb[0].mxu0 %v8217
        %v8514 = vpop.f32.mrb[0].mxu0
        %v8515 = vadd.f32 %v8385, %v8514
        %v8516 = vpop.f32.mrb[0].mxu0
        %8517 = vmatprep.mubr.f32.mxu0 0.0
        %8518 = vmatmul.mubr.f32.gmra.mrb[0].mxu0 %v8223
        %v8519 = vpop.f32.mrb[0].mxu0
        %v8520 = vadd.f32 %v8390, %v8519
        %v8521 = vpop.f32.mrb[0].mxu0
        %8522 = vmatprep.mubr.f32.mxu0 0.0
        %8523 = vmatmul.mubr.f32.gmra.mrb[0].mxu0 %v8229
        %v8524 = vpop.f32.mrb[0].mxu0
        %v8525 = vadd.f32 %v8395, %v8524
        %v8526 = vpop.f32.mrb[0].mxu0
        %8527 = vmatprep.mubr.f32.mxu0 0.0
        %8528 = vmatmul.mubr.f32.gmra.mrb[0].mxu0 %v8235
        %v8529 = vpop.f32.mrb[0].mxu0
        %v8530 = vadd.f32 %v8400, %v8529
        %v8531 = vpop.f32.mrb[0].mxu0
        %8532 = vmatprep.mubr.f32.mxu0 0.0
        %8533 = vmatmul.mubr.f32.gmra.mrb[0].mxu0 %v8241
        %v8534 = vpop.f32.mrb[0].mxu0
        %v8535 = vadd.f32 %v8405, %v8534
        %v8536 = vpop.f32.mrb[0].mxu0
        %8537 = vmatprep.mubr.f32.mxu0 0.0
        %8538 = vmatmul.mubr.f32.gmra.mrb[0].mxu0 %v8247
        %v8539 = vpop.f32.mrb[0].mxu0
        %v8540 = vadd.f32 %v8410, %v8539
        %v8541 = vpop.f32.mrb[0].mxu0
        %8542 = vmatprep.mubr.f32.mxu0 0.0
        %8543 = vmatmul.mubr.f32.gmra.mrb[0].mxu0 %v8253
        %v8544 = vpop.f32.mrb[0].mxu0
        %v8545 = vadd.f32 %v8415, %v8544
        %v8546 = vpop.f32.mrb[0].mxu0
        %8547 = vmatprep.mubr.f32.mxu0 0.0
        %8548 = vmatmul.mubr.f32.gmra.mrb[0].mxu0 %v8252
        %v8549 = vpop.f32.mrb[0].mxu0
        %v8550 = vadd.f32 %v8420, %v8549
        %v8551 = vpop.f32.mrb[0].mxu0
        %8552 = vdwg.mxu0
        %v8553 = vadd.f32 %v8051, %v8490
        %v8554 = vadd.f32 %v8051, %v8495
        %v8555 = vadd.f32 %v8051, %v8500
        %v8556 = vadd.f32 %v8051, %v8505
        %v8557 = vadd.f32 %v8051, %v8510
        %v8558 = vadd.f32 %v8051, %v8515
        %v8559 = vadd.f32 %v8051, %v8520
        %v8560 = vadd.f32 %v8051, %v8525
        %v8561 = vadd.f32 %v8051, %v8530
        %v8562 = vadd.f32 %v8051, %v8535
        %v8563 = vadd.f32 %v8051, %v8540
        %v8564 = vadd.f32 %v8051, %v8545
        %v8565 = vadd.f32 %v8051, %v8550
        %v8566 = vld [vmem:[#allocation2 + $0x18] sm:$0xf8]
        %v8567 = vld [vmem:[#allocation2 + $0x20] sm:$0xf8]
        %v8568 = vld [vmem:[#allocation2 + $0x28] sm:$0xf8]
        %v8569 = vld [vmem:[#allocation2 + $0x30] sm:$0xff]
        %v8570 = vld [vmem:[#allocation2 + $0x38] sm:$0xff]
        %v8571 = vld [vmem:[#allocation2 + $0x40] sm:$0xff]
        %v8572 = vld [vmem:[#allocation2 + $0x48] sm:$0xff]
        %v8573 = vld [vmem:[#allocation2 + $0x50] sm:$0xff]
        %v8574 = vld [vmem:[#allocation2 + $0x58] sm:$0xff]
        %v8575 = vld [vmem:[#allocation2 + $0x60] sm:$0xff]
        %v8576 = vld [vmem:[#allocation2 + $0x68] sm:$0xff]
        %v8577 = vld [vmem:[#allocation2 + $0x70] sm:$0xff]
        %v8578 = vld [vmem:[#allocation2 + $0x78] sm:$0xff]
        %v8579 = vld [vmem:[#allocation2 + $0x80] sm:$0xff]
        %v8580 = vld [vmem:[#allocation2 + $0x88] sm:$0xff]
        %v8581 = vld [vmem:[#allocation2 + $0x90] sm:$0xff]
        %v8582 = vld [vmem:[#allocation2 + $0x98] sm:$0xff]
        %v8583 = vld [vmem:[#allocation2 + $0xa0] sm:$0xff]
        %v8584 = vld [vmem:[#allocation2 + $0xa8] sm:$0xff]
        %v8585 = vld [vmem:[#allocation2 + $0xb0] sm:$0xff]
        %v8586 = vld [vmem:[#allocation2 + $0xb8] sm:$0xff]
        %v8587 = vld [vmem:[#allocation2 + $0xc0] sm:$0xff]
        %v8588 = vld [vmem:[#allocation2 + $0xc8] sm:$0xff]
        %v8589 = vld [vmem:[#allocation2 + $0xd0] sm:$0xff]
        %v8590 = vld [vmem:[#allocation2 + $0xd8] sm:$0xff]
        %v8591 = vld [vmem:[#allocation2 + $0xe0] sm:$0xff]
        %v8592 = vld [vmem:[#allocation2 + $0xe8] sm:$0xff]
        %v8593 = vld [vmem:[#allocation2 + $0xf0] sm:$0xff]
        %v8594 = vld [vmem:[#allocation2 + $0xf8] sm:$0xff]
        %v8595 = vld [vmem:[#allocation2 + $0x100] sm:$0xff]
        %v8596 = vld [vmem:[#allocation2 + $0x108] sm:$0xff]
        %v8597 = vld [vmem:[#allocation2 + $0x110] sm:$0xff]
        %v8598 = vld [vmem:[#allocation2 + $0x118] sm:$0xff]
        %v8599 = vld [vmem:[#allocation2 + $0x120] sm:$0xff]
        %v8600 = vld [vmem:[#allocation2 + $0x128] sm:$0xff]
        %v8601 = vld [vmem:[#allocation2 + $0x130] sm:$0xff]
        %v8602 = vld [vmem:[#allocation2 + $0x138] sm:$0x7f]
        %v8603 = vld [vmem:[#allocation2 + $0x140] sm:$0x7f]
        %v8604 = vld [vmem:[#allocation2 + $0x148] sm:$0x7f]
        %s8605 = scalar_lea.vmem [#allocation11], 384
        %v8606 = vld [vmem:[%s8605] sm:$0xff]
        %v8607 = vld [vmem:[%s8605 + $0x8] sm:$0xff]
        %v8608 = vld [vmem:[%s8605 + $0x10] sm:$0xff]
        %v8609 = vld [vmem:[%s8605 + $0x18] sm:$0xff]
        %v8610 = vld [vmem:[%s8605 + $0x20] sm:$0xff]
        %v8611 = vld [vmem:[%s8605 + $0x28] sm:$0xff]
        %v8612 = vld [vmem:[%s8605 + $0x30] sm:$0xff]
        %v8613 = vld [vmem:[%s8605 + $0x38] sm:$0xff]
        %v8614 = vld [vmem:[%s8605 + $0x40] sm:$0xff]
        %v8615 = vld [vmem:[%s8605 + $0x48] sm:$0xff]
        %v8616 = vld [vmem:[%s8605 + $0x50] sm:$0xff]
        %v8617 = vld [vmem:[%s8605 + $0x58] sm:$0xff]
        %v8618 = vld [vmem:[%s8605 + $0x60] sm:$0xff]
        %v8619 = vld [vmem:[%s8605 + $0x68] sm:$0xff]
        %v8620 = vld [vmem:[%s8605 + $0x70] sm:$0xff]
        %v8621 = vld [vmem:[%s8605 + $0x78] sm:$0xff]
        %v8622 = vld [vmem:[%s8605 + $0x80] sm:$0xff]
        %v8623 = vld [vmem:[%s8605 + $0x88] sm:$0xff]
        %v8624 = vld [vmem:[%s8605 + $0x90] sm:$0xff]
        %v8625 = vld [vmem:[%s8605 + $0x98] sm:$0xff]
        %v8626 = vld [vmem:[%s8605 + $0xa0] sm:$0xff]
        %v8627 = vld [vmem:[%s8605 + $0xa8] sm:$0xff]
        %v8628 = vld [vmem:[%s8605 + $0xb0] sm:$0xff]
        %v8629 = vld [vmem:[%s8605 + $0xb8] sm:$0xff]
        %v8630 = vld [vmem:[%s8605 + $0xc0] sm:$0xff]
        %v8631 = vld [vmem:[%s8605 + $0xc8] sm:$0xff]
        %v8632 = vld [vmem:[%s8605 + $0xd0] sm:$0xff]
        %v8633 = vld [vmem:[%s8605 + $0xd8] sm:$0xff]
        %v8634 = vld [vmem:[%s8605 + $0xe0] sm:$0xff]
        %v8635 = vld [vmem:[%s8605 + $0xe8] sm:$0xff]
        %v8636 = vld [vmem:[%s8605 + $0xf0] sm:$0xff]
        %v8637 = vld [vmem:[%s8605 + $0xf8] sm:$0xff]
        %v8638 = vld [vmem:[%s8605 + $0x100] sm:$0xff]
        %v8639 = vld [vmem:[%s8605 + $0x108] sm:$0xff]
        %v8640 = vld [vmem:[%s8605 + $0x110] sm:$0xff]
        %v8641 = vld [vmem:[%s8605 + $0x118] sm:$0xff]
        %v8642 = vld [vmem:[%s8605 + $0x120] sm:$0xff]
        %v8643 = vld [vmem:[%s8605 + $0x128] sm:$0xff]
        %v8644 = vld [vmem:[%s8605 + $0x130] sm:$0xff]
        %v8645 = vld [vmem:[%s8605 + $0x138] sm:$0xff]
        %v8646 = vld [vmem:[%s8605 + $0x140] sm:$0xff]
        %v8647 = vld [vmem:[%s8605 + $0x148] sm:$0xff]
        %v8648 = vld [vmem:[%s8605 + $0x150] sm:$0xff]
        %v8649 = vld [vmem:[%s8605 + $0x158] sm:$0xff]
        %v8650 = vld [vmem:[%s8605 + $0x160] sm:$0xff]
        %v8651 = vld [vmem:[%s8605 + $0x168] sm:$0xff]
        %v8652 = vld [vmem:[%s8605 + $0x170] sm:$0xff]
        %v8653 = vld [vmem:[%s8605 + $0x178] sm:$0xff]
        %v8693 = vrot.slane %v8566, 3
        %v8694 = vrot.slane %v8569, 3
        %v8695 = vsel %vm1424, %v8693, %v8694
        %v8696 = vrot.slane %v8567, 3
        %v8697 = vrot.slane %v8570, 3
        %v8698 = vsel %vm1424, %v8696, %v8697
        %v8699 = vrot.slane %v8568, 3
        %v8700 = vrot.slane %v8571, 3
        %v8701 = vsel %vm1424, %v8699, %v8700
        %v8702 = vrot.slane %v8572, 3
        %v8703 = vsel %vm1424, %v8694, %v8702
        %v8704 = vrot.slane %v8573, 3
        %v8705 = vsel %vm1424, %v8697, %v8704
        %v8706 = vrot.slane %v8574, 3
        %v8707 = vsel %vm1424, %v8700, %v8706
        %v8708 = vrot.slane %v8575, 3
        %v8709 = vsel %vm1424, %v8702, %v8708
        %v8710 = vrot.slane %v8576, 3
        %v8711 = vsel %vm1424, %v8704, %v8710
        %v8712 = vrot.slane %v8577, 3
        %v8713 = vsel %vm1424, %v8706, %v8712
        %v8714 = vrot.slane %v8578, 3
        %v8715 = vsel %vm1424, %v8708, %v8714
        %v8716 = vrot.slane %v8579, 3
        %v8717 = vsel %vm1424, %v8710, %v8716
        %v8718 = vrot.slane %v8580, 3
        %v8719 = vsel %vm1424, %v8712, %v8718
        %v8720 = vrot.slane %v8581, 3
        %v8721 = vsel %vm1424, %v8714, %v8720
        %v8722 = vrot.slane %v8582, 3
        %v8723 = vsel %vm1424, %v8716, %v8722
        %v8724 = vrot.slane %v8583, 3
        %v8725 = vsel %vm1424, %v8718, %v8724
        %v8726 = vrot.slane %v8584, 3
        %v8727 = vsel %vm1424, %v8720, %v8726
        %v8728 = vrot.slane %v8585, 3
        %v8729 = vsel %vm1424, %v8722, %v8728
        %v8730 = vrot.slane %v8586, 3
        %v8731 = vsel %vm1424, %v8724, %v8730
        %v8732 = vrot.slane %v8587, 3
        %v8733 = vsel %vm1424, %v8726, %v8732
        %v8734 = vrot.slane %v8588, 3
        %v8735 = vsel %vm1424, %v8728, %v8734
        %v8736 = vrot.slane %v8589, 3
        %v8737 = vsel %vm1424, %v8730, %v8736
        %v8738 = vrot.slane %v8590, 3
        %v8739 = vsel %vm1424, %v8732, %v8738
        %v8740 = vrot.slane %v8591, 3
        %v8741 = vsel %vm1424, %v8734, %v8740
        %v8742 = vrot.slane %v8592, 3
        %v8743 = vsel %vm1424, %v8736, %v8742
        %v8744 = vrot.slane %v8593, 3
        %v8745 = vsel %vm1424, %v8738, %v8744
        %v8746 = vrot.slane %v8594, 3
        %v8747 = vsel %vm1424, %v8740, %v8746
        %v8748 = vrot.slane %v8595, 3
        %v8749 = vsel %vm1424, %v8742, %v8748
        %v8750 = vrot.slane %v8596, 3
        %v8751 = vsel %vm1424, %v8744, %v8750
        %v8752 = vrot.slane %v8597, 3
        %v8753 = vsel %vm1424, %v8746, %v8752
        %v8754 = vrot.slane %v8598, 3
        %v8755 = vsel %vm1424, %v8748, %v8754
        %v8756 = vrot.slane %v8599, 3
        %v8757 = vsel %vm1424, %v8750, %v8756
        %v8758 = vrot.slane %v8600, 3
        %v8759 = vsel %vm1424, %v8752, %v8758
        %v8760 = vrot.slane %v8601, 3
        %v8761 = vsel %vm1424, %v8754, %v8760
        %v8762 = vrot.slane %v8602, 3
        %v8763 = vsel %vm1424, %v8756, %v8762
        %v8764 = vrot.slane %v8603, 3
        %v8765 = vsel %vm1424, %v8758, %v8764
        %v8766 = vrot.slane %v8604, 3
        %v8767 = vsel %vm1424, %v8760, %v8766
        %8807 = vmatprep.subr.mxu0 0.0
        %8808 = vmatpush1.msra.mxu0 %v8606
        %8809 = vmatprep.subr.mxu0 0.0
        %8810 = vmatpush1.msra.mxu0 %v8607
        %8811 = vmatprep.subr.mxu0 0.0
        %8812 = vmatpush1.msra.mxu0 %v8608
        %8813 = vmatprep.subr.mxu0 0.0
        %8814 = vmatpush1.msra.mxu0 %v8609
        %8815 = vmatprep.subr.mxu0 0.0
        %8816 = vmatpush1.msra.mxu0 %v8610
        %8817 = vmatprep.subr.mxu0 0.0
        %8818 = vmatpush1.msra.mxu0 %v8611
        %8819 = vmatprep.subr.mxu0 0.0
        %8820 = vmatpush1.msra.mxu0 %v8612
        %8821 = vmatprep.subr.mxu0 0.0
        %8822 = vmatpush1.msra.mxu0 %v8613
        %8823 = vmatprep.subr.mxu0 0.0
        %8824 = vmatpush1.msra.mxu0 %v8614
        %8825 = vmatprep.subr.mxu0 0.0
        %8826 = vmatpush1.msra.mxu0 %v8615
        %8827 = vmatprep.subr.mxu0 0.0
        %8828 = vmatpush1.msra.mxu0 %v8616
        %8829 = vmatprep.subr.mxu0 0.0
        %8830 = vmatpush1.msra.mxu0 %v8617
        %8831 = vmatprep.subr.mxu0 0.0
        %8832 = vmatpush1.msra.mxu0 %v8618
        %8833 = vmatprep.subr.mxu0 0.0
        %8834 = vmatpush1.msra.mxu0 %v8619
        %8835 = vmatprep.subr.mxu0 0.0
        %8836 = vmatpush1.msra.mxu0 %v8620
        %8837 = vmatprep.subr.mxu0 0.0
        %8838 = vmatpush1.msra.mxu0 %v8621
        %8839 = vmatprep.subr.mxu0 0.0
        %8840 = vmatpush1.msra.mxu0 %v8622
        %8841 = vmatprep.subr.mxu0 0.0
        %8842 = vmatpush1.msra.mxu0 %v8623
        %8843 = vmatprep.subr.mxu0 0.0
        %8844 = vmatpush1.msra.mxu0 %v8624
        %8845 = vmatprep.subr.mxu0 0.0
        %8846 = vmatpush1.msra.mxu0 %v8625
        %8847 = vmatprep.subr.mxu0 0.0
        %8848 = vmatpush1.msra.mxu0 %v8626
        %8849 = vmatprep.subr.mxu0 0.0
        %8850 = vmatpush1.msra.mxu0 %v8627
        %8851 = vmatprep.subr.mxu0 0.0
        %8852 = vmatpush1.msra.mxu0 %v8628
        %8853 = vmatprep.subr.mxu0 0.0
        %8854 = vmatpush1.msra.mxu0 %v8629
        %8855 = vmatprep.subr.mxu0 0.0
        %8856 = vmatpush1.msra.mxu0 %v8630
        %8857 = vmatprep.subr.mxu0 0.0
        %8858 = vmatpush1.msra.mxu0 %v8631
        %8859 = vmatprep.subr.mxu0 0.0
        %8860 = vmatpush1.msra.mxu0 %v8632
        %8861 = vmatprep.subr.mxu0 0.0
        %8862 = vmatpush1.msra.mxu0 %v8633
        %8863 = vmatprep.subr.mxu0 0.0
        %8864 = vmatpush1.msra.mxu0 %v8634
        %8865 = vmatprep.subr.mxu0 0.0
        %8866 = vmatpush1.msra.mxu0 %v8635
        %8867 = vmatprep.subr.mxu0 0.0
        %8868 = vmatpush1.msra.mxu0 %v8636
        %8869 = vmatprep.subr.mxu0 0.0
        %8870 = vmatpush1.msra.mxu0 %v8637
        %8871 = vmatprep.mubr.f32.mxu0 %v8698
        %8872 = vmatmul.mubr.f32.gmra.mrb[0].mxu0 %v8695
        %v8873 = vpop.f32.mrb[0].mxu0
        %v8874 = vadd.f32 0.0, %v8873
        %v8875 = vpop.f32.mrb[0].mxu0
        %8876 = vmatprep.mubr.f32.mxu0 %v8705
        %8877 = vmatmul.mubr.f32.gmra.mrb[0].mxu0 %v8703
        %v8878 = vpop.f32.mrb[0].mxu0
        %v8879 = vadd.f32 0.0, %v8878
        %v8880 = vpop.f32.mrb[0].mxu0
        %8881 = vmatprep.mubr.f32.mxu0 %v8711
        %8882 = vmatmul.mubr.f32.gmra.mrb[0].mxu0 %v8709
        %v8883 = vpop.f32.mrb[0].mxu0
        %v8884 = vadd.f32 0.0, %v8883
        %v8885 = vpop.f32.mrb[0].mxu0
        %8886 = vmatprep.mubr.f32.mxu0 %v8717
        %8887 = vmatmul.mubr.f32.gmra.mrb[0].mxu0 %v8715
        %v8888 = vpop.f32.mrb[0].mxu0
        %v8889 = vadd.f32 0.0, %v8888
        %v8890 = vpop.f32.mrb[0].mxu0
        %8891 = vmatprep.mubr.f32.mxu0 %v8723
        %8892 = vmatmul.mubr.f32.gmra.mrb[0].mxu0 %v8721
        %v8893 = vpop.f32.mrb[0].mxu0
        %v8894 = vadd.f32 0.0, %v8893
        %v8895 = vpop.f32.mrb[0].mxu0
        %8896 = vmatprep.mubr.f32.mxu0 %v8729
        %8897 = vmatmul.mubr.f32.gmra.mrb[0].mxu0 %v8727
        %v8898 = vpop.f32.mrb[0].mxu0
        %v8899 = vadd.f32 0.0, %v8898
        %v8900 = vpop.f32.mrb[0].mxu0
        %8901 = vmatprep.mubr.f32.mxu0 %v8735
        %8902 = vmatmul.mubr.f32.gmra.mrb[0].mxu0 %v8733
        %v8903 = vpop.f32.mrb[0].mxu0
        %v8904 = vadd.f32 0.0, %v8903
        %v8905 = vpop.f32.mrb[0].mxu0
        %8906 = vmatprep.mubr.f32.mxu0 %v8741
        %8907 = vmatmul.mubr.f32.gmra.mrb[0].mxu0 %v8739
        %v8908 = vpop.f32.mrb[0].mxu0
        %v8909 = vadd.f32 0.0, %v8908
        %v8910 = vpop.f32.mrb[0].mxu0
        %8911 = vmatprep.mubr.f32.mxu0 %v8747
        %8912 = vmatmul.mubr.f32.gmra.mrb[0].mxu0 %v8745
        %v8913 = vpop.f32.mrb[0].mxu0
        %v8914 = vadd.f32 0.0, %v8913
        %v8915 = vpop.f32.mrb[0].mxu0
        %8916 = vmatprep.mubr.f32.mxu0 %v8753
        %8917 = vmatmul.mubr.f32.gmra.mrb[0].mxu0 %v8751
        %v8918 = vpop.f32.mrb[0].mxu0
        %v8919 = vadd.f32 0.0, %v8918
        %v8920 = vpop.f32.mrb[0].mxu0
        %8921 = vmatprep.mubr.f32.mxu0 %v8759
        %8922 = vmatmul.mubr.f32.gmra.mrb[0].mxu0 %v8757
        %v8923 = vpop.f32.mrb[0].mxu0
        %v8924 = vadd.f32 0.0, %v8923
        %v8925 = vpop.f32.mrb[0].mxu0
        %8926 = vmatprep.mubr.f32.mxu0 %v8765
        %8927 = vmatmul.mubr.f32.gmra.mrb[0].mxu0 %v8763
        %v8928 = vpop.f32.mrb[0].mxu0
        %v8929 = vadd.f32 0.0, %v8928
        %v8930 = vpop.f32.mrb[0].mxu0
        %8931 = vmatprep.mubr.f32.mxu0 %v8764
        %8932 = vmatmul.mubr.f32.gmra.mrb[0].mxu0 %v8762
        %v8933 = vpop.f32.mrb[0].mxu0
        %v8934 = vadd.f32 0.0, %v8933
        %v8935 = vpop.f32.mrb[0].mxu0
        %8936 = vdwg.mxu0
        %8937 = vmatprep.subr.mxu0 0.0
        %8938 = vmatpush1.msra.mxu0 %v8638
        %8939 = vmatprep.subr.mxu0 0.0
        %8940 = vmatpush1.msra.mxu0 %v8639
        %8941 = vmatprep.subr.mxu0 0.0
        %8942 = vmatpush1.msra.mxu0 %v8640
        %8943 = vmatprep.subr.mxu0 0.0
        %8944 = vmatpush1.msra.mxu0 %v8641
        %8945 = vmatprep.subr.mxu0 0.0
        %8946 = vmatpush1.msra.mxu0 %v8642
        %8947 = vmatprep.subr.mxu0 0.0
        %8948 = vmatpush1.msra.mxu0 %v8643
        %8949 = vmatprep.subr.mxu0 0.0
        %8950 = vmatpush1.msra.mxu0 %v8644
        %8951 = vmatprep.subr.mxu0 0.0
        %8952 = vmatpush1.msra.mxu0 %v8645
        %8953 = vmatprep.subr.mxu0 0.0
        %8954 = vmatpush1.msra.mxu0 %v8646
        %8955 = vmatprep.subr.mxu0 0.0
        %8956 = vmatpush1.msra.mxu0 %v8647
        %8957 = vmatprep.subr.mxu0 0.0
        %8958 = vmatpush1.msra.mxu0 %v8648
        %8959 = vmatprep.subr.mxu0 0.0
        %8960 = vmatpush1.msra.mxu0 %v8649
        %8961 = vmatprep.subr.mxu0 0.0
        %8962 = vmatpush1.msra.mxu0 %v8650
        %8963 = vmatprep.subr.mxu0 0.0
        %8964 = vmatpush1.msra.mxu0 %v8651
        %8965 = vmatprep.subr.mxu0 0.0
        %8966 = vmatpush1.msra.mxu0 %v8652
        %8967 = vmatprep.subr.mxu0 0.0
        %8968 = vmatpush1.msra.mxu0 %v8653
        %8969 = vmatprep.subr.mxu0 0.0
        %8970 = vmatpush1.msra.mxu0 0.0
        %8971 = vmatprep.subr.mxu0 0.0
        %8972 = vmatpush1.msra.mxu0 0.0
        %8973 = vmatprep.subr.mxu0 0.0
        %8974 = vmatpush1.msra.mxu0 0.0
        %8975 = vmatprep.subr.mxu0 0.0
        %8976 = vmatpush1.msra.mxu0 0.0
        %8977 = vmatprep.subr.mxu0 0.0
        %8978 = vmatpush1.msra.mxu0 0.0
        %8979 = vmatprep.subr.mxu0 0.0
        %8980 = vmatpush1.msra.mxu0 0.0
        %8981 = vmatprep.subr.mxu0 0.0
        %8982 = vmatpush1.msra.mxu0 0.0
        %8983 = vmatprep.subr.mxu0 0.0
        %8984 = vmatpush1.msra.mxu0 0.0
        %8985 = vmatprep.subr.mxu0 0.0
        %8986 = vmatpush1.msra.mxu0 0.0
        %8987 = vmatprep.subr.mxu0 0.0
        %8988 = vmatpush1.msra.mxu0 0.0
        %8989 = vmatprep.subr.mxu0 0.0
        %8990 = vmatpush1.msra.mxu0 0.0
        %8991 = vmatprep.subr.mxu0 0.0
        %8992 = vmatpush1.msra.mxu0 0.0
        %8993 = vmatprep.subr.mxu0 0.0
        %8994 = vmatpush1.msra.mxu0 0.0
        %8995 = vmatprep.subr.mxu0 0.0
        %8996 = vmatpush1.msra.mxu0 0.0
        %8997 = vmatprep.subr.mxu0 0.0
        %8998 = vmatpush1.msra.mxu0 0.0
        %8999 = vmatprep.subr.mxu0 0.0
        %9000 = vmatpush1.msra.mxu0 0.0
        %9001 = vmatprep.mubr.f32.mxu0 0.0
        %9002 = vmatmul.mubr.f32.gmra.mrb[0].mxu0 %v8701
        %v9003 = vpop.f32.mrb[0].mxu0
        %v9004 = vadd.f32 %v8874, %v9003
        %v9005 = vpop.f32.mrb[0].mxu0
        %9006 = vmatprep.mubr.f32.mxu0 0.0
        %9007 = vmatmul.mubr.f32.gmra.mrb[0].mxu0 %v8707
        %v9008 = vpop.f32.mrb[0].mxu0
        %v9009 = vadd.f32 %v8879, %v9008
        %v9010 = vpop.f32.mrb[0].mxu0
        %9011 = vmatprep.mubr.f32.mxu0 0.0
        %9012 = vmatmul.mubr.f32.gmra.mrb[0].mxu0 %v8713
        %v9013 = vpop.f32.mrb[0].mxu0
        %v9014 = vadd.f32 %v8884, %v9013
        %v9015 = vpop.f32.mrb[0].mxu0
        %9016 = vmatprep.mubr.f32.mxu0 0.0
        %9017 = vmatmul.mubr.f32.gmra.mrb[0].mxu0 %v8719
        %v9018 = vpop.f32.mrb[0].mxu0
        %v9019 = vadd.f32 %v8889, %v9018
        %v9020 = vpop.f32.mrb[0].mxu0
        %9021 = vmatprep.mubr.f32.mxu0 0.0
        %9022 = vmatmul.mubr.f32.gmra.mrb[0].mxu0 %v8725
        %v9023 = vpop.f32.mrb[0].mxu0
        %v9024 = vadd.f32 %v8894, %v9023
        %v9025 = vpop.f32.mrb[0].mxu0
        %9026 = vmatprep.mubr.f32.mxu0 0.0
        %9027 = vmatmul.mubr.f32.gmra.mrb[0].mxu0 %v8731
        %v9028 = vpop.f32.mrb[0].mxu0
        %v9029 = vadd.f32 %v8899, %v9028
        %v9030 = vpop.f32.mrb[0].mxu0
        %9031 = vmatprep.mubr.f32.mxu0 0.0
        %9032 = vmatmul.mubr.f32.gmra.mrb[0].mxu0 %v8737
        %v9033 = vpop.f32.mrb[0].mxu0
        %v9034 = vadd.f32 %v8904, %v9033
        %v9035 = vpop.f32.mrb[0].mxu0
        %9036 = vmatprep.mubr.f32.mxu0 0.0
        %9037 = vmatmul.mubr.f32.gmra.mrb[0].mxu0 %v8743
        %v9038 = vpop.f32.mrb[0].mxu0
        %v9039 = vadd.f32 %v8909, %v9038
        %v9040 = vpop.f32.mrb[0].mxu0
        %9041 = vmatprep.mubr.f32.mxu0 0.0
        %9042 = vmatmul.mubr.f32.gmra.mrb[0].mxu0 %v8749
        %v9043 = vpop.f32.mrb[0].mxu0
        %v9044 = vadd.f32 %v8914, %v9043
        %v9045 = vpop.f32.mrb[0].mxu0
        %9046 = vmatprep.mubr.f32.mxu0 0.0
        %9047 = vmatmul.mubr.f32.gmra.mrb[0].mxu0 %v8755
        %v9048 = vpop.f32.mrb[0].mxu0
        %v9049 = vadd.f32 %v8919, %v9048
        %v9050 = vpop.f32.mrb[0].mxu0
        %9051 = vmatprep.mubr.f32.mxu0 0.0
        %9052 = vmatmul.mubr.f32.gmra.mrb[0].mxu0 %v8761
        %v9053 = vpop.f32.mrb[0].mxu0
        %v9054 = vadd.f32 %v8924, %v9053
        %v9055 = vpop.f32.mrb[0].mxu0
        %9056 = vmatprep.mubr.f32.mxu0 0.0
        %9057 = vmatmul.mubr.f32.gmra.mrb[0].mxu0 %v8767
        %v9058 = vpop.f32.mrb[0].mxu0
        %v9059 = vadd.f32 %v8929, %v9058
        %v9060 = vpop.f32.mrb[0].mxu0
        %9061 = vmatprep.mubr.f32.mxu0 0.0
        %9062 = vmatmul.mubr.f32.gmra.mrb[0].mxu0 %v8766
        %v9063 = vpop.f32.mrb[0].mxu0
        %v9064 = vadd.f32 %v8934, %v9063
        %v9065 = vpop.f32.mrb[0].mxu0
        %9066 = vdwg.mxu0
        %v9067 = vadd.f32 %v8553, %v9004
        %v9068 = vadd.f32 %v8554, %v9009
        %v9069 = vadd.f32 %v8555, %v9014
        %v9070 = vadd.f32 %v8556, %v9019
        %v9071 = vadd.f32 %v8557, %v9024
        %v9072 = vadd.f32 %v8558, %v9029
        %v9073 = vadd.f32 %v8559, %v9034
        %v9074 = vadd.f32 %v8560, %v9039
        %v9075 = vadd.f32 %v8561, %v9044
        %v9076 = vadd.f32 %v8562, %v9049
        %v9077 = vadd.f32 %v8563, %v9054
        %v9078 = vadd.f32 %v8564, %v9059
        %v9079 = vadd.f32 %v8565, %v9064
        %v9080 = vld [vmem:[#allocation2 + $0x30] sm:$0xe0]
        %v9081 = vld [vmem:[#allocation2 + $0x38] sm:$0xe0]
        %v9082 = vld [vmem:[#allocation2 + $0x40] sm:$0xe0]
        %v9083 = vld [vmem:[#allocation2 + $0x48] sm:$0xff]
        %v9084 = vld [vmem:[#allocation2 + $0x50] sm:$0xff]
        %v9085 = vld [vmem:[#allocation2 + $0x58] sm:$0xff]
        %v9086 = vld [vmem:[#allocation2 + $0x60] sm:$0xff]
        %v9087 = vld [vmem:[#allocation2 + $0x68] sm:$0xff]
        %v9088 = vld [vmem:[#allocation2 + $0x70] sm:$0xff]
        %v9089 = vld [vmem:[#allocation2 + $0x78] sm:$0xff]
        %v9090 = vld [vmem:[#allocation2 + $0x80] sm:$0xff]
        %v9091 = vld [vmem:[#allocation2 + $0x88] sm:$0xff]
        %v9092 = vld [vmem:[#allocation2 + $0x90] sm:$0xff]
        %v9093 = vld [vmem:[#allocation2 + $0x98] sm:$0xff]
        %v9094 = vld [vmem:[#allocation2 + $0xa0] sm:$0xff]
        %v9095 = vld [vmem:[#allocation2 + $0xa8] sm:$0xff]
        %v9096 = vld [vmem:[#allocation2 + $0xb0] sm:$0xff]
        %v9097 = vld [vmem:[#allocation2 + $0xb8] sm:$0xff]
        %v9098 = vld [vmem:[#allocation2 + $0xc0] sm:$0xff]
        %v9099 = vld [vmem:[#allocation2 + $0xc8] sm:$0xff]
        %v9100 = vld [vmem:[#allocation2 + $0xd0] sm:$0xff]
        %v9101 = vld [vmem:[#allocation2 + $0xd8] sm:$0xff]
        %v9102 = vld [vmem:[#allocation2 + $0xe0] sm:$0xff]
        %v9103 = vld [vmem:[#allocation2 + $0xe8] sm:$0xff]
        %v9104 = vld [vmem:[#allocation2 + $0xf0] sm:$0xff]
        %v9105 = vld [vmem:[#allocation2 + $0xf8] sm:$0xff]
        %v9106 = vld [vmem:[#allocation2 + $0x100] sm:$0xff]
        %v9107 = vld [vmem:[#allocation2 + $0x108] sm:$0xff]
        %v9108 = vld [vmem:[#allocation2 + $0x110] sm:$0xff]
        %v9109 = vld [vmem:[#allocation2 + $0x118] sm:$0xff]
        %v9110 = vld [vmem:[#allocation2 + $0x120] sm:$0xff]
        %v9111 = vld [vmem:[#allocation2 + $0x128] sm:$0xff]
        %v9112 = vld [vmem:[#allocation2 + $0x130] sm:$0xff]
        %v9113 = vld [vmem:[#allocation2 + $0x138] sm:$0xff]
        %v9114 = vld [vmem:[#allocation2 + $0x140] sm:$0xff]
        %v9115 = vld [vmem:[#allocation2 + $0x148] sm:$0xff]
        %v9116 = vld [vmem:[#allocation2 + $0x150] sm:$0xff]
        %v9117 = vld [vmem:[#allocation2 + $0x158] sm:$0xff]
        %v9118 = vld [vmem:[#allocation2 + $0x160] sm:$0xff]
        %v9119 = vld [vmem:[#allocation2 + $0x168] sm:$0x1]
        %v9120 = vld [vmem:[#allocation2 + $0x170] sm:$0x1]
        %v9121 = vld [vmem:[#allocation2 + $0x178] sm:$0x1]
        %s9122 = scalar_lea.vmem [#allocation11], 768
        %v9123 = vld [vmem:[%s9122] sm:$0xff]
        %v9124 = vld [vmem:[%s9122 + $0x8] sm:$0xff]
        %v9125 = vld [vmem:[%s9122 + $0x10] sm:$0xff]
        %v9126 = vld [vmem:[%s9122 + $0x18] sm:$0xff]
        %v9127 = vld [vmem:[%s9122 + $0x20] sm:$0xff]
        %v9128 = vld [vmem:[%s9122 + $0x28] sm:$0xff]
        %v9129 = vld [vmem:[%s9122 + $0x30] sm:$0xff]
        %v9130 = vld [vmem:[%s9122 + $0x38] sm:$0xff]
        %v9131 = vld [vmem:[%s9122 + $0x40] sm:$0xff]
        %v9132 = vld [vmem:[%s9122 + $0x48] sm:$0xff]
        %v9133 = vld [vmem:[%s9122 + $0x50] sm:$0xff]
        %v9134 = vld [vmem:[%s9122 + $0x58] sm:$0xff]
        %v9135 = vld [vmem:[%s9122 + $0x60] sm:$0xff]
        %v9136 = vld [vmem:[%s9122 + $0x68] sm:$0xff]
        %v9137 = vld [vmem:[%s9122 + $0x70] sm:$0xff]
        %v9138 = vld [vmem:[%s9122 + $0x78] sm:$0xff]
        %v9139 = vld [vmem:[%s9122 + $0x80] sm:$0xff]
        %v9140 = vld [vmem:[%s9122 + $0x88] sm:$0xff]
        %v9141 = vld [vmem:[%s9122 + $0x90] sm:$0xff]
        %v9142 = vld [vmem:[%s9122 + $0x98] sm:$0xff]
        %v9143 = vld [vmem:[%s9122 + $0xa0] sm:$0xff]
        %v9144 = vld [vmem:[%s9122 + $0xa8] sm:$0xff]
        %v9145 = vld [vmem:[%s9122 + $0xb0] sm:$0xff]
        %v9146 = vld [vmem:[%s9122 + $0xb8] sm:$0xff]
        %v9147 = vld [vmem:[%s9122 + $0xc0] sm:$0xff]
        %v9148 = vld [vmem:[%s9122 + $0xc8] sm:$0xff]
        %v9149 = vld [vmem:[%s9122 + $0xd0] sm:$0xff]
        %v9150 = vld [vmem:[%s9122 + $0xd8] sm:$0xff]
        %v9151 = vld [vmem:[%s9122 + $0xe0] sm:$0xff]
        %v9152 = vld [vmem:[%s9122 + $0xe8] sm:$0xff]
        %v9153 = vld [vmem:[%s9122 + $0xf0] sm:$0xff]
        %v9154 = vld [vmem:[%s9122 + $0xf8] sm:$0xff]
        %v9155 = vld [vmem:[%s9122 + $0x100] sm:$0xff]
        %v9156 = vld [vmem:[%s9122 + $0x108] sm:$0xff]
        %v9157 = vld [vmem:[%s9122 + $0x110] sm:$0xff]
        %v9158 = vld [vmem:[%s9122 + $0x118] sm:$0xff]
        %v9159 = vld [vmem:[%s9122 + $0x120] sm:$0xff]
        %v9160 = vld [vmem:[%s9122 + $0x128] sm:$0xff]
        %v9161 = vld [vmem:[%s9122 + $0x130] sm:$0xff]
        %v9162 = vld [vmem:[%s9122 + $0x138] sm:$0xff]
        %v9163 = vld [vmem:[%s9122 + $0x140] sm:$0xff]
        %v9164 = vld [vmem:[%s9122 + $0x148] sm:$0xff]
        %v9165 = vld [vmem:[%s9122 + $0x150] sm:$0xff]
        %v9166 = vld [vmem:[%s9122 + $0x158] sm:$0xff]
        %v9167 = vld [vmem:[%s9122 + $0x160] sm:$0xff]
        %v9168 = vld [vmem:[%s9122 + $0x168] sm:$0xff]
        %v9169 = vld [vmem:[%s9122 + $0x170] sm:$0xff]
        %v9170 = vld [vmem:[%s9122 + $0x178] sm:$0xff]
        %v9213 = vrot.slane %v9080, 5
        %v9214 = vrot.slane %v9083, 5
        %v9215 = vsel %vm920, %v9213, %v9214
        %v9216 = vrot.slane %v9081, 5
        %v9217 = vrot.slane %v9084, 5
        %v9218 = vsel %vm920, %v9216, %v9217
        %v9219 = vrot.slane %v9082, 5
        %v9220 = vrot.slane %v9085, 5
        %v9221 = vsel %vm920, %v9219, %v9220
        %v9222 = vrot.slane %v9086, 5
        %v9223 = vsel %vm920, %v9214, %v9222
        %v9224 = vrot.slane %v9087, 5
        %v9225 = vsel %vm920, %v9217, %v9224
        %v9226 = vrot.slane %v9088, 5
        %v9227 = vsel %vm920, %v9220, %v9226
        %v9228 = vrot.slane %v9089, 5
        %v9229 = vsel %vm920, %v9222, %v9228
        %v9230 = vrot.slane %v9090, 5
        %v9231 = vsel %vm920, %v9224, %v9230
        %v9232 = vrot.slane %v9091, 5
        %v9233 = vsel %vm920, %v9226, %v9232
        %v9234 = vrot.slane %v9092, 5
        %v9235 = vsel %vm920, %v9228, %v9234
        %v9236 = vrot.slane %v9093, 5
        %v9237 = vsel %vm920, %v9230, %v9236
        %v9238 = vrot.slane %v9094, 5
        %v9239 = vsel %vm920, %v9232, %v9238
        %v9240 = vrot.slane %v9095, 5
        %v9241 = vsel %vm920, %v9234, %v9240
        %v9242 = vrot.slane %v9096, 5
        %v9243 = vsel %vm920, %v9236, %v9242
        %v9244 = vrot.slane %v9097, 5
        %v9245 = vsel %vm920, %v9238, %v9244
        %v9246 = vrot.slane %v9098, 5
        %v9247 = vsel %vm920, %v9240, %v9246
        %v9248 = vrot.slane %v9099, 5
        %v9249 = vsel %vm920, %v9242, %v9248
        %v9250 = vrot.slane %v9100, 5
        %v9251 = vsel %vm920, %v9244, %v9250
        %v9252 = vrot.slane %v9101, 5
        %v9253 = vsel %vm920, %v9246, %v9252
        %v9254 = vrot.slane %v9102, 5
        %v9255 = vsel %vm920, %v9248, %v9254
        %v9256 = vrot.slane %v9103, 5
        %v9257 = vsel %vm920, %v9250, %v9256
        %v9258 = vrot.slane %v9104, 5
        %v9259 = vsel %vm920, %v9252, %v9258
        %v9260 = vrot.slane %v9105, 5
        %v9261 = vsel %vm920, %v9254, %v9260
        %v9262 = vrot.slane %v9106, 5
        %v9263 = vsel %vm920, %v9256, %v9262
        %v9264 = vrot.slane %v9107, 5
        %v9265 = vsel %vm920, %v9258, %v9264
        %v9266 = vrot.slane %v9108, 5
        %v9267 = vsel %vm920, %v9260, %v9266
        %v9268 = vrot.slane %v9109, 5
        %v9269 = vsel %vm920, %v9262, %v9268
        %v9270 = vrot.slane %v9110, 5
        %v9271 = vsel %vm920, %v9264, %v9270
        %v9272 = vrot.slane %v9111, 5
        %v9273 = vsel %vm920, %v9266, %v9272
        %v9274 = vrot.slane %v9112, 5
        %v9275 = vsel %vm920, %v9268, %v9274
        %v9276 = vrot.slane %v9113, 5
        %v9277 = vsel %vm920, %v9270, %v9276
        %v9278 = vrot.slane %v9114, 5
        %v9279 = vsel %vm920, %v9272, %v9278
        %v9280 = vrot.slane %v9115, 5
        %v9281 = vsel %vm920, %v9274, %v9280
        %v9282 = vrot.slane %v9116, 5
        %v9283 = vsel %vm920, %v9276, %v9282
        %v9284 = vrot.slane %v9117, 5
        %v9285 = vsel %vm920, %v9278, %v9284
        %v9286 = vrot.slane %v9118, 5
        %v9287 = vsel %vm920, %v9280, %v9286
        %v9288 = vrot.slane %v9119, 5
        %v9289 = vsel %vm920, %v9282, %v9288
        %v9290 = vrot.slane %v9120, 5
        %v9291 = vsel %vm920, %v9284, %v9290
        %v9292 = vrot.slane %v9121, 5
        %v9293 = vsel %vm920, %v9286, %v9292
        %9333 = vmatprep.subr.mxu0 0.0
        %9334 = vmatpush1.msra.mxu0 %v9123
        %9335 = vmatprep.subr.mxu0 0.0
        %9336 = vmatpush1.msra.mxu0 %v9124
        %9337 = vmatprep.subr.mxu0 0.0
        %9338 = vmatpush1.msra.mxu0 %v9125
        %9339 = vmatprep.subr.mxu0 0.0
        %9340 = vmatpush1.msra.mxu0 %v9126
        %9341 = vmatprep.subr.mxu0 0.0
        %9342 = vmatpush1.msra.mxu0 %v9127
        %9343 = vmatprep.subr.mxu0 0.0
        %9344 = vmatpush1.msra.mxu0 %v9128
        %9345 = vmatprep.subr.mxu0 0.0
        %9346 = vmatpush1.msra.mxu0 %v9129
        %9347 = vmatprep.subr.mxu0 0.0
        %9348 = vmatpush1.msra.mxu0 %v9130
        %9349 = vmatprep.subr.mxu0 0.0
        %9350 = vmatpush1.msra.mxu0 %v9131
        %9351 = vmatprep.subr.mxu0 0.0
        %9352 = vmatpush1.msra.mxu0 %v9132
        %9353 = vmatprep.subr.mxu0 0.0
        %9354 = vmatpush1.msra.mxu0 %v9133
        %9355 = vmatprep.subr.mxu0 0.0
        %9356 = vmatpush1.msra.mxu0 %v9134
        %9357 = vmatprep.subr.mxu0 0.0
        %9358 = vmatpush1.msra.mxu0 %v9135
        %9359 = vmatprep.subr.mxu0 0.0
        %9360 = vmatpush1.msra.mxu0 %v9136
        %9361 = vmatprep.subr.mxu0 0.0
        %9362 = vmatpush1.msra.mxu0 %v9137
        %9363 = vmatprep.subr.mxu0 0.0
        %9364 = vmatpush1.msra.mxu0 %v9138
        %9365 = vmatprep.subr.mxu0 0.0
        %9366 = vmatpush1.msra.mxu0 %v9139
        %9367 = vmatprep.subr.mxu0 0.0
        %9368 = vmatpush1.msra.mxu0 %v9140
        %9369 = vmatprep.subr.mxu0 0.0
        %9370 = vmatpush1.msra.mxu0 %v9141
        %9371 = vmatprep.subr.mxu0 0.0
        %9372 = vmatpush1.msra.mxu0 %v9142
        %9373 = vmatprep.subr.mxu0 0.0
        %9374 = vmatpush1.msra.mxu0 %v9143
        %9375 = vmatprep.subr.mxu0 0.0
        %9376 = vmatpush1.msra.mxu0 %v9144
        %9377 = vmatprep.subr.mxu0 0.0
        %9378 = vmatpush1.msra.mxu0 %v9145
        %9379 = vmatprep.subr.mxu0 0.0
        %9380 = vmatpush1.msra.mxu0 %v9146
        %9381 = vmatprep.subr.mxu0 0.0
        %9382 = vmatpush1.msra.mxu0 %v9147
        %9383 = vmatprep.subr.mxu0 0.0
        %9384 = vmatpush1.msra.mxu0 %v9148
        %9385 = vmatprep.subr.mxu0 0.0
        %9386 = vmatpush1.msra.mxu0 %v9149
        %9387 = vmatprep.subr.mxu0 0.0
        %9388 = vmatpush1.msra.mxu0 %v9150
        %9389 = vmatprep.subr.mxu0 0.0
        %9390 = vmatpush1.msra.mxu0 %v9151
        %9391 = vmatprep.subr.mxu0 0.0
        %9392 = vmatpush1.msra.mxu0 %v9152
        %9393 = vmatprep.subr.mxu0 0.0
        %9394 = vmatpush1.msra.mxu0 %v9153
        %9395 = vmatprep.subr.mxu0 0.0
        %9396 = vmatpush1.msra.mxu0 %v9154
        %9397 = vmatprep.mubr.f32.mxu0 %v9218
        %9398 = vmatmul.mubr.f32.gmra.mrb[0].mxu0 %v9215
        %v9399 = vpop.f32.mrb[0].mxu0
        %v9400 = vadd.f32 0.0, %v9399
        %v9401 = vpop.f32.mrb[0].mxu0
        %9402 = vmatprep.mubr.f32.mxu0 %v9225
        %9403 = vmatmul.mubr.f32.gmra.mrb[0].mxu0 %v9223
        %v9404 = vpop.f32.mrb[0].mxu0
        %v9405 = vadd.f32 0.0, %v9404
        %v9406 = vpop.f32.mrb[0].mxu0
        %9407 = vmatprep.mubr.f32.mxu0 %v9231
        %9408 = vmatmul.mubr.f32.gmra.mrb[0].mxu0 %v9229
        %v9409 = vpop.f32.mrb[0].mxu0
        %v9410 = vadd.f32 0.0, %v9409
        %v9411 = vpop.f32.mrb[0].mxu0
        %9412 = vmatprep.mubr.f32.mxu0 %v9237
        %9413 = vmatmul.mubr.f32.gmra.mrb[0].mxu0 %v9235
        %v9414 = vpop.f32.mrb[0].mxu0
        %v9415 = vadd.f32 0.0, %v9414
        %v9416 = vpop.f32.mrb[0].mxu0
        %9417 = vmatprep.mubr.f32.mxu0 %v9243
        %9418 = vmatmul.mubr.f32.gmra.mrb[0].mxu0 %v9241
        %v9419 = vpop.f32.mrb[0].mxu0
        %v9420 = vadd.f32 0.0, %v9419
        %v9421 = vpop.f32.mrb[0].mxu0
        %9422 = vmatprep.mubr.f32.mxu0 %v9249
        %9423 = vmatmul.mubr.f32.gmra.mrb[0].mxu0 %v9247
        %v9424 = vpop.f32.mrb[0].mxu0
        %v9425 = vadd.f32 0.0, %v9424
        %v9426 = vpop.f32.mrb[0].mxu0
        %9427 = vmatprep.mubr.f32.mxu0 %v9255
        %9428 = vmatmul.mubr.f32.gmra.mrb[0].mxu0 %v9253
        %v9429 = vpop.f32.mrb[0].mxu0
        %v9430 = vadd.f32 0.0, %v9429
        %v9431 = vpop.f32.mrb[0].mxu0
        %9432 = vmatprep.mubr.f32.mxu0 %v9261
        %9433 = vmatmul.mubr.f32.gmra.mrb[0].mxu0 %v9259
        %v9434 = vpop.f32.mrb[0].mxu0
        %v9435 = vadd.f32 0.0, %v9434
        %v9436 = vpop.f32.mrb[0].mxu0
        %9437 = vmatprep.mubr.f32.mxu0 %v9267
        %9438 = vmatmul.mubr.f32.gmra.mrb[0].mxu0 %v9265
        %v9439 = vpop.f32.mrb[0].mxu0
        %v9440 = vadd.f32 0.0, %v9439
        %v9441 = vpop.f32.mrb[0].mxu0
        %9442 = vmatprep.mubr.f32.mxu0 %v9273
        %9443 = vmatmul.mubr.f32.gmra.mrb[0].mxu0 %v9271
        %v9444 = vpop.f32.mrb[0].mxu0
        %v9445 = vadd.f32 0.0, %v9444
        %v9446 = vpop.f32.mrb[0].mxu0
        %9447 = vmatprep.mubr.f32.mxu0 %v9279
        %9448 = vmatmul.mubr.f32.gmra.mrb[0].mxu0 %v9277
        %v9449 = vpop.f32.mrb[0].mxu0
        %v9450 = vadd.f32 0.0, %v9449
        %v9451 = vpop.f32.mrb[0].mxu0
        %9452 = vmatprep.mubr.f32.mxu0 %v9285
        %9453 = vmatmul.mubr.f32.gmra.mrb[0].mxu0 %v9283
        %v9454 = vpop.f32.mrb[0].mxu0
        %v9455 = vadd.f32 0.0, %v9454
        %v9456 = vpop.f32.mrb[0].mxu0
        %9457 = vmatprep.mubr.f32.mxu0 %v9291
        %9458 = vmatmul.mubr.f32.gmra.mrb[0].mxu0 %v9289
        %v9459 = vpop.f32.mrb[0].mxu0
        %v9460 = vadd.f32 0.0, %v9459
        %v9461 = vpop.f32.mrb[0].mxu0
        %9462 = vdwg.mxu0
        %9463 = vmatprep.subr.mxu0 0.0
        %9464 = vmatpush1.msra.mxu0 %v9155
        %9465 = vmatprep.subr.mxu0 0.0
        %9466 = vmatpush1.msra.mxu0 %v9156
        %9467 = vmatprep.subr.mxu0 0.0
        %9468 = vmatpush1.msra.mxu0 %v9157
        %9469 = vmatprep.subr.mxu0 0.0
        %9470 = vmatpush1.msra.mxu0 %v9158
        %9471 = vmatprep.subr.mxu0 0.0
        %9472 = vmatpush1.msra.mxu0 %v9159
        %9473 = vmatprep.subr.mxu0 0.0
        %9474 = vmatpush1.msra.mxu0 %v9160
        %9475 = vmatprep.subr.mxu0 0.0
        %9476 = vmatpush1.msra.mxu0 %v9161
        %9477 = vmatprep.subr.mxu0 0.0
        %9478 = vmatpush1.msra.mxu0 %v9162
        %9479 = vmatprep.subr.mxu0 0.0
        %9480 = vmatpush1.msra.mxu0 %v9163
        %9481 = vmatprep.subr.mxu0 0.0
        %9482 = vmatpush1.msra.mxu0 %v9164
        %9483 = vmatprep.subr.mxu0 0.0
        %9484 = vmatpush1.msra.mxu0 %v9165
        %9485 = vmatprep.subr.mxu0 0.0
        %9486 = vmatpush1.msra.mxu0 %v9166
        %9487 = vmatprep.subr.mxu0 0.0
        %9488 = vmatpush1.msra.mxu0 %v9167
        %9489 = vmatprep.subr.mxu0 0.0
        %9490 = vmatpush1.msra.mxu0 %v9168
        %9491 = vmatprep.subr.mxu0 0.0
        %9492 = vmatpush1.msra.mxu0 %v9169
        %9493 = vmatprep.subr.mxu0 0.0
        %9494 = vmatpush1.msra.mxu0 %v9170
        %9495 = vmatprep.subr.mxu0 0.0
        %9496 = vmatpush1.msra.mxu0 0.0
        %9497 = vmatprep.subr.mxu0 0.0
        %9498 = vmatpush1.msra.mxu0 0.0
        %9499 = vmatprep.subr.mxu0 0.0
        %9500 = vmatpush1.msra.mxu0 0.0
        %9501 = vmatprep.subr.mxu0 0.0
        %9502 = vmatpush1.msra.mxu0 0.0
        %9503 = vmatprep.subr.mxu0 0.0
        %9504 = vmatpush1.msra.mxu0 0.0
        %9505 = vmatprep.subr.mxu0 0.0
        %9506 = vmatpush1.msra.mxu0 0.0
        %9507 = vmatprep.subr.mxu0 0.0
        %9508 = vmatpush1.msra.mxu0 0.0
        %9509 = vmatprep.subr.mxu0 0.0
        %9510 = vmatpush1.msra.mxu0 0.0
        %9511 = vmatprep.subr.mxu0 0.0
        %9512 = vmatpush1.msra.mxu0 0.0
        %9513 = vmatprep.subr.mxu0 0.0
        %9514 = vmatpush1.msra.mxu0 0.0
        %9515 = vmatprep.subr.mxu0 0.0
        %9516 = vmatpush1.msra.mxu0 0.0
        %9517 = vmatprep.subr.mxu0 0.0
        %9518 = vmatpush1.msra.mxu0 0.0
        %9519 = vmatprep.subr.mxu0 0.0
        %9520 = vmatpush1.msra.mxu0 0.0
        %9521 = vmatprep.subr.mxu0 0.0
        %9522 = vmatpush1.msra.mxu0 0.0
        %9523 = vmatprep.subr.mxu0 0.0
        %9524 = vmatpush1.msra.mxu0 0.0
        %9525 = vmatprep.subr.mxu0 0.0
        %9526 = vmatpush1.msra.mxu0 0.0
        %9527 = vmatprep.mubr.f32.mxu0 0.0
        %9528 = vmatmul.mubr.f32.gmra.mrb[0].mxu0 %v9221
        %v9529 = vpop.f32.mrb[0].mxu0
        %v9530 = vadd.f32 %v9400, %v9529
        %v9531 = vpop.f32.mrb[0].mxu0
        %9532 = vmatprep.mubr.f32.mxu0 0.0
        %9533 = vmatmul.mubr.f32.gmra.mrb[0].mxu0 %v9227
        %v9534 = vpop.f32.mrb[0].mxu0
        %v9535 = vadd.f32 %v9405, %v9534
        %v9536 = vpop.f32.mrb[0].mxu0
        %9537 = vmatprep.mubr.f32.mxu0 0.0
        %9538 = vmatmul.mubr.f32.gmra.mrb[0].mxu0 %v9233
        %v9539 = vpop.f32.mrb[0].mxu0
        %v9540 = vadd.f32 %v9410, %v9539
        %v9541 = vpop.f32.mrb[0].mxu0
        %9542 = vmatprep.mubr.f32.mxu0 0.0
        %9543 = vmatmul.mubr.f32.gmra.mrb[0].mxu0 %v9239
        %v9544 = vpop.f32.mrb[0].mxu0
        %v9545 = vadd.f32 %v9415, %v9544
        %v9546 = vpop.f32.mrb[0].mxu0
        %9547 = vmatprep.mubr.f32.mxu0 0.0
        %9548 = vmatmul.mubr.f32.gmra.mrb[0].mxu0 %v9245
        %v9549 = vpop.f32.mrb[0].mxu0
        %v9550 = vadd.f32 %v9420, %v9549
        %v9551 = vpop.f32.mrb[0].mxu0
        %9552 = vmatprep.mubr.f32.mxu0 0.0
        %9553 = vmatmul.mubr.f32.gmra.mrb[0].mxu0 %v9251
        %v9554 = vpop.f32.mrb[0].mxu0
        %v9555 = vadd.f32 %v9425, %v9554
        %v9556 = vpop.f32.mrb[0].mxu0
        %9557 = vmatprep.mubr.f32.mxu0 0.0
        %9558 = vmatmul.mubr.f32.gmra.mrb[0].mxu0 %v9257
        %v9559 = vpop.f32.mrb[0].mxu0
        %v9560 = vadd.f32 %v9430, %v9559
        %v9561 = vpop.f32.mrb[0].mxu0
        %9562 = vmatprep.mubr.f32.mxu0 0.0
        %9563 = vmatmul.mubr.f32.gmra.mrb[0].mxu0 %v9263
        %v9564 = vpop.f32.mrb[0].mxu0
        %v9565 = vadd.f32 %v9435, %v9564
        %v9566 = vpop.f32.mrb[0].mxu0
        %9567 = vmatprep.mubr.f32.mxu0 0.0
        %9568 = vmatmul.mubr.f32.gmra.mrb[0].mxu0 %v9269
        %v9569 = vpop.f32.mrb[0].mxu0
        %v9570 = vadd.f32 %v9440, %v9569
        %v9571 = vpop.f32.mrb[0].mxu0
        %9572 = vmatprep.mubr.f32.mxu0 0.0
        %9573 = vmatmul.mubr.f32.gmra.mrb[0].mxu0 %v9275
        %v9574 = vpop.f32.mrb[0].mxu0
        %v9575 = vadd.f32 %v9445, %v9574
        %v9576 = vpop.f32.mrb[0].mxu0
        %9577 = vmatprep.mubr.f32.mxu0 0.0
        %9578 = vmatmul.mubr.f32.gmra.mrb[0].mxu0 %v9281
        %v9579 = vpop.f32.mrb[0].mxu0
        %v9580 = vadd.f32 %v9450, %v9579
        %v9581 = vpop.f32.mrb[0].mxu0
        %9582 = vmatprep.mubr.f32.mxu0 0.0
        %9583 = vmatmul.mubr.f32.gmra.mrb[0].mxu0 %v9287
        %v9584 = vpop.f32.mrb[0].mxu0
        %v9585 = vadd.f32 %v9455, %v9584
        %v9586 = vpop.f32.mrb[0].mxu0
        %9587 = vmatprep.mubr.f32.mxu0 0.0
        %9588 = vmatmul.mubr.f32.gmra.mrb[0].mxu0 %v9293
        %v9589 = vpop.f32.mrb[0].mxu0
        %v9590 = vadd.f32 %v9460, %v9589
        %v9591 = vpop.f32.mrb[0].mxu0
        %9592 = vdwg.mxu0
        %v9593 = vadd.f32 %v9067, %v9530
        %v9594 = vadd.f32 %v9068, %v9535
        %v9595 = vadd.f32 %v9069, %v9540
        %v9596 = vadd.f32 %v9070, %v9545
        %v9597 = vadd.f32 %v9071, %v9550
        %v9598 = vadd.f32 %v9072, %v9555
        %v9599 = vadd.f32 %v9073, %v9560
        %v9600 = vadd.f32 %v9074, %v9565
        %v9601 = vadd.f32 %v9075, %v9570
        %v9602 = vadd.f32 %v9076, %v9575
        %v9603 = vadd.f32 %v9077, %v9580
        %v9604 = vadd.f32 %v9078, %v9585
        %v9605 = vadd.f32 %v9079, %v9590
        %v9606 = vmax.f32 %v9593, 0.0
        %v9607 = vmax.f32 %v9594, 0.0
        %v9608 = vmax.f32 %v9595, 0.0
        %v9609 = vmax.f32 %v9596, 0.0
        %v9610 = vmax.f32 %v9597, 0.0
        %v9611 = vmax.f32 %v9598, 0.0
        %v9612 = vmax.f32 %v9599, 0.0
        %v9613 = vmax.f32 %v9600, 0.0
        %v9614 = vmax.f32 %v9601, 0.0
        %v9615 = vmax.f32 %v9602, 0.0
        %v9616 = vmax.f32 %v9603, 0.0
        %v9617 = vmax.f32 %v9604, 0.0
        %v9618 = vmax.f32 %v9605, 0.0
        %v9619 = vmin.f32 %v9606, 255.0
        %v9620 = vmin.f32 %v9607, 255.0
        %v9621 = vmin.f32 %v9608, 255.0
        %v9622 = vmin.f32 %v9609, 255.0
        %v9623 = vmin.f32 %v9610, 255.0
        %v9624 = vmin.f32 %v9611, 255.0
        %v9625 = vmin.f32 %v9612, 255.0
        %v9626 = vmin.f32 %v9613, 255.0
        %v9627 = vmin.f32 %v9614, 255.0
        %v9628 = vmin.f32 %v9615, 255.0
        %v9629 = vmin.f32 %v9616, 255.0
        %v9630 = vmin.f32 %v9617, 255.0
        %v9631 = vmin.f32 %v9618, 255.0
        %vm9632 = vcmask 97280
        %9633 = vst.msk [vmem:[%s690] sm:$0xff] %vm9632, %v9619
        %9634 = vst.msk [vmem:[%s690 + $0x8] sm:$0xff] %vm9632, %v9620
        %9635 = vst.msk [vmem:[%s690 + $0x10] sm:$0xff] %vm9632, %v9621
        %9636 = vst.msk [vmem:[%s690 + $0x18] sm:$0xff] %vm9632, %v9622
        %9637 = vst.msk [vmem:[%s690 + $0x20] sm:$0xff] %vm9632, %v9623
        %9638 = vst.msk [vmem:[%s690 + $0x28] sm:$0xff] %vm9632, %v9624
        %9639 = vst.msk [vmem:[%s690 + $0x30] sm:$0xff] %vm9632, %v9625
        %9640 = vst.msk [vmem:[%s690 + $0x38] sm:$0xff] %vm9632, %v9626
        %9641 = vst.msk [vmem:[%s690 + $0x40] sm:$0xff] %vm9632, %v9627
        %9642 = vst.msk [vmem:[%s690 + $0x48] sm:$0xff] %vm9632, %v9628
        %9643 = vst.msk [vmem:[%s690 + $0x50] sm:$0xff] %vm9632, %v9629
        %9644 = vst.msk [vmem:[%s690 + $0x58] sm:$0xff] %vm9632, %v9630
        %vm9645 = vcmask 93184
        %9646 = vst.msk [vmem:[%s690 + $0x60] sm:$0xf] %vm9645, %v9631
        %p9647 = scmp.lt.s32.totalorder %s34, 1
        %s9648 = scalar_select %p9647, %s34, 1
        %s9649 = smul.addr %s9648, 13
        %s9650 = smul.addr %s9649, 8
        %s9651 = scalar_lea.vmem %s19, %s9650
        // Predicated region
        $region121: #{edsr_forward_pallas.1} parent=95 // pred_check
          %p9652 = pneg %p456
        $region122: #{edsr_forward_pallas.1} parent=95 // pred_check_branch
          %9654 = sbr.rel (%p9652) target = $region124
        $region123: #{edsr_forward_pallas.1} parent=95 // pred_region
          _
        $region124: #{edsr_forward_pallas.1} parent=95 // pred_fallthru
          _
      $region96: #{edsr_forward_pallas.1} parent=5 // pred_fallthru
        _
      %p9655 = scmp.le.s32.totalorder 2, %s29
      // Predicated region
      $region125: #{edsr_forward_pallas.1} parent=5 // pred_check
        %p9656 = pneg %p9655
      $region126: #{edsr_forward_pallas.1} parent=5 // pred_check_branch
        %9658 = sbr.rel (%p9656) target = $region128
      $region127: #{edsr_forward_pallas.1} parent=5 // pred_region
        %s9659 = ssub.s32 %s29, 2
        // Predicated region
        $region129: #{edsr_forward_pallas.1} parent=127 // pred_check
          %p9660 = pneg %p462
        $region130: #{edsr_forward_pallas.1} parent=127 // pred_check_branch
          %9662 = sbr.rel (%p9660) target = $region132
        $region131: #{edsr_forward_pallas.1} parent=127 // pred_region
          %p9663 = scmp.lt.s32.totalorder %s35, 1
          %s9664 = scalar_select %p9663, %s35, 1
          %s9665 = smul.addr %s9664, 13
          %s9666 = smul.addr %s9665, 8
          %s9667 = scalar_lea.vmem %s19, %s9666
        $region132: #{edsr_forward_pallas.1} parent=127 // pred_fallthru
          _
      $region128: #{edsr_forward_pallas.1} parent=5 // pred_fallthru
        _
    $region6: #{edsr_forward_pallas.1} parent=1 // loop_footer
      %s33 = sadd.s32 1, %s29
    $region7: #{edsr_forward_pallas.1} parent=1 // loop_footer_branch
      %28 = sbr.rel target = $region3
    $region8: #{edsr_forward_pallas.1} parent=1 // loop_exit
      _
    %9668 = vsyncpa [#allocation4], 1
    %s9669 = scalar_lea.sflag [#allocation4], 1
    %9670 = vsyncpa %s9669, 1
    %9671 = vsyncpa [#allocation6], 1
    %9672 = vsyncpa [#allocation9], 1
    %9673 = vsyncpa [#allocation12], 1

</llo_original>
